<compile_context>
chip_gen: v5e
topology: v5e:2x2
jax: 0.10.0
libtpu: 0.0.40
codegen_flags: <defaults>
</compile_context>

<pallas_src>
import functools
import math

import jax
import jax.numpy as jnp
import numpy as np
from jax.experimental import pallas as pl
from jax.experimental.pallas import tpu as pltpu


def _pe_kernel(div_ref, posoff_ref, out_ref, *, pos_step):
    """Fill one (TR, W) tile of the (flat, lane-dense) sinusoidal PE table.

    Element (row r, lane l) of the flat slab corresponds to
        pos = r * pos_step + posoff[l]
        arg = pos * div[l]                    # div[l] = exp(-2i*ln(1e4)/d_model)
        out = cos(arg) if the column is odd else sin(arg)
    Column parity equals lane parity because d_model is even, so it is derived
    from an in-kernel lane iota; div/posoff are (1, W) per-lane constants.
    pos stays exactly representable in f32, so arg is bit-identical to the
    reference's position * div_term.
    """
    tr, w = out_ref.shape
    row0 = pl.program_id(0) * tr
    row = jax.lax.broadcasted_iota(jnp.int32, (tr, w), 0) + row0
    lane = jax.lax.broadcasted_iota(jnp.int32, (tr, w), 1)

    pos = row.astype(jnp.float32) * pos_step + posoff_ref[...]
    arg = pos * div_ref[...]
    is_odd = (lane & 1) == 1
    out_ref[...] = jnp.where(is_odd, jnp.cos(arg), jnp.sin(arg))


def _choose_row_tile(num_rows, width):
    """Rows per output block for the flat (num_rows, width) slab.

    Small tables (<= ~4 MiB) build in a single block (one unmasked bulk write,
    zero per-step overhead).  Larger tables use <=4 MiB blocks (double-buffered
    -> <=8 MiB, safe on every generation's scoped-VMEM default), rows a
    multiple of 8, and an even number of grid steps so a v7x chip can shard
    the parallel build across both TensorCores.
    """
    bytes_per_row = width * 4
    max_rows = max(8, (4 * 1024 * 1024) // bytes_per_row)
    if num_rows <= max_rows:
        return num_rows
    steps = pl.cdiv(num_rows, max_rows)
    if steps % 2:
        steps += 1  # even step count -> both v7x TensorCores busy
    tr = pl.cdiv(num_rows, steps)
    return max(8, ((tr + 7) // 8) * 8)


@functools.lru_cache(maxsize=None)
def _build_pe_table(d_model, max_len):
    """Build the (1, max_len, d_model) PE buffer once (like register_buffer)."""
    assert d_model % 2 == 0, "d_model must be even (same constraint as torch code)"

    # Exactly the reference expression -> bit-identical frequencies.
    half = jnp.exp(
        jnp.arange(0, d_model, 2, dtype=jnp.float32) * (-math.log(10000.0) / d_model)
    )  # (d_model // 2,)

    packed = (d_model < 128) and (128 % d_model == 0)
    if packed:
        # Lane-dense: fold 128/d_model consecutive positions into each 128-lane
        # row.  flat = pos * d_model + col, laid out as (num_rows, 128).
        per_row = 128 // d_model                     # positions per packed row
        ml_pad = pl.cdiv(max_len, per_row) * per_row
        num_rows, width = ml_pad // per_row, 128
        pos_step = float(per_row)
        lane = np.arange(width)
        col = lane % d_model
        posoff = (lane // d_model).astype(np.float32)
    else:
        # d_model >= 128 (already lane-dense when a multiple of 128) or an
        # awkward width: plain (max_len, d_model) layout.
        ml_pad = max_len
        num_rows, width = max_len, d_model
        pos_step = 1.0
        col = np.arange(width)
        posoff = np.zeros((width,), np.float32)

    div_lane = half[col // 2].reshape(1, width)              # (1, W) f32
    posoff_lane = jnp.asarray(posoff).reshape(1, width)      # (1, W) f32

    tr = _choose_row_tile(num_rows, width)
    grid = (pl.cdiv(num_rows, tr),)

    flat = pl.pallas_call(
        functools.partial(_pe_kernel, pos_step=pos_step),
        out_shape=jax.ShapeDtypeStruct((num_rows, width), jnp.float32),
        grid=grid,
        in_specs=[
            pl.BlockSpec((1, width), lambda i: (0, 0)),
            pl.BlockSpec((1, width), lambda i: (0, 0)),
        ],
        out_specs=pl.BlockSpec((tr, width), lambda i: (i, 0)),
        compiler_params=pltpu.CompilerParams(dimension_semantics=("parallel",)),
    )(div_lane, posoff_lane)

    # Metadata-only reshape/slice back to the logical (max_len, d_model) view.
    pe = flat.reshape(ml_pad, d_model)[:max_len]
    return pe[None]  # (1, max_len, d_model)


class FixedPositionalEncoding:
    """Pallas/JAX equivalent of deepod's FixedPositionalEncoding.

    The sinusoidal table is built ONCE at construction (register_buffer);
    __call__/forward just slices it: pe[:, :x.shape[1]].
    """

    def __init__(self, d_model, dropout=0.1, max_len=1024, scale_factor=1.0):
        del dropout, scale_factor  # unused by the reference forward
        self.d_model = d_model
        self.max_len = max_len
        self.pe = _build_pe_table(d_model, max_len)  # (1, max_len, d_model)

    def __call__(self, x):
        # x: (seq_len, batch, embed) — only x.shape[1] is read, matching torch.
        assert x.shape[1] <= self.max_len, "position count exceeds max_len"
        return self.pe[:, : x.shape[1]]

    forward = __call__


def fixed_positional_encoding(x, d_model, max_len=1024):
    """Functional wrapper: pe[:, :x.shape[1]] with a cached Pallas-built table."""
    assert x.shape[1] <= max_len, "position count exceeds max_len"
    return _build_pe_table(d_model, max_len)[:, : x.shape[1]]


def _reference_table(d_model, max_len):
    """Plain-JAX reference mirroring the torch buffer construction."""
    position = jnp.arange(max_len, dtype=jnp.float32)[:, None]
    div_term = jnp.exp(
        jnp.arange(0, d_model, 2, dtype=jnp.float32) * (-math.log(10000.0) / d_model)
    )
    pe = jnp.zeros((max_len, d_model), jnp.float32)
    pe = pe.at[:, 0::2].set(jnp.sin(position * div_term))
    pe = pe.at[:, 1::2].set(jnp.cos(position * div_term))
    return pe[None]


def _reference(x, d_model, max_len=1024):
    return _reference_table(d_model, max_len)[:, : x.shape[1]]


if __name__ == "__main__":
    key = jax.random.PRNGKey(0)
    seq_len, batch, d_model = 8, 2, 32
    x = jax.random.normal(key, (seq_len, batch, d_model), dtype=jnp.float32)

    module = FixedPositionalEncoding(d_model=d_model, max_len=1024)
    out = jax.block_until_ready(module(x))

    ref_fwd = _reference(x, d_model=d_model, max_len=1024)
    assert out.shape == (1, batch, d_model), out.shape
    assert out.dtype == jnp.float32
    assert jnp.allclose(out, ref_fwd, atol=1e-5, rtol=1e-5), "forward mismatch"

    # Buffer-level checks: tight on small positions (tiny sin/cos arguments),
    # loose bound over the full 1024 positions (only f32 range-reduction
    # differences between the Mosaic and XLA sin/cos implementations remain —
    # any layout/indexing bug would show up as O(1) errors).
    full_ref = _reference_table(d_model, 1024)
    assert jnp.allclose(module.pe[:, :16], full_ref[:, :16], atol=1e-5, rtol=1e-5)
    assert jnp.allclose(module.pe, full_ref, atol=1e-3, rtol=1e-3)

    # Second forward reuses the cached buffer (no recompute), like register_buffer.
    out2 = jax.block_until_ready(module(x))
    assert jnp.array_equal(out, out2)

    print("KERNEL_OK")
</pallas_src>

<mosaic_0001>
module attributes {stable_mosaic.version = 11 : i64} {
  func.func @_pe_kernel(%arg0: i32, %arg1: memref<1x128xf32, #tpu.memory_space<vmem>>, %arg2: memref<1x128xf32, #tpu.memory_space<vmem>>, %arg3: memref<256x128xf32, #tpu.memory_space<vmem>>) attributes {dimension_semantics = [#tpu.dimension_semantics<parallel>], iteration_bounds = array<i64: 1>, scalar_prefetch = 0 : i64, scratch_operands = 0 : i64, tpu.core_type = #tpu.core_type<tc>, window_params = [{pipeline_mode = #tpu.pipeline_mode<synchronous>, transform_indices = @transform_0, window_bounds = array<i64: 1, 128>}, {pipeline_mode = #tpu.pipeline_mode<synchronous>, transform_indices = @transform_1, window_bounds = array<i64: 1, 128>}, {transform_indices = @transform_2, window_bounds = array<i64: 256, 128>}]} {
    %c256_i32 = arith.constant 256 : i32
    %0 = arith.muli %arg0, %c256_i32 : i32
    %1 = tpu.iota {dimensions = array<i32: 0>} : vector<256x128xi32>
    %2 = vector.broadcast %0 : i32 to vector<256x128xi32>
    %3 = arith.addi %1, %2 : vector<256x128xi32>
    %4 = tpu.iota {dimensions = array<i32: 1>} : vector<256x128xi32>
    %5 = arith.sitofp %3 : vector<256x128xi32> to vector<256x128xf32>
    %cst = arith.constant 4.000000e+00 : f32
    %6 = vector.broadcast %cst : f32 to vector<256x128xf32>
    %7 = arith.mulf %5, %6 : vector<256x128xf32>
    %c0 = arith.constant 0 : index
    %c0_0 = arith.constant 0 : index
    %8 = vector.load %arg2[%c0, %c0_0] : memref<1x128xf32, #tpu.memory_space<vmem>>, vector<1x128xf32>
    %9 = vector.broadcast %8 : vector<1x128xf32> to vector<256x128xf32>
    %10 = arith.addf %7, %9 : vector<256x128xf32>
    %c0_1 = arith.constant 0 : index
    %c0_2 = arith.constant 0 : index
    %11 = vector.load %arg1[%c0_1, %c0_2] : memref<1x128xf32, #tpu.memory_space<vmem>>, vector<1x128xf32>
    %12 = vector.broadcast %11 : vector<1x128xf32> to vector<256x128xf32>
    %13 = arith.mulf %10, %12 : vector<256x128xf32>
    %c1_i32 = arith.constant 1 : i32
    %14 = vector.broadcast %c1_i32 : i32 to vector<256x128xi32>
    %15 = arith.andi %4, %14 : vector<256x128xi32>
    %c1_i32_3 = arith.constant 1 : i32
    %16 = vector.broadcast %c1_i32_3 : i32 to vector<256x128xi32>
    %17 = arith.cmpi eq, %15, %16 : vector<256x128xi32>
    %18 = math.cos %13 : vector<256x128xf32>
    %19 = math.sin %13 : vector<256x128xf32>
    %20 = arith.select %17, %18, %19 : vector<256x128xi1>, vector<256x128xf32>
    %c0_4 = arith.constant 0 : index
    %c0_5 = arith.constant 0 : index
    %21 = vector.load %arg3[%c0_4, %c0_5] : memref<256x128xf32, #tpu.memory_space<vmem>>, vector<256x128xf32>
    tpu.vector_store %arg3[%c0_4, %c0_5], %20 {strides = array<i32>} : memref<256x128xf32, #tpu.memory_space<vmem>>, vector<256x128xf32>,
    return
  }
  func.func @transform_0(%arg0: i32) -> (i32, i32) {
    %c0_i32 = arith.constant 0 : i32
    %c0_i32_0 = arith.constant 0 : i32
    %c0_i32_1 = arith.constant 0 : i32
    return %c0_i32, %c0_i32_0 : i32, i32
  }
  func.func @transform_1(%arg0: i32) -> (i32, i32) {
    %c0_i32 = arith.constant 0 : i32
    %c0_i32_0 = arith.constant 0 : i32
    %c0_i32_1 = arith.constant 0 : i32
    return %c0_i32, %c0_i32_0 : i32, i32
  }
  func.func @transform_2(%arg0: i32) -> (i32, i32) {
    %c0_i32 = arith.constant 0 : i32
    %c0_i32_0 = arith.constant 0 : i32
    return %arg0, %c0_i32 : i32, i32
  }
}

</mosaic_0001>

<llo_original>
// kernel: tpu_custom_call.1
$region0: #{tpu_custom_call.1}
  #allocation0 [shape = 'u32[]', space=smem, size = 0x4, offset = 0x4, fixed_abs, tag = 'smem constant byte address 0x4 - core index']
  #allocation1 [shape = 'u32[72,128]{1,0:T(1,128)}', space=vmem, size = 0x9000, scoped, tag = 'internal scratch']
  %s0 = inlined_call_operand.hbm [shape: f32[1,128], index: 0, kind: input, shape index: {}]
  %s1 = inlined_call_operand.hbm [shape: f32[1,128], index: 1, kind: input, shape index: {}]
  %s2 = inlined_call_operand.hbm [shape: f32[256,128], index: 2, kind: output, shape index: {}]
  %s3 = sld [smem:[#allocation0]]
  $region26: #{tpu_custom_call.1} parent=0
    _
  %s5 = ssub.s32 1, %s3
  %s6 = scalar_select 0, %s5, %s3
  $region1: #{tpu_custom_call.1} parent=0
    #allocation2 [shape = 'u8[512]{0}', space=vmem, size = 0x400, scoped, tag = 'input window, operand 0, single buffered']
    #allocation3 [shape = 's32[1]{0}', space=sflag, size = 0x4, scoped, tag = 'scoped memory for tpu_custom_call.1']
    #allocation4 [shape = 's32[1]{0}', space=sflag, size = 0x4, scoped, tag = 'scoped memory for tpu_custom_call.1']
    #allocation5 [shape = 'u8[512]{0}', space=vmem, size = 0x400, scoped, tag = 'input window, operand 1, single buffered']
    #allocation6 [shape = 's32[1]{0}', space=sflag, size = 0x4, scoped, tag = 'scoped memory for tpu_custom_call.1']
    #allocation7 [shape = 'u8[131072]{0}', space=vmem, size = 0x20000, scoped, tag = 'output window, operand 0, single buffered']
    %7 = vsyncpa [#allocation3], 0
    %8 = vsyncpa [#allocation6], 0
    %9 = vsyncpa [#allocation4], 0
    // Predicated region
    $region2: #{tpu_custom_call.1} parent=1 // pred_check
      _
    $region3: #{tpu_custom_call.1} parent=1 // pred_check_branch
      %11 = sbr.rel (0) target = $region5
    $region4: #{tpu_custom_call.1} parent=1 // pred_region
      %13 = vsyncadd [#allocation3], 0
      %s15 = sshll.u32 %s0, 4
      %s16 = int_to_ptr.hbm [resolvable:$true] %s15
      %s17 = sshll.u32 [#allocation2], 4
      %s18 = int_to_ptr.vmem [resolvable:$true] %s17
      %20 = dma.hbm_to_vmem [thread:$0]  %s16, 16, %s18, [#allocation3]
    $region5: #{tpu_custom_call.1} parent=1 // pred_fallthru
      _
    // Predicated region
    $region6: #{tpu_custom_call.1} parent=1 // pred_check
      _
    $region7: #{tpu_custom_call.1} parent=1 // pred_check_branch
      %22 = sbr.rel (0) target = $region9
    $region8: #{tpu_custom_call.1} parent=1 // pred_region
      %24 = vsyncadd [#allocation6], 0
      %s26 = sshll.u32 %s1, 4
      %s27 = int_to_ptr.hbm [resolvable:$true] %s26
      %s28 = sshll.u32 [#allocation5], 4
      %s29 = int_to_ptr.vmem [resolvable:$true] %s28
      %31 = dma.hbm_to_vmem [thread:$0]  %s27, 16, %s29, [#allocation6]
    $region9: #{tpu_custom_call.1} parent=1 // pred_fallthru
      _
    // Predicated region
    $region10: #{tpu_custom_call.1} parent=1 // pred_check
      _
    $region11: #{tpu_custom_call.1} parent=1 // pred_check_branch
      %33 = sbr.rel (0) target = $region13
    $region12: #{tpu_custom_call.1} parent=1 // pred_region
      %35 = dma.done [#allocation3], 16
    $region13: #{tpu_custom_call.1} parent=1 // pred_fallthru
      _
    // Predicated region
    $region14: #{tpu_custom_call.1} parent=1 // pred_check
      _
    $region15: #{tpu_custom_call.1} parent=1 // pred_check_branch
      %37 = sbr.rel (0) target = $region17
    $region16: #{tpu_custom_call.1} parent=1 // pred_region
      %39 = dma.done [#allocation6], 16
    $region17: #{tpu_custom_call.1} parent=1 // pred_fallthru
      _
    %s40 = smul.u32 0, 256
    %v41 = vlaneseq
    %v42 = vshrl.u32 %v41, 7
    %v43 = vadd.s32 %v42, 8
    %v44 = vadd.s32 %v42, 16
    %v45 = vadd.s32 %v42, 24
    %v46 = vadd.s32 %v42, 32
    %v47 = vadd.s32 %v42, 40
    %v48 = vadd.s32 %v42, 48
    %v49 = vadd.s32 %v42, 56
    %v50 = vadd.s32 %v42, 64
    %v51 = vadd.s32 %v42, 72
    %v52 = vadd.s32 %v42, 80
    %v53 = vadd.s32 %v42, 88
    %v54 = vadd.s32 %v42, 96
    %v55 = vadd.s32 %v42, 104
    %v56 = vadd.s32 %v42, 112
    %v57 = vadd.s32 %v42, 120
    %v58 = vadd.s32 %v42, 128
    %v59 = vadd.s32 %v42, 136
    %v60 = vadd.s32 %v42, 144
    %v61 = vadd.s32 %v42, 152
    %v62 = vadd.s32 %v42, 160
    %v63 = vadd.s32 %v42, 168
    %v64 = vadd.s32 %v42, 176
    %v65 = vadd.s32 %v42, 184
    %v66 = vadd.s32 %v42, 192
    %v67 = vadd.s32 %v42, 200
    %v68 = vadd.s32 %v42, 208
    %v69 = vadd.s32 %v42, 216
    %v70 = vadd.s32 %v42, 224
    %v71 = vadd.s32 %v42, 232
    %v72 = vadd.s32 %v42, 240
    %v73 = vadd.s32 %v42, 248
    %v74 = vstv %s40
    %v75 = vadd.s32 %v42, %v74
    %v76 = vadd.s32 %v43, %v74
    %v77 = vadd.s32 %v44, %v74
    %v78 = vadd.s32 %v45, %v74
    %v79 = vadd.s32 %v46, %v74
    %v80 = vadd.s32 %v47, %v74
    %v81 = vadd.s32 %v48, %v74
    %v82 = vadd.s32 %v49, %v74
    %v83 = vadd.s32 %v50, %v74
    %v84 = vadd.s32 %v51, %v74
    %v85 = vadd.s32 %v52, %v74
    %v86 = vadd.s32 %v53, %v74
    %v87 = vadd.s32 %v54, %v74
    %v88 = vadd.s32 %v55, %v74
    %v89 = vadd.s32 %v56, %v74
    %v90 = vadd.s32 %v57, %v74
    %v91 = vadd.s32 %v58, %v74
    %v92 = vadd.s32 %v59, %v74
    %v93 = vadd.s32 %v60, %v74
    %v94 = vadd.s32 %v61, %v74
    %v95 = vadd.s32 %v62, %v74
    %v96 = vadd.s32 %v63, %v74
    %v97 = vadd.s32 %v64, %v74
    %v98 = vadd.s32 %v65, %v74
    %v99 = vadd.s32 %v66, %v74
    %v100 = vadd.s32 %v67, %v74
    %v101 = vadd.s32 %v68, %v74
    %v102 = vadd.s32 %v69, %v74
    %v103 = vadd.s32 %v70, %v74
    %v104 = vadd.s32 %v71, %v74
    %v105 = vadd.s32 %v72, %v74
    %v106 = vadd.s32 %v73, %v74
    %v107 = vlaneseq
    %v108 = vand.u32 %v107, 127
    %v109 = vcvt.s32.f32 %v75
    %v110 = vcvt.s32.f32 %v76
    %v111 = vcvt.s32.f32 %v77
    %v112 = vcvt.s32.f32 %v78
    %v113 = vcvt.s32.f32 %v79
    %v114 = vcvt.s32.f32 %v80
    %v115 = vcvt.s32.f32 %v81
    %v116 = vcvt.s32.f32 %v82
    %v117 = vcvt.s32.f32 %v83
    %v118 = vcvt.s32.f32 %v84
    %v119 = vcvt.s32.f32 %v85
    %v120 = vcvt.s32.f32 %v86
    %v121 = vcvt.s32.f32 %v87
    %v122 = vcvt.s32.f32 %v88
    %v123 = vcvt.s32.f32 %v89
    %v124 = vcvt.s32.f32 %v90
    %v125 = vcvt.s32.f32 %v91
    %v126 = vcvt.s32.f32 %v92
    %v127 = vcvt.s32.f32 %v93
    %v128 = vcvt.s32.f32 %v94
    %v129 = vcvt.s32.f32 %v95
    %v130 = vcvt.s32.f32 %v96
    %v131 = vcvt.s32.f32 %v97
    %v132 = vcvt.s32.f32 %v98
    %v133 = vcvt.s32.f32 %v99
    %v134 = vcvt.s32.f32 %v100
    %v135 = vcvt.s32.f32 %v101
    %v136 = vcvt.s32.f32 %v102
    %v137 = vcvt.s32.f32 %v103
    %v138 = vcvt.s32.f32 %v104
    %v139 = vcvt.s32.f32 %v105
    %v140 = vcvt.s32.f32 %v106
    %v141 = vmul.f32 %v109, 4.0
    %v142 = vmul.f32 %v110, 4.0
    %v143 = vmul.f32 %v111, 4.0
    %v144 = vmul.f32 %v112, 4.0
    %v145 = vmul.f32 %v113, 4.0
    %v146 = vmul.f32 %v114, 4.0
    %v147 = vmul.f32 %v115, 4.0
    %v148 = vmul.f32 %v116, 4.0
    %v149 = vmul.f32 %v117, 4.0
    %v150 = vmul.f32 %v118, 4.0
    %v151 = vmul.f32 %v119, 4.0
    %v152 = vmul.f32 %v120, 4.0
    %v153 = vmul.f32 %v121, 4.0
    %v154 = vmul.f32 %v122, 4.0
    %v155 = vmul.f32 %v123, 4.0
    %v156 = vmul.f32 %v124, 4.0
    %v157 = vmul.f32 %v125, 4.0
    %v158 = vmul.f32 %v126, 4.0
    %v159 = vmul.f32 %v127, 4.0
    %v160 = vmul.f32 %v128, 4.0
    %v161 = vmul.f32 %v129, 4.0
    %v162 = vmul.f32 %v130, 4.0
    %v163 = vmul.f32 %v131, 4.0
    %v164 = vmul.f32 %v132, 4.0
    %v165 = vmul.f32 %v133, 4.0
    %v166 = vmul.f32 %v134, 4.0
    %v167 = vmul.f32 %v135, 4.0
    %v168 = vmul.f32 %v136, 4.0
    %v169 = vmul.f32 %v137, 4.0
    %v170 = vmul.f32 %v138, 4.0
    %v171 = vmul.f32 %v139, 4.0
    %v172 = vmul.f32 %v140, 4.0
    %v173 = vld [vmem:[#allocation5] sm:$0x1]
    %v175 = vperm.slane %v173, 0
    %v177 = vadd.f32 %v141, %v175
    %v178 = vadd.f32 %v142, %v175
    %v179 = vadd.f32 %v143, %v175
    %v180 = vadd.f32 %v144, %v175
    %v181 = vadd.f32 %v145, %v175
    %v182 = vadd.f32 %v146, %v175
    %v183 = vadd.f32 %v147, %v175
    %v184 = vadd.f32 %v148, %v175
    %v185 = vadd.f32 %v149, %v175
    %v186 = vadd.f32 %v150, %v175
    %v187 = vadd.f32 %v151, %v175
    %v188 = vadd.f32 %v152, %v175
    %v189 = vadd.f32 %v153, %v175
    %v190 = vadd.f32 %v154, %v175
    %v191 = vadd.f32 %v155, %v175
    %v192 = vadd.f32 %v156, %v175
    %v193 = vadd.f32 %v157, %v175
    %v194 = vadd.f32 %v158, %v175
    %v195 = vadd.f32 %v159, %v175
    %v196 = vadd.f32 %v160, %v175
    %v197 = vadd.f32 %v161, %v175
    %v198 = vadd.f32 %v162, %v175
    %v199 = vadd.f32 %v163, %v175
    %v200 = vadd.f32 %v164, %v175
    %v201 = vadd.f32 %v165, %v175
    %v202 = vadd.f32 %v166, %v175
    %v203 = vadd.f32 %v167, %v175
    %v204 = vadd.f32 %v168, %v175
    %v205 = vadd.f32 %v169, %v175
    %v206 = vadd.f32 %v170, %v175
    %v207 = vadd.f32 %v171, %v175
    %v208 = vadd.f32 %v172, %v175
    %v209 = vld [vmem:[#allocation2] sm:$0x1]
    %v211 = vperm.slane %v209, 0
    %v213 = vmul.f32 %v177, %v211
    %v214 = vmul.f32 %v178, %v211
    %v215 = vmul.f32 %v179, %v211
    %v216 = vmul.f32 %v180, %v211
    %v217 = vmul.f32 %v181, %v211
    %v218 = vmul.f32 %v182, %v211
    %v219 = vmul.f32 %v183, %v211
    %v220 = vmul.f32 %v184, %v211
    %v221 = vmul.f32 %v185, %v211
    %v222 = vmul.f32 %v186, %v211
    %v223 = vmul.f32 %v187, %v211
    %v224 = vmul.f32 %v188, %v211
    %v225 = vmul.f32 %v189, %v211
    %v226 = vmul.f32 %v190, %v211
    %v227 = vmul.f32 %v191, %v211
    %v228 = vmul.f32 %v192, %v211
    %v229 = vmul.f32 %v193, %v211
    %v230 = vmul.f32 %v194, %v211
    %v231 = vmul.f32 %v195, %v211
    %v232 = vmul.f32 %v196, %v211
    %v233 = vmul.f32 %v197, %v211
    %v234 = vmul.f32 %v198, %v211
    %v235 = vmul.f32 %v199, %v211
    %v236 = vmul.f32 %v200, %v211
    %v237 = vmul.f32 %v201, %v211
    %v238 = vmul.f32 %v202, %v211
    %v239 = vmul.f32 %v203, %v211
    %v240 = vmul.f32 %v204, %v211
    %v241 = vmul.f32 %v205, %v211
    %v242 = vmul.f32 %v206, %v211
    %v243 = vmul.f32 %v207, %v211
    %v244 = vmul.f32 %v208, %v211
    %v245 = vand.u32 %v108, 1
    %vm246 = vcmp.eq.s32.totalorder %v245, 1
    %v247 = vand.u32 2147483647, %v213
    %vm248 = vcmp.le.f32.partialorder %v247, 0.7853982
    %vm249 = vcmp.lt.s32.totalorder %v213, 0
    %v250 = vand.u32 %v213, 2139095040
    %v251 = vshrl.u32 %v250, 23
    %v252 = vsub.s32 %v251, 127
    %v253 = vand.u32 2147483647, %v213
    %v254 = vand.u32 %v253, 8388607
    %v255 = vor.u32 %v254, 8388608
    %v256 = vsub.s32 0, %v255
    %v257 = vadd.s32 %v252, 1
    %vm258 = vcmp.gt.s32.totalorder %v257, 0
    %v259 = vsel %vm258, %v257, 0
    %v260 = vshrl.u32 %v259, 5
    %v261 = vand.u32 %v259, 31
    %v262 = vsub.s32 32, %v261
    %v263 = vshrl.u32 683565275, %v262
    %v264 = vshll.u32 683565275, %v261
    %v265 = vshrl.u32 2475754826, %v262
    %v266 = vor.u32 %v264, %v265
    %v267 = vshll.u32 2475754826, %v261
    %v268 = vshrl.u32 2131351028, %v262
    %v269 = vor.u32 %v267, %v268
    %v270 = vshll.u32 2131351028, %v261
    %v271 = vshrl.u32 2102212464, %v262
    %v272 = vor.u32 %v270, %v271
    %v273 = vshll.u32 2102212464, %v261
    %v274 = vshrl.u32 920167782, %v262
    %v275 = vor.u32 %v273, %v274
    %v276 = vshll.u32 920167782, %v261
    %v277 = vshrl.u32 1326507024, %v262
    %v278 = vor.u32 %v276, %v277
    %vm279 = vcmp.lt.s32.totalorder %v260, 1
    %vm280 = vcmp.lt.s32.totalorder %v260, 2
    %vm281 = vcmp.lt.s32.totalorder %v260, 3
    %vm282 = vcmp.lt.s32.totalorder %v260, 4
    %v283 = vsel %vm279, %v263, %v266
    %v284 = vsel %vm282, %v272, 2102212464
    %v285 = vsel %vm281, %v269, %v284
    %v286 = vsel %vm280, %v283, %v285
    %v287 = vsel %vm279, %v266, %v269
    %v288 = vsel %vm282, %v275, 920167782
    %v289 = vsel %vm281, %v272, %v288
    %v290 = vsel %vm280, %v287, %v289
    %v291 = vsel %vm279, %v269, %v272
    %v292 = vsel %vm282, %v278, 1326507024
    %v293 = vsel %vm281, %v275, %v292
    %v294 = vsel %vm280, %v291, %v293
    %v295 = vshll.u32 %v255, 8
    %v296 = vand.u32 %v295, 65535
    %v297 = vshrl.u32 %v295, 16
    %v298 = vand.u32 %v294, 65535
    %v299 = vshrl.u32 %v294, 16
    %v300 = vmul.u32 %v296, %v298
    %v301 = vmul.u32 %v296, %v299
    %v302 = vmul.u32 %v297, %v298
    %v303 = vmul.u32 %v297, %v299
    %v304 = vshll.u32 %v301, 16
    %v305 = vshrl.u32 %v301, 16
    %v306 = vshll.u32 %v302, 16
    %v307 = vshrl.u32 %v302, 16
    %vm308 = vc.u32 %v300, %v304
    %v309 = vsel %vm308, 1, 0
    %v310 = vadd.s32 %v300, %v304
    %v311 = vadd.s32 %v303, %v309
    %vm312 = vc.u32 %v310, %v306
    %v313 = vsel %vm312, 1, 0
    %v314 = vadd.s32 %v310, %v306
    %v315 = vadd.s32 %v311, %v313
    %v316 = vadd.s32 %v315, %v305
    %v317 = vadd.s32 %v316, %v307
    %v318 = vand.u32 %v295, 65535
    %v319 = vshrl.u32 %v295, 16
    %v320 = vand.u32 %v290, 65535
    %v321 = vshrl.u32 %v290, 16
    %v322 = vmul.u32 %v318, %v320
    %v323 = vmul.u32 %v318, %v321
    %v324 = vmul.u32 %v319, %v320
    %v325 = vmul.u32 %v319, %v321
    %v326 = vshll.u32 %v323, 16
    %v327 = vshrl.u32 %v323, 16
    %v328 = vshll.u32 %v324, 16
    %v329 = vshrl.u32 %v324, 16
    %vm330 = vc.u32 %v322, %v326
    %v331 = vsel %vm330, 1, 0
    %v332 = vadd.s32 %v322, %v326
    %v333 = vadd.s32 %v325, %v331
    %vm334 = vc.u32 %v332, %v328
    %v335 = vsel %vm334, 1, 0
    %v336 = vadd.s32 %v332, %v328
    %v337 = vadd.s32 %v333, %v335
    %v338 = vadd.s32 %v337, %v327
    %v339 = vadd.s32 %v338, %v329
    %v340 = vmul.u32 %v295, %v286
    %v341 = vadd.s32 %v317, %v336
    %vm342 = vc.u32 %v317, %v336
    %v343 = vadd.s32 %v339, 1
    %v344 = vsel %vm342, %v343, %v339
    %v345 = vadd.s32 %v340, %v344
    %v346 = vadd.s32 %v345, 536870912
    %v347 = vshrl.u32 %v346, 30
    %v348 = vshll.u32 %v347, 30
    %v349 = vsub.s32 %v345, %v348
    %vm350 = vcmp.lt.s32.totalorder %v349, 0
    %v351 = vsub.s32 0, %v349
    %v352 = vsel %vm350, %v351, %v349
    %v353 = vclz %v352
    %v354 = vsub.s32 %v353, 2
    %vm355 = vcmp.gt.s32.totalorder 0, %v354
    %v356 = vsel %vm355, 0, %v354
    %v357 = vsub.s32 32, %v356
    %v358 = vshll.u32 %v349, %v356
    %v359 = vshrl.u32 %v341, %v357
    %v360 = vor.u32 %v358, %v359
    %v361 = vsub.s32 4294967266, %v356
    %v362 = vadd.s32 %v361, 127
    %v363 = vshll.u32 %v362, 23
    %v364 = vor.u32 4788187, %v363
    %v365 = vand.u32 2147483647, %v364
    %v367 = vcvt.s32.f32 %v360
    %v368 = vmul.f32 %v367, %v365
    %v369 = vxor.u32 %v368, 2147483648
    %v370 = vsel %vm249, %v369, %v368
    %v371 = vsub.s32 4, %v347
    %v372 = vsel %vm249, %v371, %v347
    %v373 = vsel %vm248, %v213, %v370
    %v374 = vsel %vm248, 0, %v372
    %v375 = vmul.f32 %v373, %v373
    %v376 = vmul.f32 %v375, -0.001358992
    %v377 = vadd.f32 %v376, 0.041655596
    %v378 = vmul.f32 %v375, %v377
    %v379 = vadd.f32 %v378, -0.4999988
    %v380 = vmul.f32 %v375, %v379
    %v381 = vadd.f32 1.0, %v380
    %v382 = vmul.f32 %v373, %v373
    %v383 = vmul.f32 %v382, -0.00019511016
    %v384 = vadd.f32 %v383, 0.008332121
    %v385 = vmul.f32 %v382, %v384
    %v386 = vadd.f32 %v385, -0.16666654
    %v387 = vmul.f32 %v382, %v386
    %v388 = vadd.f32 %v387, 1.0
    %v389 = vmul.f32 %v388, %v373
    %vm390 = vweird.f32 %v213
    %v391 = vand.u32 %v374, 3
    %vm392 = vcmp.lt.s32.totalorder %v391, 2
    %vm393 = vcmp.eq.s32.totalorder %v391, 0
    %v394 = vxor.u32 %v389, 2147483648
    %v395 = vsel %vm393, %v381, %v394
    %vm396 = vcmp.eq.s32.totalorder %v391, 2
    %v397 = vxor.u32 %v381, 2147483648
    %v398 = vsel %vm396, %v397, %v389
    %v399 = vsel %vm392, %v395, %v398
    %v400 = vsel %vm390, nan, %v399
    %v401 = vand.u32 2147483647, %v214
    %vm402 = vcmp.le.f32.partialorder %v401, 0.7853982
    %vm403 = vcmp.lt.s32.totalorder %v214, 0
    %v404 = vand.u32 %v214, 2139095040
    %v405 = vshrl.u32 %v404, 23
    %v406 = vsub.s32 %v405, 127
    %v407 = vand.u32 2147483647, %v214
    %v408 = vand.u32 %v407, 8388607
    %v409 = vor.u32 %v408, 8388608
    %v410 = vsub.s32 0, %v409
    %v411 = vadd.s32 %v406, 1
    %vm412 = vcmp.gt.s32.totalorder %v411, 0
    %v413 = vsel %vm412, %v411, 0
    %v414 = vshrl.u32 %v413, 5
    %v415 = vand.u32 %v413, 31
    %v416 = vsub.s32 32, %v415
    %v417 = vshrl.u32 683565275, %v416
    %v418 = vshll.u32 683565275, %v415
    %v419 = vshrl.u32 2475754826, %v416
    %v420 = vor.u32 %v418, %v419
    %v421 = vshll.u32 2475754826, %v415
    %v422 = vshrl.u32 2131351028, %v416
    %v423 = vor.u32 %v421, %v422
    %v424 = vshll.u32 2131351028, %v415
    %v425 = vshrl.u32 2102212464, %v416
    %v426 = vor.u32 %v424, %v425
    %v427 = vshll.u32 2102212464, %v415
    %v428 = vshrl.u32 920167782, %v416
    %v429 = vor.u32 %v427, %v428
    %v430 = vshll.u32 920167782, %v415
    %v431 = vshrl.u32 1326507024, %v416
    %v432 = vor.u32 %v430, %v431
    %vm433 = vcmp.lt.s32.totalorder %v414, 1
    %vm434 = vcmp.lt.s32.totalorder %v414, 2
    %vm435 = vcmp.lt.s32.totalorder %v414, 3
    %vm436 = vcmp.lt.s32.totalorder %v414, 4
    %v437 = vsel %vm433, %v417, %v420
    %v438 = vsel %vm436, %v426, 2102212464
    %v439 = vsel %vm435, %v423, %v438
    %v440 = vsel %vm434, %v437, %v439
    %v441 = vsel %vm433, %v420, %v423
    %v442 = vsel %vm436, %v429, 920167782
    %v443 = vsel %vm435, %v426, %v442
    %v444 = vsel %vm434, %v441, %v443
    %v445 = vsel %vm433, %v423, %v426
    %v446 = vsel %vm436, %v432, 1326507024
    %v447 = vsel %vm435, %v429, %v446
    %v448 = vsel %vm434, %v445, %v447
    %v449 = vshll.u32 %v409, 8
    %v450 = vand.u32 %v449, 65535
    %v451 = vshrl.u32 %v449, 16
    %v452 = vand.u32 %v448, 65535
    %v453 = vshrl.u32 %v448, 16
    %v454 = vmul.u32 %v450, %v452
    %v455 = vmul.u32 %v450, %v453
    %v456 = vmul.u32 %v451, %v452
    %v457 = vmul.u32 %v451, %v453
    %v458 = vshll.u32 %v455, 16
    %v459 = vshrl.u32 %v455, 16
    %v460 = vshll.u32 %v456, 16
    %v461 = vshrl.u32 %v456, 16
    %vm462 = vc.u32 %v454, %v458
    %v463 = vsel %vm462, 1, 0
    %v464 = vadd.s32 %v454, %v458
    %v465 = vadd.s32 %v457, %v463
    %vm466 = vc.u32 %v464, %v460
    %v467 = vsel %vm466, 1, 0
    %v468 = vadd.s32 %v464, %v460
    %v469 = vadd.s32 %v465, %v467
    %v470 = vadd.s32 %v469, %v459
    %v471 = vadd.s32 %v470, %v461
    %v472 = vand.u32 %v449, 65535
    %v473 = vshrl.u32 %v449, 16
    %v474 = vand.u32 %v444, 65535
    %v475 = vshrl.u32 %v444, 16
    %v476 = vmul.u32 %v472, %v474
    %v477 = vmul.u32 %v472, %v475
    %v478 = vmul.u32 %v473, %v474
    %v479 = vmul.u32 %v473, %v475
    %v480 = vshll.u32 %v477, 16
    %v481 = vshrl.u32 %v477, 16
    %v482 = vshll.u32 %v478, 16
    %v483 = vshrl.u32 %v478, 16
    %vm484 = vc.u32 %v476, %v480
    %v485 = vsel %vm484, 1, 0
    %v486 = vadd.s32 %v476, %v480
    %v487 = vadd.s32 %v479, %v485
    %vm488 = vc.u32 %v486, %v482
    %v489 = vsel %vm488, 1, 0
    %v490 = vadd.s32 %v486, %v482
    %v491 = vadd.s32 %v487, %v489
    %v492 = vadd.s32 %v491, %v481
    %v493 = vadd.s32 %v492, %v483
    %v494 = vmul.u32 %v449, %v440
    %v495 = vadd.s32 %v471, %v490
    %vm496 = vc.u32 %v471, %v490
    %v497 = vadd.s32 %v493, 1
    %v498 = vsel %vm496, %v497, %v493
    %v499 = vadd.s32 %v494, %v498
    %v500 = vadd.s32 %v499, 536870912
    %v501 = vshrl.u32 %v500, 30
    %v502 = vshll.u32 %v501, 30
    %v503 = vsub.s32 %v499, %v502
    %vm504 = vcmp.lt.s32.totalorder %v503, 0
    %v505 = vsub.s32 0, %v503
    %v506 = vsel %vm504, %v505, %v503
    %v507 = vclz %v506
    %v508 = vsub.s32 %v507, 2
    %vm509 = vcmp.gt.s32.totalorder 0, %v508
    %v510 = vsel %vm509, 0, %v508
    %v511 = vsub.s32 32, %v510
    %v512 = vshll.u32 %v503, %v510
    %v513 = vshrl.u32 %v495, %v511
    %v514 = vor.u32 %v512, %v513
    %v515 = vsub.s32 4294967266, %v510
    %v516 = vadd.s32 %v515, 127
    %v517 = vshll.u32 %v516, 23
    %v518 = vor.u32 4788187, %v517
    %v519 = vand.u32 2147483647, %v518
    %v521 = vcvt.s32.f32 %v514
    %v522 = vmul.f32 %v521, %v519
    %v523 = vxor.u32 %v522, 2147483648
    %v524 = vsel %vm403, %v523, %v522
    %v525 = vsub.s32 4, %v501
    %v526 = vsel %vm403, %v525, %v501
    %v527 = vsel %vm402, %v214, %v524
    %v528 = vsel %vm402, 0, %v526
    %v529 = vmul.f32 %v527, %v527
    %v530 = vmul.f32 %v529, -0.001358992
    %v531 = vadd.f32 %v530, 0.041655596
    %v532 = vmul.f32 %v529, %v531
    %v533 = vadd.f32 %v532, -0.4999988
    %v534 = vmul.f32 %v529, %v533
    %v535 = vadd.f32 1.0, %v534
    %v536 = vmul.f32 %v527, %v527
    %v537 = vmul.f32 %v536, -0.00019511016
    %v538 = vadd.f32 %v537, 0.008332121
    %v539 = vmul.f32 %v536, %v538
    %v540 = vadd.f32 %v539, -0.16666654
    %v541 = vmul.f32 %v536, %v540
    %v542 = vadd.f32 %v541, 1.0
    %v543 = vmul.f32 %v542, %v527
    %vm544 = vweird.f32 %v214
    %v545 = vand.u32 %v528, 3
    %vm546 = vcmp.lt.s32.totalorder %v545, 2
    %vm547 = vcmp.eq.s32.totalorder %v545, 0
    %v548 = vxor.u32 %v543, 2147483648
    %v549 = vsel %vm547, %v535, %v548
    %vm550 = vcmp.eq.s32.totalorder %v545, 2
    %v551 = vxor.u32 %v535, 2147483648
    %v552 = vsel %vm550, %v551, %v543
    %v553 = vsel %vm546, %v549, %v552
    %v554 = vsel %vm544, nan, %v553
    %v555 = vand.u32 2147483647, %v215
    %vm556 = vcmp.le.f32.partialorder %v555, 0.7853982
    %vm557 = vcmp.lt.s32.totalorder %v215, 0
    %v558 = vand.u32 %v215, 2139095040
    %v559 = vshrl.u32 %v558, 23
    %v560 = vsub.s32 %v559, 127
    %v561 = vand.u32 2147483647, %v215
    %v562 = vand.u32 %v561, 8388607
    %v563 = vor.u32 %v562, 8388608
    %v564 = vsub.s32 0, %v563
    %v565 = vadd.s32 %v560, 1
    %vm566 = vcmp.gt.s32.totalorder %v565, 0
    %v567 = vsel %vm566, %v565, 0
    %v568 = vshrl.u32 %v567, 5
    %v569 = vand.u32 %v567, 31
    %v570 = vsub.s32 32, %v569
    %v571 = vshrl.u32 683565275, %v570
    %v572 = vshll.u32 683565275, %v569
    %v573 = vshrl.u32 2475754826, %v570
    %v574 = vor.u32 %v572, %v573
    %v575 = vshll.u32 2475754826, %v569
    %v576 = vshrl.u32 2131351028, %v570
    %v577 = vor.u32 %v575, %v576
    %v578 = vshll.u32 2131351028, %v569
    %v579 = vshrl.u32 2102212464, %v570
    %v580 = vor.u32 %v578, %v579
    %v581 = vshll.u32 2102212464, %v569
    %v582 = vshrl.u32 920167782, %v570
    %v583 = vor.u32 %v581, %v582
    %v584 = vshll.u32 920167782, %v569
    %v585 = vshrl.u32 1326507024, %v570
    %v586 = vor.u32 %v584, %v585
    %vm587 = vcmp.lt.s32.totalorder %v568, 1
    %vm588 = vcmp.lt.s32.totalorder %v568, 2
    %vm589 = vcmp.lt.s32.totalorder %v568, 3
    %vm590 = vcmp.lt.s32.totalorder %v568, 4
    %v591 = vsel %vm587, %v571, %v574
    %v592 = vsel %vm590, %v580, 2102212464
    %v593 = vsel %vm589, %v577, %v592
    %v594 = vsel %vm588, %v591, %v593
    %v595 = vsel %vm587, %v574, %v577
    %v596 = vsel %vm590, %v583, 920167782
    %v597 = vsel %vm589, %v580, %v596
    %v598 = vsel %vm588, %v595, %v597
    %v599 = vsel %vm587, %v577, %v580
    %v600 = vsel %vm590, %v586, 1326507024
    %v601 = vsel %vm589, %v583, %v600
    %v602 = vsel %vm588, %v599, %v601
    %v603 = vshll.u32 %v563, 8
    %v604 = vand.u32 %v603, 65535
    %v605 = vshrl.u32 %v603, 16
    %v606 = vand.u32 %v602, 65535
    %v607 = vshrl.u32 %v602, 16
    %v608 = vmul.u32 %v604, %v606
    %v609 = vmul.u32 %v604, %v607
    %v610 = vmul.u32 %v605, %v606
    %v611 = vmul.u32 %v605, %v607
    %v612 = vshll.u32 %v609, 16
    %v613 = vshrl.u32 %v609, 16
    %v614 = vshll.u32 %v610, 16
    %v615 = vshrl.u32 %v610, 16
    %vm616 = vc.u32 %v608, %v612
    %v617 = vsel %vm616, 1, 0
    %v618 = vadd.s32 %v608, %v612
    %v619 = vadd.s32 %v611, %v617
    %vm620 = vc.u32 %v618, %v614
    %v621 = vsel %vm620, 1, 0
    %v622 = vadd.s32 %v618, %v614
    %v623 = vadd.s32 %v619, %v621
    %v624 = vadd.s32 %v623, %v613
    %v625 = vadd.s32 %v624, %v615
    %v626 = vand.u32 %v603, 65535
    %v627 = vshrl.u32 %v603, 16
    %v628 = vand.u32 %v598, 65535
    %v629 = vshrl.u32 %v598, 16
    %v630 = vmul.u32 %v626, %v628
    %v631 = vmul.u32 %v626, %v629
    %v632 = vmul.u32 %v627, %v628
    %v633 = vmul.u32 %v627, %v629
    %v634 = vshll.u32 %v631, 16
    %v635 = vshrl.u32 %v631, 16
    %v636 = vshll.u32 %v632, 16
    %v637 = vshrl.u32 %v632, 16
    %vm638 = vc.u32 %v630, %v634
    %v639 = vsel %vm638, 1, 0
    %v640 = vadd.s32 %v630, %v634
    %v641 = vadd.s32 %v633, %v639
    %vm642 = vc.u32 %v640, %v636
    %v643 = vsel %vm642, 1, 0
    %v644 = vadd.s32 %v640, %v636
    %v645 = vadd.s32 %v641, %v643
    %v646 = vadd.s32 %v645, %v635
    %v647 = vadd.s32 %v646, %v637
    %v648 = vmul.u32 %v603, %v594
    %v649 = vadd.s32 %v625, %v644
    %vm650 = vc.u32 %v625, %v644
    %v651 = vadd.s32 %v647, 1
    %v652 = vsel %vm650, %v651, %v647
    %v653 = vadd.s32 %v648, %v652
    %v654 = vadd.s32 %v653, 536870912
    %v655 = vshrl.u32 %v654, 30
    %v656 = vshll.u32 %v655, 30
    %v657 = vsub.s32 %v653, %v656
    %vm658 = vcmp.lt.s32.totalorder %v657, 0
    %v659 = vsub.s32 0, %v657
    %v660 = vsel %vm658, %v659, %v657
    %v661 = vclz %v660
    %v662 = vsub.s32 %v661, 2
    %vm663 = vcmp.gt.s32.totalorder 0, %v662
    %v664 = vsel %vm663, 0, %v662
    %v665 = vsub.s32 32, %v664
    %v666 = vshll.u32 %v657, %v664
    %v667 = vshrl.u32 %v649, %v665
    %v668 = vor.u32 %v666, %v667
    %v669 = vsub.s32 4294967266, %v664
    %v670 = vadd.s32 %v669, 127
    %v671 = vshll.u32 %v670, 23
    %v672 = vor.u32 4788187, %v671
    %v673 = vand.u32 2147483647, %v672
    %v675 = vcvt.s32.f32 %v668
    %v676 = vmul.f32 %v675, %v673
    %v677 = vxor.u32 %v676, 2147483648
    %v678 = vsel %vm557, %v677, %v676
    %v679 = vsub.s32 4, %v655
    %v680 = vsel %vm557, %v679, %v655
    %v681 = vsel %vm556, %v215, %v678
    %v682 = vsel %vm556, 0, %v680
    %v683 = vmul.f32 %v681, %v681
    %v684 = vmul.f32 %v683, -0.001358992
    %v685 = vadd.f32 %v684, 0.041655596
    %v686 = vmul.f32 %v683, %v685
    %v687 = vadd.f32 %v686, -0.4999988
    %v688 = vmul.f32 %v683, %v687
    %v689 = vadd.f32 1.0, %v688
    %v690 = vmul.f32 %v681, %v681
    %v691 = vmul.f32 %v690, -0.00019511016
    %v692 = vadd.f32 %v691, 0.008332121
    %v693 = vmul.f32 %v690, %v692
    %v694 = vadd.f32 %v693, -0.16666654
    %v695 = vmul.f32 %v690, %v694
    %v696 = vadd.f32 %v695, 1.0
    %v697 = vmul.f32 %v696, %v681
    %vm698 = vweird.f32 %v215
    %v699 = vand.u32 %v682, 3
    %vm700 = vcmp.lt.s32.totalorder %v699, 2
    %vm701 = vcmp.eq.s32.totalorder %v699, 0
    %v702 = vxor.u32 %v697, 2147483648
    %v703 = vsel %vm701, %v689, %v702
    %vm704 = vcmp.eq.s32.totalorder %v699, 2
    %v705 = vxor.u32 %v689, 2147483648
    %v706 = vsel %vm704, %v705, %v697
    %v707 = vsel %vm700, %v703, %v706
    %v708 = vsel %vm698, nan, %v707
    %v709 = vand.u32 2147483647, %v216
    %vm710 = vcmp.le.f32.partialorder %v709, 0.7853982
    %vm711 = vcmp.lt.s32.totalorder %v216, 0
    %v712 = vand.u32 %v216, 2139095040
    %v713 = vshrl.u32 %v712, 23
    %v714 = vsub.s32 %v713, 127
    %v715 = vand.u32 2147483647, %v216
    %v716 = vand.u32 %v715, 8388607
    %v717 = vor.u32 %v716, 8388608
    %v718 = vsub.s32 0, %v717
    %v719 = vadd.s32 %v714, 1
    %vm720 = vcmp.gt.s32.totalorder %v719, 0
    %v721 = vsel %vm720, %v719, 0
    %v722 = vshrl.u32 %v721, 5
    %v723 = vand.u32 %v721, 31
    %v724 = vsub.s32 32, %v723
    %v725 = vshrl.u32 683565275, %v724
    %v726 = vshll.u32 683565275, %v723
    %v727 = vshrl.u32 2475754826, %v724
    %v728 = vor.u32 %v726, %v727
    %v729 = vshll.u32 2475754826, %v723
    %v730 = vshrl.u32 2131351028, %v724
    %v731 = vor.u32 %v729, %v730
    %v732 = vshll.u32 2131351028, %v723
    %v733 = vshrl.u32 2102212464, %v724
    %v734 = vor.u32 %v732, %v733
    %v735 = vshll.u32 2102212464, %v723
    %v736 = vshrl.u32 920167782, %v724
    %v737 = vor.u32 %v735, %v736
    %v738 = vshll.u32 920167782, %v723
    %v739 = vshrl.u32 1326507024, %v724
    %v740 = vor.u32 %v738, %v739
    %vm741 = vcmp.lt.s32.totalorder %v722, 1
    %vm742 = vcmp.lt.s32.totalorder %v722, 2
    %vm743 = vcmp.lt.s32.totalorder %v722, 3
    %vm744 = vcmp.lt.s32.totalorder %v722, 4
    %v745 = vsel %vm741, %v725, %v728
    %v746 = vsel %vm744, %v734, 2102212464
    %v747 = vsel %vm743, %v731, %v746
    %v748 = vsel %vm742, %v745, %v747
    %v749 = vsel %vm741, %v728, %v731
    %v750 = vsel %vm744, %v737, 920167782
    %v751 = vsel %vm743, %v734, %v750
    %v752 = vsel %vm742, %v749, %v751
    %v753 = vsel %vm741, %v731, %v734
    %v754 = vsel %vm744, %v740, 1326507024
    %v755 = vsel %vm743, %v737, %v754
    %v756 = vsel %vm742, %v753, %v755
    %v757 = vshll.u32 %v717, 8
    %v758 = vand.u32 %v757, 65535
    %v759 = vshrl.u32 %v757, 16
    %v760 = vand.u32 %v756, 65535
    %v761 = vshrl.u32 %v756, 16
    %v762 = vmul.u32 %v758, %v760
    %v763 = vmul.u32 %v758, %v761
    %v764 = vmul.u32 %v759, %v760
    %v765 = vmul.u32 %v759, %v761
    %v766 = vshll.u32 %v763, 16
    %v767 = vshrl.u32 %v763, 16
    %v768 = vshll.u32 %v764, 16
    %v769 = vshrl.u32 %v764, 16
    %vm770 = vc.u32 %v762, %v766
    %v771 = vsel %vm770, 1, 0
    %v772 = vadd.s32 %v762, %v766
    %v773 = vadd.s32 %v765, %v771
    %vm774 = vc.u32 %v772, %v768
    %v775 = vsel %vm774, 1, 0
    %v776 = vadd.s32 %v772, %v768
    %v777 = vadd.s32 %v773, %v775
    %v778 = vadd.s32 %v777, %v767
    %v779 = vadd.s32 %v778, %v769
    %v780 = vand.u32 %v757, 65535
    %v781 = vshrl.u32 %v757, 16
    %v782 = vand.u32 %v752, 65535
    %v783 = vshrl.u32 %v752, 16
    %v784 = vmul.u32 %v780, %v782
    %v785 = vmul.u32 %v780, %v783
    %v786 = vmul.u32 %v781, %v782
    %v787 = vmul.u32 %v781, %v783
    %v788 = vshll.u32 %v785, 16
    %v789 = vshrl.u32 %v785, 16
    %v790 = vshll.u32 %v786, 16
    %v791 = vshrl.u32 %v786, 16
    %vm792 = vc.u32 %v784, %v788
    %v793 = vsel %vm792, 1, 0
    %v794 = vadd.s32 %v784, %v788
    %v795 = vadd.s32 %v787, %v793
    %vm796 = vc.u32 %v794, %v790
    %v797 = vsel %vm796, 1, 0
    %v798 = vadd.s32 %v794, %v790
    %v799 = vadd.s32 %v795, %v797
    %v800 = vadd.s32 %v799, %v789
    %v801 = vadd.s32 %v800, %v791
    %v802 = vmul.u32 %v757, %v748
    %v803 = vadd.s32 %v779, %v798
    %vm804 = vc.u32 %v779, %v798
    %v805 = vadd.s32 %v801, 1
    %v806 = vsel %vm804, %v805, %v801
    %v807 = vadd.s32 %v802, %v806
    %v808 = vadd.s32 %v807, 536870912
    %v809 = vshrl.u32 %v808, 30
    %v810 = vshll.u32 %v809, 30
    %v811 = vsub.s32 %v807, %v810
    %vm812 = vcmp.lt.s32.totalorder %v811, 0
    %v813 = vsub.s32 0, %v811
    %v814 = vsel %vm812, %v813, %v811
    %v815 = vclz %v814
    %v816 = vsub.s32 %v815, 2
    %vm817 = vcmp.gt.s32.totalorder 0, %v816
    %v818 = vsel %vm817, 0, %v816
    %v819 = vsub.s32 32, %v818
    %v820 = vshll.u32 %v811, %v818
    %v821 = vshrl.u32 %v803, %v819
    %v822 = vor.u32 %v820, %v821
    %v823 = vsub.s32 4294967266, %v818
    %v824 = vadd.s32 %v823, 127
    %v825 = vshll.u32 %v824, 23
    %v826 = vor.u32 4788187, %v825
    %v827 = vand.u32 2147483647, %v826
    %v829 = vcvt.s32.f32 %v822
    %v830 = vmul.f32 %v829, %v827
    %v831 = vxor.u32 %v830, 2147483648
    %v832 = vsel %vm711, %v831, %v830
    %v833 = vsub.s32 4, %v809
    %v834 = vsel %vm711, %v833, %v809
    %v835 = vsel %vm710, %v216, %v832
    %v836 = vsel %vm710, 0, %v834
    %v837 = vmul.f32 %v835, %v835
    %v838 = vmul.f32 %v837, -0.001358992
    %v839 = vadd.f32 %v838, 0.041655596
    %v840 = vmul.f32 %v837, %v839
    %v841 = vadd.f32 %v840, -0.4999988
    %v842 = vmul.f32 %v837, %v841
    %v843 = vadd.f32 1.0, %v842
    %v844 = vmul.f32 %v835, %v835
    %v845 = vmul.f32 %v844, -0.00019511016
    %v846 = vadd.f32 %v845, 0.008332121
    %v847 = vmul.f32 %v844, %v846
    %v848 = vadd.f32 %v847, -0.16666654
    %v849 = vmul.f32 %v844, %v848
    %v850 = vadd.f32 %v849, 1.0
    %v851 = vmul.f32 %v850, %v835
    %vm852 = vweird.f32 %v216
    %v853 = vand.u32 %v836, 3
    %vm854 = vcmp.lt.s32.totalorder %v853, 2
    %vm855 = vcmp.eq.s32.totalorder %v853, 0
    %v856 = vxor.u32 %v851, 2147483648
    %v857 = vsel %vm855, %v843, %v856
    %vm858 = vcmp.eq.s32.totalorder %v853, 2
    %v859 = vxor.u32 %v843, 2147483648
    %v860 = vsel %vm858, %v859, %v851
    %v861 = vsel %vm854, %v857, %v860
    %v862 = vsel %vm852, nan, %v861
    %v863 = vand.u32 2147483647, %v217
    %vm864 = vcmp.le.f32.partialorder %v863, 0.7853982
    %vm865 = vcmp.lt.s32.totalorder %v217, 0
    %v866 = vand.u32 %v217, 2139095040
    %v867 = vshrl.u32 %v866, 23
    %v868 = vsub.s32 %v867, 127
    %v869 = vand.u32 2147483647, %v217
    %v870 = vand.u32 %v869, 8388607
    %v871 = vor.u32 %v870, 8388608
    %v872 = vsub.s32 0, %v871
    %v873 = vadd.s32 %v868, 1
    %vm874 = vcmp.gt.s32.totalorder %v873, 0
    %v875 = vsel %vm874, %v873, 0
    %v876 = vshrl.u32 %v875, 5
    %v877 = vand.u32 %v875, 31
    %v878 = vsub.s32 32, %v877
    %v879 = vshrl.u32 683565275, %v878
    %v880 = vshll.u32 683565275, %v877
    %v881 = vshrl.u32 2475754826, %v878
    %v882 = vor.u32 %v880, %v881
    %v883 = vshll.u32 2475754826, %v877
    %v884 = vshrl.u32 2131351028, %v878
    %v885 = vor.u32 %v883, %v884
    %v886 = vshll.u32 2131351028, %v877
    %v887 = vshrl.u32 2102212464, %v878
    %v888 = vor.u32 %v886, %v887
    %v889 = vshll.u32 2102212464, %v877
    %v890 = vshrl.u32 920167782, %v878
    %v891 = vor.u32 %v889, %v890
    %v892 = vshll.u32 920167782, %v877
    %v893 = vshrl.u32 1326507024, %v878
    %v894 = vor.u32 %v892, %v893
    %vm895 = vcmp.lt.s32.totalorder %v876, 1
    %vm896 = vcmp.lt.s32.totalorder %v876, 2
    %vm897 = vcmp.lt.s32.totalorder %v876, 3
    %vm898 = vcmp.lt.s32.totalorder %v876, 4
    %v899 = vsel %vm895, %v879, %v882
    %v900 = vsel %vm898, %v888, 2102212464
    %v901 = vsel %vm897, %v885, %v900
    %v902 = vsel %vm896, %v899, %v901
    %v903 = vsel %vm895, %v882, %v885
    %v904 = vsel %vm898, %v891, 920167782
    %v905 = vsel %vm897, %v888, %v904
    %v906 = vsel %vm896, %v903, %v905
    %v907 = vsel %vm895, %v885, %v888
    %v908 = vsel %vm898, %v894, 1326507024
    %v909 = vsel %vm897, %v891, %v908
    %v910 = vsel %vm896, %v907, %v909
    %v911 = vshll.u32 %v871, 8
    %v912 = vand.u32 %v911, 65535
    %v913 = vshrl.u32 %v911, 16
    %v914 = vand.u32 %v910, 65535
    %v915 = vshrl.u32 %v910, 16
    %v916 = vmul.u32 %v912, %v914
    %v917 = vmul.u32 %v912, %v915
    %v918 = vmul.u32 %v913, %v914
    %v919 = vmul.u32 %v913, %v915
    %v920 = vshll.u32 %v917, 16
    %v921 = vshrl.u32 %v917, 16
    %v922 = vshll.u32 %v918, 16
    %v923 = vshrl.u32 %v918, 16
    %vm924 = vc.u32 %v916, %v920
    %v925 = vsel %vm924, 1, 0
    %v926 = vadd.s32 %v916, %v920
    %v927 = vadd.s32 %v919, %v925
    %vm928 = vc.u32 %v926, %v922
    %v929 = vsel %vm928, 1, 0
    %v930 = vadd.s32 %v926, %v922
    %v931 = vadd.s32 %v927, %v929
    %v932 = vadd.s32 %v931, %v921
    %v933 = vadd.s32 %v932, %v923
    %v934 = vand.u32 %v911, 65535
    %v935 = vshrl.u32 %v911, 16
    %v936 = vand.u32 %v906, 65535
    %v937 = vshrl.u32 %v906, 16
    %v938 = vmul.u32 %v934, %v936
    %v939 = vmul.u32 %v934, %v937
    %v940 = vmul.u32 %v935, %v936
    %v941 = vmul.u32 %v935, %v937
    %v942 = vshll.u32 %v939, 16
    %v943 = vshrl.u32 %v939, 16
    %v944 = vshll.u32 %v940, 16
    %v945 = vshrl.u32 %v940, 16
    %vm946 = vc.u32 %v938, %v942
    %v947 = vsel %vm946, 1, 0
    %v948 = vadd.s32 %v938, %v942
    %v949 = vadd.s32 %v941, %v947
    %vm950 = vc.u32 %v948, %v944
    %v951 = vsel %vm950, 1, 0
    %v952 = vadd.s32 %v948, %v944
    %v953 = vadd.s32 %v949, %v951
    %v954 = vadd.s32 %v953, %v943
    %v955 = vadd.s32 %v954, %v945
    %v956 = vmul.u32 %v911, %v902
    %v957 = vadd.s32 %v933, %v952
    %vm958 = vc.u32 %v933, %v952
    %v959 = vadd.s32 %v955, 1
    %v960 = vsel %vm958, %v959, %v955
    %v961 = vadd.s32 %v956, %v960
    %v962 = vadd.s32 %v961, 536870912
    %v963 = vshrl.u32 %v962, 30
    %v964 = vshll.u32 %v963, 30
    %v965 = vsub.s32 %v961, %v964
    %vm966 = vcmp.lt.s32.totalorder %v965, 0
    %v967 = vsub.s32 0, %v965
    %v968 = vsel %vm966, %v967, %v965
    %v969 = vclz %v968
    %v970 = vsub.s32 %v969, 2
    %vm971 = vcmp.gt.s32.totalorder 0, %v970
    %v972 = vsel %vm971, 0, %v970
    %v973 = vsub.s32 32, %v972
    %v974 = vshll.u32 %v965, %v972
    %v975 = vshrl.u32 %v957, %v973
    %v976 = vor.u32 %v974, %v975
    %v977 = vsub.s32 4294967266, %v972
    %v978 = vadd.s32 %v977, 127
    %v979 = vshll.u32 %v978, 23
    %v980 = vor.u32 4788187, %v979
    %v981 = vand.u32 2147483647, %v980
    %v983 = vcvt.s32.f32 %v976
    %v984 = vmul.f32 %v983, %v981
    %v985 = vxor.u32 %v984, 2147483648
    %v986 = vsel %vm865, %v985, %v984
    %v987 = vsub.s32 4, %v963
    %v988 = vsel %vm865, %v987, %v963
    %v989 = vsel %vm864, %v217, %v986
    %v990 = vsel %vm864, 0, %v988
    %v991 = vmul.f32 %v989, %v989
    %v992 = vmul.f32 %v991, -0.001358992
    %v993 = vadd.f32 %v992, 0.041655596
    %v994 = vmul.f32 %v991, %v993
    %v995 = vadd.f32 %v994, -0.4999988
    %v996 = vmul.f32 %v991, %v995
    %v997 = vadd.f32 1.0, %v996
    %v998 = vmul.f32 %v989, %v989
    %v999 = vmul.f32 %v998, -0.00019511016
    %v1000 = vadd.f32 %v999, 0.008332121
    %v1001 = vmul.f32 %v998, %v1000
    %v1002 = vadd.f32 %v1001, -0.16666654
    %v1003 = vmul.f32 %v998, %v1002
    %v1004 = vadd.f32 %v1003, 1.0
    %v1005 = vmul.f32 %v1004, %v989
    %vm1006 = vweird.f32 %v217
    %v1007 = vand.u32 %v990, 3
    %vm1008 = vcmp.lt.s32.totalorder %v1007, 2
    %vm1009 = vcmp.eq.s32.totalorder %v1007, 0
    %v1010 = vxor.u32 %v1005, 2147483648
    %v1011 = vsel %vm1009, %v997, %v1010
    %vm1012 = vcmp.eq.s32.totalorder %v1007, 2
    %v1013 = vxor.u32 %v997, 2147483648
    %v1014 = vsel %vm1012, %v1013, %v1005
    %v1015 = vsel %vm1008, %v1011, %v1014
    %v1016 = vsel %vm1006, nan, %v1015
    %v1017 = vand.u32 2147483647, %v218
    %vm1018 = vcmp.le.f32.partialorder %v1017, 0.7853982
    %vm1019 = vcmp.lt.s32.totalorder %v218, 0
    %v1020 = vand.u32 %v218, 2139095040
    %v1021 = vshrl.u32 %v1020, 23
    %v1022 = vsub.s32 %v1021, 127
    %v1023 = vand.u32 2147483647, %v218
    %v1024 = vand.u32 %v1023, 8388607
    %v1025 = vor.u32 %v1024, 8388608
    %v1026 = vsub.s32 0, %v1025
    %v1027 = vadd.s32 %v1022, 1
    %vm1028 = vcmp.gt.s32.totalorder %v1027, 0
    %v1029 = vsel %vm1028, %v1027, 0
    %v1030 = vshrl.u32 %v1029, 5
    %v1031 = vand.u32 %v1029, 31
    %v1032 = vsub.s32 32, %v1031
    %v1033 = vshrl.u32 683565275, %v1032
    %v1034 = vshll.u32 683565275, %v1031
    %v1035 = vshrl.u32 2475754826, %v1032
    %v1036 = vor.u32 %v1034, %v1035
    %v1037 = vshll.u32 2475754826, %v1031
    %v1038 = vshrl.u32 2131351028, %v1032
    %v1039 = vor.u32 %v1037, %v1038
    %v1040 = vshll.u32 2131351028, %v1031
    %v1041 = vshrl.u32 2102212464, %v1032
    %v1042 = vor.u32 %v1040, %v1041
    %v1043 = vshll.u32 2102212464, %v1031
    %v1044 = vshrl.u32 920167782, %v1032
    %v1045 = vor.u32 %v1043, %v1044
    %v1046 = vshll.u32 920167782, %v1031
    %v1047 = vshrl.u32 1326507024, %v1032
    %v1048 = vor.u32 %v1046, %v1047
    %vm1049 = vcmp.lt.s32.totalorder %v1030, 1
    %vm1050 = vcmp.lt.s32.totalorder %v1030, 2
    %vm1051 = vcmp.lt.s32.totalorder %v1030, 3
    %vm1052 = vcmp.lt.s32.totalorder %v1030, 4
    %v1053 = vsel %vm1049, %v1033, %v1036
    %v1054 = vsel %vm1052, %v1042, 2102212464
    %v1055 = vsel %vm1051, %v1039, %v1054
    %v1056 = vsel %vm1050, %v1053, %v1055
    %v1057 = vsel %vm1049, %v1036, %v1039
    %v1058 = vsel %vm1052, %v1045, 920167782
    %v1059 = vsel %vm1051, %v1042, %v1058
    %v1060 = vsel %vm1050, %v1057, %v1059
    %v1061 = vsel %vm1049, %v1039, %v1042
    %v1062 = vsel %vm1052, %v1048, 1326507024
    %v1063 = vsel %vm1051, %v1045, %v1062
    %v1064 = vsel %vm1050, %v1061, %v1063
    %v1065 = vshll.u32 %v1025, 8
    %v1066 = vand.u32 %v1065, 65535
    %v1067 = vshrl.u32 %v1065, 16
    %v1068 = vand.u32 %v1064, 65535
    %v1069 = vshrl.u32 %v1064, 16
    %v1070 = vmul.u32 %v1066, %v1068
    %v1071 = vmul.u32 %v1066, %v1069
    %v1072 = vmul.u32 %v1067, %v1068
    %v1073 = vmul.u32 %v1067, %v1069
    %v1074 = vshll.u32 %v1071, 16
    %v1075 = vshrl.u32 %v1071, 16
    %v1076 = vshll.u32 %v1072, 16
    %v1077 = vshrl.u32 %v1072, 16
    %vm1078 = vc.u32 %v1070, %v1074
    %v1079 = vsel %vm1078, 1, 0
    %v1080 = vadd.s32 %v1070, %v1074
    %v1081 = vadd.s32 %v1073, %v1079
    %vm1082 = vc.u32 %v1080, %v1076
    %v1083 = vsel %vm1082, 1, 0
    %v1084 = vadd.s32 %v1080, %v1076
    %v1085 = vadd.s32 %v1081, %v1083
    %v1086 = vadd.s32 %v1085, %v1075
    %v1087 = vadd.s32 %v1086, %v1077
    %v1088 = vand.u32 %v1065, 65535
    %v1089 = vshrl.u32 %v1065, 16
    %v1090 = vand.u32 %v1060, 65535
    %v1091 = vshrl.u32 %v1060, 16
    %v1092 = vmul.u32 %v1088, %v1090
    %v1093 = vmul.u32 %v1088, %v1091
    %v1094 = vmul.u32 %v1089, %v1090
    %v1095 = vmul.u32 %v1089, %v1091
    %v1096 = vshll.u32 %v1093, 16
    %v1097 = vshrl.u32 %v1093, 16
    %v1098 = vshll.u32 %v1094, 16
    %v1099 = vshrl.u32 %v1094, 16
    %vm1100 = vc.u32 %v1092, %v1096
    %v1101 = vsel %vm1100, 1, 0
    %v1102 = vadd.s32 %v1092, %v1096
    %v1103 = vadd.s32 %v1095, %v1101
    %vm1104 = vc.u32 %v1102, %v1098
    %v1105 = vsel %vm1104, 1, 0
    %v1106 = vadd.s32 %v1102, %v1098
    %v1107 = vadd.s32 %v1103, %v1105
    %v1108 = vadd.s32 %v1107, %v1097
    %v1109 = vadd.s32 %v1108, %v1099
    %v1110 = vmul.u32 %v1065, %v1056
    %v1111 = vadd.s32 %v1087, %v1106
    %vm1112 = vc.u32 %v1087, %v1106
    %v1113 = vadd.s32 %v1109, 1
    %v1114 = vsel %vm1112, %v1113, %v1109
    %v1115 = vadd.s32 %v1110, %v1114
    %v1116 = vadd.s32 %v1115, 536870912
    %v1117 = vshrl.u32 %v1116, 30
    %v1118 = vshll.u32 %v1117, 30
    %v1119 = vsub.s32 %v1115, %v1118
    %vm1120 = vcmp.lt.s32.totalorder %v1119, 0
    %v1121 = vsub.s32 0, %v1119
    %v1122 = vsel %vm1120, %v1121, %v1119
    %v1123 = vclz %v1122
    %v1124 = vsub.s32 %v1123, 2
    %vm1125 = vcmp.gt.s32.totalorder 0, %v1124
    %v1126 = vsel %vm1125, 0, %v1124
    %v1127 = vsub.s32 32, %v1126
    %v1128 = vshll.u32 %v1119, %v1126
    %v1129 = vshrl.u32 %v1111, %v1127
    %v1130 = vor.u32 %v1128, %v1129
    %v1131 = vsub.s32 4294967266, %v1126
    %v1132 = vadd.s32 %v1131, 127
    %v1133 = vshll.u32 %v1132, 23
    %v1134 = vor.u32 4788187, %v1133
    %v1135 = vand.u32 2147483647, %v1134
    %v1137 = vcvt.s32.f32 %v1130
    %v1138 = vmul.f32 %v1137, %v1135
    %v1139 = vxor.u32 %v1138, 2147483648
    %v1140 = vsel %vm1019, %v1139, %v1138
    %v1141 = vsub.s32 4, %v1117
    %v1142 = vsel %vm1019, %v1141, %v1117
    %v1143 = vsel %vm1018, %v218, %v1140
    %v1144 = vsel %vm1018, 0, %v1142
    %v1145 = vmul.f32 %v1143, %v1143
    %v1146 = vmul.f32 %v1145, -0.001358992
    %v1147 = vadd.f32 %v1146, 0.041655596
    %v1148 = vmul.f32 %v1145, %v1147
    %v1149 = vadd.f32 %v1148, -0.4999988
    %v1150 = vmul.f32 %v1145, %v1149
    %v1151 = vadd.f32 1.0, %v1150
    %v1152 = vmul.f32 %v1143, %v1143
    %v1153 = vmul.f32 %v1152, -0.00019511016
    %v1154 = vadd.f32 %v1153, 0.008332121
    %v1155 = vmul.f32 %v1152, %v1154
    %v1156 = vadd.f32 %v1155, -0.16666654
    %v1157 = vmul.f32 %v1152, %v1156
    %v1158 = vadd.f32 %v1157, 1.0
    %v1159 = vmul.f32 %v1158, %v1143
    %vm1160 = vweird.f32 %v218
    %v1161 = vand.u32 %v1144, 3
    %vm1162 = vcmp.lt.s32.totalorder %v1161, 2
    %vm1163 = vcmp.eq.s32.totalorder %v1161, 0
    %v1164 = vxor.u32 %v1159, 2147483648
    %v1165 = vsel %vm1163, %v1151, %v1164
    %vm1166 = vcmp.eq.s32.totalorder %v1161, 2
    %v1167 = vxor.u32 %v1151, 2147483648
    %v1168 = vsel %vm1166, %v1167, %v1159
    %v1169 = vsel %vm1162, %v1165, %v1168
    %v1170 = vsel %vm1160, nan, %v1169
    %v1171 = vand.u32 2147483647, %v219
    %vm1172 = vcmp.le.f32.partialorder %v1171, 0.7853982
    %vm1173 = vcmp.lt.s32.totalorder %v219, 0
    %v1174 = vand.u32 %v219, 2139095040
    %v1175 = vshrl.u32 %v1174, 23
    %v1176 = vsub.s32 %v1175, 127
    %v1177 = vand.u32 2147483647, %v219
    %v1178 = vand.u32 %v1177, 8388607
    %v1179 = vor.u32 %v1178, 8388608
    %v1180 = vsub.s32 0, %v1179
    %v1181 = vadd.s32 %v1176, 1
    %vm1182 = vcmp.gt.s32.totalorder %v1181, 0
    %v1183 = vsel %vm1182, %v1181, 0
    %v1184 = vshrl.u32 %v1183, 5
    %v1185 = vand.u32 %v1183, 31
    %v1186 = vsub.s32 32, %v1185
    %v1187 = vshrl.u32 683565275, %v1186
    %v1188 = vshll.u32 683565275, %v1185
    %v1189 = vshrl.u32 2475754826, %v1186
    %v1190 = vor.u32 %v1188, %v1189
    %v1191 = vshll.u32 2475754826, %v1185
    %v1192 = vshrl.u32 2131351028, %v1186
    %v1193 = vor.u32 %v1191, %v1192
    %v1194 = vshll.u32 2131351028, %v1185
    %v1195 = vshrl.u32 2102212464, %v1186
    %v1196 = vor.u32 %v1194, %v1195
    %v1197 = vshll.u32 2102212464, %v1185
    %v1198 = vshrl.u32 920167782, %v1186
    %v1199 = vor.u32 %v1197, %v1198
    %v1200 = vshll.u32 920167782, %v1185
    %v1201 = vshrl.u32 1326507024, %v1186
    %v1202 = vor.u32 %v1200, %v1201
    %vm1203 = vcmp.lt.s32.totalorder %v1184, 1
    %vm1204 = vcmp.lt.s32.totalorder %v1184, 2
    %vm1205 = vcmp.lt.s32.totalorder %v1184, 3
    %vm1206 = vcmp.lt.s32.totalorder %v1184, 4
    %v1207 = vsel %vm1203, %v1187, %v1190
    %v1208 = vsel %vm1206, %v1196, 2102212464
    %v1209 = vsel %vm1205, %v1193, %v1208
    %v1210 = vsel %vm1204, %v1207, %v1209
    %v1211 = vsel %vm1203, %v1190, %v1193
    %v1212 = vsel %vm1206, %v1199, 920167782
    %v1213 = vsel %vm1205, %v1196, %v1212
    %v1214 = vsel %vm1204, %v1211, %v1213
    %v1215 = vsel %vm1203, %v1193, %v1196
    %v1216 = vsel %vm1206, %v1202, 1326507024
    %v1217 = vsel %vm1205, %v1199, %v1216
    %v1218 = vsel %vm1204, %v1215, %v1217
    %v1219 = vshll.u32 %v1179, 8
    %v1220 = vand.u32 %v1219, 65535
    %v1221 = vshrl.u32 %v1219, 16
    %v1222 = vand.u32 %v1218, 65535
    %v1223 = vshrl.u32 %v1218, 16
    %v1224 = vmul.u32 %v1220, %v1222
    %v1225 = vmul.u32 %v1220, %v1223
    %v1226 = vmul.u32 %v1221, %v1222
    %v1227 = vmul.u32 %v1221, %v1223
    %v1228 = vshll.u32 %v1225, 16
    %v1229 = vshrl.u32 %v1225, 16
    %v1230 = vshll.u32 %v1226, 16
    %v1231 = vshrl.u32 %v1226, 16
    %vm1232 = vc.u32 %v1224, %v1228
    %v1233 = vsel %vm1232, 1, 0
    %v1234 = vadd.s32 %v1224, %v1228
    %v1235 = vadd.s32 %v1227, %v1233
    %vm1236 = vc.u32 %v1234, %v1230
    %v1237 = vsel %vm1236, 1, 0
    %v1238 = vadd.s32 %v1234, %v1230
    %v1239 = vadd.s32 %v1235, %v1237
    %v1240 = vadd.s32 %v1239, %v1229
    %v1241 = vadd.s32 %v1240, %v1231
    %v1242 = vand.u32 %v1219, 65535
    %v1243 = vshrl.u32 %v1219, 16
    %v1244 = vand.u32 %v1214, 65535
    %v1245 = vshrl.u32 %v1214, 16
    %v1246 = vmul.u32 %v1242, %v1244
    %v1247 = vmul.u32 %v1242, %v1245
    %v1248 = vmul.u32 %v1243, %v1244
    %v1249 = vmul.u32 %v1243, %v1245
    %v1250 = vshll.u32 %v1247, 16
    %v1251 = vshrl.u32 %v1247, 16
    %v1252 = vshll.u32 %v1248, 16
    %v1253 = vshrl.u32 %v1248, 16
    %vm1254 = vc.u32 %v1246, %v1250
    %v1255 = vsel %vm1254, 1, 0
    %v1256 = vadd.s32 %v1246, %v1250
    %v1257 = vadd.s32 %v1249, %v1255
    %vm1258 = vc.u32 %v1256, %v1252
    %v1259 = vsel %vm1258, 1, 0
    %v1260 = vadd.s32 %v1256, %v1252
    %v1261 = vadd.s32 %v1257, %v1259
    %v1262 = vadd.s32 %v1261, %v1251
    %v1263 = vadd.s32 %v1262, %v1253
    %v1264 = vmul.u32 %v1219, %v1210
    %v1265 = vadd.s32 %v1241, %v1260
    %vm1266 = vc.u32 %v1241, %v1260
    %v1267 = vadd.s32 %v1263, 1
    %v1268 = vsel %vm1266, %v1267, %v1263
    %v1269 = vadd.s32 %v1264, %v1268
    %v1270 = vadd.s32 %v1269, 536870912
    %v1271 = vshrl.u32 %v1270, 30
    %v1272 = vshll.u32 %v1271, 30
    %v1273 = vsub.s32 %v1269, %v1272
    %vm1274 = vcmp.lt.s32.totalorder %v1273, 0
    %v1275 = vsub.s32 0, %v1273
    %v1276 = vsel %vm1274, %v1275, %v1273
    %v1277 = vclz %v1276
    %v1278 = vsub.s32 %v1277, 2
    %vm1279 = vcmp.gt.s32.totalorder 0, %v1278
    %v1280 = vsel %vm1279, 0, %v1278
    %v1281 = vsub.s32 32, %v1280
    %v1282 = vshll.u32 %v1273, %v1280
    %v1283 = vshrl.u32 %v1265, %v1281
    %v1284 = vor.u32 %v1282, %v1283
    %v1285 = vsub.s32 4294967266, %v1280
    %v1286 = vadd.s32 %v1285, 127
    %v1287 = vshll.u32 %v1286, 23
    %v1288 = vor.u32 4788187, %v1287
    %v1289 = vand.u32 2147483647, %v1288
    %v1291 = vcvt.s32.f32 %v1284
    %v1292 = vmul.f32 %v1291, %v1289
    %v1293 = vxor.u32 %v1292, 2147483648
    %v1294 = vsel %vm1173, %v1293, %v1292
    %v1295 = vsub.s32 4, %v1271
    %v1296 = vsel %vm1173, %v1295, %v1271
    %v1297 = vsel %vm1172, %v219, %v1294
    %v1298 = vsel %vm1172, 0, %v1296
    %v1299 = vmul.f32 %v1297, %v1297
    %v1300 = vmul.f32 %v1299, -0.001358992
    %v1301 = vadd.f32 %v1300, 0.041655596
    %v1302 = vmul.f32 %v1299, %v1301
    %v1303 = vadd.f32 %v1302, -0.4999988
    %v1304 = vmul.f32 %v1299, %v1303
    %v1305 = vadd.f32 1.0, %v1304
    %v1306 = vmul.f32 %v1297, %v1297
    %v1307 = vmul.f32 %v1306, -0.00019511016
    %v1308 = vadd.f32 %v1307, 0.008332121
    %v1309 = vmul.f32 %v1306, %v1308
    %v1310 = vadd.f32 %v1309, -0.16666654
    %v1311 = vmul.f32 %v1306, %v1310
    %v1312 = vadd.f32 %v1311, 1.0
    %v1313 = vmul.f32 %v1312, %v1297
    %vm1314 = vweird.f32 %v219
    %v1315 = vand.u32 %v1298, 3
    %vm1316 = vcmp.lt.s32.totalorder %v1315, 2
    %vm1317 = vcmp.eq.s32.totalorder %v1315, 0
    %v1318 = vxor.u32 %v1313, 2147483648
    %v1319 = vsel %vm1317, %v1305, %v1318
    %vm1320 = vcmp.eq.s32.totalorder %v1315, 2
    %v1321 = vxor.u32 %v1305, 2147483648
    %v1322 = vsel %vm1320, %v1321, %v1313
    %v1323 = vsel %vm1316, %v1319, %v1322
    %v1324 = vsel %vm1314, nan, %v1323
    %v1325 = vand.u32 2147483647, %v220
    %vm1326 = vcmp.le.f32.partialorder %v1325, 0.7853982
    %vm1327 = vcmp.lt.s32.totalorder %v220, 0
    %v1328 = vand.u32 %v220, 2139095040
    %v1329 = vshrl.u32 %v1328, 23
    %v1330 = vsub.s32 %v1329, 127
    %v1331 = vand.u32 2147483647, %v220
    %v1332 = vand.u32 %v1331, 8388607
    %v1333 = vor.u32 %v1332, 8388608
    %v1334 = vsub.s32 0, %v1333
    %v1335 = vadd.s32 %v1330, 1
    %vm1336 = vcmp.gt.s32.totalorder %v1335, 0
    %v1337 = vsel %vm1336, %v1335, 0
    %v1338 = vshrl.u32 %v1337, 5
    %v1339 = vand.u32 %v1337, 31
    %v1340 = vsub.s32 32, %v1339
    %v1341 = vshrl.u32 683565275, %v1340
    %v1342 = vshll.u32 683565275, %v1339
    %v1343 = vshrl.u32 2475754826, %v1340
    %v1344 = vor.u32 %v1342, %v1343
    %v1345 = vshll.u32 2475754826, %v1339
    %v1346 = vshrl.u32 2131351028, %v1340
    %v1347 = vor.u32 %v1345, %v1346
    %v1348 = vshll.u32 2131351028, %v1339
    %v1349 = vshrl.u32 2102212464, %v1340
    %v1350 = vor.u32 %v1348, %v1349
    %v1351 = vshll.u32 2102212464, %v1339
    %v1352 = vshrl.u32 920167782, %v1340
    %v1353 = vor.u32 %v1351, %v1352
    %v1354 = vshll.u32 920167782, %v1339
    %v1355 = vshrl.u32 1326507024, %v1340
    %v1356 = vor.u32 %v1354, %v1355
    %vm1357 = vcmp.lt.s32.totalorder %v1338, 1
    %vm1358 = vcmp.lt.s32.totalorder %v1338, 2
    %vm1359 = vcmp.lt.s32.totalorder %v1338, 3
    %vm1360 = vcmp.lt.s32.totalorder %v1338, 4
    %v1361 = vsel %vm1357, %v1341, %v1344
    %v1362 = vsel %vm1360, %v1350, 2102212464
    %v1363 = vsel %vm1359, %v1347, %v1362
    %v1364 = vsel %vm1358, %v1361, %v1363
    %v1365 = vsel %vm1357, %v1344, %v1347
    %v1366 = vsel %vm1360, %v1353, 920167782
    %v1367 = vsel %vm1359, %v1350, %v1366
    %v1368 = vsel %vm1358, %v1365, %v1367
    %v1369 = vsel %vm1357, %v1347, %v1350
    %v1370 = vsel %vm1360, %v1356, 1326507024
    %v1371 = vsel %vm1359, %v1353, %v1370
    %v1372 = vsel %vm1358, %v1369, %v1371
    %v1373 = vshll.u32 %v1333, 8
    %v1374 = vand.u32 %v1373, 65535
    %v1375 = vshrl.u32 %v1373, 16
    %v1376 = vand.u32 %v1372, 65535
    %v1377 = vshrl.u32 %v1372, 16
    %v1378 = vmul.u32 %v1374, %v1376
    %v1379 = vmul.u32 %v1374, %v1377
    %v1380 = vmul.u32 %v1375, %v1376
    %v1381 = vmul.u32 %v1375, %v1377
    %v1382 = vshll.u32 %v1379, 16
    %v1383 = vshrl.u32 %v1379, 16
    %v1384 = vshll.u32 %v1380, 16
    %v1385 = vshrl.u32 %v1380, 16
    %vm1386 = vc.u32 %v1378, %v1382
    %v1387 = vsel %vm1386, 1, 0
    %v1388 = vadd.s32 %v1378, %v1382
    %v1389 = vadd.s32 %v1381, %v1387
    %vm1390 = vc.u32 %v1388, %v1384
    %v1391 = vsel %vm1390, 1, 0
    %v1392 = vadd.s32 %v1388, %v1384
    %v1393 = vadd.s32 %v1389, %v1391
    %v1394 = vadd.s32 %v1393, %v1383
    %v1395 = vadd.s32 %v1394, %v1385
    %v1396 = vand.u32 %v1373, 65535
    %v1397 = vshrl.u32 %v1373, 16
    %v1398 = vand.u32 %v1368, 65535
    %v1399 = vshrl.u32 %v1368, 16
    %v1400 = vmul.u32 %v1396, %v1398
    %v1401 = vmul.u32 %v1396, %v1399
    %v1402 = vmul.u32 %v1397, %v1398
    %v1403 = vmul.u32 %v1397, %v1399
    %v1404 = vshll.u32 %v1401, 16
    %v1405 = vshrl.u32 %v1401, 16
    %v1406 = vshll.u32 %v1402, 16
    %v1407 = vshrl.u32 %v1402, 16
    %vm1408 = vc.u32 %v1400, %v1404
    %v1409 = vsel %vm1408, 1, 0
    %v1410 = vadd.s32 %v1400, %v1404
    %v1411 = vadd.s32 %v1403, %v1409
    %vm1412 = vc.u32 %v1410, %v1406
    %v1413 = vsel %vm1412, 1, 0
    %v1414 = vadd.s32 %v1410, %v1406
    %v1415 = vadd.s32 %v1411, %v1413
    %v1416 = vadd.s32 %v1415, %v1405
    %v1417 = vadd.s32 %v1416, %v1407
    %v1418 = vmul.u32 %v1373, %v1364
    %v1419 = vadd.s32 %v1395, %v1414
    %vm1420 = vc.u32 %v1395, %v1414
    %v1421 = vadd.s32 %v1417, 1
    %v1422 = vsel %vm1420, %v1421, %v1417
    %v1423 = vadd.s32 %v1418, %v1422
    %v1424 = vadd.s32 %v1423, 536870912
    %v1425 = vshrl.u32 %v1424, 30
    %v1426 = vshll.u32 %v1425, 30
    %v1427 = vsub.s32 %v1423, %v1426
    %vm1428 = vcmp.lt.s32.totalorder %v1427, 0
    %v1429 = vsub.s32 0, %v1427
    %v1430 = vsel %vm1428, %v1429, %v1427
    %v1431 = vclz %v1430
    %v1432 = vsub.s32 %v1431, 2
    %vm1433 = vcmp.gt.s32.totalorder 0, %v1432
    %v1434 = vsel %vm1433, 0, %v1432
    %v1435 = vsub.s32 32, %v1434
    %v1436 = vshll.u32 %v1427, %v1434
    %v1437 = vshrl.u32 %v1419, %v1435
    %v1438 = vor.u32 %v1436, %v1437
    %v1439 = vsub.s32 4294967266, %v1434
    %v1440 = vadd.s32 %v1439, 127
    %v1441 = vshll.u32 %v1440, 23
    %v1442 = vor.u32 4788187, %v1441
    %v1443 = vand.u32 2147483647, %v1442
    %v1445 = vcvt.s32.f32 %v1438
    %v1446 = vmul.f32 %v1445, %v1443
    %v1447 = vxor.u32 %v1446, 2147483648
    %v1448 = vsel %vm1327, %v1447, %v1446
    %v1449 = vsub.s32 4, %v1425
    %v1450 = vsel %vm1327, %v1449, %v1425
    %v1451 = vsel %vm1326, %v220, %v1448
    %v1452 = vsel %vm1326, 0, %v1450
    %v1453 = vmul.f32 %v1451, %v1451
    %v1454 = vmul.f32 %v1453, -0.001358992
    %v1455 = vadd.f32 %v1454, 0.041655596
    %v1456 = vmul.f32 %v1453, %v1455
    %v1457 = vadd.f32 %v1456, -0.4999988
    %v1458 = vmul.f32 %v1453, %v1457
    %v1459 = vadd.f32 1.0, %v1458
    %v1460 = vmul.f32 %v1451, %v1451
    %v1461 = vmul.f32 %v1460, -0.00019511016
    %v1462 = vadd.f32 %v1461, 0.008332121
    %v1463 = vmul.f32 %v1460, %v1462
    %v1464 = vadd.f32 %v1463, -0.16666654
    %v1465 = vmul.f32 %v1460, %v1464
    %v1466 = vadd.f32 %v1465, 1.0
    %v1467 = vmul.f32 %v1466, %v1451
    %vm1468 = vweird.f32 %v220
    %v1469 = vand.u32 %v1452, 3
    %vm1470 = vcmp.lt.s32.totalorder %v1469, 2
    %vm1471 = vcmp.eq.s32.totalorder %v1469, 0
    %v1472 = vxor.u32 %v1467, 2147483648
    %v1473 = vsel %vm1471, %v1459, %v1472
    %vm1474 = vcmp.eq.s32.totalorder %v1469, 2
    %v1475 = vxor.u32 %v1459, 2147483648
    %v1476 = vsel %vm1474, %v1475, %v1467
    %v1477 = vsel %vm1470, %v1473, %v1476
    %v1478 = vsel %vm1468, nan, %v1477
    %v1479 = vand.u32 2147483647, %v221
    %vm1480 = vcmp.le.f32.partialorder %v1479, 0.7853982
    %vm1481 = vcmp.lt.s32.totalorder %v221, 0
    %v1482 = vand.u32 %v221, 2139095040
    %v1483 = vshrl.u32 %v1482, 23
    %v1484 = vsub.s32 %v1483, 127
    %v1485 = vand.u32 2147483647, %v221
    %v1486 = vand.u32 %v1485, 8388607
    %v1487 = vor.u32 %v1486, 8388608
    %v1488 = vsub.s32 0, %v1487
    %v1489 = vadd.s32 %v1484, 1
    %vm1490 = vcmp.gt.s32.totalorder %v1489, 0
    %v1491 = vsel %vm1490, %v1489, 0
    %v1492 = vshrl.u32 %v1491, 5
    %v1493 = vand.u32 %v1491, 31
    %v1494 = vsub.s32 32, %v1493
    %v1495 = vshrl.u32 683565275, %v1494
    %v1496 = vshll.u32 683565275, %v1493
    %v1497 = vshrl.u32 2475754826, %v1494
    %v1498 = vor.u32 %v1496, %v1497
    %v1499 = vshll.u32 2475754826, %v1493
    %v1500 = vshrl.u32 2131351028, %v1494
    %v1501 = vor.u32 %v1499, %v1500
    %v1502 = vshll.u32 2131351028, %v1493
    %v1503 = vshrl.u32 2102212464, %v1494
    %v1504 = vor.u32 %v1502, %v1503
    %v1505 = vshll.u32 2102212464, %v1493
    %v1506 = vshrl.u32 920167782, %v1494
    %v1507 = vor.u32 %v1505, %v1506
    %v1508 = vshll.u32 920167782, %v1493
    %v1509 = vshrl.u32 1326507024, %v1494
    %v1510 = vor.u32 %v1508, %v1509
    %vm1511 = vcmp.lt.s32.totalorder %v1492, 1
    %vm1512 = vcmp.lt.s32.totalorder %v1492, 2
    %vm1513 = vcmp.lt.s32.totalorder %v1492, 3
    %vm1514 = vcmp.lt.s32.totalorder %v1492, 4
    %v1515 = vsel %vm1511, %v1495, %v1498
    %v1516 = vsel %vm1514, %v1504, 2102212464
    %v1517 = vsel %vm1513, %v1501, %v1516
    %v1518 = vsel %vm1512, %v1515, %v1517
    %v1519 = vsel %vm1511, %v1498, %v1501
    %v1520 = vsel %vm1514, %v1507, 920167782
    %v1521 = vsel %vm1513, %v1504, %v1520
    %v1522 = vsel %vm1512, %v1519, %v1521
    %v1523 = vsel %vm1511, %v1501, %v1504
    %v1524 = vsel %vm1514, %v1510, 1326507024
    %v1525 = vsel %vm1513, %v1507, %v1524
    %v1526 = vsel %vm1512, %v1523, %v1525
    %v1527 = vshll.u32 %v1487, 8
    %v1528 = vand.u32 %v1527, 65535
    %v1529 = vshrl.u32 %v1527, 16
    %v1530 = vand.u32 %v1526, 65535
    %v1531 = vshrl.u32 %v1526, 16
    %v1532 = vmul.u32 %v1528, %v1530
    %v1533 = vmul.u32 %v1528, %v1531
    %v1534 = vmul.u32 %v1529, %v1530
    %v1535 = vmul.u32 %v1529, %v1531
    %v1536 = vshll.u32 %v1533, 16
    %v1537 = vshrl.u32 %v1533, 16
    %v1538 = vshll.u32 %v1534, 16
    %v1539 = vshrl.u32 %v1534, 16
    %vm1540 = vc.u32 %v1532, %v1536
    %v1541 = vsel %vm1540, 1, 0
    %v1542 = vadd.s32 %v1532, %v1536
    %v1543 = vadd.s32 %v1535, %v1541
    %vm1544 = vc.u32 %v1542, %v1538
    %v1545 = vsel %vm1544, 1, 0
    %v1546 = vadd.s32 %v1542, %v1538
    %v1547 = vadd.s32 %v1543, %v1545
    %v1548 = vadd.s32 %v1547, %v1537
    %v1549 = vadd.s32 %v1548, %v1539
    %v1550 = vand.u32 %v1527, 65535
    %v1551 = vshrl.u32 %v1527, 16
    %v1552 = vand.u32 %v1522, 65535
    %v1553 = vshrl.u32 %v1522, 16
    %v1554 = vmul.u32 %v1550, %v1552
    %v1555 = vmul.u32 %v1550, %v1553
    %v1556 = vmul.u32 %v1551, %v1552
    %v1557 = vmul.u32 %v1551, %v1553
    %v1558 = vshll.u32 %v1555, 16
    %v1559 = vshrl.u32 %v1555, 16
    %v1560 = vshll.u32 %v1556, 16
    %v1561 = vshrl.u32 %v1556, 16
    %vm1562 = vc.u32 %v1554, %v1558
    %v1563 = vsel %vm1562, 1, 0
    %v1564 = vadd.s32 %v1554, %v1558
    %v1565 = vadd.s32 %v1557, %v1563
    %vm1566 = vc.u32 %v1564, %v1560
    %v1567 = vsel %vm1566, 1, 0
    %v1568 = vadd.s32 %v1564, %v1560
    %v1569 = vadd.s32 %v1565, %v1567
    %v1570 = vadd.s32 %v1569, %v1559
    %v1571 = vadd.s32 %v1570, %v1561
    %v1572 = vmul.u32 %v1527, %v1518
    %v1573 = vadd.s32 %v1549, %v1568
    %vm1574 = vc.u32 %v1549, %v1568
    %v1575 = vadd.s32 %v1571, 1
    %v1576 = vsel %vm1574, %v1575, %v1571
    %v1577 = vadd.s32 %v1572, %v1576
    %v1578 = vadd.s32 %v1577, 536870912
    %v1579 = vshrl.u32 %v1578, 30
    %v1580 = vshll.u32 %v1579, 30
    %v1581 = vsub.s32 %v1577, %v1580
    %vm1582 = vcmp.lt.s32.totalorder %v1581, 0
    %v1583 = vsub.s32 0, %v1581
    %v1584 = vsel %vm1582, %v1583, %v1581
    %v1585 = vclz %v1584
    %v1586 = vsub.s32 %v1585, 2
    %vm1587 = vcmp.gt.s32.totalorder 0, %v1586
    %v1588 = vsel %vm1587, 0, %v1586
    %v1589 = vsub.s32 32, %v1588
    %v1590 = vshll.u32 %v1581, %v1588
    %v1591 = vshrl.u32 %v1573, %v1589
    %v1592 = vor.u32 %v1590, %v1591
    %v1593 = vsub.s32 4294967266, %v1588
    %v1594 = vadd.s32 %v1593, 127
    %v1595 = vshll.u32 %v1594, 23
    %v1596 = vor.u32 4788187, %v1595
    %v1597 = vand.u32 2147483647, %v1596
    %v1599 = vcvt.s32.f32 %v1592
    %v1600 = vmul.f32 %v1599, %v1597
    %v1601 = vxor.u32 %v1600, 2147483648
    %v1602 = vsel %vm1481, %v1601, %v1600
    %v1603 = vsub.s32 4, %v1579
    %v1604 = vsel %vm1481, %v1603, %v1579
    %v1605 = vsel %vm1480, %v221, %v1602
    %v1606 = vsel %vm1480, 0, %v1604
    %v1607 = vmul.f32 %v1605, %v1605
    %v1608 = vmul.f32 %v1607, -0.001358992
    %v1609 = vadd.f32 %v1608, 0.041655596
    %v1610 = vmul.f32 %v1607, %v1609
    %v1611 = vadd.f32 %v1610, -0.4999988
    %v1612 = vmul.f32 %v1607, %v1611
    %v1613 = vadd.f32 1.0, %v1612
    %v1614 = vmul.f32 %v1605, %v1605
    %v1615 = vmul.f32 %v1614, -0.00019511016
    %v1616 = vadd.f32 %v1615, 0.008332121
    %v1617 = vmul.f32 %v1614, %v1616
    %v1618 = vadd.f32 %v1617, -0.16666654
    %v1619 = vmul.f32 %v1614, %v1618
    %v1620 = vadd.f32 %v1619, 1.0
    %v1621 = vmul.f32 %v1620, %v1605
    %vm1622 = vweird.f32 %v221
    %v1623 = vand.u32 %v1606, 3
    %vm1624 = vcmp.lt.s32.totalorder %v1623, 2
    %vm1625 = vcmp.eq.s32.totalorder %v1623, 0
    %v1626 = vxor.u32 %v1621, 2147483648
    %v1627 = vsel %vm1625, %v1613, %v1626
    %vm1628 = vcmp.eq.s32.totalorder %v1623, 2
    %v1629 = vxor.u32 %v1613, 2147483648
    %v1630 = vsel %vm1628, %v1629, %v1621
    %v1631 = vsel %vm1624, %v1627, %v1630
    %v1632 = vsel %vm1622, nan, %v1631
    %v1633 = vand.u32 2147483647, %v222
    %vm1634 = vcmp.le.f32.partialorder %v1633, 0.7853982
    %vm1635 = vcmp.lt.s32.totalorder %v222, 0
    %v1636 = vand.u32 %v222, 2139095040
    %v1637 = vshrl.u32 %v1636, 23
    %v1638 = vsub.s32 %v1637, 127
    %v1639 = vand.u32 2147483647, %v222
    %v1640 = vand.u32 %v1639, 8388607
    %v1641 = vor.u32 %v1640, 8388608
    %v1642 = vsub.s32 0, %v1641
    %v1643 = vadd.s32 %v1638, 1
    %vm1644 = vcmp.gt.s32.totalorder %v1643, 0
    %v1645 = vsel %vm1644, %v1643, 0
    %v1646 = vshrl.u32 %v1645, 5
    %v1647 = vand.u32 %v1645, 31
    %v1648 = vsub.s32 32, %v1647
    %v1649 = vshrl.u32 683565275, %v1648
    %v1650 = vshll.u32 683565275, %v1647
    %v1651 = vshrl.u32 2475754826, %v1648
    %v1652 = vor.u32 %v1650, %v1651
    %v1653 = vshll.u32 2475754826, %v1647
    %v1654 = vshrl.u32 2131351028, %v1648
    %v1655 = vor.u32 %v1653, %v1654
    %v1656 = vshll.u32 2131351028, %v1647
    %v1657 = vshrl.u32 2102212464, %v1648
    %v1658 = vor.u32 %v1656, %v1657
    %v1659 = vshll.u32 2102212464, %v1647
    %v1660 = vshrl.u32 920167782, %v1648
    %v1661 = vor.u32 %v1659, %v1660
    %v1662 = vshll.u32 920167782, %v1647
    %v1663 = vshrl.u32 1326507024, %v1648
    %v1664 = vor.u32 %v1662, %v1663
    %vm1665 = vcmp.lt.s32.totalorder %v1646, 1
    %vm1666 = vcmp.lt.s32.totalorder %v1646, 2
    %vm1667 = vcmp.lt.s32.totalorder %v1646, 3
    %vm1668 = vcmp.lt.s32.totalorder %v1646, 4
    %v1669 = vsel %vm1665, %v1649, %v1652
    %v1670 = vsel %vm1668, %v1658, 2102212464
    %v1671 = vsel %vm1667, %v1655, %v1670
    %v1672 = vsel %vm1666, %v1669, %v1671
    %v1673 = vsel %vm1665, %v1652, %v1655
    %v1674 = vsel %vm1668, %v1661, 920167782
    %v1675 = vsel %vm1667, %v1658, %v1674
    %v1676 = vsel %vm1666, %v1673, %v1675
    %v1677 = vsel %vm1665, %v1655, %v1658
    %v1678 = vsel %vm1668, %v1664, 1326507024
    %v1679 = vsel %vm1667, %v1661, %v1678
    %v1680 = vsel %vm1666, %v1677, %v1679
    %v1681 = vshll.u32 %v1641, 8
    %v1682 = vand.u32 %v1681, 65535
    %v1683 = vshrl.u32 %v1681, 16
    %v1684 = vand.u32 %v1680, 65535
    %v1685 = vshrl.u32 %v1680, 16
    %v1686 = vmul.u32 %v1682, %v1684
    %v1687 = vmul.u32 %v1682, %v1685
    %v1688 = vmul.u32 %v1683, %v1684
    %v1689 = vmul.u32 %v1683, %v1685
    %v1690 = vshll.u32 %v1687, 16
    %v1691 = vshrl.u32 %v1687, 16
    %v1692 = vshll.u32 %v1688, 16
    %v1693 = vshrl.u32 %v1688, 16
    %vm1694 = vc.u32 %v1686, %v1690
    %v1695 = vsel %vm1694, 1, 0
    %v1696 = vadd.s32 %v1686, %v1690
    %v1697 = vadd.s32 %v1689, %v1695
    %vm1698 = vc.u32 %v1696, %v1692
    %v1699 = vsel %vm1698, 1, 0
    %v1700 = vadd.s32 %v1696, %v1692
    %v1701 = vadd.s32 %v1697, %v1699
    %v1702 = vadd.s32 %v1701, %v1691
    %v1703 = vadd.s32 %v1702, %v1693
    %v1704 = vand.u32 %v1681, 65535
    %v1705 = vshrl.u32 %v1681, 16
    %v1706 = vand.u32 %v1676, 65535
    %v1707 = vshrl.u32 %v1676, 16
    %v1708 = vmul.u32 %v1704, %v1706
    %v1709 = vmul.u32 %v1704, %v1707
    %v1710 = vmul.u32 %v1705, %v1706
    %v1711 = vmul.u32 %v1705, %v1707
    %v1712 = vshll.u32 %v1709, 16
    %v1713 = vshrl.u32 %v1709, 16
    %v1714 = vshll.u32 %v1710, 16
    %v1715 = vshrl.u32 %v1710, 16
    %vm1716 = vc.u32 %v1708, %v1712
    %v1717 = vsel %vm1716, 1, 0
    %v1718 = vadd.s32 %v1708, %v1712
    %v1719 = vadd.s32 %v1711, %v1717
    %vm1720 = vc.u32 %v1718, %v1714
    %v1721 = vsel %vm1720, 1, 0
    %v1722 = vadd.s32 %v1718, %v1714
    %v1723 = vadd.s32 %v1719, %v1721
    %v1724 = vadd.s32 %v1723, %v1713
    %v1725 = vadd.s32 %v1724, %v1715
    %v1726 = vmul.u32 %v1681, %v1672
    %v1727 = vadd.s32 %v1703, %v1722
    %vm1728 = vc.u32 %v1703, %v1722
    %v1729 = vadd.s32 %v1725, 1
    %v1730 = vsel %vm1728, %v1729, %v1725
    %v1731 = vadd.s32 %v1726, %v1730
    %v1732 = vadd.s32 %v1731, 536870912
    %v1733 = vshrl.u32 %v1732, 30
    %v1734 = vshll.u32 %v1733, 30
    %v1735 = vsub.s32 %v1731, %v1734
    %vm1736 = vcmp.lt.s32.totalorder %v1735, 0
    %v1737 = vsub.s32 0, %v1735
    %v1738 = vsel %vm1736, %v1737, %v1735
    %v1739 = vclz %v1738
    %v1740 = vsub.s32 %v1739, 2
    %vm1741 = vcmp.gt.s32.totalorder 0, %v1740
    %v1742 = vsel %vm1741, 0, %v1740
    %v1743 = vsub.s32 32, %v1742
    %v1744 = vshll.u32 %v1735, %v1742
    %v1745 = vshrl.u32 %v1727, %v1743
    %v1746 = vor.u32 %v1744, %v1745
    %v1747 = vsub.s32 4294967266, %v1742
    %v1748 = vadd.s32 %v1747, 127
    %v1749 = vshll.u32 %v1748, 23
    %v1750 = vor.u32 4788187, %v1749
    %v1751 = vand.u32 2147483647, %v1750
    %v1753 = vcvt.s32.f32 %v1746
    %v1754 = vmul.f32 %v1753, %v1751
    %v1755 = vxor.u32 %v1754, 2147483648
    %v1756 = vsel %vm1635, %v1755, %v1754
    %v1757 = vsub.s32 4, %v1733
    %v1758 = vsel %vm1635, %v1757, %v1733
    %v1759 = vsel %vm1634, %v222, %v1756
    %v1760 = vsel %vm1634, 0, %v1758
    %v1761 = vmul.f32 %v1759, %v1759
    %v1762 = vmul.f32 %v1761, -0.001358992
    %v1763 = vadd.f32 %v1762, 0.041655596
    %v1764 = vmul.f32 %v1761, %v1763
    %v1765 = vadd.f32 %v1764, -0.4999988
    %v1766 = vmul.f32 %v1761, %v1765
    %v1767 = vadd.f32 1.0, %v1766
    %v1768 = vmul.f32 %v1759, %v1759
    %v1769 = vmul.f32 %v1768, -0.00019511016
    %v1770 = vadd.f32 %v1769, 0.008332121
    %v1771 = vmul.f32 %v1768, %v1770
    %v1772 = vadd.f32 %v1771, -0.16666654
    %v1773 = vmul.f32 %v1768, %v1772
    %v1774 = vadd.f32 %v1773, 1.0
    %v1775 = vmul.f32 %v1774, %v1759
    %vm1776 = vweird.f32 %v222
    %v1777 = vand.u32 %v1760, 3
    %vm1778 = vcmp.lt.s32.totalorder %v1777, 2
    %vm1779 = vcmp.eq.s32.totalorder %v1777, 0
    %v1780 = vxor.u32 %v1775, 2147483648
    %v1781 = vsel %vm1779, %v1767, %v1780
    %vm1782 = vcmp.eq.s32.totalorder %v1777, 2
    %v1783 = vxor.u32 %v1767, 2147483648
    %v1784 = vsel %vm1782, %v1783, %v1775
    %v1785 = vsel %vm1778, %v1781, %v1784
    %v1786 = vsel %vm1776, nan, %v1785
    %v1787 = vand.u32 2147483647, %v223
    %vm1788 = vcmp.le.f32.partialorder %v1787, 0.7853982
    %vm1789 = vcmp.lt.s32.totalorder %v223, 0
    %v1790 = vand.u32 %v223, 2139095040
    %v1791 = vshrl.u32 %v1790, 23
    %v1792 = vsub.s32 %v1791, 127
    %v1793 = vand.u32 2147483647, %v223
    %v1794 = vand.u32 %v1793, 8388607
    %v1795 = vor.u32 %v1794, 8388608
    %v1796 = vsub.s32 0, %v1795
    %v1797 = vadd.s32 %v1792, 1
    %vm1798 = vcmp.gt.s32.totalorder %v1797, 0
    %v1799 = vsel %vm1798, %v1797, 0
    %v1800 = vshrl.u32 %v1799, 5
    %v1801 = vand.u32 %v1799, 31
    %v1802 = vsub.s32 32, %v1801
    %v1803 = vshrl.u32 683565275, %v1802
    %v1804 = vshll.u32 683565275, %v1801
    %v1805 = vshrl.u32 2475754826, %v1802
    %v1806 = vor.u32 %v1804, %v1805
    %v1807 = vshll.u32 2475754826, %v1801
    %v1808 = vshrl.u32 2131351028, %v1802
    %v1809 = vor.u32 %v1807, %v1808
    %v1810 = vshll.u32 2131351028, %v1801
    %v1811 = vshrl.u32 2102212464, %v1802
    %v1812 = vor.u32 %v1810, %v1811
    %v1813 = vshll.u32 2102212464, %v1801
    %v1814 = vshrl.u32 920167782, %v1802
    %v1815 = vor.u32 %v1813, %v1814
    %v1816 = vshll.u32 920167782, %v1801
    %v1817 = vshrl.u32 1326507024, %v1802
    %v1818 = vor.u32 %v1816, %v1817
    %vm1819 = vcmp.lt.s32.totalorder %v1800, 1
    %vm1820 = vcmp.lt.s32.totalorder %v1800, 2
    %vm1821 = vcmp.lt.s32.totalorder %v1800, 3
    %vm1822 = vcmp.lt.s32.totalorder %v1800, 4
    %v1823 = vsel %vm1819, %v1803, %v1806
    %v1824 = vsel %vm1822, %v1812, 2102212464
    %v1825 = vsel %vm1821, %v1809, %v1824
    %v1826 = vsel %vm1820, %v1823, %v1825
    %v1827 = vsel %vm1819, %v1806, %v1809
    %v1828 = vsel %vm1822, %v1815, 920167782
    %v1829 = vsel %vm1821, %v1812, %v1828
    %v1830 = vsel %vm1820, %v1827, %v1829
    %v1831 = vsel %vm1819, %v1809, %v1812
    %v1832 = vsel %vm1822, %v1818, 1326507024
    %v1833 = vsel %vm1821, %v1815, %v1832
    %v1834 = vsel %vm1820, %v1831, %v1833
    %v1835 = vshll.u32 %v1795, 8
    %v1836 = vand.u32 %v1835, 65535
    %v1837 = vshrl.u32 %v1835, 16
    %v1838 = vand.u32 %v1834, 65535
    %v1839 = vshrl.u32 %v1834, 16
    %v1840 = vmul.u32 %v1836, %v1838
    %v1841 = vmul.u32 %v1836, %v1839
    %v1842 = vmul.u32 %v1837, %v1838
    %v1843 = vmul.u32 %v1837, %v1839
    %v1844 = vshll.u32 %v1841, 16
    %v1845 = vshrl.u32 %v1841, 16
    %v1846 = vshll.u32 %v1842, 16
    %v1847 = vshrl.u32 %v1842, 16
    %vm1848 = vc.u32 %v1840, %v1844
    %v1849 = vsel %vm1848, 1, 0
    %v1850 = vadd.s32 %v1840, %v1844
    %v1851 = vadd.s32 %v1843, %v1849
    %vm1852 = vc.u32 %v1850, %v1846
    %v1853 = vsel %vm1852, 1, 0
    %v1854 = vadd.s32 %v1850, %v1846
    %v1855 = vadd.s32 %v1851, %v1853
    %v1856 = vadd.s32 %v1855, %v1845
    %v1857 = vadd.s32 %v1856, %v1847
    %v1858 = vand.u32 %v1835, 65535
    %v1859 = vshrl.u32 %v1835, 16
    %v1860 = vand.u32 %v1830, 65535
    %v1861 = vshrl.u32 %v1830, 16
    %v1862 = vmul.u32 %v1858, %v1860
    %v1863 = vmul.u32 %v1858, %v1861
    %v1864 = vmul.u32 %v1859, %v1860
    %v1865 = vmul.u32 %v1859, %v1861
    %v1866 = vshll.u32 %v1863, 16
    %v1867 = vshrl.u32 %v1863, 16
    %v1868 = vshll.u32 %v1864, 16
    %v1869 = vshrl.u32 %v1864, 16
    %vm1870 = vc.u32 %v1862, %v1866
    %v1871 = vsel %vm1870, 1, 0
    %v1872 = vadd.s32 %v1862, %v1866
    %v1873 = vadd.s32 %v1865, %v1871
    %vm1874 = vc.u32 %v1872, %v1868
    %v1875 = vsel %vm1874, 1, 0
    %v1876 = vadd.s32 %v1872, %v1868
    %v1877 = vadd.s32 %v1873, %v1875
    %v1878 = vadd.s32 %v1877, %v1867
    %v1879 = vadd.s32 %v1878, %v1869
    %v1880 = vmul.u32 %v1835, %v1826
    %v1881 = vadd.s32 %v1857, %v1876
    %vm1882 = vc.u32 %v1857, %v1876
    %v1883 = vadd.s32 %v1879, 1
    %v1884 = vsel %vm1882, %v1883, %v1879
    %v1885 = vadd.s32 %v1880, %v1884
    %v1886 = vadd.s32 %v1885, 536870912
    %v1887 = vshrl.u32 %v1886, 30
    %v1888 = vshll.u32 %v1887, 30
    %v1889 = vsub.s32 %v1885, %v1888
    %vm1890 = vcmp.lt.s32.totalorder %v1889, 0
    %v1891 = vsub.s32 0, %v1889
    %v1892 = vsel %vm1890, %v1891, %v1889
    %v1893 = vclz %v1892
    %v1894 = vsub.s32 %v1893, 2
    %vm1895 = vcmp.gt.s32.totalorder 0, %v1894
    %v1896 = vsel %vm1895, 0, %v1894
    %v1897 = vsub.s32 32, %v1896
    %v1898 = vshll.u32 %v1889, %v1896
    %v1899 = vshrl.u32 %v1881, %v1897
    %v1900 = vor.u32 %v1898, %v1899
    %v1901 = vsub.s32 4294967266, %v1896
    %v1902 = vadd.s32 %v1901, 127
    %v1903 = vshll.u32 %v1902, 23
    %v1904 = vor.u32 4788187, %v1903
    %v1905 = vand.u32 2147483647, %v1904
    %v1907 = vcvt.s32.f32 %v1900
    %v1908 = vmul.f32 %v1907, %v1905
    %v1909 = vxor.u32 %v1908, 2147483648
    %v1910 = vsel %vm1789, %v1909, %v1908
    %v1911 = vsub.s32 4, %v1887
    %v1912 = vsel %vm1789, %v1911, %v1887
    %v1913 = vsel %vm1788, %v223, %v1910
    %v1914 = vsel %vm1788, 0, %v1912
    %v1915 = vmul.f32 %v1913, %v1913
    %v1916 = vmul.f32 %v1915, -0.001358992
    %v1917 = vadd.f32 %v1916, 0.041655596
    %v1918 = vmul.f32 %v1915, %v1917
    %v1919 = vadd.f32 %v1918, -0.4999988
    %v1920 = vmul.f32 %v1915, %v1919
    %v1921 = vadd.f32 1.0, %v1920
    %v1922 = vmul.f32 %v1913, %v1913
    %v1923 = vmul.f32 %v1922, -0.00019511016
    %v1924 = vadd.f32 %v1923, 0.008332121
    %v1925 = vmul.f32 %v1922, %v1924
    %v1926 = vadd.f32 %v1925, -0.16666654
    %v1927 = vmul.f32 %v1922, %v1926
    %v1928 = vadd.f32 %v1927, 1.0
    %v1929 = vmul.f32 %v1928, %v1913
    %vm1930 = vweird.f32 %v223
    %v1931 = vand.u32 %v1914, 3
    %vm1932 = vcmp.lt.s32.totalorder %v1931, 2
    %vm1933 = vcmp.eq.s32.totalorder %v1931, 0
    %v1934 = vxor.u32 %v1929, 2147483648
    %v1935 = vsel %vm1933, %v1921, %v1934
    %vm1936 = vcmp.eq.s32.totalorder %v1931, 2
    %v1937 = vxor.u32 %v1921, 2147483648
    %v1938 = vsel %vm1936, %v1937, %v1929
    %v1939 = vsel %vm1932, %v1935, %v1938
    %v1940 = vsel %vm1930, nan, %v1939
    %v1941 = vand.u32 2147483647, %v224
    %vm1942 = vcmp.le.f32.partialorder %v1941, 0.7853982
    %vm1943 = vcmp.lt.s32.totalorder %v224, 0
    %v1944 = vand.u32 %v224, 2139095040
    %v1945 = vshrl.u32 %v1944, 23
    %v1946 = vsub.s32 %v1945, 127
    %v1947 = vand.u32 2147483647, %v224
    %v1948 = vand.u32 %v1947, 8388607
    %v1949 = vor.u32 %v1948, 8388608
    %v1950 = vsub.s32 0, %v1949
    %v1951 = vadd.s32 %v1946, 1
    %vm1952 = vcmp.gt.s32.totalorder %v1951, 0
    %v1953 = vsel %vm1952, %v1951, 0
    %v1954 = vshrl.u32 %v1953, 5
    %v1955 = vand.u32 %v1953, 31
    %v1956 = vsub.s32 32, %v1955
    %v1957 = vshrl.u32 683565275, %v1956
    %v1958 = vshll.u32 683565275, %v1955
    %v1959 = vshrl.u32 2475754826, %v1956
    %v1960 = vor.u32 %v1958, %v1959
    %v1961 = vshll.u32 2475754826, %v1955
    %v1962 = vshrl.u32 2131351028, %v1956
    %v1963 = vor.u32 %v1961, %v1962
    %v1964 = vshll.u32 2131351028, %v1955
    %v1965 = vshrl.u32 2102212464, %v1956
    %v1966 = vor.u32 %v1964, %v1965
    %v1967 = vshll.u32 2102212464, %v1955
    %v1968 = vshrl.u32 920167782, %v1956
    %v1969 = vor.u32 %v1967, %v1968
    %v1970 = vshll.u32 920167782, %v1955
    %v1971 = vshrl.u32 1326507024, %v1956
    %v1972 = vor.u32 %v1970, %v1971
    %vm1973 = vcmp.lt.s32.totalorder %v1954, 1
    %vm1974 = vcmp.lt.s32.totalorder %v1954, 2
    %vm1975 = vcmp.lt.s32.totalorder %v1954, 3
    %vm1976 = vcmp.lt.s32.totalorder %v1954, 4
    %v1977 = vsel %vm1973, %v1957, %v1960
    %v1978 = vsel %vm1976, %v1966, 2102212464
    %v1979 = vsel %vm1975, %v1963, %v1978
    %v1980 = vsel %vm1974, %v1977, %v1979
    %v1981 = vsel %vm1973, %v1960, %v1963
    %v1982 = vsel %vm1976, %v1969, 920167782
    %v1983 = vsel %vm1975, %v1966, %v1982
    %v1984 = vsel %vm1974, %v1981, %v1983
    %v1985 = vsel %vm1973, %v1963, %v1966
    %v1986 = vsel %vm1976, %v1972, 1326507024
    %v1987 = vsel %vm1975, %v1969, %v1986
    %v1988 = vsel %vm1974, %v1985, %v1987
    %v1989 = vshll.u32 %v1949, 8
    %v1990 = vand.u32 %v1989, 65535
    %v1991 = vshrl.u32 %v1989, 16
    %v1992 = vand.u32 %v1988, 65535
    %v1993 = vshrl.u32 %v1988, 16
    %v1994 = vmul.u32 %v1990, %v1992
    %v1995 = vmul.u32 %v1990, %v1993
    %v1996 = vmul.u32 %v1991, %v1992
    %v1997 = vmul.u32 %v1991, %v1993
    %v1998 = vshll.u32 %v1995, 16
    %v1999 = vshrl.u32 %v1995, 16
    %v2000 = vshll.u32 %v1996, 16
    %v2001 = vshrl.u32 %v1996, 16
    %vm2002 = vc.u32 %v1994, %v1998
    %v2003 = vsel %vm2002, 1, 0
    %v2004 = vadd.s32 %v1994, %v1998
    %v2005 = vadd.s32 %v1997, %v2003
    %vm2006 = vc.u32 %v2004, %v2000
    %v2007 = vsel %vm2006, 1, 0
    %v2008 = vadd.s32 %v2004, %v2000
    %v2009 = vadd.s32 %v2005, %v2007
    %v2010 = vadd.s32 %v2009, %v1999
    %v2011 = vadd.s32 %v2010, %v2001
    %v2012 = vand.u32 %v1989, 65535
    %v2013 = vshrl.u32 %v1989, 16
    %v2014 = vand.u32 %v1984, 65535
    %v2015 = vshrl.u32 %v1984, 16
    %v2016 = vmul.u32 %v2012, %v2014
    %v2017 = vmul.u32 %v2012, %v2015
    %v2018 = vmul.u32 %v2013, %v2014
    %v2019 = vmul.u32 %v2013, %v2015
    %v2020 = vshll.u32 %v2017, 16
    %v2021 = vshrl.u32 %v2017, 16
    %v2022 = vshll.u32 %v2018, 16
    %v2023 = vshrl.u32 %v2018, 16
    %vm2024 = vc.u32 %v2016, %v2020
    %v2025 = vsel %vm2024, 1, 0
    %v2026 = vadd.s32 %v2016, %v2020
    %v2027 = vadd.s32 %v2019, %v2025
    %vm2028 = vc.u32 %v2026, %v2022
    %v2029 = vsel %vm2028, 1, 0
    %v2030 = vadd.s32 %v2026, %v2022
    %v2031 = vadd.s32 %v2027, %v2029
    %v2032 = vadd.s32 %v2031, %v2021
    %v2033 = vadd.s32 %v2032, %v2023
    %v2034 = vmul.u32 %v1989, %v1980
    %v2035 = vadd.s32 %v2011, %v2030
    %vm2036 = vc.u32 %v2011, %v2030
    %v2037 = vadd.s32 %v2033, 1
    %v2038 = vsel %vm2036, %v2037, %v2033
    %v2039 = vadd.s32 %v2034, %v2038
    %v2040 = vadd.s32 %v2039, 536870912
    %v2041 = vshrl.u32 %v2040, 30
    %v2042 = vshll.u32 %v2041, 30
    %v2043 = vsub.s32 %v2039, %v2042
    %vm2044 = vcmp.lt.s32.totalorder %v2043, 0
    %v2045 = vsub.s32 0, %v2043
    %v2046 = vsel %vm2044, %v2045, %v2043
    %v2047 = vclz %v2046
    %v2048 = vsub.s32 %v2047, 2
    %vm2049 = vcmp.gt.s32.totalorder 0, %v2048
    %v2050 = vsel %vm2049, 0, %v2048
    %v2051 = vsub.s32 32, %v2050
    %v2052 = vshll.u32 %v2043, %v2050
    %v2053 = vshrl.u32 %v2035, %v2051
    %v2054 = vor.u32 %v2052, %v2053
    %v2055 = vsub.s32 4294967266, %v2050
    %v2056 = vadd.s32 %v2055, 127
    %v2057 = vshll.u32 %v2056, 23
    %v2058 = vor.u32 4788187, %v2057
    %v2059 = vand.u32 2147483647, %v2058
    %v2061 = vcvt.s32.f32 %v2054
    %v2062 = vmul.f32 %v2061, %v2059
    %v2063 = vxor.u32 %v2062, 2147483648
    %v2064 = vsel %vm1943, %v2063, %v2062
    %v2065 = vsub.s32 4, %v2041
    %v2066 = vsel %vm1943, %v2065, %v2041
    %v2067 = vsel %vm1942, %v224, %v2064
    %v2068 = vsel %vm1942, 0, %v2066
    %v2069 = vmul.f32 %v2067, %v2067
    %v2070 = vmul.f32 %v2069, -0.001358992
    %v2071 = vadd.f32 %v2070, 0.041655596
    %v2072 = vmul.f32 %v2069, %v2071
    %v2073 = vadd.f32 %v2072, -0.4999988
    %v2074 = vmul.f32 %v2069, %v2073
    %v2075 = vadd.f32 1.0, %v2074
    %v2076 = vmul.f32 %v2067, %v2067
    %v2077 = vmul.f32 %v2076, -0.00019511016
    %v2078 = vadd.f32 %v2077, 0.008332121
    %v2079 = vmul.f32 %v2076, %v2078
    %v2080 = vadd.f32 %v2079, -0.16666654
    %v2081 = vmul.f32 %v2076, %v2080
    %v2082 = vadd.f32 %v2081, 1.0
    %v2083 = vmul.f32 %v2082, %v2067
    %vm2084 = vweird.f32 %v224
    %v2085 = vand.u32 %v2068, 3
    %vm2086 = vcmp.lt.s32.totalorder %v2085, 2
    %vm2087 = vcmp.eq.s32.totalorder %v2085, 0
    %v2088 = vxor.u32 %v2083, 2147483648
    %v2089 = vsel %vm2087, %v2075, %v2088
    %vm2090 = vcmp.eq.s32.totalorder %v2085, 2
    %v2091 = vxor.u32 %v2075, 2147483648
    %v2092 = vsel %vm2090, %v2091, %v2083
    %v2093 = vsel %vm2086, %v2089, %v2092
    %v2094 = vsel %vm2084, nan, %v2093
    %v2095 = vand.u32 2147483647, %v225
    %vm2096 = vcmp.le.f32.partialorder %v2095, 0.7853982
    %vm2097 = vcmp.lt.s32.totalorder %v225, 0
    %v2098 = vand.u32 %v225, 2139095040
    %v2099 = vshrl.u32 %v2098, 23
    %v2100 = vsub.s32 %v2099, 127
    %v2101 = vand.u32 2147483647, %v225
    %v2102 = vand.u32 %v2101, 8388607
    %v2103 = vor.u32 %v2102, 8388608
    %v2104 = vsub.s32 0, %v2103
    %v2105 = vadd.s32 %v2100, 1
    %vm2106 = vcmp.gt.s32.totalorder %v2105, 0
    %v2107 = vsel %vm2106, %v2105, 0
    %v2108 = vshrl.u32 %v2107, 5
    %v2109 = vand.u32 %v2107, 31
    %v2110 = vsub.s32 32, %v2109
    %v2111 = vshrl.u32 683565275, %v2110
    %v2112 = vshll.u32 683565275, %v2109
    %v2113 = vshrl.u32 2475754826, %v2110
    %v2114 = vor.u32 %v2112, %v2113
    %v2115 = vshll.u32 2475754826, %v2109
    %v2116 = vshrl.u32 2131351028, %v2110
    %v2117 = vor.u32 %v2115, %v2116
    %v2118 = vshll.u32 2131351028, %v2109
    %v2119 = vshrl.u32 2102212464, %v2110
    %v2120 = vor.u32 %v2118, %v2119
    %v2121 = vshll.u32 2102212464, %v2109
    %v2122 = vshrl.u32 920167782, %v2110
    %v2123 = vor.u32 %v2121, %v2122
    %v2124 = vshll.u32 920167782, %v2109
    %v2125 = vshrl.u32 1326507024, %v2110
    %v2126 = vor.u32 %v2124, %v2125
    %vm2127 = vcmp.lt.s32.totalorder %v2108, 1
    %vm2128 = vcmp.lt.s32.totalorder %v2108, 2
    %vm2129 = vcmp.lt.s32.totalorder %v2108, 3
    %vm2130 = vcmp.lt.s32.totalorder %v2108, 4
    %v2131 = vsel %vm2127, %v2111, %v2114
    %v2132 = vsel %vm2130, %v2120, 2102212464
    %v2133 = vsel %vm2129, %v2117, %v2132
    %v2134 = vsel %vm2128, %v2131, %v2133
    %v2135 = vsel %vm2127, %v2114, %v2117
    %v2136 = vsel %vm2130, %v2123, 920167782
    %v2137 = vsel %vm2129, %v2120, %v2136
    %v2138 = vsel %vm2128, %v2135, %v2137
    %v2139 = vsel %vm2127, %v2117, %v2120
    %v2140 = vsel %vm2130, %v2126, 1326507024
    %v2141 = vsel %vm2129, %v2123, %v2140
    %v2142 = vsel %vm2128, %v2139, %v2141
    %v2143 = vshll.u32 %v2103, 8
    %v2144 = vand.u32 %v2143, 65535
    %v2145 = vshrl.u32 %v2143, 16
    %v2146 = vand.u32 %v2142, 65535
    %v2147 = vshrl.u32 %v2142, 16
    %v2148 = vmul.u32 %v2144, %v2146
    %v2149 = vmul.u32 %v2144, %v2147
    %v2150 = vmul.u32 %v2145, %v2146
    %v2151 = vmul.u32 %v2145, %v2147
    %v2152 = vshll.u32 %v2149, 16
    %v2153 = vshrl.u32 %v2149, 16
    %v2154 = vshll.u32 %v2150, 16
    %v2155 = vshrl.u32 %v2150, 16
    %vm2156 = vc.u32 %v2148, %v2152
    %v2157 = vsel %vm2156, 1, 0
    %v2158 = vadd.s32 %v2148, %v2152
    %v2159 = vadd.s32 %v2151, %v2157
    %vm2160 = vc.u32 %v2158, %v2154
    %v2161 = vsel %vm2160, 1, 0
    %v2162 = vadd.s32 %v2158, %v2154
    %v2163 = vadd.s32 %v2159, %v2161
    %v2164 = vadd.s32 %v2163, %v2153
    %v2165 = vadd.s32 %v2164, %v2155
    %v2166 = vand.u32 %v2143, 65535
    %v2167 = vshrl.u32 %v2143, 16
    %v2168 = vand.u32 %v2138, 65535
    %v2169 = vshrl.u32 %v2138, 16
    %v2170 = vmul.u32 %v2166, %v2168
    %v2171 = vmul.u32 %v2166, %v2169
    %v2172 = vmul.u32 %v2167, %v2168
    %v2173 = vmul.u32 %v2167, %v2169
    %v2174 = vshll.u32 %v2171, 16
    %v2175 = vshrl.u32 %v2171, 16
    %v2176 = vshll.u32 %v2172, 16
    %v2177 = vshrl.u32 %v2172, 16
    %vm2178 = vc.u32 %v2170, %v2174
    %v2179 = vsel %vm2178, 1, 0
    %v2180 = vadd.s32 %v2170, %v2174
    %v2181 = vadd.s32 %v2173, %v2179
    %vm2182 = vc.u32 %v2180, %v2176
    %v2183 = vsel %vm2182, 1, 0
    %v2184 = vadd.s32 %v2180, %v2176
    %v2185 = vadd.s32 %v2181, %v2183
    %v2186 = vadd.s32 %v2185, %v2175
    %v2187 = vadd.s32 %v2186, %v2177
    %v2188 = vmul.u32 %v2143, %v2134
    %v2189 = vadd.s32 %v2165, %v2184
    %vm2190 = vc.u32 %v2165, %v2184
    %v2191 = vadd.s32 %v2187, 1
    %v2192 = vsel %vm2190, %v2191, %v2187
    %v2193 = vadd.s32 %v2188, %v2192
    %v2194 = vadd.s32 %v2193, 536870912
    %v2195 = vshrl.u32 %v2194, 30
    %v2196 = vshll.u32 %v2195, 30
    %v2197 = vsub.s32 %v2193, %v2196
    %vm2198 = vcmp.lt.s32.totalorder %v2197, 0
    %v2199 = vsub.s32 0, %v2197
    %v2200 = vsel %vm2198, %v2199, %v2197
    %v2201 = vclz %v2200
    %v2202 = vsub.s32 %v2201, 2
    %vm2203 = vcmp.gt.s32.totalorder 0, %v2202
    %v2204 = vsel %vm2203, 0, %v2202
    %v2205 = vsub.s32 32, %v2204
    %v2206 = vshll.u32 %v2197, %v2204
    %v2207 = vshrl.u32 %v2189, %v2205
    %v2208 = vor.u32 %v2206, %v2207
    %v2209 = vsub.s32 4294967266, %v2204
    %v2210 = vadd.s32 %v2209, 127
    %v2211 = vshll.u32 %v2210, 23
    %v2212 = vor.u32 4788187, %v2211
    %v2213 = vand.u32 2147483647, %v2212
    %v2215 = vcvt.s32.f32 %v2208
    %v2216 = vmul.f32 %v2215, %v2213
    %v2217 = vxor.u32 %v2216, 2147483648
    %v2218 = vsel %vm2097, %v2217, %v2216
    %v2219 = vsub.s32 4, %v2195
    %v2220 = vsel %vm2097, %v2219, %v2195
    %v2221 = vsel %vm2096, %v225, %v2218
    %v2222 = vsel %vm2096, 0, %v2220
    %v2223 = vmul.f32 %v2221, %v2221
    %v2224 = vmul.f32 %v2223, -0.001358992
    %v2225 = vadd.f32 %v2224, 0.041655596
    %v2226 = vmul.f32 %v2223, %v2225
    %v2227 = vadd.f32 %v2226, -0.4999988
    %v2228 = vmul.f32 %v2223, %v2227
    %v2229 = vadd.f32 1.0, %v2228
    %v2230 = vmul.f32 %v2221, %v2221
    %v2231 = vmul.f32 %v2230, -0.00019511016
    %v2232 = vadd.f32 %v2231, 0.008332121
    %v2233 = vmul.f32 %v2230, %v2232
    %v2234 = vadd.f32 %v2233, -0.16666654
    %v2235 = vmul.f32 %v2230, %v2234
    %v2236 = vadd.f32 %v2235, 1.0
    %v2237 = vmul.f32 %v2236, %v2221
    %vm2238 = vweird.f32 %v225
    %v2239 = vand.u32 %v2222, 3
    %vm2240 = vcmp.lt.s32.totalorder %v2239, 2
    %vm2241 = vcmp.eq.s32.totalorder %v2239, 0
    %v2242 = vxor.u32 %v2237, 2147483648
    %v2243 = vsel %vm2241, %v2229, %v2242
    %vm2244 = vcmp.eq.s32.totalorder %v2239, 2
    %v2245 = vxor.u32 %v2229, 2147483648
    %v2246 = vsel %vm2244, %v2245, %v2237
    %v2247 = vsel %vm2240, %v2243, %v2246
    %v2248 = vsel %vm2238, nan, %v2247
    %v2249 = vand.u32 2147483647, %v226
    %vm2250 = vcmp.le.f32.partialorder %v2249, 0.7853982
    %vm2251 = vcmp.lt.s32.totalorder %v226, 0
    %v2252 = vand.u32 %v226, 2139095040
    %v2253 = vshrl.u32 %v2252, 23
    %v2254 = vsub.s32 %v2253, 127
    %v2255 = vand.u32 2147483647, %v226
    %v2256 = vand.u32 %v2255, 8388607
    %v2257 = vor.u32 %v2256, 8388608
    %v2258 = vsub.s32 0, %v2257
    %v2259 = vadd.s32 %v2254, 1
    %vm2260 = vcmp.gt.s32.totalorder %v2259, 0
    %v2261 = vsel %vm2260, %v2259, 0
    %v2262 = vshrl.u32 %v2261, 5
    %v2263 = vand.u32 %v2261, 31
    %v2264 = vsub.s32 32, %v2263
    %v2265 = vshrl.u32 683565275, %v2264
    %v2266 = vshll.u32 683565275, %v2263
    %v2267 = vshrl.u32 2475754826, %v2264
    %v2268 = vor.u32 %v2266, %v2267
    %v2269 = vshll.u32 2475754826, %v2263
    %v2270 = vshrl.u32 2131351028, %v2264
    %v2271 = vor.u32 %v2269, %v2270
    %v2272 = vshll.u32 2131351028, %v2263
    %v2273 = vshrl.u32 2102212464, %v2264
    %v2274 = vor.u32 %v2272, %v2273
    %v2275 = vshll.u32 2102212464, %v2263
    %v2276 = vshrl.u32 920167782, %v2264
    %v2277 = vor.u32 %v2275, %v2276
    %v2278 = vshll.u32 920167782, %v2263
    %v2279 = vshrl.u32 1326507024, %v2264
    %v2280 = vor.u32 %v2278, %v2279
    %vm2281 = vcmp.lt.s32.totalorder %v2262, 1
    %vm2282 = vcmp.lt.s32.totalorder %v2262, 2
    %vm2283 = vcmp.lt.s32.totalorder %v2262, 3
    %vm2284 = vcmp.lt.s32.totalorder %v2262, 4
    %v2285 = vsel %vm2281, %v2265, %v2268
    %v2286 = vsel %vm2284, %v2274, 2102212464
    %v2287 = vsel %vm2283, %v2271, %v2286
    %v2288 = vsel %vm2282, %v2285, %v2287
    %v2289 = vsel %vm2281, %v2268, %v2271
    %v2290 = vsel %vm2284, %v2277, 920167782
    %v2291 = vsel %vm2283, %v2274, %v2290
    %v2292 = vsel %vm2282, %v2289, %v2291
    %v2293 = vsel %vm2281, %v2271, %v2274
    %v2294 = vsel %vm2284, %v2280, 1326507024
    %v2295 = vsel %vm2283, %v2277, %v2294
    %v2296 = vsel %vm2282, %v2293, %v2295
    %v2297 = vshll.u32 %v2257, 8
    %v2298 = vand.u32 %v2297, 65535
    %v2299 = vshrl.u32 %v2297, 16
    %v2300 = vand.u32 %v2296, 65535
    %v2301 = vshrl.u32 %v2296, 16
    %v2302 = vmul.u32 %v2298, %v2300
    %v2303 = vmul.u32 %v2298, %v2301
    %v2304 = vmul.u32 %v2299, %v2300
    %v2305 = vmul.u32 %v2299, %v2301
    %v2306 = vshll.u32 %v2303, 16
    %v2307 = vshrl.u32 %v2303, 16
    %v2308 = vshll.u32 %v2304, 16
    %v2309 = vshrl.u32 %v2304, 16
    %vm2310 = vc.u32 %v2302, %v2306
    %v2311 = vsel %vm2310, 1, 0
    %v2312 = vadd.s32 %v2302, %v2306
    %v2313 = vadd.s32 %v2305, %v2311
    %vm2314 = vc.u32 %v2312, %v2308
    %v2315 = vsel %vm2314, 1, 0
    %v2316 = vadd.s32 %v2312, %v2308
    %v2317 = vadd.s32 %v2313, %v2315
    %v2318 = vadd.s32 %v2317, %v2307
    %v2319 = vadd.s32 %v2318, %v2309
    %v2320 = vand.u32 %v2297, 65535
    %v2321 = vshrl.u32 %v2297, 16
    %v2322 = vand.u32 %v2292, 65535
    %v2323 = vshrl.u32 %v2292, 16
    %v2324 = vmul.u32 %v2320, %v2322
    %v2325 = vmul.u32 %v2320, %v2323
    %v2326 = vmul.u32 %v2321, %v2322
    %v2327 = vmul.u32 %v2321, %v2323
    %v2328 = vshll.u32 %v2325, 16
    %v2329 = vshrl.u32 %v2325, 16
    %v2330 = vshll.u32 %v2326, 16
    %v2331 = vshrl.u32 %v2326, 16
    %vm2332 = vc.u32 %v2324, %v2328
    %v2333 = vsel %vm2332, 1, 0
    %v2334 = vadd.s32 %v2324, %v2328
    %v2335 = vadd.s32 %v2327, %v2333
    %vm2336 = vc.u32 %v2334, %v2330
    %v2337 = vsel %vm2336, 1, 0
    %v2338 = vadd.s32 %v2334, %v2330
    %v2339 = vadd.s32 %v2335, %v2337
    %v2340 = vadd.s32 %v2339, %v2329
    %v2341 = vadd.s32 %v2340, %v2331
    %v2342 = vmul.u32 %v2297, %v2288
    %v2343 = vadd.s32 %v2319, %v2338
    %vm2344 = vc.u32 %v2319, %v2338
    %v2345 = vadd.s32 %v2341, 1
    %v2346 = vsel %vm2344, %v2345, %v2341
    %v2347 = vadd.s32 %v2342, %v2346
    %v2348 = vadd.s32 %v2347, 536870912
    %v2349 = vshrl.u32 %v2348, 30
    %v2350 = vshll.u32 %v2349, 30
    %v2351 = vsub.s32 %v2347, %v2350
    %vm2352 = vcmp.lt.s32.totalorder %v2351, 0
    %v2353 = vsub.s32 0, %v2351
    %v2354 = vsel %vm2352, %v2353, %v2351
    %v2355 = vclz %v2354
    %v2356 = vsub.s32 %v2355, 2
    %vm2357 = vcmp.gt.s32.totalorder 0, %v2356
    %v2358 = vsel %vm2357, 0, %v2356
    %v2359 = vsub.s32 32, %v2358
    %v2360 = vshll.u32 %v2351, %v2358
    %v2361 = vshrl.u32 %v2343, %v2359
    %v2362 = vor.u32 %v2360, %v2361
    %v2363 = vsub.s32 4294967266, %v2358
    %v2364 = vadd.s32 %v2363, 127
    %v2365 = vshll.u32 %v2364, 23
    %v2366 = vor.u32 4788187, %v2365
    %v2367 = vand.u32 2147483647, %v2366
    %v2369 = vcvt.s32.f32 %v2362
    %v2370 = vmul.f32 %v2369, %v2367
    %v2371 = vxor.u32 %v2370, 2147483648
    %v2372 = vsel %vm2251, %v2371, %v2370
    %v2373 = vsub.s32 4, %v2349
    %v2374 = vsel %vm2251, %v2373, %v2349
    %v2375 = vsel %vm2250, %v226, %v2372
    %v2376 = vsel %vm2250, 0, %v2374
    %v2377 = vmul.f32 %v2375, %v2375
    %v2378 = vmul.f32 %v2377, -0.001358992
    %v2379 = vadd.f32 %v2378, 0.041655596
    %v2380 = vmul.f32 %v2377, %v2379
    %v2381 = vadd.f32 %v2380, -0.4999988
    %v2382 = vmul.f32 %v2377, %v2381
    %v2383 = vadd.f32 1.0, %v2382
    %v2384 = vmul.f32 %v2375, %v2375
    %v2385 = vmul.f32 %v2384, -0.00019511016
    %v2386 = vadd.f32 %v2385, 0.008332121
    %v2387 = vmul.f32 %v2384, %v2386
    %v2388 = vadd.f32 %v2387, -0.16666654
    %v2389 = vmul.f32 %v2384, %v2388
    %v2390 = vadd.f32 %v2389, 1.0
    %v2391 = vmul.f32 %v2390, %v2375
    %vm2392 = vweird.f32 %v226
    %v2393 = vand.u32 %v2376, 3
    %vm2394 = vcmp.lt.s32.totalorder %v2393, 2
    %vm2395 = vcmp.eq.s32.totalorder %v2393, 0
    %v2396 = vxor.u32 %v2391, 2147483648
    %v2397 = vsel %vm2395, %v2383, %v2396
    %vm2398 = vcmp.eq.s32.totalorder %v2393, 2
    %v2399 = vxor.u32 %v2383, 2147483648
    %v2400 = vsel %vm2398, %v2399, %v2391
    %v2401 = vsel %vm2394, %v2397, %v2400
    %v2402 = vsel %vm2392, nan, %v2401
    %v2403 = vand.u32 2147483647, %v227
    %vm2404 = vcmp.le.f32.partialorder %v2403, 0.7853982
    %vm2405 = vcmp.lt.s32.totalorder %v227, 0
    %v2406 = vand.u32 %v227, 2139095040
    %v2407 = vshrl.u32 %v2406, 23
    %v2408 = vsub.s32 %v2407, 127
    %v2409 = vand.u32 2147483647, %v227
    %v2410 = vand.u32 %v2409, 8388607
    %v2411 = vor.u32 %v2410, 8388608
    %v2412 = vsub.s32 0, %v2411
    %v2413 = vadd.s32 %v2408, 1
    %vm2414 = vcmp.gt.s32.totalorder %v2413, 0
    %v2415 = vsel %vm2414, %v2413, 0
    %v2416 = vshrl.u32 %v2415, 5
    %v2417 = vand.u32 %v2415, 31
    %v2418 = vsub.s32 32, %v2417
    %v2419 = vshrl.u32 683565275, %v2418
    %v2420 = vshll.u32 683565275, %v2417
    %v2421 = vshrl.u32 2475754826, %v2418
    %v2422 = vor.u32 %v2420, %v2421
    %v2423 = vshll.u32 2475754826, %v2417
    %v2424 = vshrl.u32 2131351028, %v2418
    %v2425 = vor.u32 %v2423, %v2424
    %v2426 = vshll.u32 2131351028, %v2417
    %v2427 = vshrl.u32 2102212464, %v2418
    %v2428 = vor.u32 %v2426, %v2427
    %v2429 = vshll.u32 2102212464, %v2417
    %v2430 = vshrl.u32 920167782, %v2418
    %v2431 = vor.u32 %v2429, %v2430
    %v2432 = vshll.u32 920167782, %v2417
    %v2433 = vshrl.u32 1326507024, %v2418
    %v2434 = vor.u32 %v2432, %v2433
    %vm2435 = vcmp.lt.s32.totalorder %v2416, 1
    %vm2436 = vcmp.lt.s32.totalorder %v2416, 2
    %vm2437 = vcmp.lt.s32.totalorder %v2416, 3
    %vm2438 = vcmp.lt.s32.totalorder %v2416, 4
    %v2439 = vsel %vm2435, %v2419, %v2422
    %v2440 = vsel %vm2438, %v2428, 2102212464
    %v2441 = vsel %vm2437, %v2425, %v2440
    %v2442 = vsel %vm2436, %v2439, %v2441
    %v2443 = vsel %vm2435, %v2422, %v2425
    %v2444 = vsel %vm2438, %v2431, 920167782
    %v2445 = vsel %vm2437, %v2428, %v2444
    %v2446 = vsel %vm2436, %v2443, %v2445
    %v2447 = vsel %vm2435, %v2425, %v2428
    %v2448 = vsel %vm2438, %v2434, 1326507024
    %v2449 = vsel %vm2437, %v2431, %v2448
    %v2450 = vsel %vm2436, %v2447, %v2449
    %v2451 = vshll.u32 %v2411, 8
    %v2452 = vand.u32 %v2451, 65535
    %v2453 = vshrl.u32 %v2451, 16
    %v2454 = vand.u32 %v2450, 65535
    %v2455 = vshrl.u32 %v2450, 16
    %v2456 = vmul.u32 %v2452, %v2454
    %v2457 = vmul.u32 %v2452, %v2455
    %v2458 = vmul.u32 %v2453, %v2454
    %v2459 = vmul.u32 %v2453, %v2455
    %v2460 = vshll.u32 %v2457, 16
    %v2461 = vshrl.u32 %v2457, 16
    %v2462 = vshll.u32 %v2458, 16
    %v2463 = vshrl.u32 %v2458, 16
    %vm2464 = vc.u32 %v2456, %v2460
    %v2465 = vsel %vm2464, 1, 0
    %v2466 = vadd.s32 %v2456, %v2460
    %v2467 = vadd.s32 %v2459, %v2465
    %vm2468 = vc.u32 %v2466, %v2462
    %v2469 = vsel %vm2468, 1, 0
    %v2470 = vadd.s32 %v2466, %v2462
    %v2471 = vadd.s32 %v2467, %v2469
    %v2472 = vadd.s32 %v2471, %v2461
    %v2473 = vadd.s32 %v2472, %v2463
    %v2474 = vand.u32 %v2451, 65535
    %v2475 = vshrl.u32 %v2451, 16
    %v2476 = vand.u32 %v2446, 65535
    %v2477 = vshrl.u32 %v2446, 16
    %v2478 = vmul.u32 %v2474, %v2476
    %v2479 = vmul.u32 %v2474, %v2477
    %v2480 = vmul.u32 %v2475, %v2476
    %v2481 = vmul.u32 %v2475, %v2477
    %v2482 = vshll.u32 %v2479, 16
    %v2483 = vshrl.u32 %v2479, 16
    %v2484 = vshll.u32 %v2480, 16
    %v2485 = vshrl.u32 %v2480, 16
    %vm2486 = vc.u32 %v2478, %v2482
    %v2487 = vsel %vm2486, 1, 0
    %v2488 = vadd.s32 %v2478, %v2482
    %v2489 = vadd.s32 %v2481, %v2487
    %vm2490 = vc.u32 %v2488, %v2484
    %v2491 = vsel %vm2490, 1, 0
    %v2492 = vadd.s32 %v2488, %v2484
    %v2493 = vadd.s32 %v2489, %v2491
    %v2494 = vadd.s32 %v2493, %v2483
    %v2495 = vadd.s32 %v2494, %v2485
    %v2496 = vmul.u32 %v2451, %v2442
    %v2497 = vadd.s32 %v2473, %v2492
    %vm2498 = vc.u32 %v2473, %v2492
    %v2499 = vadd.s32 %v2495, 1
    %v2500 = vsel %vm2498, %v2499, %v2495
    %v2501 = vadd.s32 %v2496, %v2500
    %v2502 = vadd.s32 %v2501, 536870912
    %v2503 = vshrl.u32 %v2502, 30
    %v2504 = vshll.u32 %v2503, 30
    %v2505 = vsub.s32 %v2501, %v2504
    %vm2506 = vcmp.lt.s32.totalorder %v2505, 0
    %v2507 = vsub.s32 0, %v2505
    %v2508 = vsel %vm2506, %v2507, %v2505
    %v2509 = vclz %v2508
    %v2510 = vsub.s32 %v2509, 2
    %vm2511 = vcmp.gt.s32.totalorder 0, %v2510
    %v2512 = vsel %vm2511, 0, %v2510
    %v2513 = vsub.s32 32, %v2512
    %v2514 = vshll.u32 %v2505, %v2512
    %v2515 = vshrl.u32 %v2497, %v2513
    %v2516 = vor.u32 %v2514, %v2515
    %v2517 = vsub.s32 4294967266, %v2512
    %v2518 = vadd.s32 %v2517, 127
    %v2519 = vshll.u32 %v2518, 23
    %v2520 = vor.u32 4788187, %v2519
    %v2521 = vand.u32 2147483647, %v2520
    %v2523 = vcvt.s32.f32 %v2516
    %v2524 = vmul.f32 %v2523, %v2521
    %v2525 = vxor.u32 %v2524, 2147483648
    %v2526 = vsel %vm2405, %v2525, %v2524
    %v2527 = vsub.s32 4, %v2503
    %v2528 = vsel %vm2405, %v2527, %v2503
    %v2529 = vsel %vm2404, %v227, %v2526
    %v2530 = vsel %vm2404, 0, %v2528
    %v2531 = vmul.f32 %v2529, %v2529
    %v2532 = vmul.f32 %v2531, -0.001358992
    %v2533 = vadd.f32 %v2532, 0.041655596
    %v2534 = vmul.f32 %v2531, %v2533
    %v2535 = vadd.f32 %v2534, -0.4999988
    %v2536 = vmul.f32 %v2531, %v2535
    %v2537 = vadd.f32 1.0, %v2536
    %v2538 = vmul.f32 %v2529, %v2529
    %v2539 = vmul.f32 %v2538, -0.00019511016
    %v2540 = vadd.f32 %v2539, 0.008332121
    %v2541 = vmul.f32 %v2538, %v2540
    %v2542 = vadd.f32 %v2541, -0.16666654
    %v2543 = vmul.f32 %v2538, %v2542
    %v2544 = vadd.f32 %v2543, 1.0
    %v2545 = vmul.f32 %v2544, %v2529
    %vm2546 = vweird.f32 %v227
    %v2547 = vand.u32 %v2530, 3
    %vm2548 = vcmp.lt.s32.totalorder %v2547, 2
    %vm2549 = vcmp.eq.s32.totalorder %v2547, 0
    %v2550 = vxor.u32 %v2545, 2147483648
    %v2551 = vsel %vm2549, %v2537, %v2550
    %vm2552 = vcmp.eq.s32.totalorder %v2547, 2
    %v2553 = vxor.u32 %v2537, 2147483648
    %v2554 = vsel %vm2552, %v2553, %v2545
    %v2555 = vsel %vm2548, %v2551, %v2554
    %v2556 = vsel %vm2546, nan, %v2555
    %v2557 = vand.u32 2147483647, %v228
    %vm2558 = vcmp.le.f32.partialorder %v2557, 0.7853982
    %vm2559 = vcmp.lt.s32.totalorder %v228, 0
    %v2560 = vand.u32 %v228, 2139095040
    %v2561 = vshrl.u32 %v2560, 23
    %v2562 = vsub.s32 %v2561, 127
    %v2563 = vand.u32 2147483647, %v228
    %v2564 = vand.u32 %v2563, 8388607
    %v2565 = vor.u32 %v2564, 8388608
    %v2566 = vsub.s32 0, %v2565
    %v2567 = vadd.s32 %v2562, 1
    %vm2568 = vcmp.gt.s32.totalorder %v2567, 0
    %v2569 = vsel %vm2568, %v2567, 0
    %v2570 = vshrl.u32 %v2569, 5
    %v2571 = vand.u32 %v2569, 31
    %v2572 = vsub.s32 32, %v2571
    %v2573 = vshrl.u32 683565275, %v2572
    %v2574 = vshll.u32 683565275, %v2571
    %v2575 = vshrl.u32 2475754826, %v2572
    %v2576 = vor.u32 %v2574, %v2575
    %v2577 = vshll.u32 2475754826, %v2571
    %v2578 = vshrl.u32 2131351028, %v2572
    %v2579 = vor.u32 %v2577, %v2578
    %v2580 = vshll.u32 2131351028, %v2571
    %v2581 = vshrl.u32 2102212464, %v2572
    %v2582 = vor.u32 %v2580, %v2581
    %v2583 = vshll.u32 2102212464, %v2571
    %v2584 = vshrl.u32 920167782, %v2572
    %v2585 = vor.u32 %v2583, %v2584
    %v2586 = vshll.u32 920167782, %v2571
    %v2587 = vshrl.u32 1326507024, %v2572
    %v2588 = vor.u32 %v2586, %v2587
    %vm2589 = vcmp.lt.s32.totalorder %v2570, 1
    %vm2590 = vcmp.lt.s32.totalorder %v2570, 2
    %vm2591 = vcmp.lt.s32.totalorder %v2570, 3
    %vm2592 = vcmp.lt.s32.totalorder %v2570, 4
    %v2593 = vsel %vm2589, %v2573, %v2576
    %v2594 = vsel %vm2592, %v2582, 2102212464
    %v2595 = vsel %vm2591, %v2579, %v2594
    %v2596 = vsel %vm2590, %v2593, %v2595
    %v2597 = vsel %vm2589, %v2576, %v2579
    %v2598 = vsel %vm2592, %v2585, 920167782
    %v2599 = vsel %vm2591, %v2582, %v2598
    %v2600 = vsel %vm2590, %v2597, %v2599
    %v2601 = vsel %vm2589, %v2579, %v2582
    %v2602 = vsel %vm2592, %v2588, 1326507024
    %v2603 = vsel %vm2591, %v2585, %v2602
    %v2604 = vsel %vm2590, %v2601, %v2603
    %v2605 = vshll.u32 %v2565, 8
    %v2606 = vand.u32 %v2605, 65535
    %v2607 = vshrl.u32 %v2605, 16
    %v2608 = vand.u32 %v2604, 65535
    %v2609 = vshrl.u32 %v2604, 16
    %v2610 = vmul.u32 %v2606, %v2608
    %v2611 = vmul.u32 %v2606, %v2609
    %v2612 = vmul.u32 %v2607, %v2608
    %v2613 = vmul.u32 %v2607, %v2609
    %v2614 = vshll.u32 %v2611, 16
    %v2615 = vshrl.u32 %v2611, 16
    %v2616 = vshll.u32 %v2612, 16
    %v2617 = vshrl.u32 %v2612, 16
    %vm2618 = vc.u32 %v2610, %v2614
    %v2619 = vsel %vm2618, 1, 0
    %v2620 = vadd.s32 %v2610, %v2614
    %v2621 = vadd.s32 %v2613, %v2619
    %vm2622 = vc.u32 %v2620, %v2616
    %v2623 = vsel %vm2622, 1, 0
    %v2624 = vadd.s32 %v2620, %v2616
    %v2625 = vadd.s32 %v2621, %v2623
    %v2626 = vadd.s32 %v2625, %v2615
    %v2627 = vadd.s32 %v2626, %v2617
    %v2628 = vand.u32 %v2605, 65535
    %v2629 = vshrl.u32 %v2605, 16
    %v2630 = vand.u32 %v2600, 65535
    %v2631 = vshrl.u32 %v2600, 16
    %v2632 = vmul.u32 %v2628, %v2630
    %v2633 = vmul.u32 %v2628, %v2631
    %v2634 = vmul.u32 %v2629, %v2630
    %v2635 = vmul.u32 %v2629, %v2631
    %v2636 = vshll.u32 %v2633, 16
    %v2637 = vshrl.u32 %v2633, 16
    %v2638 = vshll.u32 %v2634, 16
    %v2639 = vshrl.u32 %v2634, 16
    %vm2640 = vc.u32 %v2632, %v2636
    %v2641 = vsel %vm2640, 1, 0
    %v2642 = vadd.s32 %v2632, %v2636
    %v2643 = vadd.s32 %v2635, %v2641
    %vm2644 = vc.u32 %v2642, %v2638
    %v2645 = vsel %vm2644, 1, 0
    %v2646 = vadd.s32 %v2642, %v2638
    %v2647 = vadd.s32 %v2643, %v2645
    %v2648 = vadd.s32 %v2647, %v2637
    %v2649 = vadd.s32 %v2648, %v2639
    %v2650 = vmul.u32 %v2605, %v2596
    %v2651 = vadd.s32 %v2627, %v2646
    %vm2652 = vc.u32 %v2627, %v2646
    %v2653 = vadd.s32 %v2649, 1
    %v2654 = vsel %vm2652, %v2653, %v2649
    %v2655 = vadd.s32 %v2650, %v2654
    %v2656 = vadd.s32 %v2655, 536870912
    %v2657 = vshrl.u32 %v2656, 30
    %v2658 = vshll.u32 %v2657, 30
    %v2659 = vsub.s32 %v2655, %v2658
    %vm2660 = vcmp.lt.s32.totalorder %v2659, 0
    %v2661 = vsub.s32 0, %v2659
    %v2662 = vsel %vm2660, %v2661, %v2659
    %v2663 = vclz %v2662
    %v2664 = vsub.s32 %v2663, 2
    %vm2665 = vcmp.gt.s32.totalorder 0, %v2664
    %v2666 = vsel %vm2665, 0, %v2664
    %v2667 = vsub.s32 32, %v2666
    %v2668 = vshll.u32 %v2659, %v2666
    %v2669 = vshrl.u32 %v2651, %v2667
    %v2670 = vor.u32 %v2668, %v2669
    %v2671 = vsub.s32 4294967266, %v2666
    %v2672 = vadd.s32 %v2671, 127
    %v2673 = vshll.u32 %v2672, 23
    %v2674 = vor.u32 4788187, %v2673
    %v2675 = vand.u32 2147483647, %v2674
    %v2677 = vcvt.s32.f32 %v2670
    %v2678 = vmul.f32 %v2677, %v2675
    %v2679 = vxor.u32 %v2678, 2147483648
    %v2680 = vsel %vm2559, %v2679, %v2678
    %v2681 = vsub.s32 4, %v2657
    %v2682 = vsel %vm2559, %v2681, %v2657
    %v2683 = vsel %vm2558, %v228, %v2680
    %v2684 = vsel %vm2558, 0, %v2682
    %v2685 = vmul.f32 %v2683, %v2683
    %v2686 = vmul.f32 %v2685, -0.001358992
    %v2687 = vadd.f32 %v2686, 0.041655596
    %v2688 = vmul.f32 %v2685, %v2687
    %v2689 = vadd.f32 %v2688, -0.4999988
    %v2690 = vmul.f32 %v2685, %v2689
    %v2691 = vadd.f32 1.0, %v2690
    %v2692 = vmul.f32 %v2683, %v2683
    %v2693 = vmul.f32 %v2692, -0.00019511016
    %v2694 = vadd.f32 %v2693, 0.008332121
    %v2695 = vmul.f32 %v2692, %v2694
    %v2696 = vadd.f32 %v2695, -0.16666654
    %v2697 = vmul.f32 %v2692, %v2696
    %v2698 = vadd.f32 %v2697, 1.0
    %v2699 = vmul.f32 %v2698, %v2683
    %vm2700 = vweird.f32 %v228
    %v2701 = vand.u32 %v2684, 3
    %vm2702 = vcmp.lt.s32.totalorder %v2701, 2
    %vm2703 = vcmp.eq.s32.totalorder %v2701, 0
    %v2704 = vxor.u32 %v2699, 2147483648
    %v2705 = vsel %vm2703, %v2691, %v2704
    %vm2706 = vcmp.eq.s32.totalorder %v2701, 2
    %v2707 = vxor.u32 %v2691, 2147483648
    %v2708 = vsel %vm2706, %v2707, %v2699
    %v2709 = vsel %vm2702, %v2705, %v2708
    %v2710 = vsel %vm2700, nan, %v2709
    %v2711 = vand.u32 2147483647, %v229
    %vm2712 = vcmp.le.f32.partialorder %v2711, 0.7853982
    %vm2713 = vcmp.lt.s32.totalorder %v229, 0
    %v2714 = vand.u32 %v229, 2139095040
    %v2715 = vshrl.u32 %v2714, 23
    %v2716 = vsub.s32 %v2715, 127
    %v2717 = vand.u32 2147483647, %v229
    %v2718 = vand.u32 %v2717, 8388607
    %v2719 = vor.u32 %v2718, 8388608
    %v2720 = vsub.s32 0, %v2719
    %v2721 = vadd.s32 %v2716, 1
    %vm2722 = vcmp.gt.s32.totalorder %v2721, 0
    %v2723 = vsel %vm2722, %v2721, 0
    %v2724 = vshrl.u32 %v2723, 5
    %v2725 = vand.u32 %v2723, 31
    %v2726 = vsub.s32 32, %v2725
    %v2727 = vshrl.u32 683565275, %v2726
    %v2728 = vshll.u32 683565275, %v2725
    %v2729 = vshrl.u32 2475754826, %v2726
    %v2730 = vor.u32 %v2728, %v2729
    %v2731 = vshll.u32 2475754826, %v2725
    %v2732 = vshrl.u32 2131351028, %v2726
    %v2733 = vor.u32 %v2731, %v2732
    %v2734 = vshll.u32 2131351028, %v2725
    %v2735 = vshrl.u32 2102212464, %v2726
    %v2736 = vor.u32 %v2734, %v2735
    %v2737 = vshll.u32 2102212464, %v2725
    %v2738 = vshrl.u32 920167782, %v2726
    %v2739 = vor.u32 %v2737, %v2738
    %v2740 = vshll.u32 920167782, %v2725
    %v2741 = vshrl.u32 1326507024, %v2726
    %v2742 = vor.u32 %v2740, %v2741
    %vm2743 = vcmp.lt.s32.totalorder %v2724, 1
    %vm2744 = vcmp.lt.s32.totalorder %v2724, 2
    %vm2745 = vcmp.lt.s32.totalorder %v2724, 3
    %vm2746 = vcmp.lt.s32.totalorder %v2724, 4
    %v2747 = vsel %vm2743, %v2727, %v2730
    %v2748 = vsel %vm2746, %v2736, 2102212464
    %v2749 = vsel %vm2745, %v2733, %v2748
    %v2750 = vsel %vm2744, %v2747, %v2749
    %v2751 = vsel %vm2743, %v2730, %v2733
    %v2752 = vsel %vm2746, %v2739, 920167782
    %v2753 = vsel %vm2745, %v2736, %v2752
    %v2754 = vsel %vm2744, %v2751, %v2753
    %v2755 = vsel %vm2743, %v2733, %v2736
    %v2756 = vsel %vm2746, %v2742, 1326507024
    %v2757 = vsel %vm2745, %v2739, %v2756
    %v2758 = vsel %vm2744, %v2755, %v2757
    %v2759 = vshll.u32 %v2719, 8
    %v2760 = vand.u32 %v2759, 65535
    %v2761 = vshrl.u32 %v2759, 16
    %v2762 = vand.u32 %v2758, 65535
    %v2763 = vshrl.u32 %v2758, 16
    %v2764 = vmul.u32 %v2760, %v2762
    %v2765 = vmul.u32 %v2760, %v2763
    %v2766 = vmul.u32 %v2761, %v2762
    %v2767 = vmul.u32 %v2761, %v2763
    %v2768 = vshll.u32 %v2765, 16
    %v2769 = vshrl.u32 %v2765, 16
    %v2770 = vshll.u32 %v2766, 16
    %v2771 = vshrl.u32 %v2766, 16
    %vm2772 = vc.u32 %v2764, %v2768
    %v2773 = vsel %vm2772, 1, 0
    %v2774 = vadd.s32 %v2764, %v2768
    %v2775 = vadd.s32 %v2767, %v2773
    %vm2776 = vc.u32 %v2774, %v2770
    %v2777 = vsel %vm2776, 1, 0
    %v2778 = vadd.s32 %v2774, %v2770
    %v2779 = vadd.s32 %v2775, %v2777
    %v2780 = vadd.s32 %v2779, %v2769
    %v2781 = vadd.s32 %v2780, %v2771
    %v2782 = vand.u32 %v2759, 65535
    %v2783 = vshrl.u32 %v2759, 16
    %v2784 = vand.u32 %v2754, 65535
    %v2785 = vshrl.u32 %v2754, 16
    %v2786 = vmul.u32 %v2782, %v2784
    %v2787 = vmul.u32 %v2782, %v2785
    %v2788 = vmul.u32 %v2783, %v2784
    %v2789 = vmul.u32 %v2783, %v2785
    %v2790 = vshll.u32 %v2787, 16
    %v2791 = vshrl.u32 %v2787, 16
    %v2792 = vshll.u32 %v2788, 16
    %v2793 = vshrl.u32 %v2788, 16
    %vm2794 = vc.u32 %v2786, %v2790
    %v2795 = vsel %vm2794, 1, 0
    %v2796 = vadd.s32 %v2786, %v2790
    %v2797 = vadd.s32 %v2789, %v2795
    %vm2798 = vc.u32 %v2796, %v2792
    %v2799 = vsel %vm2798, 1, 0
    %v2800 = vadd.s32 %v2796, %v2792
    %v2801 = vadd.s32 %v2797, %v2799
    %v2802 = vadd.s32 %v2801, %v2791
    %v2803 = vadd.s32 %v2802, %v2793
    %v2804 = vmul.u32 %v2759, %v2750
    %v2805 = vadd.s32 %v2781, %v2800
    %vm2806 = vc.u32 %v2781, %v2800
    %v2807 = vadd.s32 %v2803, 1
    %v2808 = vsel %vm2806, %v2807, %v2803
    %v2809 = vadd.s32 %v2804, %v2808
    %v2810 = vadd.s32 %v2809, 536870912
    %v2811 = vshrl.u32 %v2810, 30
    %v2812 = vshll.u32 %v2811, 30
    %v2813 = vsub.s32 %v2809, %v2812
    %vm2814 = vcmp.lt.s32.totalorder %v2813, 0
    %v2815 = vsub.s32 0, %v2813
    %v2816 = vsel %vm2814, %v2815, %v2813
    %v2817 = vclz %v2816
    %v2818 = vsub.s32 %v2817, 2
    %vm2819 = vcmp.gt.s32.totalorder 0, %v2818
    %v2820 = vsel %vm2819, 0, %v2818
    %v2821 = vsub.s32 32, %v2820
    %v2822 = vshll.u32 %v2813, %v2820
    %v2823 = vshrl.u32 %v2805, %v2821
    %v2824 = vor.u32 %v2822, %v2823
    %v2825 = vsub.s32 4294967266, %v2820
    %v2826 = vadd.s32 %v2825, 127
    %v2827 = vshll.u32 %v2826, 23
    %v2828 = vor.u32 4788187, %v2827
    %v2829 = vand.u32 2147483647, %v2828
    %v2831 = vcvt.s32.f32 %v2824
    %v2832 = vmul.f32 %v2831, %v2829
    %v2833 = vxor.u32 %v2832, 2147483648
    %v2834 = vsel %vm2713, %v2833, %v2832
    %v2835 = vsub.s32 4, %v2811
    %v2836 = vsel %vm2713, %v2835, %v2811
    %v2837 = vsel %vm2712, %v229, %v2834
    %v2838 = vsel %vm2712, 0, %v2836
    %v2839 = vmul.f32 %v2837, %v2837
    %v2840 = vmul.f32 %v2839, -0.001358992
    %v2841 = vadd.f32 %v2840, 0.041655596
    %v2842 = vmul.f32 %v2839, %v2841
    %v2843 = vadd.f32 %v2842, -0.4999988
    %v2844 = vmul.f32 %v2839, %v2843
    %v2845 = vadd.f32 1.0, %v2844
    %v2846 = vmul.f32 %v2837, %v2837
    %v2847 = vmul.f32 %v2846, -0.00019511016
    %v2848 = vadd.f32 %v2847, 0.008332121
    %v2849 = vmul.f32 %v2846, %v2848
    %v2850 = vadd.f32 %v2849, -0.16666654
    %v2851 = vmul.f32 %v2846, %v2850
    %v2852 = vadd.f32 %v2851, 1.0
    %v2853 = vmul.f32 %v2852, %v2837
    %vm2854 = vweird.f32 %v229
    %v2855 = vand.u32 %v2838, 3
    %vm2856 = vcmp.lt.s32.totalorder %v2855, 2
    %vm2857 = vcmp.eq.s32.totalorder %v2855, 0
    %v2858 = vxor.u32 %v2853, 2147483648
    %v2859 = vsel %vm2857, %v2845, %v2858
    %vm2860 = vcmp.eq.s32.totalorder %v2855, 2
    %v2861 = vxor.u32 %v2845, 2147483648
    %v2862 = vsel %vm2860, %v2861, %v2853
    %v2863 = vsel %vm2856, %v2859, %v2862
    %v2864 = vsel %vm2854, nan, %v2863
    %v2865 = vand.u32 2147483647, %v230
    %vm2866 = vcmp.le.f32.partialorder %v2865, 0.7853982
    %vm2867 = vcmp.lt.s32.totalorder %v230, 0
    %v2868 = vand.u32 %v230, 2139095040
    %v2869 = vshrl.u32 %v2868, 23
    %v2870 = vsub.s32 %v2869, 127
    %v2871 = vand.u32 2147483647, %v230
    %v2872 = vand.u32 %v2871, 8388607
    %v2873 = vor.u32 %v2872, 8388608
    %v2874 = vsub.s32 0, %v2873
    %v2875 = vadd.s32 %v2870, 1
    %vm2876 = vcmp.gt.s32.totalorder %v2875, 0
    %v2877 = vsel %vm2876, %v2875, 0
    %v2878 = vshrl.u32 %v2877, 5
    %v2879 = vand.u32 %v2877, 31
    %v2880 = vsub.s32 32, %v2879
    %v2881 = vshrl.u32 683565275, %v2880
    %v2882 = vshll.u32 683565275, %v2879
    %v2883 = vshrl.u32 2475754826, %v2880
    %v2884 = vor.u32 %v2882, %v2883
    %v2885 = vshll.u32 2475754826, %v2879
    %v2886 = vshrl.u32 2131351028, %v2880
    %v2887 = vor.u32 %v2885, %v2886
    %v2888 = vshll.u32 2131351028, %v2879
    %v2889 = vshrl.u32 2102212464, %v2880
    %v2890 = vor.u32 %v2888, %v2889
    %v2891 = vshll.u32 2102212464, %v2879
    %v2892 = vshrl.u32 920167782, %v2880
    %v2893 = vor.u32 %v2891, %v2892
    %v2894 = vshll.u32 920167782, %v2879
    %v2895 = vshrl.u32 1326507024, %v2880
    %v2896 = vor.u32 %v2894, %v2895
    %vm2897 = vcmp.lt.s32.totalorder %v2878, 1
    %vm2898 = vcmp.lt.s32.totalorder %v2878, 2
    %vm2899 = vcmp.lt.s32.totalorder %v2878, 3
    %vm2900 = vcmp.lt.s32.totalorder %v2878, 4
    %v2901 = vsel %vm2897, %v2881, %v2884
    %v2902 = vsel %vm2900, %v2890, 2102212464
    %v2903 = vsel %vm2899, %v2887, %v2902
    %v2904 = vsel %vm2898, %v2901, %v2903
    %v2905 = vsel %vm2897, %v2884, %v2887
    %v2906 = vsel %vm2900, %v2893, 920167782
    %v2907 = vsel %vm2899, %v2890, %v2906
    %v2908 = vsel %vm2898, %v2905, %v2907
    %v2909 = vsel %vm2897, %v2887, %v2890
    %v2910 = vsel %vm2900, %v2896, 1326507024
    %v2911 = vsel %vm2899, %v2893, %v2910
    %v2912 = vsel %vm2898, %v2909, %v2911
    %v2913 = vshll.u32 %v2873, 8
    %v2914 = vand.u32 %v2913, 65535
    %v2915 = vshrl.u32 %v2913, 16
    %v2916 = vand.u32 %v2912, 65535
    %v2917 = vshrl.u32 %v2912, 16
    %v2918 = vmul.u32 %v2914, %v2916
    %v2919 = vmul.u32 %v2914, %v2917
    %v2920 = vmul.u32 %v2915, %v2916
    %v2921 = vmul.u32 %v2915, %v2917
    %v2922 = vshll.u32 %v2919, 16
    %v2923 = vshrl.u32 %v2919, 16
    %v2924 = vshll.u32 %v2920, 16
    %v2925 = vshrl.u32 %v2920, 16
    %vm2926 = vc.u32 %v2918, %v2922
    %v2927 = vsel %vm2926, 1, 0
    %v2928 = vadd.s32 %v2918, %v2922
    %v2929 = vadd.s32 %v2921, %v2927
    %vm2930 = vc.u32 %v2928, %v2924
    %v2931 = vsel %vm2930, 1, 0
    %v2932 = vadd.s32 %v2928, %v2924
    %v2933 = vadd.s32 %v2929, %v2931
    %v2934 = vadd.s32 %v2933, %v2923
    %v2935 = vadd.s32 %v2934, %v2925
    %v2936 = vand.u32 %v2913, 65535
    %v2937 = vshrl.u32 %v2913, 16
    %v2938 = vand.u32 %v2908, 65535
    %v2939 = vshrl.u32 %v2908, 16
    %v2940 = vmul.u32 %v2936, %v2938
    %v2941 = vmul.u32 %v2936, %v2939
    %v2942 = vmul.u32 %v2937, %v2938
    %v2943 = vmul.u32 %v2937, %v2939
    %v2944 = vshll.u32 %v2941, 16
    %v2945 = vshrl.u32 %v2941, 16
    %v2946 = vshll.u32 %v2942, 16
    %v2947 = vshrl.u32 %v2942, 16
    %vm2948 = vc.u32 %v2940, %v2944
    %v2949 = vsel %vm2948, 1, 0
    %v2950 = vadd.s32 %v2940, %v2944
    %v2951 = vadd.s32 %v2943, %v2949
    %vm2952 = vc.u32 %v2950, %v2946
    %v2953 = vsel %vm2952, 1, 0
    %v2954 = vadd.s32 %v2950, %v2946
    %v2955 = vadd.s32 %v2951, %v2953
    %v2956 = vadd.s32 %v2955, %v2945
    %v2957 = vadd.s32 %v2956, %v2947
    %v2958 = vmul.u32 %v2913, %v2904
    %v2959 = vadd.s32 %v2935, %v2954
    %vm2960 = vc.u32 %v2935, %v2954
    %v2961 = vadd.s32 %v2957, 1
    %v2962 = vsel %vm2960, %v2961, %v2957
    %v2963 = vadd.s32 %v2958, %v2962
    %v2964 = vadd.s32 %v2963, 536870912
    %v2965 = vshrl.u32 %v2964, 30
    %v2966 = vshll.u32 %v2965, 30
    %v2967 = vsub.s32 %v2963, %v2966
    %vm2968 = vcmp.lt.s32.totalorder %v2967, 0
    %v2969 = vsub.s32 0, %v2967
    %v2970 = vsel %vm2968, %v2969, %v2967
    %v2971 = vclz %v2970
    %v2972 = vsub.s32 %v2971, 2
    %vm2973 = vcmp.gt.s32.totalorder 0, %v2972
    %v2974 = vsel %vm2973, 0, %v2972
    %v2975 = vsub.s32 32, %v2974
    %v2976 = vshll.u32 %v2967, %v2974
    %v2977 = vshrl.u32 %v2959, %v2975
    %v2978 = vor.u32 %v2976, %v2977
    %v2979 = vsub.s32 4294967266, %v2974
    %v2980 = vadd.s32 %v2979, 127
    %v2981 = vshll.u32 %v2980, 23
    %v2982 = vor.u32 4788187, %v2981
    %v2983 = vand.u32 2147483647, %v2982
    %v2985 = vcvt.s32.f32 %v2978
    %v2986 = vmul.f32 %v2985, %v2983
    %v2987 = vxor.u32 %v2986, 2147483648
    %v2988 = vsel %vm2867, %v2987, %v2986
    %v2989 = vsub.s32 4, %v2965
    %v2990 = vsel %vm2867, %v2989, %v2965
    %v2991 = vsel %vm2866, %v230, %v2988
    %v2992 = vsel %vm2866, 0, %v2990
    %v2993 = vmul.f32 %v2991, %v2991
    %v2994 = vmul.f32 %v2993, -0.001358992
    %v2995 = vadd.f32 %v2994, 0.041655596
    %v2996 = vmul.f32 %v2993, %v2995
    %v2997 = vadd.f32 %v2996, -0.4999988
    %v2998 = vmul.f32 %v2993, %v2997
    %v2999 = vadd.f32 1.0, %v2998
    %v3000 = vmul.f32 %v2991, %v2991
    %v3001 = vmul.f32 %v3000, -0.00019511016
    %v3002 = vadd.f32 %v3001, 0.008332121
    %v3003 = vmul.f32 %v3000, %v3002
    %v3004 = vadd.f32 %v3003, -0.16666654
    %v3005 = vmul.f32 %v3000, %v3004
    %v3006 = vadd.f32 %v3005, 1.0
    %v3007 = vmul.f32 %v3006, %v2991
    %vm3008 = vweird.f32 %v230
    %v3009 = vand.u32 %v2992, 3
    %vm3010 = vcmp.lt.s32.totalorder %v3009, 2
    %vm3011 = vcmp.eq.s32.totalorder %v3009, 0
    %v3012 = vxor.u32 %v3007, 2147483648
    %v3013 = vsel %vm3011, %v2999, %v3012
    %vm3014 = vcmp.eq.s32.totalorder %v3009, 2
    %v3015 = vxor.u32 %v2999, 2147483648
    %v3016 = vsel %vm3014, %v3015, %v3007
    %v3017 = vsel %vm3010, %v3013, %v3016
    %v3018 = vsel %vm3008, nan, %v3017
    %v3019 = vand.u32 2147483647, %v231
    %vm3020 = vcmp.le.f32.partialorder %v3019, 0.7853982
    %vm3021 = vcmp.lt.s32.totalorder %v231, 0
    %v3022 = vand.u32 %v231, 2139095040
    %v3023 = vshrl.u32 %v3022, 23
    %v3024 = vsub.s32 %v3023, 127
    %v3025 = vand.u32 2147483647, %v231
    %v3026 = vand.u32 %v3025, 8388607
    %v3027 = vor.u32 %v3026, 8388608
    %v3028 = vsub.s32 0, %v3027
    %v3029 = vadd.s32 %v3024, 1
    %vm3030 = vcmp.gt.s32.totalorder %v3029, 0
    %v3031 = vsel %vm3030, %v3029, 0
    %v3032 = vshrl.u32 %v3031, 5
    %v3033 = vand.u32 %v3031, 31
    %v3034 = vsub.s32 32, %v3033
    %v3035 = vshrl.u32 683565275, %v3034
    %v3036 = vshll.u32 683565275, %v3033
    %v3037 = vshrl.u32 2475754826, %v3034
    %v3038 = vor.u32 %v3036, %v3037
    %v3039 = vshll.u32 2475754826, %v3033
    %v3040 = vshrl.u32 2131351028, %v3034
    %v3041 = vor.u32 %v3039, %v3040
    %v3042 = vshll.u32 2131351028, %v3033
    %v3043 = vshrl.u32 2102212464, %v3034
    %v3044 = vor.u32 %v3042, %v3043
    %v3045 = vshll.u32 2102212464, %v3033
    %v3046 = vshrl.u32 920167782, %v3034
    %v3047 = vor.u32 %v3045, %v3046
    %v3048 = vshll.u32 920167782, %v3033
    %v3049 = vshrl.u32 1326507024, %v3034
    %v3050 = vor.u32 %v3048, %v3049
    %vm3051 = vcmp.lt.s32.totalorder %v3032, 1
    %vm3052 = vcmp.lt.s32.totalorder %v3032, 2
    %vm3053 = vcmp.lt.s32.totalorder %v3032, 3
    %vm3054 = vcmp.lt.s32.totalorder %v3032, 4
    %v3055 = vsel %vm3051, %v3035, %v3038
    %v3056 = vsel %vm3054, %v3044, 2102212464
    %v3057 = vsel %vm3053, %v3041, %v3056
    %v3058 = vsel %vm3052, %v3055, %v3057
    %v3059 = vsel %vm3051, %v3038, %v3041
    %v3060 = vsel %vm3054, %v3047, 920167782
    %v3061 = vsel %vm3053, %v3044, %v3060
    %v3062 = vsel %vm3052, %v3059, %v3061
    %v3063 = vsel %vm3051, %v3041, %v3044
    %v3064 = vsel %vm3054, %v3050, 1326507024
    %v3065 = vsel %vm3053, %v3047, %v3064
    %v3066 = vsel %vm3052, %v3063, %v3065
    %v3067 = vshll.u32 %v3027, 8
    %v3068 = vand.u32 %v3067, 65535
    %v3069 = vshrl.u32 %v3067, 16
    %v3070 = vand.u32 %v3066, 65535
    %v3071 = vshrl.u32 %v3066, 16
    %v3072 = vmul.u32 %v3068, %v3070
    %v3073 = vmul.u32 %v3068, %v3071
    %v3074 = vmul.u32 %v3069, %v3070
    %v3075 = vmul.u32 %v3069, %v3071
    %v3076 = vshll.u32 %v3073, 16
    %v3077 = vshrl.u32 %v3073, 16
    %v3078 = vshll.u32 %v3074, 16
    %v3079 = vshrl.u32 %v3074, 16
    %vm3080 = vc.u32 %v3072, %v3076
    %v3081 = vsel %vm3080, 1, 0
    %v3082 = vadd.s32 %v3072, %v3076
    %v3083 = vadd.s32 %v3075, %v3081
    %vm3084 = vc.u32 %v3082, %v3078
    %v3085 = vsel %vm3084, 1, 0
    %v3086 = vadd.s32 %v3082, %v3078
    %v3087 = vadd.s32 %v3083, %v3085
    %v3088 = vadd.s32 %v3087, %v3077
    %v3089 = vadd.s32 %v3088, %v3079
    %v3090 = vand.u32 %v3067, 65535
    %v3091 = vshrl.u32 %v3067, 16
    %v3092 = vand.u32 %v3062, 65535
    %v3093 = vshrl.u32 %v3062, 16
    %v3094 = vmul.u32 %v3090, %v3092
    %v3095 = vmul.u32 %v3090, %v3093
    %v3096 = vmul.u32 %v3091, %v3092
    %v3097 = vmul.u32 %v3091, %v3093
    %v3098 = vshll.u32 %v3095, 16
    %v3099 = vshrl.u32 %v3095, 16
    %v3100 = vshll.u32 %v3096, 16
    %v3101 = vshrl.u32 %v3096, 16
    %vm3102 = vc.u32 %v3094, %v3098
    %v3103 = vsel %vm3102, 1, 0
    %v3104 = vadd.s32 %v3094, %v3098
    %v3105 = vadd.s32 %v3097, %v3103
    %vm3106 = vc.u32 %v3104, %v3100
    %v3107 = vsel %vm3106, 1, 0
    %v3108 = vadd.s32 %v3104, %v3100
    %v3109 = vadd.s32 %v3105, %v3107
    %v3110 = vadd.s32 %v3109, %v3099
    %v3111 = vadd.s32 %v3110, %v3101
    %v3112 = vmul.u32 %v3067, %v3058
    %v3113 = vadd.s32 %v3089, %v3108
    %vm3114 = vc.u32 %v3089, %v3108
    %v3115 = vadd.s32 %v3111, 1
    %v3116 = vsel %vm3114, %v3115, %v3111
    %v3117 = vadd.s32 %v3112, %v3116
    %v3118 = vadd.s32 %v3117, 536870912
    %v3119 = vshrl.u32 %v3118, 30
    %v3120 = vshll.u32 %v3119, 30
    %v3121 = vsub.s32 %v3117, %v3120
    %vm3122 = vcmp.lt.s32.totalorder %v3121, 0
    %v3123 = vsub.s32 0, %v3121
    %v3124 = vsel %vm3122, %v3123, %v3121
    %v3125 = vclz %v3124
    %v3126 = vsub.s32 %v3125, 2
    %vm3127 = vcmp.gt.s32.totalorder 0, %v3126
    %v3128 = vsel %vm3127, 0, %v3126
    %v3129 = vsub.s32 32, %v3128
    %v3130 = vshll.u32 %v3121, %v3128
    %v3131 = vshrl.u32 %v3113, %v3129
    %v3132 = vor.u32 %v3130, %v3131
    %v3133 = vsub.s32 4294967266, %v3128
    %v3134 = vadd.s32 %v3133, 127
    %v3135 = vshll.u32 %v3134, 23
    %v3136 = vor.u32 4788187, %v3135
    %v3137 = vand.u32 2147483647, %v3136
    %v3139 = vcvt.s32.f32 %v3132
    %v3140 = vmul.f32 %v3139, %v3137
    %v3141 = vxor.u32 %v3140, 2147483648
    %v3142 = vsel %vm3021, %v3141, %v3140
    %v3143 = vsub.s32 4, %v3119
    %v3144 = vsel %vm3021, %v3143, %v3119
    %v3145 = vsel %vm3020, %v231, %v3142
    %v3146 = vsel %vm3020, 0, %v3144
    %v3147 = vmul.f32 %v3145, %v3145
    %v3148 = vmul.f32 %v3147, -0.001358992
    %v3149 = vadd.f32 %v3148, 0.041655596
    %v3150 = vmul.f32 %v3147, %v3149
    %v3151 = vadd.f32 %v3150, -0.4999988
    %v3152 = vmul.f32 %v3147, %v3151
    %v3153 = vadd.f32 1.0, %v3152
    %v3154 = vmul.f32 %v3145, %v3145
    %v3155 = vmul.f32 %v3154, -0.00019511016
    %v3156 = vadd.f32 %v3155, 0.008332121
    %v3157 = vmul.f32 %v3154, %v3156
    %v3158 = vadd.f32 %v3157, -0.16666654
    %v3159 = vmul.f32 %v3154, %v3158
    %v3160 = vadd.f32 %v3159, 1.0
    %v3161 = vmul.f32 %v3160, %v3145
    %vm3162 = vweird.f32 %v231
    %v3163 = vand.u32 %v3146, 3
    %vm3164 = vcmp.lt.s32.totalorder %v3163, 2
    %vm3165 = vcmp.eq.s32.totalorder %v3163, 0
    %v3166 = vxor.u32 %v3161, 2147483648
    %v3167 = vsel %vm3165, %v3153, %v3166
    %vm3168 = vcmp.eq.s32.totalorder %v3163, 2
    %v3169 = vxor.u32 %v3153, 2147483648
    %v3170 = vsel %vm3168, %v3169, %v3161
    %v3171 = vsel %vm3164, %v3167, %v3170
    %v3172 = vsel %vm3162, nan, %v3171
    %v3173 = vand.u32 2147483647, %v232
    %vm3174 = vcmp.le.f32.partialorder %v3173, 0.7853982
    %vm3175 = vcmp.lt.s32.totalorder %v232, 0
    %v3176 = vand.u32 %v232, 2139095040
    %v3177 = vshrl.u32 %v3176, 23
    %v3178 = vsub.s32 %v3177, 127
    %v3179 = vand.u32 2147483647, %v232
    %v3180 = vand.u32 %v3179, 8388607
    %v3181 = vor.u32 %v3180, 8388608
    %v3182 = vsub.s32 0, %v3181
    %v3183 = vadd.s32 %v3178, 1
    %vm3184 = vcmp.gt.s32.totalorder %v3183, 0
    %v3185 = vsel %vm3184, %v3183, 0
    %v3186 = vshrl.u32 %v3185, 5
    %v3187 = vand.u32 %v3185, 31
    %v3188 = vsub.s32 32, %v3187
    %v3189 = vshrl.u32 683565275, %v3188
    %v3190 = vshll.u32 683565275, %v3187
    %v3191 = vshrl.u32 2475754826, %v3188
    %v3192 = vor.u32 %v3190, %v3191
    %v3193 = vshll.u32 2475754826, %v3187
    %v3194 = vshrl.u32 2131351028, %v3188
    %v3195 = vor.u32 %v3193, %v3194
    %v3196 = vshll.u32 2131351028, %v3187
    %v3197 = vshrl.u32 2102212464, %v3188
    %v3198 = vor.u32 %v3196, %v3197
    %v3199 = vshll.u32 2102212464, %v3187
    %v3200 = vshrl.u32 920167782, %v3188
    %v3201 = vor.u32 %v3199, %v3200
    %v3202 = vshll.u32 920167782, %v3187
    %v3203 = vshrl.u32 1326507024, %v3188
    %v3204 = vor.u32 %v3202, %v3203
    %vm3205 = vcmp.lt.s32.totalorder %v3186, 1
    %vm3206 = vcmp.lt.s32.totalorder %v3186, 2
    %vm3207 = vcmp.lt.s32.totalorder %v3186, 3
    %vm3208 = vcmp.lt.s32.totalorder %v3186, 4
    %v3209 = vsel %vm3205, %v3189, %v3192
    %v3210 = vsel %vm3208, %v3198, 2102212464
    %v3211 = vsel %vm3207, %v3195, %v3210
    %v3212 = vsel %vm3206, %v3209, %v3211
    %v3213 = vsel %vm3205, %v3192, %v3195
    %v3214 = vsel %vm3208, %v3201, 920167782
    %v3215 = vsel %vm3207, %v3198, %v3214
    %v3216 = vsel %vm3206, %v3213, %v3215
    %v3217 = vsel %vm3205, %v3195, %v3198
    %v3218 = vsel %vm3208, %v3204, 1326507024
    %v3219 = vsel %vm3207, %v3201, %v3218
    %v3220 = vsel %vm3206, %v3217, %v3219
    %v3221 = vshll.u32 %v3181, 8
    %v3222 = vand.u32 %v3221, 65535
    %v3223 = vshrl.u32 %v3221, 16
    %v3224 = vand.u32 %v3220, 65535
    %v3225 = vshrl.u32 %v3220, 16
    %v3226 = vmul.u32 %v3222, %v3224
    %v3227 = vmul.u32 %v3222, %v3225
    %v3228 = vmul.u32 %v3223, %v3224
    %v3229 = vmul.u32 %v3223, %v3225
    %v3230 = vshll.u32 %v3227, 16
    %v3231 = vshrl.u32 %v3227, 16
    %v3232 = vshll.u32 %v3228, 16
    %v3233 = vshrl.u32 %v3228, 16
    %vm3234 = vc.u32 %v3226, %v3230
    %v3235 = vsel %vm3234, 1, 0
    %v3236 = vadd.s32 %v3226, %v3230
    %v3237 = vadd.s32 %v3229, %v3235
    %vm3238 = vc.u32 %v3236, %v3232
    %v3239 = vsel %vm3238, 1, 0
    %v3240 = vadd.s32 %v3236, %v3232
    %v3241 = vadd.s32 %v3237, %v3239
    %v3242 = vadd.s32 %v3241, %v3231
    %v3243 = vadd.s32 %v3242, %v3233
    %v3244 = vand.u32 %v3221, 65535
    %v3245 = vshrl.u32 %v3221, 16
    %v3246 = vand.u32 %v3216, 65535
    %v3247 = vshrl.u32 %v3216, 16
    %v3248 = vmul.u32 %v3244, %v3246
    %v3249 = vmul.u32 %v3244, %v3247
    %v3250 = vmul.u32 %v3245, %v3246
    %v3251 = vmul.u32 %v3245, %v3247
    %v3252 = vshll.u32 %v3249, 16
    %v3253 = vshrl.u32 %v3249, 16
    %v3254 = vshll.u32 %v3250, 16
    %v3255 = vshrl.u32 %v3250, 16
    %vm3256 = vc.u32 %v3248, %v3252
    %v3257 = vsel %vm3256, 1, 0
    %v3258 = vadd.s32 %v3248, %v3252
    %v3259 = vadd.s32 %v3251, %v3257
    %vm3260 = vc.u32 %v3258, %v3254
    %v3261 = vsel %vm3260, 1, 0
    %v3262 = vadd.s32 %v3258, %v3254
    %v3263 = vadd.s32 %v3259, %v3261
    %v3264 = vadd.s32 %v3263, %v3253
    %v3265 = vadd.s32 %v3264, %v3255
    %v3266 = vmul.u32 %v3221, %v3212
    %v3267 = vadd.s32 %v3243, %v3262
    %vm3268 = vc.u32 %v3243, %v3262
    %v3269 = vadd.s32 %v3265, 1
    %v3270 = vsel %vm3268, %v3269, %v3265
    %v3271 = vadd.s32 %v3266, %v3270
    %v3272 = vadd.s32 %v3271, 536870912
    %v3273 = vshrl.u32 %v3272, 30
    %v3274 = vshll.u32 %v3273, 30
    %v3275 = vsub.s32 %v3271, %v3274
    %vm3276 = vcmp.lt.s32.totalorder %v3275, 0
    %v3277 = vsub.s32 0, %v3275
    %v3278 = vsel %vm3276, %v3277, %v3275
    %v3279 = vclz %v3278
    %v3280 = vsub.s32 %v3279, 2
    %vm3281 = vcmp.gt.s32.totalorder 0, %v3280
    %v3282 = vsel %vm3281, 0, %v3280
    %v3283 = vsub.s32 32, %v3282
    %v3284 = vshll.u32 %v3275, %v3282
    %v3285 = vshrl.u32 %v3267, %v3283
    %v3286 = vor.u32 %v3284, %v3285
    %v3287 = vsub.s32 4294967266, %v3282
    %v3288 = vadd.s32 %v3287, 127
    %v3289 = vshll.u32 %v3288, 23
    %v3290 = vor.u32 4788187, %v3289
    %v3291 = vand.u32 2147483647, %v3290
    %v3293 = vcvt.s32.f32 %v3286
    %v3294 = vmul.f32 %v3293, %v3291
    %v3295 = vxor.u32 %v3294, 2147483648
    %v3296 = vsel %vm3175, %v3295, %v3294
    %v3297 = vsub.s32 4, %v3273
    %v3298 = vsel %vm3175, %v3297, %v3273
    %v3299 = vsel %vm3174, %v232, %v3296
    %v3300 = vsel %vm3174, 0, %v3298
    %v3301 = vmul.f32 %v3299, %v3299
    %v3302 = vmul.f32 %v3301, -0.001358992
    %v3303 = vadd.f32 %v3302, 0.041655596
    %v3304 = vmul.f32 %v3301, %v3303
    %v3305 = vadd.f32 %v3304, -0.4999988
    %v3306 = vmul.f32 %v3301, %v3305
    %v3307 = vadd.f32 1.0, %v3306
    %v3308 = vmul.f32 %v3299, %v3299
    %v3309 = vmul.f32 %v3308, -0.00019511016
    %v3310 = vadd.f32 %v3309, 0.008332121
    %v3311 = vmul.f32 %v3308, %v3310
    %v3312 = vadd.f32 %v3311, -0.16666654
    %v3313 = vmul.f32 %v3308, %v3312
    %v3314 = vadd.f32 %v3313, 1.0
    %v3315 = vmul.f32 %v3314, %v3299
    %vm3316 = vweird.f32 %v232
    %v3317 = vand.u32 %v3300, 3
    %vm3318 = vcmp.lt.s32.totalorder %v3317, 2
    %vm3319 = vcmp.eq.s32.totalorder %v3317, 0
    %v3320 = vxor.u32 %v3315, 2147483648
    %v3321 = vsel %vm3319, %v3307, %v3320
    %vm3322 = vcmp.eq.s32.totalorder %v3317, 2
    %v3323 = vxor.u32 %v3307, 2147483648
    %v3324 = vsel %vm3322, %v3323, %v3315
    %v3325 = vsel %vm3318, %v3321, %v3324
    %v3326 = vsel %vm3316, nan, %v3325
    %v3327 = vand.u32 2147483647, %v233
    %vm3328 = vcmp.le.f32.partialorder %v3327, 0.7853982
    %vm3329 = vcmp.lt.s32.totalorder %v233, 0
    %v3330 = vand.u32 %v233, 2139095040
    %v3331 = vshrl.u32 %v3330, 23
    %v3332 = vsub.s32 %v3331, 127
    %v3333 = vand.u32 2147483647, %v233
    %v3334 = vand.u32 %v3333, 8388607
    %v3335 = vor.u32 %v3334, 8388608
    %v3336 = vsub.s32 0, %v3335
    %v3337 = vadd.s32 %v3332, 1
    %vm3338 = vcmp.gt.s32.totalorder %v3337, 0
    %v3339 = vsel %vm3338, %v3337, 0
    %v3340 = vshrl.u32 %v3339, 5
    %v3341 = vand.u32 %v3339, 31
    %v3342 = vsub.s32 32, %v3341
    %v3343 = vshrl.u32 683565275, %v3342
    %v3344 = vshll.u32 683565275, %v3341
    %v3345 = vshrl.u32 2475754826, %v3342
    %v3346 = vor.u32 %v3344, %v3345
    %v3347 = vshll.u32 2475754826, %v3341
    %v3348 = vshrl.u32 2131351028, %v3342
    %v3349 = vor.u32 %v3347, %v3348
    %v3350 = vshll.u32 2131351028, %v3341
    %v3351 = vshrl.u32 2102212464, %v3342
    %v3352 = vor.u32 %v3350, %v3351
    %v3353 = vshll.u32 2102212464, %v3341
    %v3354 = vshrl.u32 920167782, %v3342
    %v3355 = vor.u32 %v3353, %v3354
    %v3356 = vshll.u32 920167782, %v3341
    %v3357 = vshrl.u32 1326507024, %v3342
    %v3358 = vor.u32 %v3356, %v3357
    %vm3359 = vcmp.lt.s32.totalorder %v3340, 1
    %vm3360 = vcmp.lt.s32.totalorder %v3340, 2
    %vm3361 = vcmp.lt.s32.totalorder %v3340, 3
    %vm3362 = vcmp.lt.s32.totalorder %v3340, 4
    %v3363 = vsel %vm3359, %v3343, %v3346
    %v3364 = vsel %vm3362, %v3352, 2102212464
    %v3365 = vsel %vm3361, %v3349, %v3364
    %v3366 = vsel %vm3360, %v3363, %v3365
    %v3367 = vsel %vm3359, %v3346, %v3349
    %v3368 = vsel %vm3362, %v3355, 920167782
    %v3369 = vsel %vm3361, %v3352, %v3368
    %v3370 = vsel %vm3360, %v3367, %v3369
    %v3371 = vsel %vm3359, %v3349, %v3352
    %v3372 = vsel %vm3362, %v3358, 1326507024
    %v3373 = vsel %vm3361, %v3355, %v3372
    %v3374 = vsel %vm3360, %v3371, %v3373
    %v3375 = vshll.u32 %v3335, 8
    %v3376 = vand.u32 %v3375, 65535
    %v3377 = vshrl.u32 %v3375, 16
    %v3378 = vand.u32 %v3374, 65535
    %v3379 = vshrl.u32 %v3374, 16
    %v3380 = vmul.u32 %v3376, %v3378
    %v3381 = vmul.u32 %v3376, %v3379
    %v3382 = vmul.u32 %v3377, %v3378
    %v3383 = vmul.u32 %v3377, %v3379
    %v3384 = vshll.u32 %v3381, 16
    %v3385 = vshrl.u32 %v3381, 16
    %v3386 = vshll.u32 %v3382, 16
    %v3387 = vshrl.u32 %v3382, 16
    %vm3388 = vc.u32 %v3380, %v3384
    %v3389 = vsel %vm3388, 1, 0
    %v3390 = vadd.s32 %v3380, %v3384
    %v3391 = vadd.s32 %v3383, %v3389
    %vm3392 = vc.u32 %v3390, %v3386
    %v3393 = vsel %vm3392, 1, 0
    %v3394 = vadd.s32 %v3390, %v3386
    %v3395 = vadd.s32 %v3391, %v3393
    %v3396 = vadd.s32 %v3395, %v3385
    %v3397 = vadd.s32 %v3396, %v3387
    %v3398 = vand.u32 %v3375, 65535
    %v3399 = vshrl.u32 %v3375, 16
    %v3400 = vand.u32 %v3370, 65535
    %v3401 = vshrl.u32 %v3370, 16
    %v3402 = vmul.u32 %v3398, %v3400
    %v3403 = vmul.u32 %v3398, %v3401
    %v3404 = vmul.u32 %v3399, %v3400
    %v3405 = vmul.u32 %v3399, %v3401
    %v3406 = vshll.u32 %v3403, 16
    %v3407 = vshrl.u32 %v3403, 16
    %v3408 = vshll.u32 %v3404, 16
    %v3409 = vshrl.u32 %v3404, 16
    %vm3410 = vc.u32 %v3402, %v3406
    %v3411 = vsel %vm3410, 1, 0
    %v3412 = vadd.s32 %v3402, %v3406
    %v3413 = vadd.s32 %v3405, %v3411
    %vm3414 = vc.u32 %v3412, %v3408
    %v3415 = vsel %vm3414, 1, 0
    %v3416 = vadd.s32 %v3412, %v3408
    %v3417 = vadd.s32 %v3413, %v3415
    %v3418 = vadd.s32 %v3417, %v3407
    %v3419 = vadd.s32 %v3418, %v3409
    %v3420 = vmul.u32 %v3375, %v3366
    %v3421 = vadd.s32 %v3397, %v3416
    %vm3422 = vc.u32 %v3397, %v3416
    %v3423 = vadd.s32 %v3419, 1
    %v3424 = vsel %vm3422, %v3423, %v3419
    %v3425 = vadd.s32 %v3420, %v3424
    %v3426 = vadd.s32 %v3425, 536870912
    %v3427 = vshrl.u32 %v3426, 30
    %v3428 = vshll.u32 %v3427, 30
    %v3429 = vsub.s32 %v3425, %v3428
    %vm3430 = vcmp.lt.s32.totalorder %v3429, 0
    %v3431 = vsub.s32 0, %v3429
    %v3432 = vsel %vm3430, %v3431, %v3429
    %v3433 = vclz %v3432
    %v3434 = vsub.s32 %v3433, 2
    %vm3435 = vcmp.gt.s32.totalorder 0, %v3434
    %v3436 = vsel %vm3435, 0, %v3434
    %v3437 = vsub.s32 32, %v3436
    %v3438 = vshll.u32 %v3429, %v3436
    %v3439 = vshrl.u32 %v3421, %v3437
    %v3440 = vor.u32 %v3438, %v3439
    %v3441 = vsub.s32 4294967266, %v3436
    %v3442 = vadd.s32 %v3441, 127
    %v3443 = vshll.u32 %v3442, 23
    %v3444 = vor.u32 4788187, %v3443
    %v3445 = vand.u32 2147483647, %v3444
    %v3447 = vcvt.s32.f32 %v3440
    %v3448 = vmul.f32 %v3447, %v3445
    %v3449 = vxor.u32 %v3448, 2147483648
    %v3450 = vsel %vm3329, %v3449, %v3448
    %v3451 = vsub.s32 4, %v3427
    %v3452 = vsel %vm3329, %v3451, %v3427
    %v3453 = vsel %vm3328, %v233, %v3450
    %v3454 = vsel %vm3328, 0, %v3452
    %v3455 = vmul.f32 %v3453, %v3453
    %v3456 = vmul.f32 %v3455, -0.001358992
    %v3457 = vadd.f32 %v3456, 0.041655596
    %v3458 = vmul.f32 %v3455, %v3457
    %v3459 = vadd.f32 %v3458, -0.4999988
    %v3460 = vmul.f32 %v3455, %v3459
    %v3461 = vadd.f32 1.0, %v3460
    %v3462 = vmul.f32 %v3453, %v3453
    %v3463 = vmul.f32 %v3462, -0.00019511016
    %v3464 = vadd.f32 %v3463, 0.008332121
    %v3465 = vmul.f32 %v3462, %v3464
    %v3466 = vadd.f32 %v3465, -0.16666654
    %v3467 = vmul.f32 %v3462, %v3466
    %v3468 = vadd.f32 %v3467, 1.0
    %v3469 = vmul.f32 %v3468, %v3453
    %vm3470 = vweird.f32 %v233
    %v3471 = vand.u32 %v3454, 3
    %vm3472 = vcmp.lt.s32.totalorder %v3471, 2
    %vm3473 = vcmp.eq.s32.totalorder %v3471, 0
    %v3474 = vxor.u32 %v3469, 2147483648
    %v3475 = vsel %vm3473, %v3461, %v3474
    %vm3476 = vcmp.eq.s32.totalorder %v3471, 2
    %v3477 = vxor.u32 %v3461, 2147483648
    %v3478 = vsel %vm3476, %v3477, %v3469
    %v3479 = vsel %vm3472, %v3475, %v3478
    %v3480 = vsel %vm3470, nan, %v3479
    %v3481 = vand.u32 2147483647, %v234
    %vm3482 = vcmp.le.f32.partialorder %v3481, 0.7853982
    %vm3483 = vcmp.lt.s32.totalorder %v234, 0
    %v3484 = vand.u32 %v234, 2139095040
    %v3485 = vshrl.u32 %v3484, 23
    %v3486 = vsub.s32 %v3485, 127
    %v3487 = vand.u32 2147483647, %v234
    %v3488 = vand.u32 %v3487, 8388607
    %v3489 = vor.u32 %v3488, 8388608
    %v3490 = vsub.s32 0, %v3489
    %v3491 = vadd.s32 %v3486, 1
    %vm3492 = vcmp.gt.s32.totalorder %v3491, 0
    %v3493 = vsel %vm3492, %v3491, 0
    %v3494 = vshrl.u32 %v3493, 5
    %v3495 = vand.u32 %v3493, 31
    %v3496 = vsub.s32 32, %v3495
    %v3497 = vshrl.u32 683565275, %v3496
    %v3498 = vshll.u32 683565275, %v3495
    %v3499 = vshrl.u32 2475754826, %v3496
    %v3500 = vor.u32 %v3498, %v3499
    %v3501 = vshll.u32 2475754826, %v3495
    %v3502 = vshrl.u32 2131351028, %v3496
    %v3503 = vor.u32 %v3501, %v3502
    %v3504 = vshll.u32 2131351028, %v3495
    %v3505 = vshrl.u32 2102212464, %v3496
    %v3506 = vor.u32 %v3504, %v3505
    %v3507 = vshll.u32 2102212464, %v3495
    %v3508 = vshrl.u32 920167782, %v3496
    %v3509 = vor.u32 %v3507, %v3508
    %v3510 = vshll.u32 920167782, %v3495
    %v3511 = vshrl.u32 1326507024, %v3496
    %v3512 = vor.u32 %v3510, %v3511
    %vm3513 = vcmp.lt.s32.totalorder %v3494, 1
    %vm3514 = vcmp.lt.s32.totalorder %v3494, 2
    %vm3515 = vcmp.lt.s32.totalorder %v3494, 3
    %vm3516 = vcmp.lt.s32.totalorder %v3494, 4
    %v3517 = vsel %vm3513, %v3497, %v3500
    %v3518 = vsel %vm3516, %v3506, 2102212464
    %v3519 = vsel %vm3515, %v3503, %v3518
    %v3520 = vsel %vm3514, %v3517, %v3519
    %v3521 = vsel %vm3513, %v3500, %v3503
    %v3522 = vsel %vm3516, %v3509, 920167782
    %v3523 = vsel %vm3515, %v3506, %v3522
    %v3524 = vsel %vm3514, %v3521, %v3523
    %v3525 = vsel %vm3513, %v3503, %v3506
    %v3526 = vsel %vm3516, %v3512, 1326507024
    %v3527 = vsel %vm3515, %v3509, %v3526
    %v3528 = vsel %vm3514, %v3525, %v3527
    %v3529 = vshll.u32 %v3489, 8
    %v3530 = vand.u32 %v3529, 65535
    %v3531 = vshrl.u32 %v3529, 16
    %v3532 = vand.u32 %v3528, 65535
    %v3533 = vshrl.u32 %v3528, 16
    %v3534 = vmul.u32 %v3530, %v3532
    %v3535 = vmul.u32 %v3530, %v3533
    %v3536 = vmul.u32 %v3531, %v3532
    %v3537 = vmul.u32 %v3531, %v3533
    %v3538 = vshll.u32 %v3535, 16
    %v3539 = vshrl.u32 %v3535, 16
    %v3540 = vshll.u32 %v3536, 16
    %v3541 = vshrl.u32 %v3536, 16
    %vm3542 = vc.u32 %v3534, %v3538
    %v3543 = vsel %vm3542, 1, 0
    %v3544 = vadd.s32 %v3534, %v3538
    %v3545 = vadd.s32 %v3537, %v3543
    %vm3546 = vc.u32 %v3544, %v3540
    %v3547 = vsel %vm3546, 1, 0
    %v3548 = vadd.s32 %v3544, %v3540
    %v3549 = vadd.s32 %v3545, %v3547
    %v3550 = vadd.s32 %v3549, %v3539
    %v3551 = vadd.s32 %v3550, %v3541
    %v3552 = vand.u32 %v3529, 65535
    %v3553 = vshrl.u32 %v3529, 16
    %v3554 = vand.u32 %v3524, 65535
    %v3555 = vshrl.u32 %v3524, 16
    %v3556 = vmul.u32 %v3552, %v3554
    %v3557 = vmul.u32 %v3552, %v3555
    %v3558 = vmul.u32 %v3553, %v3554
    %v3559 = vmul.u32 %v3553, %v3555
    %v3560 = vshll.u32 %v3557, 16
    %v3561 = vshrl.u32 %v3557, 16
    %v3562 = vshll.u32 %v3558, 16
    %v3563 = vshrl.u32 %v3558, 16
    %vm3564 = vc.u32 %v3556, %v3560
    %v3565 = vsel %vm3564, 1, 0
    %v3566 = vadd.s32 %v3556, %v3560
    %v3567 = vadd.s32 %v3559, %v3565
    %vm3568 = vc.u32 %v3566, %v3562
    %v3569 = vsel %vm3568, 1, 0
    %v3570 = vadd.s32 %v3566, %v3562
    %v3571 = vadd.s32 %v3567, %v3569
    %v3572 = vadd.s32 %v3571, %v3561
    %v3573 = vadd.s32 %v3572, %v3563
    %v3574 = vmul.u32 %v3529, %v3520
    %v3575 = vadd.s32 %v3551, %v3570
    %vm3576 = vc.u32 %v3551, %v3570
    %v3577 = vadd.s32 %v3573, 1
    %v3578 = vsel %vm3576, %v3577, %v3573
    %v3579 = vadd.s32 %v3574, %v3578
    %v3580 = vadd.s32 %v3579, 536870912
    %v3581 = vshrl.u32 %v3580, 30
    %v3582 = vshll.u32 %v3581, 30
    %v3583 = vsub.s32 %v3579, %v3582
    %vm3584 = vcmp.lt.s32.totalorder %v3583, 0
    %v3585 = vsub.s32 0, %v3583
    %v3586 = vsel %vm3584, %v3585, %v3583
    %v3587 = vclz %v3586
    %v3588 = vsub.s32 %v3587, 2
    %vm3589 = vcmp.gt.s32.totalorder 0, %v3588
    %v3590 = vsel %vm3589, 0, %v3588
    %v3591 = vsub.s32 32, %v3590
    %v3592 = vshll.u32 %v3583, %v3590
    %v3593 = vshrl.u32 %v3575, %v3591
    %v3594 = vor.u32 %v3592, %v3593
    %v3595 = vsub.s32 4294967266, %v3590
    %v3596 = vadd.s32 %v3595, 127
    %v3597 = vshll.u32 %v3596, 23
    %v3598 = vor.u32 4788187, %v3597
    %v3599 = vand.u32 2147483647, %v3598
    %v3601 = vcvt.s32.f32 %v3594
    %v3602 = vmul.f32 %v3601, %v3599
    %v3603 = vxor.u32 %v3602, 2147483648
    %v3604 = vsel %vm3483, %v3603, %v3602
    %v3605 = vsub.s32 4, %v3581
    %v3606 = vsel %vm3483, %v3605, %v3581
    %v3607 = vsel %vm3482, %v234, %v3604
    %v3608 = vsel %vm3482, 0, %v3606
    %v3609 = vmul.f32 %v3607, %v3607
    %v3610 = vmul.f32 %v3609, -0.001358992
    %v3611 = vadd.f32 %v3610, 0.041655596
    %v3612 = vmul.f32 %v3609, %v3611
    %v3613 = vadd.f32 %v3612, -0.4999988
    %v3614 = vmul.f32 %v3609, %v3613
    %v3615 = vadd.f32 1.0, %v3614
    %v3616 = vmul.f32 %v3607, %v3607
    %v3617 = vmul.f32 %v3616, -0.00019511016
    %v3618 = vadd.f32 %v3617, 0.008332121
    %v3619 = vmul.f32 %v3616, %v3618
    %v3620 = vadd.f32 %v3619, -0.16666654
    %v3621 = vmul.f32 %v3616, %v3620
    %v3622 = vadd.f32 %v3621, 1.0
    %v3623 = vmul.f32 %v3622, %v3607
    %vm3624 = vweird.f32 %v234
    %v3625 = vand.u32 %v3608, 3
    %vm3626 = vcmp.lt.s32.totalorder %v3625, 2
    %vm3627 = vcmp.eq.s32.totalorder %v3625, 0
    %v3628 = vxor.u32 %v3623, 2147483648
    %v3629 = vsel %vm3627, %v3615, %v3628
    %vm3630 = vcmp.eq.s32.totalorder %v3625, 2
    %v3631 = vxor.u32 %v3615, 2147483648
    %v3632 = vsel %vm3630, %v3631, %v3623
    %v3633 = vsel %vm3626, %v3629, %v3632
    %v3634 = vsel %vm3624, nan, %v3633
    %v3635 = vand.u32 2147483647, %v235
    %vm3636 = vcmp.le.f32.partialorder %v3635, 0.7853982
    %vm3637 = vcmp.lt.s32.totalorder %v235, 0
    %v3638 = vand.u32 %v235, 2139095040
    %v3639 = vshrl.u32 %v3638, 23
    %v3640 = vsub.s32 %v3639, 127
    %v3641 = vand.u32 2147483647, %v235
    %v3642 = vand.u32 %v3641, 8388607
    %v3643 = vor.u32 %v3642, 8388608
    %v3644 = vsub.s32 0, %v3643
    %v3645 = vadd.s32 %v3640, 1
    %vm3646 = vcmp.gt.s32.totalorder %v3645, 0
    %v3647 = vsel %vm3646, %v3645, 0
    %v3648 = vshrl.u32 %v3647, 5
    %v3649 = vand.u32 %v3647, 31
    %v3650 = vsub.s32 32, %v3649
    %v3651 = vshrl.u32 683565275, %v3650
    %v3652 = vshll.u32 683565275, %v3649
    %v3653 = vshrl.u32 2475754826, %v3650
    %v3654 = vor.u32 %v3652, %v3653
    %v3655 = vshll.u32 2475754826, %v3649
    %v3656 = vshrl.u32 2131351028, %v3650
    %v3657 = vor.u32 %v3655, %v3656
    %v3658 = vshll.u32 2131351028, %v3649
    %v3659 = vshrl.u32 2102212464, %v3650
    %v3660 = vor.u32 %v3658, %v3659
    %v3661 = vshll.u32 2102212464, %v3649
    %v3662 = vshrl.u32 920167782, %v3650
    %v3663 = vor.u32 %v3661, %v3662
    %v3664 = vshll.u32 920167782, %v3649
    %v3665 = vshrl.u32 1326507024, %v3650
    %v3666 = vor.u32 %v3664, %v3665
    %vm3667 = vcmp.lt.s32.totalorder %v3648, 1
    %vm3668 = vcmp.lt.s32.totalorder %v3648, 2
    %vm3669 = vcmp.lt.s32.totalorder %v3648, 3
    %vm3670 = vcmp.lt.s32.totalorder %v3648, 4
    %v3671 = vsel %vm3667, %v3651, %v3654
    %v3672 = vsel %vm3670, %v3660, 2102212464
    %v3673 = vsel %vm3669, %v3657, %v3672
    %v3674 = vsel %vm3668, %v3671, %v3673
    %v3675 = vsel %vm3667, %v3654, %v3657
    %v3676 = vsel %vm3670, %v3663, 920167782
    %v3677 = vsel %vm3669, %v3660, %v3676
    %v3678 = vsel %vm3668, %v3675, %v3677
    %v3679 = vsel %vm3667, %v3657, %v3660
    %v3680 = vsel %vm3670, %v3666, 1326507024
    %v3681 = vsel %vm3669, %v3663, %v3680
    %v3682 = vsel %vm3668, %v3679, %v3681
    %v3683 = vshll.u32 %v3643, 8
    %v3684 = vand.u32 %v3683, 65535
    %v3685 = vshrl.u32 %v3683, 16
    %v3686 = vand.u32 %v3682, 65535
    %v3687 = vshrl.u32 %v3682, 16
    %v3688 = vmul.u32 %v3684, %v3686
    %v3689 = vmul.u32 %v3684, %v3687
    %v3690 = vmul.u32 %v3685, %v3686
    %v3691 = vmul.u32 %v3685, %v3687
    %v3692 = vshll.u32 %v3689, 16
    %v3693 = vshrl.u32 %v3689, 16
    %v3694 = vshll.u32 %v3690, 16
    %v3695 = vshrl.u32 %v3690, 16
    %vm3696 = vc.u32 %v3688, %v3692
    %v3697 = vsel %vm3696, 1, 0
    %v3698 = vadd.s32 %v3688, %v3692
    %v3699 = vadd.s32 %v3691, %v3697
    %vm3700 = vc.u32 %v3698, %v3694
    %v3701 = vsel %vm3700, 1, 0
    %v3702 = vadd.s32 %v3698, %v3694
    %v3703 = vadd.s32 %v3699, %v3701
    %v3704 = vadd.s32 %v3703, %v3693
    %v3705 = vadd.s32 %v3704, %v3695
    %v3706 = vand.u32 %v3683, 65535
    %v3707 = vshrl.u32 %v3683, 16
    %v3708 = vand.u32 %v3678, 65535
    %v3709 = vshrl.u32 %v3678, 16
    %v3710 = vmul.u32 %v3706, %v3708
    %v3711 = vmul.u32 %v3706, %v3709
    %v3712 = vmul.u32 %v3707, %v3708
    %v3713 = vmul.u32 %v3707, %v3709
    %v3714 = vshll.u32 %v3711, 16
    %v3715 = vshrl.u32 %v3711, 16
    %v3716 = vshll.u32 %v3712, 16
    %v3717 = vshrl.u32 %v3712, 16
    %vm3718 = vc.u32 %v3710, %v3714
    %v3719 = vsel %vm3718, 1, 0
    %v3720 = vadd.s32 %v3710, %v3714
    %v3721 = vadd.s32 %v3713, %v3719
    %vm3722 = vc.u32 %v3720, %v3716
    %v3723 = vsel %vm3722, 1, 0
    %v3724 = vadd.s32 %v3720, %v3716
    %v3725 = vadd.s32 %v3721, %v3723
    %v3726 = vadd.s32 %v3725, %v3715
    %v3727 = vadd.s32 %v3726, %v3717
    %v3728 = vmul.u32 %v3683, %v3674
    %v3729 = vadd.s32 %v3705, %v3724
    %vm3730 = vc.u32 %v3705, %v3724
    %v3731 = vadd.s32 %v3727, 1
    %v3732 = vsel %vm3730, %v3731, %v3727
    %v3733 = vadd.s32 %v3728, %v3732
    %v3734 = vadd.s32 %v3733, 536870912
    %v3735 = vshrl.u32 %v3734, 30
    %v3736 = vshll.u32 %v3735, 30
    %v3737 = vsub.s32 %v3733, %v3736
    %vm3738 = vcmp.lt.s32.totalorder %v3737, 0
    %v3739 = vsub.s32 0, %v3737
    %v3740 = vsel %vm3738, %v3739, %v3737
    %v3741 = vclz %v3740
    %v3742 = vsub.s32 %v3741, 2
    %vm3743 = vcmp.gt.s32.totalorder 0, %v3742
    %v3744 = vsel %vm3743, 0, %v3742
    %v3745 = vsub.s32 32, %v3744
    %v3746 = vshll.u32 %v3737, %v3744
    %v3747 = vshrl.u32 %v3729, %v3745
    %v3748 = vor.u32 %v3746, %v3747
    %v3749 = vsub.s32 4294967266, %v3744
    %v3750 = vadd.s32 %v3749, 127
    %v3751 = vshll.u32 %v3750, 23
    %v3752 = vor.u32 4788187, %v3751
    %v3753 = vand.u32 2147483647, %v3752
    %v3755 = vcvt.s32.f32 %v3748
    %v3756 = vmul.f32 %v3755, %v3753
    %v3757 = vxor.u32 %v3756, 2147483648
    %v3758 = vsel %vm3637, %v3757, %v3756
    %v3759 = vsub.s32 4, %v3735
    %v3760 = vsel %vm3637, %v3759, %v3735
    %v3761 = vsel %vm3636, %v235, %v3758
    %v3762 = vsel %vm3636, 0, %v3760
    %v3763 = vmul.f32 %v3761, %v3761
    %v3764 = vmul.f32 %v3763, -0.001358992
    %v3765 = vadd.f32 %v3764, 0.041655596
    %v3766 = vmul.f32 %v3763, %v3765
    %v3767 = vadd.f32 %v3766, -0.4999988
    %v3768 = vmul.f32 %v3763, %v3767
    %v3769 = vadd.f32 1.0, %v3768
    %v3770 = vmul.f32 %v3761, %v3761
    %v3771 = vmul.f32 %v3770, -0.00019511016
    %v3772 = vadd.f32 %v3771, 0.008332121
    %v3773 = vmul.f32 %v3770, %v3772
    %v3774 = vadd.f32 %v3773, -0.16666654
    %v3775 = vmul.f32 %v3770, %v3774
    %v3776 = vadd.f32 %v3775, 1.0
    %v3777 = vmul.f32 %v3776, %v3761
    %vm3778 = vweird.f32 %v235
    %v3779 = vand.u32 %v3762, 3
    %vm3780 = vcmp.lt.s32.totalorder %v3779, 2
    %vm3781 = vcmp.eq.s32.totalorder %v3779, 0
    %v3782 = vxor.u32 %v3777, 2147483648
    %v3783 = vsel %vm3781, %v3769, %v3782
    %vm3784 = vcmp.eq.s32.totalorder %v3779, 2
    %v3785 = vxor.u32 %v3769, 2147483648
    %v3786 = vsel %vm3784, %v3785, %v3777
    %v3787 = vsel %vm3780, %v3783, %v3786
    %v3788 = vsel %vm3778, nan, %v3787
    %v3789 = vand.u32 2147483647, %v236
    %vm3790 = vcmp.le.f32.partialorder %v3789, 0.7853982
    %vm3791 = vcmp.lt.s32.totalorder %v236, 0
    %v3792 = vand.u32 %v236, 2139095040
    %v3793 = vshrl.u32 %v3792, 23
    %v3794 = vsub.s32 %v3793, 127
    %v3795 = vand.u32 2147483647, %v236
    %v3796 = vand.u32 %v3795, 8388607
    %v3797 = vor.u32 %v3796, 8388608
    %v3798 = vsub.s32 0, %v3797
    %v3799 = vadd.s32 %v3794, 1
    %vm3800 = vcmp.gt.s32.totalorder %v3799, 0
    %v3801 = vsel %vm3800, %v3799, 0
    %v3802 = vshrl.u32 %v3801, 5
    %v3803 = vand.u32 %v3801, 31
    %v3804 = vsub.s32 32, %v3803
    %v3805 = vshrl.u32 683565275, %v3804
    %v3806 = vshll.u32 683565275, %v3803
    %v3807 = vshrl.u32 2475754826, %v3804
    %v3808 = vor.u32 %v3806, %v3807
    %v3809 = vshll.u32 2475754826, %v3803
    %v3810 = vshrl.u32 2131351028, %v3804
    %v3811 = vor.u32 %v3809, %v3810
    %v3812 = vshll.u32 2131351028, %v3803
    %v3813 = vshrl.u32 2102212464, %v3804
    %v3814 = vor.u32 %v3812, %v3813
    %v3815 = vshll.u32 2102212464, %v3803
    %v3816 = vshrl.u32 920167782, %v3804
    %v3817 = vor.u32 %v3815, %v3816
    %v3818 = vshll.u32 920167782, %v3803
    %v3819 = vshrl.u32 1326507024, %v3804
    %v3820 = vor.u32 %v3818, %v3819
    %vm3821 = vcmp.lt.s32.totalorder %v3802, 1
    %vm3822 = vcmp.lt.s32.totalorder %v3802, 2
    %vm3823 = vcmp.lt.s32.totalorder %v3802, 3
    %vm3824 = vcmp.lt.s32.totalorder %v3802, 4
    %v3825 = vsel %vm3821, %v3805, %v3808
    %v3826 = vsel %vm3824, %v3814, 2102212464
    %v3827 = vsel %vm3823, %v3811, %v3826
    %v3828 = vsel %vm3822, %v3825, %v3827
    %v3829 = vsel %vm3821, %v3808, %v3811
    %v3830 = vsel %vm3824, %v3817, 920167782
    %v3831 = vsel %vm3823, %v3814, %v3830
    %v3832 = vsel %vm3822, %v3829, %v3831
    %v3833 = vsel %vm3821, %v3811, %v3814
    %v3834 = vsel %vm3824, %v3820, 1326507024
    %v3835 = vsel %vm3823, %v3817, %v3834
    %v3836 = vsel %vm3822, %v3833, %v3835
    %v3837 = vshll.u32 %v3797, 8
    %v3838 = vand.u32 %v3837, 65535
    %v3839 = vshrl.u32 %v3837, 16
    %v3840 = vand.u32 %v3836, 65535
    %v3841 = vshrl.u32 %v3836, 16
    %v3842 = vmul.u32 %v3838, %v3840
    %v3843 = vmul.u32 %v3838, %v3841
    %v3844 = vmul.u32 %v3839, %v3840
    %v3845 = vmul.u32 %v3839, %v3841
    %v3846 = vshll.u32 %v3843, 16
    %v3847 = vshrl.u32 %v3843, 16
    %v3848 = vshll.u32 %v3844, 16
    %v3849 = vshrl.u32 %v3844, 16
    %vm3850 = vc.u32 %v3842, %v3846
    %v3851 = vsel %vm3850, 1, 0
    %v3852 = vadd.s32 %v3842, %v3846
    %v3853 = vadd.s32 %v3845, %v3851
    %vm3854 = vc.u32 %v3852, %v3848
    %v3855 = vsel %vm3854, 1, 0
    %v3856 = vadd.s32 %v3852, %v3848
    %v3857 = vadd.s32 %v3853, %v3855
    %v3858 = vadd.s32 %v3857, %v3847
    %v3859 = vadd.s32 %v3858, %v3849
    %v3860 = vand.u32 %v3837, 65535
    %v3861 = vshrl.u32 %v3837, 16
    %v3862 = vand.u32 %v3832, 65535
    %v3863 = vshrl.u32 %v3832, 16
    %v3864 = vmul.u32 %v3860, %v3862
    %v3865 = vmul.u32 %v3860, %v3863
    %v3866 = vmul.u32 %v3861, %v3862
    %v3867 = vmul.u32 %v3861, %v3863
    %v3868 = vshll.u32 %v3865, 16
    %v3869 = vshrl.u32 %v3865, 16
    %v3870 = vshll.u32 %v3866, 16
    %v3871 = vshrl.u32 %v3866, 16
    %vm3872 = vc.u32 %v3864, %v3868
    %v3873 = vsel %vm3872, 1, 0
    %v3874 = vadd.s32 %v3864, %v3868
    %v3875 = vadd.s32 %v3867, %v3873
    %vm3876 = vc.u32 %v3874, %v3870
    %v3877 = vsel %vm3876, 1, 0
    %v3878 = vadd.s32 %v3874, %v3870
    %v3879 = vadd.s32 %v3875, %v3877
    %v3880 = vadd.s32 %v3879, %v3869
    %v3881 = vadd.s32 %v3880, %v3871
    %v3882 = vmul.u32 %v3837, %v3828
    %v3883 = vadd.s32 %v3859, %v3878
    %vm3884 = vc.u32 %v3859, %v3878
    %v3885 = vadd.s32 %v3881, 1
    %v3886 = vsel %vm3884, %v3885, %v3881
    %v3887 = vadd.s32 %v3882, %v3886
    %v3888 = vadd.s32 %v3887, 536870912
    %v3889 = vshrl.u32 %v3888, 30
    %v3890 = vshll.u32 %v3889, 30
    %v3891 = vsub.s32 %v3887, %v3890
    %vm3892 = vcmp.lt.s32.totalorder %v3891, 0
    %v3893 = vsub.s32 0, %v3891
    %v3894 = vsel %vm3892, %v3893, %v3891
    %v3895 = vclz %v3894
    %v3896 = vsub.s32 %v3895, 2
    %vm3897 = vcmp.gt.s32.totalorder 0, %v3896
    %v3898 = vsel %vm3897, 0, %v3896
    %v3899 = vsub.s32 32, %v3898
    %v3900 = vshll.u32 %v3891, %v3898
    %v3901 = vshrl.u32 %v3883, %v3899
    %v3902 = vor.u32 %v3900, %v3901
    %v3903 = vsub.s32 4294967266, %v3898
    %v3904 = vadd.s32 %v3903, 127
    %v3905 = vshll.u32 %v3904, 23
    %v3906 = vor.u32 4788187, %v3905
    %v3907 = vand.u32 2147483647, %v3906
    %v3909 = vcvt.s32.f32 %v3902
    %v3910 = vmul.f32 %v3909, %v3907
    %v3911 = vxor.u32 %v3910, 2147483648
    %v3912 = vsel %vm3791, %v3911, %v3910
    %v3913 = vsub.s32 4, %v3889
    %v3914 = vsel %vm3791, %v3913, %v3889
    %v3915 = vsel %vm3790, %v236, %v3912
    %v3916 = vsel %vm3790, 0, %v3914
    %v3917 = vmul.f32 %v3915, %v3915
    %v3918 = vmul.f32 %v3917, -0.001358992
    %v3919 = vadd.f32 %v3918, 0.041655596
    %v3920 = vmul.f32 %v3917, %v3919
    %v3921 = vadd.f32 %v3920, -0.4999988
    %v3922 = vmul.f32 %v3917, %v3921
    %v3923 = vadd.f32 1.0, %v3922
    %v3924 = vmul.f32 %v3915, %v3915
    %v3925 = vmul.f32 %v3924, -0.00019511016
    %v3926 = vadd.f32 %v3925, 0.008332121
    %v3927 = vmul.f32 %v3924, %v3926
    %v3928 = vadd.f32 %v3927, -0.16666654
    %v3929 = vmul.f32 %v3924, %v3928
    %v3930 = vadd.f32 %v3929, 1.0
    %v3931 = vmul.f32 %v3930, %v3915
    %vm3932 = vweird.f32 %v236
    %v3933 = vand.u32 %v3916, 3
    %vm3934 = vcmp.lt.s32.totalorder %v3933, 2
    %vm3935 = vcmp.eq.s32.totalorder %v3933, 0
    %v3936 = vxor.u32 %v3931, 2147483648
    %v3937 = vsel %vm3935, %v3923, %v3936
    %vm3938 = vcmp.eq.s32.totalorder %v3933, 2
    %v3939 = vxor.u32 %v3923, 2147483648
    %v3940 = vsel %vm3938, %v3939, %v3931
    %v3941 = vsel %vm3934, %v3937, %v3940
    %v3942 = vsel %vm3932, nan, %v3941
    %v3943 = vand.u32 2147483647, %v237
    %vm3944 = vcmp.le.f32.partialorder %v3943, 0.7853982
    %vm3945 = vcmp.lt.s32.totalorder %v237, 0
    %v3946 = vand.u32 %v237, 2139095040
    %v3947 = vshrl.u32 %v3946, 23
    %v3948 = vsub.s32 %v3947, 127
    %v3949 = vand.u32 2147483647, %v237
    %v3950 = vand.u32 %v3949, 8388607
    %v3951 = vor.u32 %v3950, 8388608
    %v3952 = vsub.s32 0, %v3951
    %v3953 = vadd.s32 %v3948, 1
    %vm3954 = vcmp.gt.s32.totalorder %v3953, 0
    %v3955 = vsel %vm3954, %v3953, 0
    %v3956 = vshrl.u32 %v3955, 5
    %v3957 = vand.u32 %v3955, 31
    %v3958 = vsub.s32 32, %v3957
    %v3959 = vshrl.u32 683565275, %v3958
    %v3960 = vshll.u32 683565275, %v3957
    %v3961 = vshrl.u32 2475754826, %v3958
    %v3962 = vor.u32 %v3960, %v3961
    %v3963 = vshll.u32 2475754826, %v3957
    %v3964 = vshrl.u32 2131351028, %v3958
    %v3965 = vor.u32 %v3963, %v3964
    %v3966 = vshll.u32 2131351028, %v3957
    %v3967 = vshrl.u32 2102212464, %v3958
    %v3968 = vor.u32 %v3966, %v3967
    %v3969 = vshll.u32 2102212464, %v3957
    %v3970 = vshrl.u32 920167782, %v3958
    %v3971 = vor.u32 %v3969, %v3970
    %v3972 = vshll.u32 920167782, %v3957
    %v3973 = vshrl.u32 1326507024, %v3958
    %v3974 = vor.u32 %v3972, %v3973
    %vm3975 = vcmp.lt.s32.totalorder %v3956, 1
    %vm3976 = vcmp.lt.s32.totalorder %v3956, 2
    %vm3977 = vcmp.lt.s32.totalorder %v3956, 3
    %vm3978 = vcmp.lt.s32.totalorder %v3956, 4
    %v3979 = vsel %vm3975, %v3959, %v3962
    %v3980 = vsel %vm3978, %v3968, 2102212464
    %v3981 = vsel %vm3977, %v3965, %v3980
    %v3982 = vsel %vm3976, %v3979, %v3981
    %v3983 = vsel %vm3975, %v3962, %v3965
    %v3984 = vsel %vm3978, %v3971, 920167782
    %v3985 = vsel %vm3977, %v3968, %v3984
    %v3986 = vsel %vm3976, %v3983, %v3985
    %v3987 = vsel %vm3975, %v3965, %v3968
    %v3988 = vsel %vm3978, %v3974, 1326507024
    %v3989 = vsel %vm3977, %v3971, %v3988
    %v3990 = vsel %vm3976, %v3987, %v3989
    %v3991 = vshll.u32 %v3951, 8
    %v3992 = vand.u32 %v3991, 65535
    %v3993 = vshrl.u32 %v3991, 16
    %v3994 = vand.u32 %v3990, 65535
    %v3995 = vshrl.u32 %v3990, 16
    %v3996 = vmul.u32 %v3992, %v3994
    %v3997 = vmul.u32 %v3992, %v3995
    %v3998 = vmul.u32 %v3993, %v3994
    %v3999 = vmul.u32 %v3993, %v3995
    %v4000 = vshll.u32 %v3997, 16
    %v4001 = vshrl.u32 %v3997, 16
    %v4002 = vshll.u32 %v3998, 16
    %v4003 = vshrl.u32 %v3998, 16
    %vm4004 = vc.u32 %v3996, %v4000
    %v4005 = vsel %vm4004, 1, 0
    %v4006 = vadd.s32 %v3996, %v4000
    %v4007 = vadd.s32 %v3999, %v4005
    %vm4008 = vc.u32 %v4006, %v4002
    %v4009 = vsel %vm4008, 1, 0
    %v4010 = vadd.s32 %v4006, %v4002
    %v4011 = vadd.s32 %v4007, %v4009
    %v4012 = vadd.s32 %v4011, %v4001
    %v4013 = vadd.s32 %v4012, %v4003
    %v4014 = vand.u32 %v3991, 65535
    %v4015 = vshrl.u32 %v3991, 16
    %v4016 = vand.u32 %v3986, 65535
    %v4017 = vshrl.u32 %v3986, 16
    %v4018 = vmul.u32 %v4014, %v4016
    %v4019 = vmul.u32 %v4014, %v4017
    %v4020 = vmul.u32 %v4015, %v4016
    %v4021 = vmul.u32 %v4015, %v4017
    %v4022 = vshll.u32 %v4019, 16
    %v4023 = vshrl.u32 %v4019, 16
    %v4024 = vshll.u32 %v4020, 16
    %v4025 = vshrl.u32 %v4020, 16
    %vm4026 = vc.u32 %v4018, %v4022
    %v4027 = vsel %vm4026, 1, 0
    %v4028 = vadd.s32 %v4018, %v4022
    %v4029 = vadd.s32 %v4021, %v4027
    %vm4030 = vc.u32 %v4028, %v4024
    %v4031 = vsel %vm4030, 1, 0
    %v4032 = vadd.s32 %v4028, %v4024
    %v4033 = vadd.s32 %v4029, %v4031
    %v4034 = vadd.s32 %v4033, %v4023
    %v4035 = vadd.s32 %v4034, %v4025
    %v4036 = vmul.u32 %v3991, %v3982
    %v4037 = vadd.s32 %v4013, %v4032
    %vm4038 = vc.u32 %v4013, %v4032
    %v4039 = vadd.s32 %v4035, 1
    %v4040 = vsel %vm4038, %v4039, %v4035
    %v4041 = vadd.s32 %v4036, %v4040
    %v4042 = vadd.s32 %v4041, 536870912
    %v4043 = vshrl.u32 %v4042, 30
    %v4044 = vshll.u32 %v4043, 30
    %v4045 = vsub.s32 %v4041, %v4044
    %vm4046 = vcmp.lt.s32.totalorder %v4045, 0
    %v4047 = vsub.s32 0, %v4045
    %v4048 = vsel %vm4046, %v4047, %v4045
    %v4049 = vclz %v4048
    %v4050 = vsub.s32 %v4049, 2
    %vm4051 = vcmp.gt.s32.totalorder 0, %v4050
    %v4052 = vsel %vm4051, 0, %v4050
    %v4053 = vsub.s32 32, %v4052
    %v4054 = vshll.u32 %v4045, %v4052
    %v4055 = vshrl.u32 %v4037, %v4053
    %v4056 = vor.u32 %v4054, %v4055
    %v4057 = vsub.s32 4294967266, %v4052
    %v4058 = vadd.s32 %v4057, 127
    %v4059 = vshll.u32 %v4058, 23
    %v4060 = vor.u32 4788187, %v4059
    %v4061 = vand.u32 2147483647, %v4060
    %v4063 = vcvt.s32.f32 %v4056
    %v4064 = vmul.f32 %v4063, %v4061
    %v4065 = vxor.u32 %v4064, 2147483648
    %v4066 = vsel %vm3945, %v4065, %v4064
    %v4067 = vsub.s32 4, %v4043
    %v4068 = vsel %vm3945, %v4067, %v4043
    %v4069 = vsel %vm3944, %v237, %v4066
    %v4070 = vsel %vm3944, 0, %v4068
    %v4071 = vmul.f32 %v4069, %v4069
    %v4072 = vmul.f32 %v4071, -0.001358992
    %v4073 = vadd.f32 %v4072, 0.041655596
    %v4074 = vmul.f32 %v4071, %v4073
    %v4075 = vadd.f32 %v4074, -0.4999988
    %v4076 = vmul.f32 %v4071, %v4075
    %v4077 = vadd.f32 1.0, %v4076
    %v4078 = vmul.f32 %v4069, %v4069
    %v4079 = vmul.f32 %v4078, -0.00019511016
    %v4080 = vadd.f32 %v4079, 0.008332121
    %v4081 = vmul.f32 %v4078, %v4080
    %v4082 = vadd.f32 %v4081, -0.16666654
    %v4083 = vmul.f32 %v4078, %v4082
    %v4084 = vadd.f32 %v4083, 1.0
    %v4085 = vmul.f32 %v4084, %v4069
    %vm4086 = vweird.f32 %v237
    %v4087 = vand.u32 %v4070, 3
    %vm4088 = vcmp.lt.s32.totalorder %v4087, 2
    %vm4089 = vcmp.eq.s32.totalorder %v4087, 0
    %v4090 = vxor.u32 %v4085, 2147483648
    %v4091 = vsel %vm4089, %v4077, %v4090
    %vm4092 = vcmp.eq.s32.totalorder %v4087, 2
    %v4093 = vxor.u32 %v4077, 2147483648
    %v4094 = vsel %vm4092, %v4093, %v4085
    %v4095 = vsel %vm4088, %v4091, %v4094
    %v4096 = vsel %vm4086, nan, %v4095
    %v4097 = vand.u32 2147483647, %v238
    %vm4098 = vcmp.le.f32.partialorder %v4097, 0.7853982
    %vm4099 = vcmp.lt.s32.totalorder %v238, 0
    %v4100 = vand.u32 %v238, 2139095040
    %v4101 = vshrl.u32 %v4100, 23
    %v4102 = vsub.s32 %v4101, 127
    %v4103 = vand.u32 2147483647, %v238
    %v4104 = vand.u32 %v4103, 8388607
    %v4105 = vor.u32 %v4104, 8388608
    %v4106 = vsub.s32 0, %v4105
    %v4107 = vadd.s32 %v4102, 1
    %vm4108 = vcmp.gt.s32.totalorder %v4107, 0
    %v4109 = vsel %vm4108, %v4107, 0
    %v4110 = vshrl.u32 %v4109, 5
    %v4111 = vand.u32 %v4109, 31
    %v4112 = vsub.s32 32, %v4111
    %v4113 = vshrl.u32 683565275, %v4112
    %v4114 = vshll.u32 683565275, %v4111
    %v4115 = vshrl.u32 2475754826, %v4112
    %v4116 = vor.u32 %v4114, %v4115
    %v4117 = vshll.u32 2475754826, %v4111
    %v4118 = vshrl.u32 2131351028, %v4112
    %v4119 = vor.u32 %v4117, %v4118
    %v4120 = vshll.u32 2131351028, %v4111
    %v4121 = vshrl.u32 2102212464, %v4112
    %v4122 = vor.u32 %v4120, %v4121
    %v4123 = vshll.u32 2102212464, %v4111
    %v4124 = vshrl.u32 920167782, %v4112
    %v4125 = vor.u32 %v4123, %v4124
    %v4126 = vshll.u32 920167782, %v4111
    %v4127 = vshrl.u32 1326507024, %v4112
    %v4128 = vor.u32 %v4126, %v4127
    %vm4129 = vcmp.lt.s32.totalorder %v4110, 1
    %vm4130 = vcmp.lt.s32.totalorder %v4110, 2
    %vm4131 = vcmp.lt.s32.totalorder %v4110, 3
    %vm4132 = vcmp.lt.s32.totalorder %v4110, 4
    %v4133 = vsel %vm4129, %v4113, %v4116
    %v4134 = vsel %vm4132, %v4122, 2102212464
    %v4135 = vsel %vm4131, %v4119, %v4134
    %v4136 = vsel %vm4130, %v4133, %v4135
    %v4137 = vsel %vm4129, %v4116, %v4119
    %v4138 = vsel %vm4132, %v4125, 920167782
    %v4139 = vsel %vm4131, %v4122, %v4138
    %v4140 = vsel %vm4130, %v4137, %v4139
    %v4141 = vsel %vm4129, %v4119, %v4122
    %v4142 = vsel %vm4132, %v4128, 1326507024
    %v4143 = vsel %vm4131, %v4125, %v4142
    %v4144 = vsel %vm4130, %v4141, %v4143
    %v4145 = vshll.u32 %v4105, 8
    %v4146 = vand.u32 %v4145, 65535
    %v4147 = vshrl.u32 %v4145, 16
    %v4148 = vand.u32 %v4144, 65535
    %v4149 = vshrl.u32 %v4144, 16
    %v4150 = vmul.u32 %v4146, %v4148
    %v4151 = vmul.u32 %v4146, %v4149
    %v4152 = vmul.u32 %v4147, %v4148
    %v4153 = vmul.u32 %v4147, %v4149
    %v4154 = vshll.u32 %v4151, 16
    %v4155 = vshrl.u32 %v4151, 16
    %v4156 = vshll.u32 %v4152, 16
    %v4157 = vshrl.u32 %v4152, 16
    %vm4158 = vc.u32 %v4150, %v4154
    %v4159 = vsel %vm4158, 1, 0
    %v4160 = vadd.s32 %v4150, %v4154
    %v4161 = vadd.s32 %v4153, %v4159
    %vm4162 = vc.u32 %v4160, %v4156
    %v4163 = vsel %vm4162, 1, 0
    %v4164 = vadd.s32 %v4160, %v4156
    %v4165 = vadd.s32 %v4161, %v4163
    %v4166 = vadd.s32 %v4165, %v4155
    %v4167 = vadd.s32 %v4166, %v4157
    %v4168 = vand.u32 %v4145, 65535
    %v4169 = vshrl.u32 %v4145, 16
    %v4170 = vand.u32 %v4140, 65535
    %v4171 = vshrl.u32 %v4140, 16
    %v4172 = vmul.u32 %v4168, %v4170
    %v4173 = vmul.u32 %v4168, %v4171
    %v4174 = vmul.u32 %v4169, %v4170
    %v4175 = vmul.u32 %v4169, %v4171
    %v4176 = vshll.u32 %v4173, 16
    %v4177 = vshrl.u32 %v4173, 16
    %v4178 = vshll.u32 %v4174, 16
    %v4179 = vshrl.u32 %v4174, 16
    %vm4180 = vc.u32 %v4172, %v4176
    %v4181 = vsel %vm4180, 1, 0
    %v4182 = vadd.s32 %v4172, %v4176
    %v4183 = vadd.s32 %v4175, %v4181
    %vm4184 = vc.u32 %v4182, %v4178
    %v4185 = vsel %vm4184, 1, 0
    %v4186 = vadd.s32 %v4182, %v4178
    %v4187 = vadd.s32 %v4183, %v4185
    %v4188 = vadd.s32 %v4187, %v4177
    %v4189 = vadd.s32 %v4188, %v4179
    %v4190 = vmul.u32 %v4145, %v4136
    %v4191 = vadd.s32 %v4167, %v4186
    %vm4192 = vc.u32 %v4167, %v4186
    %v4193 = vadd.s32 %v4189, 1
    %v4194 = vsel %vm4192, %v4193, %v4189
    %v4195 = vadd.s32 %v4190, %v4194
    %v4196 = vadd.s32 %v4195, 536870912
    %v4197 = vshrl.u32 %v4196, 30
    %v4198 = vshll.u32 %v4197, 30
    %v4199 = vsub.s32 %v4195, %v4198
    %vm4200 = vcmp.lt.s32.totalorder %v4199, 0
    %v4201 = vsub.s32 0, %v4199
    %v4202 = vsel %vm4200, %v4201, %v4199
    %v4203 = vclz %v4202
    %v4204 = vsub.s32 %v4203, 2
    %vm4205 = vcmp.gt.s32.totalorder 0, %v4204
    %v4206 = vsel %vm4205, 0, %v4204
    %v4207 = vsub.s32 32, %v4206
    %v4208 = vshll.u32 %v4199, %v4206
    %v4209 = vshrl.u32 %v4191, %v4207
    %v4210 = vor.u32 %v4208, %v4209
    %v4211 = vsub.s32 4294967266, %v4206
    %v4212 = vadd.s32 %v4211, 127
    %v4213 = vshll.u32 %v4212, 23
    %v4214 = vor.u32 4788187, %v4213
    %v4215 = vand.u32 2147483647, %v4214
    %v4217 = vcvt.s32.f32 %v4210
    %v4218 = vmul.f32 %v4217, %v4215
    %v4219 = vxor.u32 %v4218, 2147483648
    %v4220 = vsel %vm4099, %v4219, %v4218
    %v4221 = vsub.s32 4, %v4197
    %v4222 = vsel %vm4099, %v4221, %v4197
    %v4223 = vsel %vm4098, %v238, %v4220
    %v4224 = vsel %vm4098, 0, %v4222
    %v4225 = vmul.f32 %v4223, %v4223
    %v4226 = vmul.f32 %v4225, -0.001358992
    %v4227 = vadd.f32 %v4226, 0.041655596
    %v4228 = vmul.f32 %v4225, %v4227
    %v4229 = vadd.f32 %v4228, -0.4999988
    %v4230 = vmul.f32 %v4225, %v4229
    %v4231 = vadd.f32 1.0, %v4230
    %v4232 = vmul.f32 %v4223, %v4223
    %v4233 = vmul.f32 %v4232, -0.00019511016
    %v4234 = vadd.f32 %v4233, 0.008332121
    %v4235 = vmul.f32 %v4232, %v4234
    %v4236 = vadd.f32 %v4235, -0.16666654
    %v4237 = vmul.f32 %v4232, %v4236
    %v4238 = vadd.f32 %v4237, 1.0
    %v4239 = vmul.f32 %v4238, %v4223
    %vm4240 = vweird.f32 %v238
    %v4241 = vand.u32 %v4224, 3
    %vm4242 = vcmp.lt.s32.totalorder %v4241, 2
    %vm4243 = vcmp.eq.s32.totalorder %v4241, 0
    %v4244 = vxor.u32 %v4239, 2147483648
    %v4245 = vsel %vm4243, %v4231, %v4244
    %vm4246 = vcmp.eq.s32.totalorder %v4241, 2
    %v4247 = vxor.u32 %v4231, 2147483648
    %v4248 = vsel %vm4246, %v4247, %v4239
    %v4249 = vsel %vm4242, %v4245, %v4248
    %v4250 = vsel %vm4240, nan, %v4249
    %v4251 = vand.u32 2147483647, %v239
    %vm4252 = vcmp.le.f32.partialorder %v4251, 0.7853982
    %vm4253 = vcmp.lt.s32.totalorder %v239, 0
    %v4254 = vand.u32 %v239, 2139095040
    %v4255 = vshrl.u32 %v4254, 23
    %v4256 = vsub.s32 %v4255, 127
    %v4257 = vand.u32 2147483647, %v239
    %v4258 = vand.u32 %v4257, 8388607
    %v4259 = vor.u32 %v4258, 8388608
    %v4260 = vsub.s32 0, %v4259
    %v4261 = vadd.s32 %v4256, 1
    %vm4262 = vcmp.gt.s32.totalorder %v4261, 0
    %v4263 = vsel %vm4262, %v4261, 0
    %v4264 = vshrl.u32 %v4263, 5
    %v4265 = vand.u32 %v4263, 31
    %v4266 = vsub.s32 32, %v4265
    %v4267 = vshrl.u32 683565275, %v4266
    %v4268 = vshll.u32 683565275, %v4265
    %v4269 = vshrl.u32 2475754826, %v4266
    %v4270 = vor.u32 %v4268, %v4269
    %v4271 = vshll.u32 2475754826, %v4265
    %v4272 = vshrl.u32 2131351028, %v4266
    %v4273 = vor.u32 %v4271, %v4272
    %v4274 = vshll.u32 2131351028, %v4265
    %v4275 = vshrl.u32 2102212464, %v4266
    %v4276 = vor.u32 %v4274, %v4275
    %v4277 = vshll.u32 2102212464, %v4265
    %v4278 = vshrl.u32 920167782, %v4266
    %v4279 = vor.u32 %v4277, %v4278
    %v4280 = vshll.u32 920167782, %v4265
    %v4281 = vshrl.u32 1326507024, %v4266
    %v4282 = vor.u32 %v4280, %v4281
    %vm4283 = vcmp.lt.s32.totalorder %v4264, 1
    %vm4284 = vcmp.lt.s32.totalorder %v4264, 2
    %vm4285 = vcmp.lt.s32.totalorder %v4264, 3
    %vm4286 = vcmp.lt.s32.totalorder %v4264, 4
    %v4287 = vsel %vm4283, %v4267, %v4270
    %v4288 = vsel %vm4286, %v4276, 2102212464
    %v4289 = vsel %vm4285, %v4273, %v4288
    %v4290 = vsel %vm4284, %v4287, %v4289
    %v4291 = vsel %vm4283, %v4270, %v4273
    %v4292 = vsel %vm4286, %v4279, 920167782
    %v4293 = vsel %vm4285, %v4276, %v4292
    %v4294 = vsel %vm4284, %v4291, %v4293
    %v4295 = vsel %vm4283, %v4273, %v4276
    %v4296 = vsel %vm4286, %v4282, 1326507024
    %v4297 = vsel %vm4285, %v4279, %v4296
    %v4298 = vsel %vm4284, %v4295, %v4297
    %v4299 = vshll.u32 %v4259, 8
    %v4300 = vand.u32 %v4299, 65535
    %v4301 = vshrl.u32 %v4299, 16
    %v4302 = vand.u32 %v4298, 65535
    %v4303 = vshrl.u32 %v4298, 16
    %v4304 = vmul.u32 %v4300, %v4302
    %v4305 = vmul.u32 %v4300, %v4303
    %v4306 = vmul.u32 %v4301, %v4302
    %v4307 = vmul.u32 %v4301, %v4303
    %v4308 = vshll.u32 %v4305, 16
    %v4309 = vshrl.u32 %v4305, 16
    %v4310 = vshll.u32 %v4306, 16
    %v4311 = vshrl.u32 %v4306, 16
    %vm4312 = vc.u32 %v4304, %v4308
    %v4313 = vsel %vm4312, 1, 0
    %v4314 = vadd.s32 %v4304, %v4308
    %v4315 = vadd.s32 %v4307, %v4313
    %vm4316 = vc.u32 %v4314, %v4310
    %v4317 = vsel %vm4316, 1, 0
    %v4318 = vadd.s32 %v4314, %v4310
    %v4319 = vadd.s32 %v4315, %v4317
    %v4320 = vadd.s32 %v4319, %v4309
    %v4321 = vadd.s32 %v4320, %v4311
    %v4322 = vand.u32 %v4299, 65535
    %v4323 = vshrl.u32 %v4299, 16
    %v4324 = vand.u32 %v4294, 65535
    %v4325 = vshrl.u32 %v4294, 16
    %v4326 = vmul.u32 %v4322, %v4324
    %v4327 = vmul.u32 %v4322, %v4325
    %v4328 = vmul.u32 %v4323, %v4324
    %v4329 = vmul.u32 %v4323, %v4325
    %v4330 = vshll.u32 %v4327, 16
    %v4331 = vshrl.u32 %v4327, 16
    %v4332 = vshll.u32 %v4328, 16
    %v4333 = vshrl.u32 %v4328, 16
    %vm4334 = vc.u32 %v4326, %v4330
    %v4335 = vsel %vm4334, 1, 0
    %v4336 = vadd.s32 %v4326, %v4330
    %v4337 = vadd.s32 %v4329, %v4335
    %vm4338 = vc.u32 %v4336, %v4332
    %v4339 = vsel %vm4338, 1, 0
    %v4340 = vadd.s32 %v4336, %v4332
    %v4341 = vadd.s32 %v4337, %v4339
    %v4342 = vadd.s32 %v4341, %v4331
    %v4343 = vadd.s32 %v4342, %v4333
    %v4344 = vmul.u32 %v4299, %v4290
    %v4345 = vadd.s32 %v4321, %v4340
    %vm4346 = vc.u32 %v4321, %v4340
    %v4347 = vadd.s32 %v4343, 1
    %v4348 = vsel %vm4346, %v4347, %v4343
    %v4349 = vadd.s32 %v4344, %v4348
    %v4350 = vadd.s32 %v4349, 536870912
    %v4351 = vshrl.u32 %v4350, 30
    %v4352 = vshll.u32 %v4351, 30
    %v4353 = vsub.s32 %v4349, %v4352
    %vm4354 = vcmp.lt.s32.totalorder %v4353, 0
    %v4355 = vsub.s32 0, %v4353
    %v4356 = vsel %vm4354, %v4355, %v4353
    %v4357 = vclz %v4356
    %v4358 = vsub.s32 %v4357, 2
    %vm4359 = vcmp.gt.s32.totalorder 0, %v4358
    %v4360 = vsel %vm4359, 0, %v4358
    %v4361 = vsub.s32 32, %v4360
    %v4362 = vshll.u32 %v4353, %v4360
    %v4363 = vshrl.u32 %v4345, %v4361
    %v4364 = vor.u32 %v4362, %v4363
    %v4365 = vsub.s32 4294967266, %v4360
    %v4366 = vadd.s32 %v4365, 127
    %v4367 = vshll.u32 %v4366, 23
    %v4368 = vor.u32 4788187, %v4367
    %v4369 = vand.u32 2147483647, %v4368
    %v4371 = vcvt.s32.f32 %v4364
    %v4372 = vmul.f32 %v4371, %v4369
    %v4373 = vxor.u32 %v4372, 2147483648
    %v4374 = vsel %vm4253, %v4373, %v4372
    %v4375 = vsub.s32 4, %v4351
    %v4376 = vsel %vm4253, %v4375, %v4351
    %v4377 = vsel %vm4252, %v239, %v4374
    %v4378 = vsel %vm4252, 0, %v4376
    %v4379 = vmul.f32 %v4377, %v4377
    %v4380 = vmul.f32 %v4379, -0.001358992
    %v4381 = vadd.f32 %v4380, 0.041655596
    %v4382 = vmul.f32 %v4379, %v4381
    %v4383 = vadd.f32 %v4382, -0.4999988
    %v4384 = vmul.f32 %v4379, %v4383
    %v4385 = vadd.f32 1.0, %v4384
    %v4386 = vmul.f32 %v4377, %v4377
    %v4387 = vmul.f32 %v4386, -0.00019511016
    %v4388 = vadd.f32 %v4387, 0.008332121
    %v4389 = vmul.f32 %v4386, %v4388
    %v4390 = vadd.f32 %v4389, -0.16666654
    %v4391 = vmul.f32 %v4386, %v4390
    %v4392 = vadd.f32 %v4391, 1.0
    %v4393 = vmul.f32 %v4392, %v4377
    %vm4394 = vweird.f32 %v239
    %v4395 = vand.u32 %v4378, 3
    %vm4396 = vcmp.lt.s32.totalorder %v4395, 2
    %vm4397 = vcmp.eq.s32.totalorder %v4395, 0
    %v4398 = vxor.u32 %v4393, 2147483648
    %v4399 = vsel %vm4397, %v4385, %v4398
    %vm4400 = vcmp.eq.s32.totalorder %v4395, 2
    %v4401 = vxor.u32 %v4385, 2147483648
    %v4402 = vsel %vm4400, %v4401, %v4393
    %v4403 = vsel %vm4396, %v4399, %v4402
    %v4404 = vsel %vm4394, nan, %v4403
    %v4405 = vand.u32 2147483647, %v240
    %vm4406 = vcmp.le.f32.partialorder %v4405, 0.7853982
    %vm4407 = vcmp.lt.s32.totalorder %v240, 0
    %v4408 = vand.u32 %v240, 2139095040
    %v4409 = vshrl.u32 %v4408, 23
    %v4410 = vsub.s32 %v4409, 127
    %v4411 = vand.u32 2147483647, %v240
    %v4412 = vand.u32 %v4411, 8388607
    %v4413 = vor.u32 %v4412, 8388608
    %v4414 = vsub.s32 0, %v4413
    %v4415 = vadd.s32 %v4410, 1
    %vm4416 = vcmp.gt.s32.totalorder %v4415, 0
    %v4417 = vsel %vm4416, %v4415, 0
    %v4418 = vshrl.u32 %v4417, 5
    %v4419 = vand.u32 %v4417, 31
    %v4420 = vsub.s32 32, %v4419
    %v4421 = vshrl.u32 683565275, %v4420
    %v4422 = vshll.u32 683565275, %v4419
    %v4423 = vshrl.u32 2475754826, %v4420
    %v4424 = vor.u32 %v4422, %v4423
    %v4425 = vshll.u32 2475754826, %v4419
    %v4426 = vshrl.u32 2131351028, %v4420
    %v4427 = vor.u32 %v4425, %v4426
    %v4428 = vshll.u32 2131351028, %v4419
    %v4429 = vshrl.u32 2102212464, %v4420
    %v4430 = vor.u32 %v4428, %v4429
    %v4431 = vshll.u32 2102212464, %v4419
    %v4432 = vshrl.u32 920167782, %v4420
    %v4433 = vor.u32 %v4431, %v4432
    %v4434 = vshll.u32 920167782, %v4419
    %v4435 = vshrl.u32 1326507024, %v4420
    %v4436 = vor.u32 %v4434, %v4435
    %vm4437 = vcmp.lt.s32.totalorder %v4418, 1
    %vm4438 = vcmp.lt.s32.totalorder %v4418, 2
    %vm4439 = vcmp.lt.s32.totalorder %v4418, 3
    %vm4440 = vcmp.lt.s32.totalorder %v4418, 4
    %v4441 = vsel %vm4437, %v4421, %v4424
    %v4442 = vsel %vm4440, %v4430, 2102212464
    %v4443 = vsel %vm4439, %v4427, %v4442
    %v4444 = vsel %vm4438, %v4441, %v4443
    %v4445 = vsel %vm4437, %v4424, %v4427
    %v4446 = vsel %vm4440, %v4433, 920167782
    %v4447 = vsel %vm4439, %v4430, %v4446
    %v4448 = vsel %vm4438, %v4445, %v4447
    %v4449 = vsel %vm4437, %v4427, %v4430
    %v4450 = vsel %vm4440, %v4436, 1326507024
    %v4451 = vsel %vm4439, %v4433, %v4450
    %v4452 = vsel %vm4438, %v4449, %v4451
    %v4453 = vshll.u32 %v4413, 8
    %v4454 = vand.u32 %v4453, 65535
    %v4455 = vshrl.u32 %v4453, 16
    %v4456 = vand.u32 %v4452, 65535
    %v4457 = vshrl.u32 %v4452, 16
    %v4458 = vmul.u32 %v4454, %v4456
    %v4459 = vmul.u32 %v4454, %v4457
    %v4460 = vmul.u32 %v4455, %v4456
    %v4461 = vmul.u32 %v4455, %v4457
    %v4462 = vshll.u32 %v4459, 16
    %v4463 = vshrl.u32 %v4459, 16
    %v4464 = vshll.u32 %v4460, 16
    %v4465 = vshrl.u32 %v4460, 16
    %vm4466 = vc.u32 %v4458, %v4462
    %v4467 = vsel %vm4466, 1, 0
    %v4468 = vadd.s32 %v4458, %v4462
    %v4469 = vadd.s32 %v4461, %v4467
    %vm4470 = vc.u32 %v4468, %v4464
    %v4471 = vsel %vm4470, 1, 0
    %v4472 = vadd.s32 %v4468, %v4464
    %v4473 = vadd.s32 %v4469, %v4471
    %v4474 = vadd.s32 %v4473, %v4463
    %v4475 = vadd.s32 %v4474, %v4465
    %v4476 = vand.u32 %v4453, 65535
    %v4477 = vshrl.u32 %v4453, 16
    %v4478 = vand.u32 %v4448, 65535
    %v4479 = vshrl.u32 %v4448, 16
    %v4480 = vmul.u32 %v4476, %v4478
    %v4481 = vmul.u32 %v4476, %v4479
    %v4482 = vmul.u32 %v4477, %v4478
    %v4483 = vmul.u32 %v4477, %v4479
    %v4484 = vshll.u32 %v4481, 16
    %v4485 = vshrl.u32 %v4481, 16
    %v4486 = vshll.u32 %v4482, 16
    %v4487 = vshrl.u32 %v4482, 16
    %vm4488 = vc.u32 %v4480, %v4484
    %v4489 = vsel %vm4488, 1, 0
    %v4490 = vadd.s32 %v4480, %v4484
    %v4491 = vadd.s32 %v4483, %v4489
    %vm4492 = vc.u32 %v4490, %v4486
    %v4493 = vsel %vm4492, 1, 0
    %v4494 = vadd.s32 %v4490, %v4486
    %v4495 = vadd.s32 %v4491, %v4493
    %v4496 = vadd.s32 %v4495, %v4485
    %v4497 = vadd.s32 %v4496, %v4487
    %v4498 = vmul.u32 %v4453, %v4444
    %v4499 = vadd.s32 %v4475, %v4494
    %vm4500 = vc.u32 %v4475, %v4494
    %v4501 = vadd.s32 %v4497, 1
    %v4502 = vsel %vm4500, %v4501, %v4497
    %v4503 = vadd.s32 %v4498, %v4502
    %v4504 = vadd.s32 %v4503, 536870912
    %v4505 = vshrl.u32 %v4504, 30
    %v4506 = vshll.u32 %v4505, 30
    %v4507 = vsub.s32 %v4503, %v4506
    %vm4508 = vcmp.lt.s32.totalorder %v4507, 0
    %v4509 = vsub.s32 0, %v4507
    %v4510 = vsel %vm4508, %v4509, %v4507
    %v4511 = vclz %v4510
    %v4512 = vsub.s32 %v4511, 2
    %vm4513 = vcmp.gt.s32.totalorder 0, %v4512
    %v4514 = vsel %vm4513, 0, %v4512
    %v4515 = vsub.s32 32, %v4514
    %v4516 = vshll.u32 %v4507, %v4514
    %v4517 = vshrl.u32 %v4499, %v4515
    %v4518 = vor.u32 %v4516, %v4517
    %v4519 = vsub.s32 4294967266, %v4514
    %v4520 = vadd.s32 %v4519, 127
    %v4521 = vshll.u32 %v4520, 23
    %v4522 = vor.u32 4788187, %v4521
    %v4523 = vand.u32 2147483647, %v4522
    %v4525 = vcvt.s32.f32 %v4518
    %v4526 = vmul.f32 %v4525, %v4523
    %v4527 = vxor.u32 %v4526, 2147483648
    %v4528 = vsel %vm4407, %v4527, %v4526
    %v4529 = vsub.s32 4, %v4505
    %v4530 = vsel %vm4407, %v4529, %v4505
    %v4531 = vsel %vm4406, %v240, %v4528
    %v4532 = vsel %vm4406, 0, %v4530
    %v4533 = vmul.f32 %v4531, %v4531
    %v4534 = vmul.f32 %v4533, -0.001358992
    %v4535 = vadd.f32 %v4534, 0.041655596
    %v4536 = vmul.f32 %v4533, %v4535
    %v4537 = vadd.f32 %v4536, -0.4999988
    %v4538 = vmul.f32 %v4533, %v4537
    %v4539 = vadd.f32 1.0, %v4538
    %v4540 = vmul.f32 %v4531, %v4531
    %v4541 = vmul.f32 %v4540, -0.00019511016
    %v4542 = vadd.f32 %v4541, 0.008332121
    %v4543 = vmul.f32 %v4540, %v4542
    %v4544 = vadd.f32 %v4543, -0.16666654
    %v4545 = vmul.f32 %v4540, %v4544
    %v4546 = vadd.f32 %v4545, 1.0
    %v4547 = vmul.f32 %v4546, %v4531
    %vm4548 = vweird.f32 %v240
    %v4549 = vand.u32 %v4532, 3
    %vm4550 = vcmp.lt.s32.totalorder %v4549, 2
    %vm4551 = vcmp.eq.s32.totalorder %v4549, 0
    %v4552 = vxor.u32 %v4547, 2147483648
    %v4553 = vsel %vm4551, %v4539, %v4552
    %vm4554 = vcmp.eq.s32.totalorder %v4549, 2
    %v4555 = vxor.u32 %v4539, 2147483648
    %v4556 = vsel %vm4554, %v4555, %v4547
    %v4557 = vsel %vm4550, %v4553, %v4556
    %v4558 = vsel %vm4548, nan, %v4557
    %v4559 = vand.u32 2147483647, %v241
    %vm4560 = vcmp.le.f32.partialorder %v4559, 0.7853982
    %vm4561 = vcmp.lt.s32.totalorder %v241, 0
    %v4562 = vand.u32 %v241, 2139095040
    %v4563 = vshrl.u32 %v4562, 23
    %v4564 = vsub.s32 %v4563, 127
    %v4565 = vand.u32 2147483647, %v241
    %v4566 = vand.u32 %v4565, 8388607
    %v4567 = vor.u32 %v4566, 8388608
    %v4568 = vsub.s32 0, %v4567
    %v4569 = vadd.s32 %v4564, 1
    %vm4570 = vcmp.gt.s32.totalorder %v4569, 0
    %v4571 = vsel %vm4570, %v4569, 0
    %v4572 = vshrl.u32 %v4571, 5
    %v4573 = vand.u32 %v4571, 31
    %v4574 = vsub.s32 32, %v4573
    %v4575 = vshrl.u32 683565275, %v4574
    %v4576 = vshll.u32 683565275, %v4573
    %v4577 = vshrl.u32 2475754826, %v4574
    %v4578 = vor.u32 %v4576, %v4577
    %v4579 = vshll.u32 2475754826, %v4573
    %v4580 = vshrl.u32 2131351028, %v4574
    %v4581 = vor.u32 %v4579, %v4580
    %v4582 = vshll.u32 2131351028, %v4573
    %v4583 = vshrl.u32 2102212464, %v4574
    %v4584 = vor.u32 %v4582, %v4583
    %v4585 = vshll.u32 2102212464, %v4573
    %v4586 = vshrl.u32 920167782, %v4574
    %v4587 = vor.u32 %v4585, %v4586
    %v4588 = vshll.u32 920167782, %v4573
    %v4589 = vshrl.u32 1326507024, %v4574
    %v4590 = vor.u32 %v4588, %v4589
    %vm4591 = vcmp.lt.s32.totalorder %v4572, 1
    %vm4592 = vcmp.lt.s32.totalorder %v4572, 2
    %vm4593 = vcmp.lt.s32.totalorder %v4572, 3
    %vm4594 = vcmp.lt.s32.totalorder %v4572, 4
    %v4595 = vsel %vm4591, %v4575, %v4578
    %v4596 = vsel %vm4594, %v4584, 2102212464
    %v4597 = vsel %vm4593, %v4581, %v4596
    %v4598 = vsel %vm4592, %v4595, %v4597
    %v4599 = vsel %vm4591, %v4578, %v4581
    %v4600 = vsel %vm4594, %v4587, 920167782
    %v4601 = vsel %vm4593, %v4584, %v4600
    %v4602 = vsel %vm4592, %v4599, %v4601
    %v4603 = vsel %vm4591, %v4581, %v4584
    %v4604 = vsel %vm4594, %v4590, 1326507024
    %v4605 = vsel %vm4593, %v4587, %v4604
    %v4606 = vsel %vm4592, %v4603, %v4605
    %v4607 = vshll.u32 %v4567, 8
    %v4608 = vand.u32 %v4607, 65535
    %v4609 = vshrl.u32 %v4607, 16
    %v4610 = vand.u32 %v4606, 65535
    %v4611 = vshrl.u32 %v4606, 16
    %v4612 = vmul.u32 %v4608, %v4610
    %v4613 = vmul.u32 %v4608, %v4611
    %v4614 = vmul.u32 %v4609, %v4610
    %v4615 = vmul.u32 %v4609, %v4611
    %v4616 = vshll.u32 %v4613, 16
    %v4617 = vshrl.u32 %v4613, 16
    %v4618 = vshll.u32 %v4614, 16
    %v4619 = vshrl.u32 %v4614, 16
    %vm4620 = vc.u32 %v4612, %v4616
    %v4621 = vsel %vm4620, 1, 0
    %v4622 = vadd.s32 %v4612, %v4616
    %v4623 = vadd.s32 %v4615, %v4621
    %vm4624 = vc.u32 %v4622, %v4618
    %v4625 = vsel %vm4624, 1, 0
    %v4626 = vadd.s32 %v4622, %v4618
    %v4627 = vadd.s32 %v4623, %v4625
    %v4628 = vadd.s32 %v4627, %v4617
    %v4629 = vadd.s32 %v4628, %v4619
    %v4630 = vand.u32 %v4607, 65535
    %v4631 = vshrl.u32 %v4607, 16
    %v4632 = vand.u32 %v4602, 65535
    %v4633 = vshrl.u32 %v4602, 16
    %v4634 = vmul.u32 %v4630, %v4632
    %v4635 = vmul.u32 %v4630, %v4633
    %v4636 = vmul.u32 %v4631, %v4632
    %v4637 = vmul.u32 %v4631, %v4633
    %v4638 = vshll.u32 %v4635, 16
    %v4639 = vshrl.u32 %v4635, 16
    %v4640 = vshll.u32 %v4636, 16
    %v4641 = vshrl.u32 %v4636, 16
    %vm4642 = vc.u32 %v4634, %v4638
    %v4643 = vsel %vm4642, 1, 0
    %v4644 = vadd.s32 %v4634, %v4638
    %v4645 = vadd.s32 %v4637, %v4643
    %vm4646 = vc.u32 %v4644, %v4640
    %v4647 = vsel %vm4646, 1, 0
    %v4648 = vadd.s32 %v4644, %v4640
    %v4649 = vadd.s32 %v4645, %v4647
    %v4650 = vadd.s32 %v4649, %v4639
    %v4651 = vadd.s32 %v4650, %v4641
    %v4652 = vmul.u32 %v4607, %v4598
    %v4653 = vadd.s32 %v4629, %v4648
    %vm4654 = vc.u32 %v4629, %v4648
    %v4655 = vadd.s32 %v4651, 1
    %v4656 = vsel %vm4654, %v4655, %v4651
    %v4657 = vadd.s32 %v4652, %v4656
    %v4658 = vadd.s32 %v4657, 536870912
    %v4659 = vshrl.u32 %v4658, 30
    %v4660 = vshll.u32 %v4659, 30
    %v4661 = vsub.s32 %v4657, %v4660
    %vm4662 = vcmp.lt.s32.totalorder %v4661, 0
    %v4663 = vsub.s32 0, %v4661
    %v4664 = vsel %vm4662, %v4663, %v4661
    %v4665 = vclz %v4664
    %v4666 = vsub.s32 %v4665, 2
    %vm4667 = vcmp.gt.s32.totalorder 0, %v4666
    %v4668 = vsel %vm4667, 0, %v4666
    %v4669 = vsub.s32 32, %v4668
    %v4670 = vshll.u32 %v4661, %v4668
    %v4671 = vshrl.u32 %v4653, %v4669
    %v4672 = vor.u32 %v4670, %v4671
    %v4673 = vsub.s32 4294967266, %v4668
    %v4674 = vadd.s32 %v4673, 127
    %v4675 = vshll.u32 %v4674, 23
    %v4676 = vor.u32 4788187, %v4675
    %v4677 = vand.u32 2147483647, %v4676
    %v4679 = vcvt.s32.f32 %v4672
    %v4680 = vmul.f32 %v4679, %v4677
    %v4681 = vxor.u32 %v4680, 2147483648
    %v4682 = vsel %vm4561, %v4681, %v4680
    %v4683 = vsub.s32 4, %v4659
    %v4684 = vsel %vm4561, %v4683, %v4659
    %v4685 = vsel %vm4560, %v241, %v4682
    %v4686 = vsel %vm4560, 0, %v4684
    %v4687 = vmul.f32 %v4685, %v4685
    %v4688 = vmul.f32 %v4687, -0.001358992
    %v4689 = vadd.f32 %v4688, 0.041655596
    %v4690 = vmul.f32 %v4687, %v4689
    %v4691 = vadd.f32 %v4690, -0.4999988
    %v4692 = vmul.f32 %v4687, %v4691
    %v4693 = vadd.f32 1.0, %v4692
    %v4694 = vmul.f32 %v4685, %v4685
    %v4695 = vmul.f32 %v4694, -0.00019511016
    %v4696 = vadd.f32 %v4695, 0.008332121
    %v4697 = vmul.f32 %v4694, %v4696
    %v4698 = vadd.f32 %v4697, -0.16666654
    %v4699 = vmul.f32 %v4694, %v4698
    %v4700 = vadd.f32 %v4699, 1.0
    %v4701 = vmul.f32 %v4700, %v4685
    %vm4702 = vweird.f32 %v241
    %v4703 = vand.u32 %v4686, 3
    %vm4704 = vcmp.lt.s32.totalorder %v4703, 2
    %vm4705 = vcmp.eq.s32.totalorder %v4703, 0
    %v4706 = vxor.u32 %v4701, 2147483648
    %v4707 = vsel %vm4705, %v4693, %v4706
    %vm4708 = vcmp.eq.s32.totalorder %v4703, 2
    %v4709 = vxor.u32 %v4693, 2147483648
    %v4710 = vsel %vm4708, %v4709, %v4701
    %v4711 = vsel %vm4704, %v4707, %v4710
    %v4712 = vsel %vm4702, nan, %v4711
    %v4713 = vand.u32 2147483647, %v242
    %vm4714 = vcmp.le.f32.partialorder %v4713, 0.7853982
    %vm4715 = vcmp.lt.s32.totalorder %v242, 0
    %v4716 = vand.u32 %v242, 2139095040
    %v4717 = vshrl.u32 %v4716, 23
    %v4718 = vsub.s32 %v4717, 127
    %v4719 = vand.u32 2147483647, %v242
    %v4720 = vand.u32 %v4719, 8388607
    %v4721 = vor.u32 %v4720, 8388608
    %v4722 = vsub.s32 0, %v4721
    %v4723 = vadd.s32 %v4718, 1
    %vm4724 = vcmp.gt.s32.totalorder %v4723, 0
    %v4725 = vsel %vm4724, %v4723, 0
    %v4726 = vshrl.u32 %v4725, 5
    %v4727 = vand.u32 %v4725, 31
    %v4728 = vsub.s32 32, %v4727
    %v4729 = vshrl.u32 683565275, %v4728
    %v4730 = vshll.u32 683565275, %v4727
    %v4731 = vshrl.u32 2475754826, %v4728
    %v4732 = vor.u32 %v4730, %v4731
    %v4733 = vshll.u32 2475754826, %v4727
    %v4734 = vshrl.u32 2131351028, %v4728
    %v4735 = vor.u32 %v4733, %v4734
    %v4736 = vshll.u32 2131351028, %v4727
    %v4737 = vshrl.u32 2102212464, %v4728
    %v4738 = vor.u32 %v4736, %v4737
    %v4739 = vshll.u32 2102212464, %v4727
    %v4740 = vshrl.u32 920167782, %v4728
    %v4741 = vor.u32 %v4739, %v4740
    %v4742 = vshll.u32 920167782, %v4727
    %v4743 = vshrl.u32 1326507024, %v4728
    %v4744 = vor.u32 %v4742, %v4743
    %vm4745 = vcmp.lt.s32.totalorder %v4726, 1
    %vm4746 = vcmp.lt.s32.totalorder %v4726, 2
    %vm4747 = vcmp.lt.s32.totalorder %v4726, 3
    %vm4748 = vcmp.lt.s32.totalorder %v4726, 4
    %v4749 = vsel %vm4745, %v4729, %v4732
    %v4750 = vsel %vm4748, %v4738, 2102212464
    %v4751 = vsel %vm4747, %v4735, %v4750
    %v4752 = vsel %vm4746, %v4749, %v4751
    %v4753 = vsel %vm4745, %v4732, %v4735
    %v4754 = vsel %vm4748, %v4741, 920167782
    %v4755 = vsel %vm4747, %v4738, %v4754
    %v4756 = vsel %vm4746, %v4753, %v4755
    %v4757 = vsel %vm4745, %v4735, %v4738
    %v4758 = vsel %vm4748, %v4744, 1326507024
    %v4759 = vsel %vm4747, %v4741, %v4758
    %v4760 = vsel %vm4746, %v4757, %v4759
    %v4761 = vshll.u32 %v4721, 8
    %v4762 = vand.u32 %v4761, 65535
    %v4763 = vshrl.u32 %v4761, 16
    %v4764 = vand.u32 %v4760, 65535
    %v4765 = vshrl.u32 %v4760, 16
    %v4766 = vmul.u32 %v4762, %v4764
    %v4767 = vmul.u32 %v4762, %v4765
    %v4768 = vmul.u32 %v4763, %v4764
    %v4769 = vmul.u32 %v4763, %v4765
    %v4770 = vshll.u32 %v4767, 16
    %v4771 = vshrl.u32 %v4767, 16
    %v4772 = vshll.u32 %v4768, 16
    %v4773 = vshrl.u32 %v4768, 16
    %vm4774 = vc.u32 %v4766, %v4770
    %v4775 = vsel %vm4774, 1, 0
    %v4776 = vadd.s32 %v4766, %v4770
    %v4777 = vadd.s32 %v4769, %v4775
    %vm4778 = vc.u32 %v4776, %v4772
    %v4779 = vsel %vm4778, 1, 0
    %v4780 = vadd.s32 %v4776, %v4772
    %v4781 = vadd.s32 %v4777, %v4779
    %v4782 = vadd.s32 %v4781, %v4771
    %v4783 = vadd.s32 %v4782, %v4773
    %v4784 = vand.u32 %v4761, 65535
    %v4785 = vshrl.u32 %v4761, 16
    %v4786 = vand.u32 %v4756, 65535
    %v4787 = vshrl.u32 %v4756, 16
    %v4788 = vmul.u32 %v4784, %v4786
    %v4789 = vmul.u32 %v4784, %v4787
    %v4790 = vmul.u32 %v4785, %v4786
    %v4791 = vmul.u32 %v4785, %v4787
    %v4792 = vshll.u32 %v4789, 16
    %v4793 = vshrl.u32 %v4789, 16
    %v4794 = vshll.u32 %v4790, 16
    %v4795 = vshrl.u32 %v4790, 16
    %vm4796 = vc.u32 %v4788, %v4792
    %v4797 = vsel %vm4796, 1, 0
    %v4798 = vadd.s32 %v4788, %v4792
    %v4799 = vadd.s32 %v4791, %v4797
    %vm4800 = vc.u32 %v4798, %v4794
    %v4801 = vsel %vm4800, 1, 0
    %v4802 = vadd.s32 %v4798, %v4794
    %v4803 = vadd.s32 %v4799, %v4801
    %v4804 = vadd.s32 %v4803, %v4793
    %v4805 = vadd.s32 %v4804, %v4795
    %v4806 = vmul.u32 %v4761, %v4752
    %v4807 = vadd.s32 %v4783, %v4802
    %vm4808 = vc.u32 %v4783, %v4802
    %v4809 = vadd.s32 %v4805, 1
    %v4810 = vsel %vm4808, %v4809, %v4805
    %v4811 = vadd.s32 %v4806, %v4810
    %v4812 = vadd.s32 %v4811, 536870912
    %v4813 = vshrl.u32 %v4812, 30
    %v4814 = vshll.u32 %v4813, 30
    %v4815 = vsub.s32 %v4811, %v4814
    %vm4816 = vcmp.lt.s32.totalorder %v4815, 0
    %v4817 = vsub.s32 0, %v4815
    %v4818 = vsel %vm4816, %v4817, %v4815
    %v4819 = vclz %v4818
    %v4820 = vsub.s32 %v4819, 2
    %vm4821 = vcmp.gt.s32.totalorder 0, %v4820
    %v4822 = vsel %vm4821, 0, %v4820
    %v4823 = vsub.s32 32, %v4822
    %v4824 = vshll.u32 %v4815, %v4822
    %v4825 = vshrl.u32 %v4807, %v4823
    %v4826 = vor.u32 %v4824, %v4825
    %v4827 = vsub.s32 4294967266, %v4822
    %v4828 = vadd.s32 %v4827, 127
    %v4829 = vshll.u32 %v4828, 23
    %v4830 = vor.u32 4788187, %v4829
    %v4831 = vand.u32 2147483647, %v4830
    %v4833 = vcvt.s32.f32 %v4826
    %v4834 = vmul.f32 %v4833, %v4831
    %v4835 = vxor.u32 %v4834, 2147483648
    %v4836 = vsel %vm4715, %v4835, %v4834
    %v4837 = vsub.s32 4, %v4813
    %v4838 = vsel %vm4715, %v4837, %v4813
    %v4839 = vsel %vm4714, %v242, %v4836
    %v4840 = vsel %vm4714, 0, %v4838
    %v4841 = vmul.f32 %v4839, %v4839
    %v4842 = vmul.f32 %v4841, -0.001358992
    %v4843 = vadd.f32 %v4842, 0.041655596
    %v4844 = vmul.f32 %v4841, %v4843
    %v4845 = vadd.f32 %v4844, -0.4999988
    %v4846 = vmul.f32 %v4841, %v4845
    %v4847 = vadd.f32 1.0, %v4846
    %v4848 = vmul.f32 %v4839, %v4839
    %v4849 = vmul.f32 %v4848, -0.00019511016
    %v4850 = vadd.f32 %v4849, 0.008332121
    %v4851 = vmul.f32 %v4848, %v4850
    %v4852 = vadd.f32 %v4851, -0.16666654
    %v4853 = vmul.f32 %v4848, %v4852
    %v4854 = vadd.f32 %v4853, 1.0
    %v4855 = vmul.f32 %v4854, %v4839
    %vm4856 = vweird.f32 %v242
    %v4857 = vand.u32 %v4840, 3
    %vm4858 = vcmp.lt.s32.totalorder %v4857, 2
    %vm4859 = vcmp.eq.s32.totalorder %v4857, 0
    %v4860 = vxor.u32 %v4855, 2147483648
    %v4861 = vsel %vm4859, %v4847, %v4860
    %vm4862 = vcmp.eq.s32.totalorder %v4857, 2
    %v4863 = vxor.u32 %v4847, 2147483648
    %v4864 = vsel %vm4862, %v4863, %v4855
    %v4865 = vsel %vm4858, %v4861, %v4864
    %v4866 = vsel %vm4856, nan, %v4865
    %v4867 = vand.u32 2147483647, %v243
    %vm4868 = vcmp.le.f32.partialorder %v4867, 0.7853982
    %vm4869 = vcmp.lt.s32.totalorder %v243, 0
    %v4870 = vand.u32 %v243, 2139095040
    %v4871 = vshrl.u32 %v4870, 23
    %v4872 = vsub.s32 %v4871, 127
    %v4873 = vand.u32 2147483647, %v243
    %v4874 = vand.u32 %v4873, 8388607
    %v4875 = vor.u32 %v4874, 8388608
    %v4876 = vsub.s32 0, %v4875
    %v4877 = vadd.s32 %v4872, 1
    %vm4878 = vcmp.gt.s32.totalorder %v4877, 0
    %v4879 = vsel %vm4878, %v4877, 0
    %v4880 = vshrl.u32 %v4879, 5
    %v4881 = vand.u32 %v4879, 31
    %v4882 = vsub.s32 32, %v4881
    %v4883 = vshrl.u32 683565275, %v4882
    %v4884 = vshll.u32 683565275, %v4881
    %v4885 = vshrl.u32 2475754826, %v4882
    %v4886 = vor.u32 %v4884, %v4885
    %v4887 = vshll.u32 2475754826, %v4881
    %v4888 = vshrl.u32 2131351028, %v4882
    %v4889 = vor.u32 %v4887, %v4888
    %v4890 = vshll.u32 2131351028, %v4881
    %v4891 = vshrl.u32 2102212464, %v4882
    %v4892 = vor.u32 %v4890, %v4891
    %v4893 = vshll.u32 2102212464, %v4881
    %v4894 = vshrl.u32 920167782, %v4882
    %v4895 = vor.u32 %v4893, %v4894
    %v4896 = vshll.u32 920167782, %v4881
    %v4897 = vshrl.u32 1326507024, %v4882
    %v4898 = vor.u32 %v4896, %v4897
    %vm4899 = vcmp.lt.s32.totalorder %v4880, 1
    %vm4900 = vcmp.lt.s32.totalorder %v4880, 2
    %vm4901 = vcmp.lt.s32.totalorder %v4880, 3
    %vm4902 = vcmp.lt.s32.totalorder %v4880, 4
    %v4903 = vsel %vm4899, %v4883, %v4886
    %v4904 = vsel %vm4902, %v4892, 2102212464
    %v4905 = vsel %vm4901, %v4889, %v4904
    %v4906 = vsel %vm4900, %v4903, %v4905
    %v4907 = vsel %vm4899, %v4886, %v4889
    %v4908 = vsel %vm4902, %v4895, 920167782
    %v4909 = vsel %vm4901, %v4892, %v4908
    %v4910 = vsel %vm4900, %v4907, %v4909
    %v4911 = vsel %vm4899, %v4889, %v4892
    %v4912 = vsel %vm4902, %v4898, 1326507024
    %v4913 = vsel %vm4901, %v4895, %v4912
    %v4914 = vsel %vm4900, %v4911, %v4913
    %v4915 = vshll.u32 %v4875, 8
    %v4916 = vand.u32 %v4915, 65535
    %v4917 = vshrl.u32 %v4915, 16
    %v4918 = vand.u32 %v4914, 65535
    %v4919 = vshrl.u32 %v4914, 16
    %v4920 = vmul.u32 %v4916, %v4918
    %v4921 = vmul.u32 %v4916, %v4919
    %v4922 = vmul.u32 %v4917, %v4918
    %v4923 = vmul.u32 %v4917, %v4919
    %v4924 = vshll.u32 %v4921, 16
    %v4925 = vshrl.u32 %v4921, 16
    %v4926 = vshll.u32 %v4922, 16
    %v4927 = vshrl.u32 %v4922, 16
    %vm4928 = vc.u32 %v4920, %v4924
    %v4929 = vsel %vm4928, 1, 0
    %v4930 = vadd.s32 %v4920, %v4924
    %v4931 = vadd.s32 %v4923, %v4929
    %vm4932 = vc.u32 %v4930, %v4926
    %v4933 = vsel %vm4932, 1, 0
    %v4934 = vadd.s32 %v4930, %v4926
    %v4935 = vadd.s32 %v4931, %v4933
    %v4936 = vadd.s32 %v4935, %v4925
    %v4937 = vadd.s32 %v4936, %v4927
    %v4938 = vand.u32 %v4915, 65535
    %v4939 = vshrl.u32 %v4915, 16
    %v4940 = vand.u32 %v4910, 65535
    %v4941 = vshrl.u32 %v4910, 16
    %v4942 = vmul.u32 %v4938, %v4940
    %v4943 = vmul.u32 %v4938, %v4941
    %v4944 = vmul.u32 %v4939, %v4940
    %v4945 = vmul.u32 %v4939, %v4941
    %v4946 = vshll.u32 %v4943, 16
    %v4947 = vshrl.u32 %v4943, 16
    %v4948 = vshll.u32 %v4944, 16
    %v4949 = vshrl.u32 %v4944, 16
    %vm4950 = vc.u32 %v4942, %v4946
    %v4951 = vsel %vm4950, 1, 0
    %v4952 = vadd.s32 %v4942, %v4946
    %v4953 = vadd.s32 %v4945, %v4951
    %vm4954 = vc.u32 %v4952, %v4948
    %v4955 = vsel %vm4954, 1, 0
    %v4956 = vadd.s32 %v4952, %v4948
    %v4957 = vadd.s32 %v4953, %v4955
    %v4958 = vadd.s32 %v4957, %v4947
    %v4959 = vadd.s32 %v4958, %v4949
    %v4960 = vmul.u32 %v4915, %v4906
    %v4961 = vadd.s32 %v4937, %v4956
    %vm4962 = vc.u32 %v4937, %v4956
    %v4963 = vadd.s32 %v4959, 1
    %v4964 = vsel %vm4962, %v4963, %v4959
    %v4965 = vadd.s32 %v4960, %v4964
    %v4966 = vadd.s32 %v4965, 536870912
    %v4967 = vshrl.u32 %v4966, 30
    %v4968 = vshll.u32 %v4967, 30
    %v4969 = vsub.s32 %v4965, %v4968
    %vm4970 = vcmp.lt.s32.totalorder %v4969, 0
    %v4971 = vsub.s32 0, %v4969
    %v4972 = vsel %vm4970, %v4971, %v4969
    %v4973 = vclz %v4972
    %v4974 = vsub.s32 %v4973, 2
    %vm4975 = vcmp.gt.s32.totalorder 0, %v4974
    %v4976 = vsel %vm4975, 0, %v4974
    %v4977 = vsub.s32 32, %v4976
    %v4978 = vshll.u32 %v4969, %v4976
    %v4979 = vshrl.u32 %v4961, %v4977
    %v4980 = vor.u32 %v4978, %v4979
    %v4981 = vsub.s32 4294967266, %v4976
    %v4982 = vadd.s32 %v4981, 127
    %v4983 = vshll.u32 %v4982, 23
    %v4984 = vor.u32 4788187, %v4983
    %v4985 = vand.u32 2147483647, %v4984
    %v4987 = vcvt.s32.f32 %v4980
    %v4988 = vmul.f32 %v4987, %v4985
    %v4989 = vxor.u32 %v4988, 2147483648
    %v4990 = vsel %vm4869, %v4989, %v4988
    %v4991 = vsub.s32 4, %v4967
    %v4992 = vsel %vm4869, %v4991, %v4967
    %v4993 = vsel %vm4868, %v243, %v4990
    %v4994 = vsel %vm4868, 0, %v4992
    %v4995 = vmul.f32 %v4993, %v4993
    %v4996 = vmul.f32 %v4995, -0.001358992
    %v4997 = vadd.f32 %v4996, 0.041655596
    %v4998 = vmul.f32 %v4995, %v4997
    %v4999 = vadd.f32 %v4998, -0.4999988
    %v5000 = vmul.f32 %v4995, %v4999
    %v5001 = vadd.f32 1.0, %v5000
    %v5002 = vmul.f32 %v4993, %v4993
    %v5003 = vmul.f32 %v5002, -0.00019511016
    %v5004 = vadd.f32 %v5003, 0.008332121
    %v5005 = vmul.f32 %v5002, %v5004
    %v5006 = vadd.f32 %v5005, -0.16666654
    %v5007 = vmul.f32 %v5002, %v5006
    %v5008 = vadd.f32 %v5007, 1.0
    %v5009 = vmul.f32 %v5008, %v4993
    %vm5010 = vweird.f32 %v243
    %v5011 = vand.u32 %v4994, 3
    %vm5012 = vcmp.lt.s32.totalorder %v5011, 2
    %vm5013 = vcmp.eq.s32.totalorder %v5011, 0
    %v5014 = vxor.u32 %v5009, 2147483648
    %v5015 = vsel %vm5013, %v5001, %v5014
    %vm5016 = vcmp.eq.s32.totalorder %v5011, 2
    %v5017 = vxor.u32 %v5001, 2147483648
    %v5018 = vsel %vm5016, %v5017, %v5009
    %v5019 = vsel %vm5012, %v5015, %v5018
    %v5020 = vsel %vm5010, nan, %v5019
    %v5021 = vand.u32 2147483647, %v244
    %vm5022 = vcmp.le.f32.partialorder %v5021, 0.7853982
    %vm5023 = vcmp.lt.s32.totalorder %v244, 0
    %v5024 = vand.u32 %v244, 2139095040
    %v5025 = vshrl.u32 %v5024, 23
    %v5026 = vsub.s32 %v5025, 127
    %v5027 = vand.u32 2147483647, %v244
    %v5028 = vand.u32 %v5027, 8388607
    %v5029 = vor.u32 %v5028, 8388608
    %v5030 = vsub.s32 0, %v5029
    %v5031 = vadd.s32 %v5026, 1
    %vm5032 = vcmp.gt.s32.totalorder %v5031, 0
    %v5033 = vsel %vm5032, %v5031, 0
    %v5034 = vshrl.u32 %v5033, 5
    %v5035 = vand.u32 %v5033, 31
    %v5036 = vsub.s32 32, %v5035
    %v5037 = vshrl.u32 683565275, %v5036
    %v5038 = vshll.u32 683565275, %v5035
    %v5039 = vshrl.u32 2475754826, %v5036
    %v5040 = vor.u32 %v5038, %v5039
    %v5041 = vshll.u32 2475754826, %v5035
    %v5042 = vshrl.u32 2131351028, %v5036
    %v5043 = vor.u32 %v5041, %v5042
    %v5044 = vshll.u32 2131351028, %v5035
    %v5045 = vshrl.u32 2102212464, %v5036
    %v5046 = vor.u32 %v5044, %v5045
    %v5047 = vshll.u32 2102212464, %v5035
    %v5048 = vshrl.u32 920167782, %v5036
    %v5049 = vor.u32 %v5047, %v5048
    %v5050 = vshll.u32 920167782, %v5035
    %v5051 = vshrl.u32 1326507024, %v5036
    %v5052 = vor.u32 %v5050, %v5051
    %vm5053 = vcmp.lt.s32.totalorder %v5034, 1
    %vm5054 = vcmp.lt.s32.totalorder %v5034, 2
    %vm5055 = vcmp.lt.s32.totalorder %v5034, 3
    %vm5056 = vcmp.lt.s32.totalorder %v5034, 4
    %v5057 = vsel %vm5053, %v5037, %v5040
    %v5058 = vsel %vm5056, %v5046, 2102212464
    %v5059 = vsel %vm5055, %v5043, %v5058
    %v5060 = vsel %vm5054, %v5057, %v5059
    %v5061 = vsel %vm5053, %v5040, %v5043
    %v5062 = vsel %vm5056, %v5049, 920167782
    %v5063 = vsel %vm5055, %v5046, %v5062
    %v5064 = vsel %vm5054, %v5061, %v5063
    %v5065 = vsel %vm5053, %v5043, %v5046
    %v5066 = vsel %vm5056, %v5052, 1326507024
    %v5067 = vsel %vm5055, %v5049, %v5066
    %v5068 = vsel %vm5054, %v5065, %v5067
    %v5069 = vshll.u32 %v5029, 8
    %v5070 = vand.u32 %v5069, 65535
    %v5071 = vshrl.u32 %v5069, 16
    %v5072 = vand.u32 %v5068, 65535
    %v5073 = vshrl.u32 %v5068, 16
    %v5074 = vmul.u32 %v5070, %v5072
    %v5075 = vmul.u32 %v5070, %v5073
    %v5076 = vmul.u32 %v5071, %v5072
    %v5077 = vmul.u32 %v5071, %v5073
    %v5078 = vshll.u32 %v5075, 16
    %v5079 = vshrl.u32 %v5075, 16
    %v5080 = vshll.u32 %v5076, 16
    %v5081 = vshrl.u32 %v5076, 16
    %vm5082 = vc.u32 %v5074, %v5078
    %v5083 = vsel %vm5082, 1, 0
    %v5084 = vadd.s32 %v5074, %v5078
    %v5085 = vadd.s32 %v5077, %v5083
    %vm5086 = vc.u32 %v5084, %v5080
    %v5087 = vsel %vm5086, 1, 0
    %v5088 = vadd.s32 %v5084, %v5080
    %v5089 = vadd.s32 %v5085, %v5087
    %v5090 = vadd.s32 %v5089, %v5079
    %v5091 = vadd.s32 %v5090, %v5081
    %v5092 = vand.u32 %v5069, 65535
    %v5093 = vshrl.u32 %v5069, 16
    %v5094 = vand.u32 %v5064, 65535
    %v5095 = vshrl.u32 %v5064, 16
    %v5096 = vmul.u32 %v5092, %v5094
    %v5097 = vmul.u32 %v5092, %v5095
    %v5098 = vmul.u32 %v5093, %v5094
    %v5099 = vmul.u32 %v5093, %v5095
    %v5100 = vshll.u32 %v5097, 16
    %v5101 = vshrl.u32 %v5097, 16
    %v5102 = vshll.u32 %v5098, 16
    %v5103 = vshrl.u32 %v5098, 16
    %vm5104 = vc.u32 %v5096, %v5100
    %v5105 = vsel %vm5104, 1, 0
    %v5106 = vadd.s32 %v5096, %v5100
    %v5107 = vadd.s32 %v5099, %v5105
    %vm5108 = vc.u32 %v5106, %v5102
    %v5109 = vsel %vm5108, 1, 0
    %v5110 = vadd.s32 %v5106, %v5102
    %v5111 = vadd.s32 %v5107, %v5109
    %v5112 = vadd.s32 %v5111, %v5101
    %v5113 = vadd.s32 %v5112, %v5103
    %v5114 = vmul.u32 %v5069, %v5060
    %v5115 = vadd.s32 %v5091, %v5110
    %vm5116 = vc.u32 %v5091, %v5110
    %v5117 = vadd.s32 %v5113, 1
    %v5118 = vsel %vm5116, %v5117, %v5113
    %v5119 = vadd.s32 %v5114, %v5118
    %v5120 = vadd.s32 %v5119, 536870912
    %v5121 = vshrl.u32 %v5120, 30
    %v5122 = vshll.u32 %v5121, 30
    %v5123 = vsub.s32 %v5119, %v5122
    %vm5124 = vcmp.lt.s32.totalorder %v5123, 0
    %v5125 = vsub.s32 0, %v5123
    %v5126 = vsel %vm5124, %v5125, %v5123
    %v5127 = vclz %v5126
    %v5128 = vsub.s32 %v5127, 2
    %vm5129 = vcmp.gt.s32.totalorder 0, %v5128
    %v5130 = vsel %vm5129, 0, %v5128
    %v5131 = vsub.s32 32, %v5130
    %v5132 = vshll.u32 %v5123, %v5130
    %v5133 = vshrl.u32 %v5115, %v5131
    %v5134 = vor.u32 %v5132, %v5133
    %v5135 = vsub.s32 4294967266, %v5130
    %v5136 = vadd.s32 %v5135, 127
    %v5137 = vshll.u32 %v5136, 23
    %v5138 = vor.u32 4788187, %v5137
    %v5139 = vand.u32 2147483647, %v5138
    %v5141 = vcvt.s32.f32 %v5134
    %v5142 = vmul.f32 %v5141, %v5139
    %v5143 = vxor.u32 %v5142, 2147483648
    %v5144 = vsel %vm5023, %v5143, %v5142
    %v5145 = vsub.s32 4, %v5121
    %v5146 = vsel %vm5023, %v5145, %v5121
    %v5147 = vsel %vm5022, %v244, %v5144
    %v5148 = vsel %vm5022, 0, %v5146
    %v5149 = vmul.f32 %v5147, %v5147
    %v5150 = vmul.f32 %v5149, -0.001358992
    %v5151 = vadd.f32 %v5150, 0.041655596
    %v5152 = vmul.f32 %v5149, %v5151
    %v5153 = vadd.f32 %v5152, -0.4999988
    %v5154 = vmul.f32 %v5149, %v5153
    %v5155 = vadd.f32 1.0, %v5154
    %v5156 = vmul.f32 %v5147, %v5147
    %v5157 = vmul.f32 %v5156, -0.00019511016
    %v5158 = vadd.f32 %v5157, 0.008332121
    %v5159 = vmul.f32 %v5156, %v5158
    %v5160 = vadd.f32 %v5159, -0.16666654
    %v5161 = vmul.f32 %v5156, %v5160
    %v5162 = vadd.f32 %v5161, 1.0
    %v5163 = vmul.f32 %v5162, %v5147
    %vm5164 = vweird.f32 %v244
    %v5165 = vand.u32 %v5148, 3
    %vm5166 = vcmp.lt.s32.totalorder %v5165, 2
    %vm5167 = vcmp.eq.s32.totalorder %v5165, 0
    %v5168 = vxor.u32 %v5163, 2147483648
    %v5169 = vsel %vm5167, %v5155, %v5168
    %vm5170 = vcmp.eq.s32.totalorder %v5165, 2
    %v5171 = vxor.u32 %v5155, 2147483648
    %v5172 = vsel %vm5170, %v5171, %v5163
    %v5173 = vsel %vm5166, %v5169, %v5172
    %v5174 = vsel %vm5164, nan, %v5173
    %v5175 = vand.u32 2147483647, %v213
    %vm5176 = vcmp.le.f32.partialorder %v5175, 0.7853982
    %vm5177 = vcmp.lt.s32.totalorder %v213, 0
    %v5178 = vand.u32 %v213, 2139095040
    %v5179 = vshrl.u32 %v5178, 23
    %v5180 = vsub.s32 %v5179, 127
    %v5181 = vand.u32 2147483647, %v213
    %v5182 = vand.u32 %v5181, 8388607
    %v5183 = vor.u32 %v5182, 8388608
    %v5184 = vsub.s32 0, %v5183
    %v5185 = vadd.s32 %v5180, 1
    %vm5186 = vcmp.gt.s32.totalorder %v5185, 0
    %v5187 = vsel %vm5186, %v5185, 0
    %v5188 = vshrl.u32 %v5187, 5
    %v5189 = vand.u32 %v5187, 31
    %v5190 = vsub.s32 32, %v5189
    %v5191 = vshrl.u32 683565275, %v5190
    %v5192 = vshll.u32 683565275, %v5189
    %v5193 = vshrl.u32 2475754826, %v5190
    %v5194 = vor.u32 %v5192, %v5193
    %v5195 = vshll.u32 2475754826, %v5189
    %v5196 = vshrl.u32 2131351028, %v5190
    %v5197 = vor.u32 %v5195, %v5196
    %v5198 = vshll.u32 2131351028, %v5189
    %v5199 = vshrl.u32 2102212464, %v5190
    %v5200 = vor.u32 %v5198, %v5199
    %v5201 = vshll.u32 2102212464, %v5189
    %v5202 = vshrl.u32 920167782, %v5190
    %v5203 = vor.u32 %v5201, %v5202
    %v5204 = vshll.u32 920167782, %v5189
    %v5205 = vshrl.u32 1326507024, %v5190
    %v5206 = vor.u32 %v5204, %v5205
    %vm5207 = vcmp.lt.s32.totalorder %v5188, 1
    %vm5208 = vcmp.lt.s32.totalorder %v5188, 2
    %vm5209 = vcmp.lt.s32.totalorder %v5188, 3
    %vm5210 = vcmp.lt.s32.totalorder %v5188, 4
    %v5211 = vsel %vm5207, %v5191, %v5194
    %v5212 = vsel %vm5210, %v5200, 2102212464
    %v5213 = vsel %vm5209, %v5197, %v5212
    %v5214 = vsel %vm5208, %v5211, %v5213
    %v5215 = vsel %vm5207, %v5194, %v5197
    %v5216 = vsel %vm5210, %v5203, 920167782
    %v5217 = vsel %vm5209, %v5200, %v5216
    %v5218 = vsel %vm5208, %v5215, %v5217
    %v5219 = vsel %vm5207, %v5197, %v5200
    %v5220 = vsel %vm5210, %v5206, 1326507024
    %v5221 = vsel %vm5209, %v5203, %v5220
    %v5222 = vsel %vm5208, %v5219, %v5221
    %v5223 = vshll.u32 %v5183, 8
    %v5224 = vand.u32 %v5223, 65535
    %v5225 = vshrl.u32 %v5223, 16
    %v5226 = vand.u32 %v5222, 65535
    %v5227 = vshrl.u32 %v5222, 16
    %v5228 = vmul.u32 %v5224, %v5226
    %v5229 = vmul.u32 %v5224, %v5227
    %v5230 = vmul.u32 %v5225, %v5226
    %v5231 = vmul.u32 %v5225, %v5227
    %v5232 = vshll.u32 %v5229, 16
    %v5233 = vshrl.u32 %v5229, 16
    %v5234 = vshll.u32 %v5230, 16
    %v5235 = vshrl.u32 %v5230, 16
    %vm5236 = vc.u32 %v5228, %v5232
    %v5237 = vsel %vm5236, 1, 0
    %v5238 = vadd.s32 %v5228, %v5232
    %v5239 = vadd.s32 %v5231, %v5237
    %vm5240 = vc.u32 %v5238, %v5234
    %v5241 = vsel %vm5240, 1, 0
    %v5242 = vadd.s32 %v5238, %v5234
    %v5243 = vadd.s32 %v5239, %v5241
    %v5244 = vadd.s32 %v5243, %v5233
    %v5245 = vadd.s32 %v5244, %v5235
    %v5246 = vand.u32 %v5223, 65535
    %v5247 = vshrl.u32 %v5223, 16
    %v5248 = vand.u32 %v5218, 65535
    %v5249 = vshrl.u32 %v5218, 16
    %v5250 = vmul.u32 %v5246, %v5248
    %v5251 = vmul.u32 %v5246, %v5249
    %v5252 = vmul.u32 %v5247, %v5248
    %v5253 = vmul.u32 %v5247, %v5249
    %v5254 = vshll.u32 %v5251, 16
    %v5255 = vshrl.u32 %v5251, 16
    %v5256 = vshll.u32 %v5252, 16
    %v5257 = vshrl.u32 %v5252, 16
    %vm5258 = vc.u32 %v5250, %v5254
    %v5259 = vsel %vm5258, 1, 0
    %v5260 = vadd.s32 %v5250, %v5254
    %v5261 = vadd.s32 %v5253, %v5259
    %vm5262 = vc.u32 %v5260, %v5256
    %v5263 = vsel %vm5262, 1, 0
    %v5264 = vadd.s32 %v5260, %v5256
    %v5265 = vadd.s32 %v5261, %v5263
    %v5266 = vadd.s32 %v5265, %v5255
    %v5267 = vadd.s32 %v5266, %v5257
    %v5268 = vmul.u32 %v5223, %v5214
    %v5269 = vadd.s32 %v5245, %v5264
    %vm5270 = vc.u32 %v5245, %v5264
    %v5271 = vadd.s32 %v5267, 1
    %v5272 = vsel %vm5270, %v5271, %v5267
    %v5273 = vadd.s32 %v5268, %v5272
    %v5274 = vadd.s32 %v5273, 536870912
    %v5275 = vshrl.u32 %v5274, 30
    %v5276 = vshll.u32 %v5275, 30
    %v5277 = vsub.s32 %v5273, %v5276
    %vm5278 = vcmp.lt.s32.totalorder %v5277, 0
    %v5279 = vsub.s32 0, %v5277
    %v5280 = vsel %vm5278, %v5279, %v5277
    %v5281 = vclz %v5280
    %v5282 = vsub.s32 %v5281, 2
    %vm5283 = vcmp.gt.s32.totalorder 0, %v5282
    %v5284 = vsel %vm5283, 0, %v5282
    %v5285 = vsub.s32 32, %v5284
    %v5286 = vshll.u32 %v5277, %v5284
    %v5287 = vshrl.u32 %v5269, %v5285
    %v5288 = vor.u32 %v5286, %v5287
    %v5289 = vsub.s32 4294967266, %v5284
    %v5290 = vadd.s32 %v5289, 127
    %v5291 = vshll.u32 %v5290, 23
    %v5292 = vor.u32 4788187, %v5291
    %v5293 = vand.u32 2147483647, %v5292
    %v5295 = vcvt.s32.f32 %v5288
    %v5296 = vmul.f32 %v5295, %v5293
    %v5297 = vxor.u32 %v5296, 2147483648
    %v5298 = vsel %vm5177, %v5297, %v5296
    %v5299 = vsub.s32 4, %v5275
    %v5300 = vsel %vm5177, %v5299, %v5275
    %v5301 = vsel %vm5176, %v213, %v5298
    %v5302 = vsel %vm5176, 0, %v5300
    %v5303 = vmul.f32 %v5301, %v5301
    %v5304 = vmul.f32 %v5303, -0.001358992
    %v5305 = vadd.f32 %v5304, 0.041655596
    %v5306 = vmul.f32 %v5303, %v5305
    %v5307 = vadd.f32 %v5306, -0.4999988
    %v5308 = vmul.f32 %v5303, %v5307
    %v5309 = vadd.f32 1.0, %v5308
    %v5310 = vmul.f32 %v5301, %v5301
    %v5311 = vmul.f32 %v5310, -0.00019511016
    %v5312 = vadd.f32 %v5311, 0.008332121
    %v5313 = vmul.f32 %v5310, %v5312
    %v5314 = vadd.f32 %v5313, -0.16666654
    %v5315 = vmul.f32 %v5310, %v5314
    %v5316 = vadd.f32 %v5315, 1.0
    %v5317 = vmul.f32 %v5316, %v5301
    %vm5318 = vweird.f32 %v213
    %v5319 = vadd.s32 %v5302, 3
    %v5320 = vand.u32 %v5319, 3
    %vm5321 = vcmp.lt.s32.totalorder %v5320, 2
    %vm5322 = vcmp.eq.s32.totalorder %v5320, 0
    %v5323 = vxor.u32 %v5317, 2147483648
    %v5324 = vsel %vm5322, %v5309, %v5323
    %vm5325 = vcmp.eq.s32.totalorder %v5320, 2
    %v5326 = vxor.u32 %v5309, 2147483648
    %v5327 = vsel %vm5325, %v5326, %v5317
    %v5328 = vsel %vm5321, %v5324, %v5327
    %v5329 = vsel %vm5318, nan, %v5328
    %v5330 = vand.u32 2147483647, %v214
    %vm5331 = vcmp.le.f32.partialorder %v5330, 0.7853982
    %vm5332 = vcmp.lt.s32.totalorder %v214, 0
    %v5333 = vand.u32 %v214, 2139095040
    %v5334 = vshrl.u32 %v5333, 23
    %v5335 = vsub.s32 %v5334, 127
    %v5336 = vand.u32 2147483647, %v214
    %v5337 = vand.u32 %v5336, 8388607
    %v5338 = vor.u32 %v5337, 8388608
    %v5339 = vsub.s32 0, %v5338
    %v5340 = vadd.s32 %v5335, 1
    %vm5341 = vcmp.gt.s32.totalorder %v5340, 0
    %v5342 = vsel %vm5341, %v5340, 0
    %v5343 = vshrl.u32 %v5342, 5
    %v5344 = vand.u32 %v5342, 31
    %v5345 = vsub.s32 32, %v5344
    %v5346 = vshrl.u32 683565275, %v5345
    %v5347 = vshll.u32 683565275, %v5344
    %v5348 = vshrl.u32 2475754826, %v5345
    %v5349 = vor.u32 %v5347, %v5348
    %v5350 = vshll.u32 2475754826, %v5344
    %v5351 = vshrl.u32 2131351028, %v5345
    %v5352 = vor.u32 %v5350, %v5351
    %v5353 = vshll.u32 2131351028, %v5344
    %v5354 = vshrl.u32 2102212464, %v5345
    %v5355 = vor.u32 %v5353, %v5354
    %v5356 = vshll.u32 2102212464, %v5344
    %v5357 = vshrl.u32 920167782, %v5345
    %v5358 = vor.u32 %v5356, %v5357
    %v5359 = vshll.u32 920167782, %v5344
    %v5360 = vshrl.u32 1326507024, %v5345
    %v5361 = vor.u32 %v5359, %v5360
    %vm5362 = vcmp.lt.s32.totalorder %v5343, 1
    %vm5363 = vcmp.lt.s32.totalorder %v5343, 2
    %vm5364 = vcmp.lt.s32.totalorder %v5343, 3
    %vm5365 = vcmp.lt.s32.totalorder %v5343, 4
    %v5366 = vsel %vm5362, %v5346, %v5349
    %v5367 = vsel %vm5365, %v5355, 2102212464
    %v5368 = vsel %vm5364, %v5352, %v5367
    %v5369 = vsel %vm5363, %v5366, %v5368
    %v5370 = vsel %vm5362, %v5349, %v5352
    %v5371 = vsel %vm5365, %v5358, 920167782
    %v5372 = vsel %vm5364, %v5355, %v5371
    %v5373 = vsel %vm5363, %v5370, %v5372
    %v5374 = vsel %vm5362, %v5352, %v5355
    %v5375 = vsel %vm5365, %v5361, 1326507024
    %v5376 = vsel %vm5364, %v5358, %v5375
    %v5377 = vsel %vm5363, %v5374, %v5376
    %v5378 = vshll.u32 %v5338, 8
    %v5379 = vand.u32 %v5378, 65535
    %v5380 = vshrl.u32 %v5378, 16
    %v5381 = vand.u32 %v5377, 65535
    %v5382 = vshrl.u32 %v5377, 16
    %v5383 = vmul.u32 %v5379, %v5381
    %v5384 = vmul.u32 %v5379, %v5382
    %v5385 = vmul.u32 %v5380, %v5381
    %v5386 = vmul.u32 %v5380, %v5382
    %v5387 = vshll.u32 %v5384, 16
    %v5388 = vshrl.u32 %v5384, 16
    %v5389 = vshll.u32 %v5385, 16
    %v5390 = vshrl.u32 %v5385, 16
    %vm5391 = vc.u32 %v5383, %v5387
    %v5392 = vsel %vm5391, 1, 0
    %v5393 = vadd.s32 %v5383, %v5387
    %v5394 = vadd.s32 %v5386, %v5392
    %vm5395 = vc.u32 %v5393, %v5389
    %v5396 = vsel %vm5395, 1, 0
    %v5397 = vadd.s32 %v5393, %v5389
    %v5398 = vadd.s32 %v5394, %v5396
    %v5399 = vadd.s32 %v5398, %v5388
    %v5400 = vadd.s32 %v5399, %v5390
    %v5401 = vand.u32 %v5378, 65535
    %v5402 = vshrl.u32 %v5378, 16
    %v5403 = vand.u32 %v5373, 65535
    %v5404 = vshrl.u32 %v5373, 16
    %v5405 = vmul.u32 %v5401, %v5403
    %v5406 = vmul.u32 %v5401, %v5404
    %v5407 = vmul.u32 %v5402, %v5403
    %v5408 = vmul.u32 %v5402, %v5404
    %v5409 = vshll.u32 %v5406, 16
    %v5410 = vshrl.u32 %v5406, 16
    %v5411 = vshll.u32 %v5407, 16
    %v5412 = vshrl.u32 %v5407, 16
    %vm5413 = vc.u32 %v5405, %v5409
    %v5414 = vsel %vm5413, 1, 0
    %v5415 = vadd.s32 %v5405, %v5409
    %v5416 = vadd.s32 %v5408, %v5414
    %vm5417 = vc.u32 %v5415, %v5411
    %v5418 = vsel %vm5417, 1, 0
    %v5419 = vadd.s32 %v5415, %v5411
    %v5420 = vadd.s32 %v5416, %v5418
    %v5421 = vadd.s32 %v5420, %v5410
    %v5422 = vadd.s32 %v5421, %v5412
    %v5423 = vmul.u32 %v5378, %v5369
    %v5424 = vadd.s32 %v5400, %v5419
    %vm5425 = vc.u32 %v5400, %v5419
    %v5426 = vadd.s32 %v5422, 1
    %v5427 = vsel %vm5425, %v5426, %v5422
    %v5428 = vadd.s32 %v5423, %v5427
    %v5429 = vadd.s32 %v5428, 536870912
    %v5430 = vshrl.u32 %v5429, 30
    %v5431 = vshll.u32 %v5430, 30
    %v5432 = vsub.s32 %v5428, %v5431
    %vm5433 = vcmp.lt.s32.totalorder %v5432, 0
    %v5434 = vsub.s32 0, %v5432
    %v5435 = vsel %vm5433, %v5434, %v5432
    %v5436 = vclz %v5435
    %v5437 = vsub.s32 %v5436, 2
    %vm5438 = vcmp.gt.s32.totalorder 0, %v5437
    %v5439 = vsel %vm5438, 0, %v5437
    %v5440 = vsub.s32 32, %v5439
    %v5441 = vshll.u32 %v5432, %v5439
    %v5442 = vshrl.u32 %v5424, %v5440
    %v5443 = vor.u32 %v5441, %v5442
    %v5444 = vsub.s32 4294967266, %v5439
    %v5445 = vadd.s32 %v5444, 127
    %v5446 = vshll.u32 %v5445, 23
    %v5447 = vor.u32 4788187, %v5446
    %v5448 = vand.u32 2147483647, %v5447
    %v5450 = vcvt.s32.f32 %v5443
    %v5451 = vmul.f32 %v5450, %v5448
    %v5452 = vxor.u32 %v5451, 2147483648
    %v5453 = vsel %vm5332, %v5452, %v5451
    %v5454 = vsub.s32 4, %v5430
    %v5455 = vsel %vm5332, %v5454, %v5430
    %v5456 = vsel %vm5331, %v214, %v5453
    %v5457 = vsel %vm5331, 0, %v5455
    %v5458 = vmul.f32 %v5456, %v5456
    %v5459 = vmul.f32 %v5458, -0.001358992
    %v5460 = vadd.f32 %v5459, 0.041655596
    %v5461 = vmul.f32 %v5458, %v5460
    %v5462 = vadd.f32 %v5461, -0.4999988
    %v5463 = vmul.f32 %v5458, %v5462
    %v5464 = vadd.f32 1.0, %v5463
    %v5465 = vmul.f32 %v5456, %v5456
    %v5466 = vmul.f32 %v5465, -0.00019511016
    %v5467 = vadd.f32 %v5466, 0.008332121
    %v5468 = vmul.f32 %v5465, %v5467
    %v5469 = vadd.f32 %v5468, -0.16666654
    %v5470 = vmul.f32 %v5465, %v5469
    %v5471 = vadd.f32 %v5470, 1.0
    %v5472 = vmul.f32 %v5471, %v5456
    %vm5473 = vweird.f32 %v214
    %v5474 = vadd.s32 %v5457, 3
    %v5475 = vand.u32 %v5474, 3
    %vm5476 = vcmp.lt.s32.totalorder %v5475, 2
    %vm5477 = vcmp.eq.s32.totalorder %v5475, 0
    %v5478 = vxor.u32 %v5472, 2147483648
    %v5479 = vsel %vm5477, %v5464, %v5478
    %vm5480 = vcmp.eq.s32.totalorder %v5475, 2
    %v5481 = vxor.u32 %v5464, 2147483648
    %v5482 = vsel %vm5480, %v5481, %v5472
    %v5483 = vsel %vm5476, %v5479, %v5482
    %v5484 = vsel %vm5473, nan, %v5483
    %v5485 = vand.u32 2147483647, %v215
    %vm5486 = vcmp.le.f32.partialorder %v5485, 0.7853982
    %vm5487 = vcmp.lt.s32.totalorder %v215, 0
    %v5488 = vand.u32 %v215, 2139095040
    %v5489 = vshrl.u32 %v5488, 23
    %v5490 = vsub.s32 %v5489, 127
    %v5491 = vand.u32 2147483647, %v215
    %v5492 = vand.u32 %v5491, 8388607
    %v5493 = vor.u32 %v5492, 8388608
    %v5494 = vsub.s32 0, %v5493
    %v5495 = vadd.s32 %v5490, 1
    %vm5496 = vcmp.gt.s32.totalorder %v5495, 0
    %v5497 = vsel %vm5496, %v5495, 0
    %v5498 = vshrl.u32 %v5497, 5
    %v5499 = vand.u32 %v5497, 31
    %v5500 = vsub.s32 32, %v5499
    %v5501 = vshrl.u32 683565275, %v5500
    %v5502 = vshll.u32 683565275, %v5499
    %v5503 = vshrl.u32 2475754826, %v5500
    %v5504 = vor.u32 %v5502, %v5503
    %v5505 = vshll.u32 2475754826, %v5499
    %v5506 = vshrl.u32 2131351028, %v5500
    %v5507 = vor.u32 %v5505, %v5506
    %v5508 = vshll.u32 2131351028, %v5499
    %v5509 = vshrl.u32 2102212464, %v5500
    %v5510 = vor.u32 %v5508, %v5509
    %v5511 = vshll.u32 2102212464, %v5499
    %v5512 = vshrl.u32 920167782, %v5500
    %v5513 = vor.u32 %v5511, %v5512
    %v5514 = vshll.u32 920167782, %v5499
    %v5515 = vshrl.u32 1326507024, %v5500
    %v5516 = vor.u32 %v5514, %v5515
    %vm5517 = vcmp.lt.s32.totalorder %v5498, 1
    %vm5518 = vcmp.lt.s32.totalorder %v5498, 2
    %vm5519 = vcmp.lt.s32.totalorder %v5498, 3
    %vm5520 = vcmp.lt.s32.totalorder %v5498, 4
    %v5521 = vsel %vm5517, %v5501, %v5504
    %v5522 = vsel %vm5520, %v5510, 2102212464
    %v5523 = vsel %vm5519, %v5507, %v5522
    %v5524 = vsel %vm5518, %v5521, %v5523
    %v5525 = vsel %vm5517, %v5504, %v5507
    %v5526 = vsel %vm5520, %v5513, 920167782
    %v5527 = vsel %vm5519, %v5510, %v5526
    %v5528 = vsel %vm5518, %v5525, %v5527
    %v5529 = vsel %vm5517, %v5507, %v5510
    %v5530 = vsel %vm5520, %v5516, 1326507024
    %v5531 = vsel %vm5519, %v5513, %v5530
    %v5532 = vsel %vm5518, %v5529, %v5531
    %v5533 = vshll.u32 %v5493, 8
    %v5534 = vand.u32 %v5533, 65535
    %v5535 = vshrl.u32 %v5533, 16
    %v5536 = vand.u32 %v5532, 65535
    %v5537 = vshrl.u32 %v5532, 16
    %v5538 = vmul.u32 %v5534, %v5536
    %v5539 = vmul.u32 %v5534, %v5537
    %v5540 = vmul.u32 %v5535, %v5536
    %v5541 = vmul.u32 %v5535, %v5537
    %v5542 = vshll.u32 %v5539, 16
    %v5543 = vshrl.u32 %v5539, 16
    %v5544 = vshll.u32 %v5540, 16
    %v5545 = vshrl.u32 %v5540, 16
    %vm5546 = vc.u32 %v5538, %v5542
    %v5547 = vsel %vm5546, 1, 0
    %v5548 = vadd.s32 %v5538, %v5542
    %v5549 = vadd.s32 %v5541, %v5547
    %vm5550 = vc.u32 %v5548, %v5544
    %v5551 = vsel %vm5550, 1, 0
    %v5552 = vadd.s32 %v5548, %v5544
    %v5553 = vadd.s32 %v5549, %v5551
    %v5554 = vadd.s32 %v5553, %v5543
    %v5555 = vadd.s32 %v5554, %v5545
    %v5556 = vand.u32 %v5533, 65535
    %v5557 = vshrl.u32 %v5533, 16
    %v5558 = vand.u32 %v5528, 65535
    %v5559 = vshrl.u32 %v5528, 16
    %v5560 = vmul.u32 %v5556, %v5558
    %v5561 = vmul.u32 %v5556, %v5559
    %v5562 = vmul.u32 %v5557, %v5558
    %v5563 = vmul.u32 %v5557, %v5559
    %v5564 = vshll.u32 %v5561, 16
    %v5565 = vshrl.u32 %v5561, 16
    %v5566 = vshll.u32 %v5562, 16
    %v5567 = vshrl.u32 %v5562, 16
    %vm5568 = vc.u32 %v5560, %v5564
    %v5569 = vsel %vm5568, 1, 0
    %v5570 = vadd.s32 %v5560, %v5564
    %v5571 = vadd.s32 %v5563, %v5569
    %vm5572 = vc.u32 %v5570, %v5566
    %v5573 = vsel %vm5572, 1, 0
    %v5574 = vadd.s32 %v5570, %v5566
    %v5575 = vadd.s32 %v5571, %v5573
    %v5576 = vadd.s32 %v5575, %v5565
    %v5577 = vadd.s32 %v5576, %v5567
    %v5578 = vmul.u32 %v5533, %v5524
    %v5579 = vadd.s32 %v5555, %v5574
    %vm5580 = vc.u32 %v5555, %v5574
    %v5581 = vadd.s32 %v5577, 1
    %v5582 = vsel %vm5580, %v5581, %v5577
    %v5583 = vadd.s32 %v5578, %v5582
    %v5584 = vadd.s32 %v5583, 536870912
    %v5585 = vshrl.u32 %v5584, 30
    %v5586 = vshll.u32 %v5585, 30
    %v5587 = vsub.s32 %v5583, %v5586
    %vm5588 = vcmp.lt.s32.totalorder %v5587, 0
    %v5589 = vsub.s32 0, %v5587
    %v5590 = vsel %vm5588, %v5589, %v5587
    %v5591 = vclz %v5590
    %v5592 = vsub.s32 %v5591, 2
    %vm5593 = vcmp.gt.s32.totalorder 0, %v5592
    %v5594 = vsel %vm5593, 0, %v5592
    %v5595 = vsub.s32 32, %v5594
    %v5596 = vshll.u32 %v5587, %v5594
    %v5597 = vshrl.u32 %v5579, %v5595
    %v5598 = vor.u32 %v5596, %v5597
    %v5599 = vsub.s32 4294967266, %v5594
    %v5600 = vadd.s32 %v5599, 127
    %v5601 = vshll.u32 %v5600, 23
    %v5602 = vor.u32 4788187, %v5601
    %v5603 = vand.u32 2147483647, %v5602
    %v5605 = vcvt.s32.f32 %v5598
    %v5606 = vmul.f32 %v5605, %v5603
    %v5607 = vxor.u32 %v5606, 2147483648
    %v5608 = vsel %vm5487, %v5607, %v5606
    %v5609 = vsub.s32 4, %v5585
    %v5610 = vsel %vm5487, %v5609, %v5585
    %v5611 = vsel %vm5486, %v215, %v5608
    %v5612 = vsel %vm5486, 0, %v5610
    %v5613 = vmul.f32 %v5611, %v5611
    %v5614 = vmul.f32 %v5613, -0.001358992
    %v5615 = vadd.f32 %v5614, 0.041655596
    %v5616 = vmul.f32 %v5613, %v5615
    %v5617 = vadd.f32 %v5616, -0.4999988
    %v5618 = vmul.f32 %v5613, %v5617
    %v5619 = vadd.f32 1.0, %v5618
    %v5620 = vmul.f32 %v5611, %v5611
    %v5621 = vmul.f32 %v5620, -0.00019511016
    %v5622 = vadd.f32 %v5621, 0.008332121
    %v5623 = vmul.f32 %v5620, %v5622
    %v5624 = vadd.f32 %v5623, -0.16666654
    %v5625 = vmul.f32 %v5620, %v5624
    %v5626 = vadd.f32 %v5625, 1.0
    %v5627 = vmul.f32 %v5626, %v5611
    %vm5628 = vweird.f32 %v215
    %v5629 = vadd.s32 %v5612, 3
    %v5630 = vand.u32 %v5629, 3
    %vm5631 = vcmp.lt.s32.totalorder %v5630, 2
    %vm5632 = vcmp.eq.s32.totalorder %v5630, 0
    %v5633 = vxor.u32 %v5627, 2147483648
    %v5634 = vsel %vm5632, %v5619, %v5633
    %vm5635 = vcmp.eq.s32.totalorder %v5630, 2
    %v5636 = vxor.u32 %v5619, 2147483648
    %v5637 = vsel %vm5635, %v5636, %v5627
    %v5638 = vsel %vm5631, %v5634, %v5637
    %v5639 = vsel %vm5628, nan, %v5638
    %v5640 = vand.u32 2147483647, %v216
    %vm5641 = vcmp.le.f32.partialorder %v5640, 0.7853982
    %vm5642 = vcmp.lt.s32.totalorder %v216, 0
    %v5643 = vand.u32 %v216, 2139095040
    %v5644 = vshrl.u32 %v5643, 23
    %v5645 = vsub.s32 %v5644, 127
    %v5646 = vand.u32 2147483647, %v216
    %v5647 = vand.u32 %v5646, 8388607
    %v5648 = vor.u32 %v5647, 8388608
    %v5649 = vsub.s32 0, %v5648
    %v5650 = vadd.s32 %v5645, 1
    %vm5651 = vcmp.gt.s32.totalorder %v5650, 0
    %v5652 = vsel %vm5651, %v5650, 0
    %v5653 = vshrl.u32 %v5652, 5
    %v5654 = vand.u32 %v5652, 31
    %v5655 = vsub.s32 32, %v5654
    %v5656 = vshrl.u32 683565275, %v5655
    %v5657 = vshll.u32 683565275, %v5654
    %v5658 = vshrl.u32 2475754826, %v5655
    %v5659 = vor.u32 %v5657, %v5658
    %v5660 = vshll.u32 2475754826, %v5654
    %v5661 = vshrl.u32 2131351028, %v5655
    %v5662 = vor.u32 %v5660, %v5661
    %v5663 = vshll.u32 2131351028, %v5654
    %v5664 = vshrl.u32 2102212464, %v5655
    %v5665 = vor.u32 %v5663, %v5664
    %v5666 = vshll.u32 2102212464, %v5654
    %v5667 = vshrl.u32 920167782, %v5655
    %v5668 = vor.u32 %v5666, %v5667
    %v5669 = vshll.u32 920167782, %v5654
    %v5670 = vshrl.u32 1326507024, %v5655
    %v5671 = vor.u32 %v5669, %v5670
    %vm5672 = vcmp.lt.s32.totalorder %v5653, 1
    %vm5673 = vcmp.lt.s32.totalorder %v5653, 2
    %vm5674 = vcmp.lt.s32.totalorder %v5653, 3
    %vm5675 = vcmp.lt.s32.totalorder %v5653, 4
    %v5676 = vsel %vm5672, %v5656, %v5659
    %v5677 = vsel %vm5675, %v5665, 2102212464
    %v5678 = vsel %vm5674, %v5662, %v5677
    %v5679 = vsel %vm5673, %v5676, %v5678
    %v5680 = vsel %vm5672, %v5659, %v5662
    %v5681 = vsel %vm5675, %v5668, 920167782
    %v5682 = vsel %vm5674, %v5665, %v5681
    %v5683 = vsel %vm5673, %v5680, %v5682
    %v5684 = vsel %vm5672, %v5662, %v5665
    %v5685 = vsel %vm5675, %v5671, 1326507024
    %v5686 = vsel %vm5674, %v5668, %v5685
    %v5687 = vsel %vm5673, %v5684, %v5686
    %v5688 = vshll.u32 %v5648, 8
    %v5689 = vand.u32 %v5688, 65535
    %v5690 = vshrl.u32 %v5688, 16
    %v5691 = vand.u32 %v5687, 65535
    %v5692 = vshrl.u32 %v5687, 16
    %v5693 = vmul.u32 %v5689, %v5691
    %v5694 = vmul.u32 %v5689, %v5692
    %v5695 = vmul.u32 %v5690, %v5691
    %v5696 = vmul.u32 %v5690, %v5692
    %v5697 = vshll.u32 %v5694, 16
    %v5698 = vshrl.u32 %v5694, 16
    %v5699 = vshll.u32 %v5695, 16
    %v5700 = vshrl.u32 %v5695, 16
    %vm5701 = vc.u32 %v5693, %v5697
    %v5702 = vsel %vm5701, 1, 0
    %v5703 = vadd.s32 %v5693, %v5697
    %v5704 = vadd.s32 %v5696, %v5702
    %vm5705 = vc.u32 %v5703, %v5699
    %v5706 = vsel %vm5705, 1, 0
    %v5707 = vadd.s32 %v5703, %v5699
    %v5708 = vadd.s32 %v5704, %v5706
    %v5709 = vadd.s32 %v5708, %v5698
    %v5710 = vadd.s32 %v5709, %v5700
    %v5711 = vand.u32 %v5688, 65535
    %v5712 = vshrl.u32 %v5688, 16
    %v5713 = vand.u32 %v5683, 65535
    %v5714 = vshrl.u32 %v5683, 16
    %v5715 = vmul.u32 %v5711, %v5713
    %v5716 = vmul.u32 %v5711, %v5714
    %v5717 = vmul.u32 %v5712, %v5713
    %v5718 = vmul.u32 %v5712, %v5714
    %v5719 = vshll.u32 %v5716, 16
    %v5720 = vshrl.u32 %v5716, 16
    %v5721 = vshll.u32 %v5717, 16
    %v5722 = vshrl.u32 %v5717, 16
    %vm5723 = vc.u32 %v5715, %v5719
    %v5724 = vsel %vm5723, 1, 0
    %v5725 = vadd.s32 %v5715, %v5719
    %v5726 = vadd.s32 %v5718, %v5724
    %vm5727 = vc.u32 %v5725, %v5721
    %v5728 = vsel %vm5727, 1, 0
    %v5729 = vadd.s32 %v5725, %v5721
    %v5730 = vadd.s32 %v5726, %v5728
    %v5731 = vadd.s32 %v5730, %v5720
    %v5732 = vadd.s32 %v5731, %v5722
    %v5733 = vmul.u32 %v5688, %v5679
    %v5734 = vadd.s32 %v5710, %v5729
    %vm5735 = vc.u32 %v5710, %v5729
    %v5736 = vadd.s32 %v5732, 1
    %v5737 = vsel %vm5735, %v5736, %v5732
    %v5738 = vadd.s32 %v5733, %v5737
    %v5739 = vadd.s32 %v5738, 536870912
    %v5740 = vshrl.u32 %v5739, 30
    %v5741 = vshll.u32 %v5740, 30
    %v5742 = vsub.s32 %v5738, %v5741
    %vm5743 = vcmp.lt.s32.totalorder %v5742, 0
    %v5744 = vsub.s32 0, %v5742
    %v5745 = vsel %vm5743, %v5744, %v5742
    %v5746 = vclz %v5745
    %v5747 = vsub.s32 %v5746, 2
    %vm5748 = vcmp.gt.s32.totalorder 0, %v5747
    %v5749 = vsel %vm5748, 0, %v5747
    %v5750 = vsub.s32 32, %v5749
    %v5751 = vshll.u32 %v5742, %v5749
    %v5752 = vshrl.u32 %v5734, %v5750
    %v5753 = vor.u32 %v5751, %v5752
    %v5754 = vsub.s32 4294967266, %v5749
    %v5755 = vadd.s32 %v5754, 127
    %v5756 = vshll.u32 %v5755, 23
    %v5757 = vor.u32 4788187, %v5756
    %v5758 = vand.u32 2147483647, %v5757
    %v5760 = vcvt.s32.f32 %v5753
    %v5761 = vmul.f32 %v5760, %v5758
    %v5762 = vxor.u32 %v5761, 2147483648
    %v5763 = vsel %vm5642, %v5762, %v5761
    %v5764 = vsub.s32 4, %v5740
    %v5765 = vsel %vm5642, %v5764, %v5740
    %v5766 = vsel %vm5641, %v216, %v5763
    %v5767 = vsel %vm5641, 0, %v5765
    %v5768 = vmul.f32 %v5766, %v5766
    %v5769 = vmul.f32 %v5768, -0.001358992
    %v5770 = vadd.f32 %v5769, 0.041655596
    %v5771 = vmul.f32 %v5768, %v5770
    %v5772 = vadd.f32 %v5771, -0.4999988
    %v5773 = vmul.f32 %v5768, %v5772
    %v5774 = vadd.f32 1.0, %v5773
    %v5775 = vmul.f32 %v5766, %v5766
    %v5776 = vmul.f32 %v5775, -0.00019511016
    %v5777 = vadd.f32 %v5776, 0.008332121
    %v5778 = vmul.f32 %v5775, %v5777
    %v5779 = vadd.f32 %v5778, -0.16666654
    %v5780 = vmul.f32 %v5775, %v5779
    %v5781 = vadd.f32 %v5780, 1.0
    %v5782 = vmul.f32 %v5781, %v5766
    %vm5783 = vweird.f32 %v216
    %v5784 = vadd.s32 %v5767, 3
    %v5785 = vand.u32 %v5784, 3
    %vm5786 = vcmp.lt.s32.totalorder %v5785, 2
    %vm5787 = vcmp.eq.s32.totalorder %v5785, 0
    %v5788 = vxor.u32 %v5782, 2147483648
    %v5789 = vsel %vm5787, %v5774, %v5788
    %vm5790 = vcmp.eq.s32.totalorder %v5785, 2
    %v5791 = vxor.u32 %v5774, 2147483648
    %v5792 = vsel %vm5790, %v5791, %v5782
    %v5793 = vsel %vm5786, %v5789, %v5792
    %v5794 = vsel %vm5783, nan, %v5793
    %v5795 = vand.u32 2147483647, %v217
    %vm5796 = vcmp.le.f32.partialorder %v5795, 0.7853982
    %vm5797 = vcmp.lt.s32.totalorder %v217, 0
    %v5798 = vand.u32 %v217, 2139095040
    %v5799 = vshrl.u32 %v5798, 23
    %v5800 = vsub.s32 %v5799, 127
    %v5801 = vand.u32 2147483647, %v217
    %v5802 = vand.u32 %v5801, 8388607
    %v5803 = vor.u32 %v5802, 8388608
    %v5804 = vsub.s32 0, %v5803
    %v5805 = vadd.s32 %v5800, 1
    %vm5806 = vcmp.gt.s32.totalorder %v5805, 0
    %v5807 = vsel %vm5806, %v5805, 0
    %v5808 = vshrl.u32 %v5807, 5
    %v5809 = vand.u32 %v5807, 31
    %v5810 = vsub.s32 32, %v5809
    %v5811 = vshrl.u32 683565275, %v5810
    %v5812 = vshll.u32 683565275, %v5809
    %v5813 = vshrl.u32 2475754826, %v5810
    %v5814 = vor.u32 %v5812, %v5813
    %v5815 = vshll.u32 2475754826, %v5809
    %v5816 = vshrl.u32 2131351028, %v5810
    %v5817 = vor.u32 %v5815, %v5816
    %v5818 = vshll.u32 2131351028, %v5809
    %v5819 = vshrl.u32 2102212464, %v5810
    %v5820 = vor.u32 %v5818, %v5819
    %v5821 = vshll.u32 2102212464, %v5809
    %v5822 = vshrl.u32 920167782, %v5810
    %v5823 = vor.u32 %v5821, %v5822
    %v5824 = vshll.u32 920167782, %v5809
    %v5825 = vshrl.u32 1326507024, %v5810
    %v5826 = vor.u32 %v5824, %v5825
    %vm5827 = vcmp.lt.s32.totalorder %v5808, 1
    %vm5828 = vcmp.lt.s32.totalorder %v5808, 2
    %vm5829 = vcmp.lt.s32.totalorder %v5808, 3
    %vm5830 = vcmp.lt.s32.totalorder %v5808, 4
    %v5831 = vsel %vm5827, %v5811, %v5814
    %v5832 = vsel %vm5830, %v5820, 2102212464
    %v5833 = vsel %vm5829, %v5817, %v5832
    %v5834 = vsel %vm5828, %v5831, %v5833
    %v5835 = vsel %vm5827, %v5814, %v5817
    %v5836 = vsel %vm5830, %v5823, 920167782
    %v5837 = vsel %vm5829, %v5820, %v5836
    %v5838 = vsel %vm5828, %v5835, %v5837
    %v5839 = vsel %vm5827, %v5817, %v5820
    %v5840 = vsel %vm5830, %v5826, 1326507024
    %v5841 = vsel %vm5829, %v5823, %v5840
    %v5842 = vsel %vm5828, %v5839, %v5841
    %v5843 = vshll.u32 %v5803, 8
    %v5844 = vand.u32 %v5843, 65535
    %v5845 = vshrl.u32 %v5843, 16
    %v5846 = vand.u32 %v5842, 65535
    %v5847 = vshrl.u32 %v5842, 16
    %v5848 = vmul.u32 %v5844, %v5846
    %v5849 = vmul.u32 %v5844, %v5847
    %v5850 = vmul.u32 %v5845, %v5846
    %v5851 = vmul.u32 %v5845, %v5847
    %v5852 = vshll.u32 %v5849, 16
    %v5853 = vshrl.u32 %v5849, 16
    %v5854 = vshll.u32 %v5850, 16
    %v5855 = vshrl.u32 %v5850, 16
    %vm5856 = vc.u32 %v5848, %v5852
    %v5857 = vsel %vm5856, 1, 0
    %v5858 = vadd.s32 %v5848, %v5852
    %v5859 = vadd.s32 %v5851, %v5857
    %vm5860 = vc.u32 %v5858, %v5854
    %v5861 = vsel %vm5860, 1, 0
    %v5862 = vadd.s32 %v5858, %v5854
    %v5863 = vadd.s32 %v5859, %v5861
    %v5864 = vadd.s32 %v5863, %v5853
    %v5865 = vadd.s32 %v5864, %v5855
    %v5866 = vand.u32 %v5843, 65535
    %v5867 = vshrl.u32 %v5843, 16
    %v5868 = vand.u32 %v5838, 65535
    %v5869 = vshrl.u32 %v5838, 16
    %v5870 = vmul.u32 %v5866, %v5868
    %v5871 = vmul.u32 %v5866, %v5869
    %v5872 = vmul.u32 %v5867, %v5868
    %v5873 = vmul.u32 %v5867, %v5869
    %v5874 = vshll.u32 %v5871, 16
    %v5875 = vshrl.u32 %v5871, 16
    %v5876 = vshll.u32 %v5872, 16
    %v5877 = vshrl.u32 %v5872, 16
    %vm5878 = vc.u32 %v5870, %v5874
    %v5879 = vsel %vm5878, 1, 0
    %v5880 = vadd.s32 %v5870, %v5874
    %v5881 = vadd.s32 %v5873, %v5879
    %vm5882 = vc.u32 %v5880, %v5876
    %v5883 = vsel %vm5882, 1, 0
    %v5884 = vadd.s32 %v5880, %v5876
    %v5885 = vadd.s32 %v5881, %v5883
    %v5886 = vadd.s32 %v5885, %v5875
    %v5887 = vadd.s32 %v5886, %v5877
    %v5888 = vmul.u32 %v5843, %v5834
    %v5889 = vadd.s32 %v5865, %v5884
    %vm5890 = vc.u32 %v5865, %v5884
    %v5891 = vadd.s32 %v5887, 1
    %v5892 = vsel %vm5890, %v5891, %v5887
    %v5893 = vadd.s32 %v5888, %v5892
    %v5894 = vadd.s32 %v5893, 536870912
    %v5895 = vshrl.u32 %v5894, 30
    %v5896 = vshll.u32 %v5895, 30
    %v5897 = vsub.s32 %v5893, %v5896
    %vm5898 = vcmp.lt.s32.totalorder %v5897, 0
    %v5899 = vsub.s32 0, %v5897
    %v5900 = vsel %vm5898, %v5899, %v5897
    %v5901 = vclz %v5900
    %v5902 = vsub.s32 %v5901, 2
    %vm5903 = vcmp.gt.s32.totalorder 0, %v5902
    %v5904 = vsel %vm5903, 0, %v5902
    %v5905 = vsub.s32 32, %v5904
    %v5906 = vshll.u32 %v5897, %v5904
    %v5907 = vshrl.u32 %v5889, %v5905
    %v5908 = vor.u32 %v5906, %v5907
    %v5909 = vsub.s32 4294967266, %v5904
    %v5910 = vadd.s32 %v5909, 127
    %v5911 = vshll.u32 %v5910, 23
    %v5912 = vor.u32 4788187, %v5911
    %v5913 = vand.u32 2147483647, %v5912
    %v5915 = vcvt.s32.f32 %v5908
    %v5916 = vmul.f32 %v5915, %v5913
    %v5917 = vxor.u32 %v5916, 2147483648
    %v5918 = vsel %vm5797, %v5917, %v5916
    %v5919 = vsub.s32 4, %v5895
    %v5920 = vsel %vm5797, %v5919, %v5895
    %v5921 = vsel %vm5796, %v217, %v5918
    %v5922 = vsel %vm5796, 0, %v5920
    %v5923 = vmul.f32 %v5921, %v5921
    %v5924 = vmul.f32 %v5923, -0.001358992
    %v5925 = vadd.f32 %v5924, 0.041655596
    %v5926 = vmul.f32 %v5923, %v5925
    %v5927 = vadd.f32 %v5926, -0.4999988
    %v5928 = vmul.f32 %v5923, %v5927
    %v5929 = vadd.f32 1.0, %v5928
    %v5930 = vmul.f32 %v5921, %v5921
    %v5931 = vmul.f32 %v5930, -0.00019511016
    %v5932 = vadd.f32 %v5931, 0.008332121
    %v5933 = vmul.f32 %v5930, %v5932
    %v5934 = vadd.f32 %v5933, -0.16666654
    %v5935 = vmul.f32 %v5930, %v5934
    %v5936 = vadd.f32 %v5935, 1.0
    %v5937 = vmul.f32 %v5936, %v5921
    %vm5938 = vweird.f32 %v217
    %v5939 = vadd.s32 %v5922, 3
    %v5940 = vand.u32 %v5939, 3
    %vm5941 = vcmp.lt.s32.totalorder %v5940, 2
    %vm5942 = vcmp.eq.s32.totalorder %v5940, 0
    %v5943 = vxor.u32 %v5937, 2147483648
    %v5944 = vsel %vm5942, %v5929, %v5943
    %vm5945 = vcmp.eq.s32.totalorder %v5940, 2
    %v5946 = vxor.u32 %v5929, 2147483648
    %v5947 = vsel %vm5945, %v5946, %v5937
    %v5948 = vsel %vm5941, %v5944, %v5947
    %v5949 = vsel %vm5938, nan, %v5948
    %v5950 = vand.u32 2147483647, %v218
    %vm5951 = vcmp.le.f32.partialorder %v5950, 0.7853982
    %vm5952 = vcmp.lt.s32.totalorder %v218, 0
    %v5953 = vand.u32 %v218, 2139095040
    %v5954 = vshrl.u32 %v5953, 23
    %v5955 = vsub.s32 %v5954, 127
    %v5956 = vand.u32 2147483647, %v218
    %v5957 = vand.u32 %v5956, 8388607
    %v5958 = vor.u32 %v5957, 8388608
    %v5959 = vsub.s32 0, %v5958
    %v5960 = vadd.s32 %v5955, 1
    %vm5961 = vcmp.gt.s32.totalorder %v5960, 0
    %v5962 = vsel %vm5961, %v5960, 0
    %v5963 = vshrl.u32 %v5962, 5
    %v5964 = vand.u32 %v5962, 31
    %v5965 = vsub.s32 32, %v5964
    %v5966 = vshrl.u32 683565275, %v5965
    %v5967 = vshll.u32 683565275, %v5964
    %v5968 = vshrl.u32 2475754826, %v5965
    %v5969 = vor.u32 %v5967, %v5968
    %v5970 = vshll.u32 2475754826, %v5964
    %v5971 = vshrl.u32 2131351028, %v5965
    %v5972 = vor.u32 %v5970, %v5971
    %v5973 = vshll.u32 2131351028, %v5964
    %v5974 = vshrl.u32 2102212464, %v5965
    %v5975 = vor.u32 %v5973, %v5974
    %v5976 = vshll.u32 2102212464, %v5964
    %v5977 = vshrl.u32 920167782, %v5965
    %v5978 = vor.u32 %v5976, %v5977
    %v5979 = vshll.u32 920167782, %v5964
    %v5980 = vshrl.u32 1326507024, %v5965
    %v5981 = vor.u32 %v5979, %v5980
    %vm5982 = vcmp.lt.s32.totalorder %v5963, 1
    %vm5983 = vcmp.lt.s32.totalorder %v5963, 2
    %vm5984 = vcmp.lt.s32.totalorder %v5963, 3
    %vm5985 = vcmp.lt.s32.totalorder %v5963, 4
    %v5986 = vsel %vm5982, %v5966, %v5969
    %v5987 = vsel %vm5985, %v5975, 2102212464
    %v5988 = vsel %vm5984, %v5972, %v5987
    %v5989 = vsel %vm5983, %v5986, %v5988
    %v5990 = vsel %vm5982, %v5969, %v5972
    %v5991 = vsel %vm5985, %v5978, 920167782
    %v5992 = vsel %vm5984, %v5975, %v5991
    %v5993 = vsel %vm5983, %v5990, %v5992
    %v5994 = vsel %vm5982, %v5972, %v5975
    %v5995 = vsel %vm5985, %v5981, 1326507024
    %v5996 = vsel %vm5984, %v5978, %v5995
    %v5997 = vsel %vm5983, %v5994, %v5996
    %v5998 = vshll.u32 %v5958, 8
    %v5999 = vand.u32 %v5998, 65535
    %v6000 = vshrl.u32 %v5998, 16
    %v6001 = vand.u32 %v5997, 65535
    %v6002 = vshrl.u32 %v5997, 16
    %v6003 = vmul.u32 %v5999, %v6001
    %v6004 = vmul.u32 %v5999, %v6002
    %v6005 = vmul.u32 %v6000, %v6001
    %v6006 = vmul.u32 %v6000, %v6002
    %v6007 = vshll.u32 %v6004, 16
    %v6008 = vshrl.u32 %v6004, 16
    %v6009 = vshll.u32 %v6005, 16
    %v6010 = vshrl.u32 %v6005, 16
    %vm6011 = vc.u32 %v6003, %v6007
    %v6012 = vsel %vm6011, 1, 0
    %v6013 = vadd.s32 %v6003, %v6007
    %v6014 = vadd.s32 %v6006, %v6012
    %vm6015 = vc.u32 %v6013, %v6009
    %v6016 = vsel %vm6015, 1, 0
    %v6017 = vadd.s32 %v6013, %v6009
    %v6018 = vadd.s32 %v6014, %v6016
    %v6019 = vadd.s32 %v6018, %v6008
    %v6020 = vadd.s32 %v6019, %v6010
    %v6021 = vand.u32 %v5998, 65535
    %v6022 = vshrl.u32 %v5998, 16
    %v6023 = vand.u32 %v5993, 65535
    %v6024 = vshrl.u32 %v5993, 16
    %v6025 = vmul.u32 %v6021, %v6023
    %v6026 = vmul.u32 %v6021, %v6024
    %v6027 = vmul.u32 %v6022, %v6023
    %v6028 = vmul.u32 %v6022, %v6024
    %v6029 = vshll.u32 %v6026, 16
    %v6030 = vshrl.u32 %v6026, 16
    %v6031 = vshll.u32 %v6027, 16
    %v6032 = vshrl.u32 %v6027, 16
    %vm6033 = vc.u32 %v6025, %v6029
    %v6034 = vsel %vm6033, 1, 0
    %v6035 = vadd.s32 %v6025, %v6029
    %v6036 = vadd.s32 %v6028, %v6034
    %vm6037 = vc.u32 %v6035, %v6031
    %v6038 = vsel %vm6037, 1, 0
    %v6039 = vadd.s32 %v6035, %v6031
    %v6040 = vadd.s32 %v6036, %v6038
    %v6041 = vadd.s32 %v6040, %v6030
    %v6042 = vadd.s32 %v6041, %v6032
    %v6043 = vmul.u32 %v5998, %v5989
    %v6044 = vadd.s32 %v6020, %v6039
    %vm6045 = vc.u32 %v6020, %v6039
    %v6046 = vadd.s32 %v6042, 1
    %v6047 = vsel %vm6045, %v6046, %v6042
    %v6048 = vadd.s32 %v6043, %v6047
    %v6049 = vadd.s32 %v6048, 536870912
    %v6050 = vshrl.u32 %v6049, 30
    %v6051 = vshll.u32 %v6050, 30
    %v6052 = vsub.s32 %v6048, %v6051
    %vm6053 = vcmp.lt.s32.totalorder %v6052, 0
    %v6054 = vsub.s32 0, %v6052
    %v6055 = vsel %vm6053, %v6054, %v6052
    %v6056 = vclz %v6055
    %v6057 = vsub.s32 %v6056, 2
    %vm6058 = vcmp.gt.s32.totalorder 0, %v6057
    %v6059 = vsel %vm6058, 0, %v6057
    %v6060 = vsub.s32 32, %v6059
    %v6061 = vshll.u32 %v6052, %v6059
    %v6062 = vshrl.u32 %v6044, %v6060
    %v6063 = vor.u32 %v6061, %v6062
    %v6064 = vsub.s32 4294967266, %v6059
    %v6065 = vadd.s32 %v6064, 127
    %v6066 = vshll.u32 %v6065, 23
    %v6067 = vor.u32 4788187, %v6066
    %v6068 = vand.u32 2147483647, %v6067
    %v6070 = vcvt.s32.f32 %v6063
    %v6071 = vmul.f32 %v6070, %v6068
    %v6072 = vxor.u32 %v6071, 2147483648
    %v6073 = vsel %vm5952, %v6072, %v6071
    %v6074 = vsub.s32 4, %v6050
    %v6075 = vsel %vm5952, %v6074, %v6050
    %v6076 = vsel %vm5951, %v218, %v6073
    %v6077 = vsel %vm5951, 0, %v6075
    %v6078 = vmul.f32 %v6076, %v6076
    %v6079 = vmul.f32 %v6078, -0.001358992
    %v6080 = vadd.f32 %v6079, 0.041655596
    %v6081 = vmul.f32 %v6078, %v6080
    %v6082 = vadd.f32 %v6081, -0.4999988
    %v6083 = vmul.f32 %v6078, %v6082
    %v6084 = vadd.f32 1.0, %v6083
    %v6085 = vmul.f32 %v6076, %v6076
    %v6086 = vmul.f32 %v6085, -0.00019511016
    %v6087 = vadd.f32 %v6086, 0.008332121
    %v6088 = vmul.f32 %v6085, %v6087
    %v6089 = vadd.f32 %v6088, -0.16666654
    %v6090 = vmul.f32 %v6085, %v6089
    %v6091 = vadd.f32 %v6090, 1.0
    %v6092 = vmul.f32 %v6091, %v6076
    %vm6093 = vweird.f32 %v218
    %v6094 = vadd.s32 %v6077, 3
    %v6095 = vand.u32 %v6094, 3
    %vm6096 = vcmp.lt.s32.totalorder %v6095, 2
    %vm6097 = vcmp.eq.s32.totalorder %v6095, 0
    %v6098 = vxor.u32 %v6092, 2147483648
    %v6099 = vsel %vm6097, %v6084, %v6098
    %vm6100 = vcmp.eq.s32.totalorder %v6095, 2
    %v6101 = vxor.u32 %v6084, 2147483648
    %v6102 = vsel %vm6100, %v6101, %v6092
    %v6103 = vsel %vm6096, %v6099, %v6102
    %v6104 = vsel %vm6093, nan, %v6103
    %v6105 = vand.u32 2147483647, %v219
    %vm6106 = vcmp.le.f32.partialorder %v6105, 0.7853982
    %vm6107 = vcmp.lt.s32.totalorder %v219, 0
    %v6108 = vand.u32 %v219, 2139095040
    %v6109 = vshrl.u32 %v6108, 23
    %v6110 = vsub.s32 %v6109, 127
    %v6111 = vand.u32 2147483647, %v219
    %v6112 = vand.u32 %v6111, 8388607
    %v6113 = vor.u32 %v6112, 8388608
    %v6114 = vsub.s32 0, %v6113
    %v6115 = vadd.s32 %v6110, 1
    %vm6116 = vcmp.gt.s32.totalorder %v6115, 0
    %v6117 = vsel %vm6116, %v6115, 0
    %v6118 = vshrl.u32 %v6117, 5
    %v6119 = vand.u32 %v6117, 31
    %v6120 = vsub.s32 32, %v6119
    %v6121 = vshrl.u32 683565275, %v6120
    %v6122 = vshll.u32 683565275, %v6119
    %v6123 = vshrl.u32 2475754826, %v6120
    %v6124 = vor.u32 %v6122, %v6123
    %v6125 = vshll.u32 2475754826, %v6119
    %v6126 = vshrl.u32 2131351028, %v6120
    %v6127 = vor.u32 %v6125, %v6126
    %v6128 = vshll.u32 2131351028, %v6119
    %v6129 = vshrl.u32 2102212464, %v6120
    %v6130 = vor.u32 %v6128, %v6129
    %v6131 = vshll.u32 2102212464, %v6119
    %v6132 = vshrl.u32 920167782, %v6120
    %v6133 = vor.u32 %v6131, %v6132
    %v6134 = vshll.u32 920167782, %v6119
    %v6135 = vshrl.u32 1326507024, %v6120
    %v6136 = vor.u32 %v6134, %v6135
    %vm6137 = vcmp.lt.s32.totalorder %v6118, 1
    %vm6138 = vcmp.lt.s32.totalorder %v6118, 2
    %vm6139 = vcmp.lt.s32.totalorder %v6118, 3
    %vm6140 = vcmp.lt.s32.totalorder %v6118, 4
    %v6141 = vsel %vm6137, %v6121, %v6124
    %v6142 = vsel %vm6140, %v6130, 2102212464
    %v6143 = vsel %vm6139, %v6127, %v6142
    %v6144 = vsel %vm6138, %v6141, %v6143
    %v6145 = vsel %vm6137, %v6124, %v6127
    %v6146 = vsel %vm6140, %v6133, 920167782
    %v6147 = vsel %vm6139, %v6130, %v6146
    %v6148 = vsel %vm6138, %v6145, %v6147
    %v6149 = vsel %vm6137, %v6127, %v6130
    %v6150 = vsel %vm6140, %v6136, 1326507024
    %v6151 = vsel %vm6139, %v6133, %v6150
    %v6152 = vsel %vm6138, %v6149, %v6151
    %v6153 = vshll.u32 %v6113, 8
    %v6154 = vand.u32 %v6153, 65535
    %v6155 = vshrl.u32 %v6153, 16
    %v6156 = vand.u32 %v6152, 65535
    %v6157 = vshrl.u32 %v6152, 16
    %v6158 = vmul.u32 %v6154, %v6156
    %v6159 = vmul.u32 %v6154, %v6157
    %v6160 = vmul.u32 %v6155, %v6156
    %v6161 = vmul.u32 %v6155, %v6157
    %v6162 = vshll.u32 %v6159, 16
    %v6163 = vshrl.u32 %v6159, 16
    %v6164 = vshll.u32 %v6160, 16
    %v6165 = vshrl.u32 %v6160, 16
    %vm6166 = vc.u32 %v6158, %v6162
    %v6167 = vsel %vm6166, 1, 0
    %v6168 = vadd.s32 %v6158, %v6162
    %v6169 = vadd.s32 %v6161, %v6167
    %vm6170 = vc.u32 %v6168, %v6164
    %v6171 = vsel %vm6170, 1, 0
    %v6172 = vadd.s32 %v6168, %v6164
    %v6173 = vadd.s32 %v6169, %v6171
    %v6174 = vadd.s32 %v6173, %v6163
    %v6175 = vadd.s32 %v6174, %v6165
    %v6176 = vand.u32 %v6153, 65535
    %v6177 = vshrl.u32 %v6153, 16
    %v6178 = vand.u32 %v6148, 65535
    %v6179 = vshrl.u32 %v6148, 16
    %v6180 = vmul.u32 %v6176, %v6178
    %v6181 = vmul.u32 %v6176, %v6179
    %v6182 = vmul.u32 %v6177, %v6178
    %v6183 = vmul.u32 %v6177, %v6179
    %v6184 = vshll.u32 %v6181, 16
    %v6185 = vshrl.u32 %v6181, 16
    %v6186 = vshll.u32 %v6182, 16
    %v6187 = vshrl.u32 %v6182, 16
    %vm6188 = vc.u32 %v6180, %v6184
    %v6189 = vsel %vm6188, 1, 0
    %v6190 = vadd.s32 %v6180, %v6184
    %v6191 = vadd.s32 %v6183, %v6189
    %vm6192 = vc.u32 %v6190, %v6186
    %v6193 = vsel %vm6192, 1, 0
    %v6194 = vadd.s32 %v6190, %v6186
    %v6195 = vadd.s32 %v6191, %v6193
    %v6196 = vadd.s32 %v6195, %v6185
    %v6197 = vadd.s32 %v6196, %v6187
    %v6198 = vmul.u32 %v6153, %v6144
    %v6199 = vadd.s32 %v6175, %v6194
    %vm6200 = vc.u32 %v6175, %v6194
    %v6201 = vadd.s32 %v6197, 1
    %v6202 = vsel %vm6200, %v6201, %v6197
    %v6203 = vadd.s32 %v6198, %v6202
    %v6204 = vadd.s32 %v6203, 536870912
    %v6205 = vshrl.u32 %v6204, 30
    %v6206 = vshll.u32 %v6205, 30
    %v6207 = vsub.s32 %v6203, %v6206
    %vm6208 = vcmp.lt.s32.totalorder %v6207, 0
    %v6209 = vsub.s32 0, %v6207
    %v6210 = vsel %vm6208, %v6209, %v6207
    %v6211 = vclz %v6210
    %v6212 = vsub.s32 %v6211, 2
    %vm6213 = vcmp.gt.s32.totalorder 0, %v6212
    %v6214 = vsel %vm6213, 0, %v6212
    %v6215 = vsub.s32 32, %v6214
    %v6216 = vshll.u32 %v6207, %v6214
    %v6217 = vshrl.u32 %v6199, %v6215
    %v6218 = vor.u32 %v6216, %v6217
    %v6219 = vsub.s32 4294967266, %v6214
    %v6220 = vadd.s32 %v6219, 127
    %v6221 = vshll.u32 %v6220, 23
    %v6222 = vor.u32 4788187, %v6221
    %v6223 = vand.u32 2147483647, %v6222
    %v6225 = vcvt.s32.f32 %v6218
    %v6226 = vmul.f32 %v6225, %v6223
    %v6227 = vxor.u32 %v6226, 2147483648
    %v6228 = vsel %vm6107, %v6227, %v6226
    %v6229 = vsub.s32 4, %v6205
    %v6230 = vsel %vm6107, %v6229, %v6205
    %v6231 = vsel %vm6106, %v219, %v6228
    %v6232 = vsel %vm6106, 0, %v6230
    %v6233 = vmul.f32 %v6231, %v6231
    %v6234 = vmul.f32 %v6233, -0.001358992
    %v6235 = vadd.f32 %v6234, 0.041655596
    %v6236 = vmul.f32 %v6233, %v6235
    %v6237 = vadd.f32 %v6236, -0.4999988
    %v6238 = vmul.f32 %v6233, %v6237
    %v6239 = vadd.f32 1.0, %v6238
    %v6240 = vmul.f32 %v6231, %v6231
    %v6241 = vmul.f32 %v6240, -0.00019511016
    %v6242 = vadd.f32 %v6241, 0.008332121
    %v6243 = vmul.f32 %v6240, %v6242
    %v6244 = vadd.f32 %v6243, -0.16666654
    %v6245 = vmul.f32 %v6240, %v6244
    %v6246 = vadd.f32 %v6245, 1.0
    %v6247 = vmul.f32 %v6246, %v6231
    %vm6248 = vweird.f32 %v219
    %v6249 = vadd.s32 %v6232, 3
    %v6250 = vand.u32 %v6249, 3
    %vm6251 = vcmp.lt.s32.totalorder %v6250, 2
    %vm6252 = vcmp.eq.s32.totalorder %v6250, 0
    %v6253 = vxor.u32 %v6247, 2147483648
    %v6254 = vsel %vm6252, %v6239, %v6253
    %vm6255 = vcmp.eq.s32.totalorder %v6250, 2
    %v6256 = vxor.u32 %v6239, 2147483648
    %v6257 = vsel %vm6255, %v6256, %v6247
    %v6258 = vsel %vm6251, %v6254, %v6257
    %v6259 = vsel %vm6248, nan, %v6258
    %v6260 = vand.u32 2147483647, %v220
    %vm6261 = vcmp.le.f32.partialorder %v6260, 0.7853982
    %vm6262 = vcmp.lt.s32.totalorder %v220, 0
    %v6263 = vand.u32 %v220, 2139095040
    %v6264 = vshrl.u32 %v6263, 23
    %v6265 = vsub.s32 %v6264, 127
    %v6266 = vand.u32 2147483647, %v220
    %v6267 = vand.u32 %v6266, 8388607
    %v6268 = vor.u32 %v6267, 8388608
    %v6269 = vsub.s32 0, %v6268
    %v6270 = vadd.s32 %v6265, 1
    %vm6271 = vcmp.gt.s32.totalorder %v6270, 0
    %v6272 = vsel %vm6271, %v6270, 0
    %v6273 = vshrl.u32 %v6272, 5
    %v6274 = vand.u32 %v6272, 31
    %v6275 = vsub.s32 32, %v6274
    %v6276 = vshrl.u32 683565275, %v6275
    %v6277 = vshll.u32 683565275, %v6274
    %v6278 = vshrl.u32 2475754826, %v6275
    %v6279 = vor.u32 %v6277, %v6278
    %v6280 = vshll.u32 2475754826, %v6274
    %v6281 = vshrl.u32 2131351028, %v6275
    %v6282 = vor.u32 %v6280, %v6281
    %v6283 = vshll.u32 2131351028, %v6274
    %v6284 = vshrl.u32 2102212464, %v6275
    %v6285 = vor.u32 %v6283, %v6284
    %v6286 = vshll.u32 2102212464, %v6274
    %v6287 = vshrl.u32 920167782, %v6275
    %v6288 = vor.u32 %v6286, %v6287
    %v6289 = vshll.u32 920167782, %v6274
    %v6290 = vshrl.u32 1326507024, %v6275
    %v6291 = vor.u32 %v6289, %v6290
    %vm6292 = vcmp.lt.s32.totalorder %v6273, 1
    %vm6293 = vcmp.lt.s32.totalorder %v6273, 2
    %vm6294 = vcmp.lt.s32.totalorder %v6273, 3
    %vm6295 = vcmp.lt.s32.totalorder %v6273, 4
    %v6296 = vsel %vm6292, %v6276, %v6279
    %v6297 = vsel %vm6295, %v6285, 2102212464
    %v6298 = vsel %vm6294, %v6282, %v6297
    %v6299 = vsel %vm6293, %v6296, %v6298
    %v6300 = vsel %vm6292, %v6279, %v6282
    %v6301 = vsel %vm6295, %v6288, 920167782
    %v6302 = vsel %vm6294, %v6285, %v6301
    %v6303 = vsel %vm6293, %v6300, %v6302
    %v6304 = vsel %vm6292, %v6282, %v6285
    %v6305 = vsel %vm6295, %v6291, 1326507024
    %v6306 = vsel %vm6294, %v6288, %v6305
    %v6307 = vsel %vm6293, %v6304, %v6306
    %v6308 = vshll.u32 %v6268, 8
    %v6309 = vand.u32 %v6308, 65535
    %v6310 = vshrl.u32 %v6308, 16
    %v6311 = vand.u32 %v6307, 65535
    %v6312 = vshrl.u32 %v6307, 16
    %v6313 = vmul.u32 %v6309, %v6311
    %v6314 = vmul.u32 %v6309, %v6312
    %v6315 = vmul.u32 %v6310, %v6311
    %v6316 = vmul.u32 %v6310, %v6312
    %v6317 = vshll.u32 %v6314, 16
    %v6318 = vshrl.u32 %v6314, 16
    %v6319 = vshll.u32 %v6315, 16
    %v6320 = vshrl.u32 %v6315, 16
    %vm6321 = vc.u32 %v6313, %v6317
    %v6322 = vsel %vm6321, 1, 0
    %v6323 = vadd.s32 %v6313, %v6317
    %v6324 = vadd.s32 %v6316, %v6322
    %vm6325 = vc.u32 %v6323, %v6319
    %v6326 = vsel %vm6325, 1, 0
    %v6327 = vadd.s32 %v6323, %v6319
    %v6328 = vadd.s32 %v6324, %v6326
    %v6329 = vadd.s32 %v6328, %v6318
    %v6330 = vadd.s32 %v6329, %v6320
    %v6331 = vand.u32 %v6308, 65535
    %v6332 = vshrl.u32 %v6308, 16
    %v6333 = vand.u32 %v6303, 65535
    %v6334 = vshrl.u32 %v6303, 16
    %v6335 = vmul.u32 %v6331, %v6333
    %v6336 = vmul.u32 %v6331, %v6334
    %v6337 = vmul.u32 %v6332, %v6333
    %v6338 = vmul.u32 %v6332, %v6334
    %v6339 = vshll.u32 %v6336, 16
    %v6340 = vshrl.u32 %v6336, 16
    %v6341 = vshll.u32 %v6337, 16
    %v6342 = vshrl.u32 %v6337, 16
    %vm6343 = vc.u32 %v6335, %v6339
    %v6344 = vsel %vm6343, 1, 0
    %v6345 = vadd.s32 %v6335, %v6339
    %v6346 = vadd.s32 %v6338, %v6344
    %vm6347 = vc.u32 %v6345, %v6341
    %v6348 = vsel %vm6347, 1, 0
    %v6349 = vadd.s32 %v6345, %v6341
    %v6350 = vadd.s32 %v6346, %v6348
    %v6351 = vadd.s32 %v6350, %v6340
    %v6352 = vadd.s32 %v6351, %v6342
    %v6353 = vmul.u32 %v6308, %v6299
    %v6354 = vadd.s32 %v6330, %v6349
    %vm6355 = vc.u32 %v6330, %v6349
    %v6356 = vadd.s32 %v6352, 1
    %v6357 = vsel %vm6355, %v6356, %v6352
    %v6358 = vadd.s32 %v6353, %v6357
    %v6359 = vadd.s32 %v6358, 536870912
    %v6360 = vshrl.u32 %v6359, 30
    %v6361 = vshll.u32 %v6360, 30
    %v6362 = vsub.s32 %v6358, %v6361
    %vm6363 = vcmp.lt.s32.totalorder %v6362, 0
    %v6364 = vsub.s32 0, %v6362
    %v6365 = vsel %vm6363, %v6364, %v6362
    %v6366 = vclz %v6365
    %v6367 = vsub.s32 %v6366, 2
    %vm6368 = vcmp.gt.s32.totalorder 0, %v6367
    %v6369 = vsel %vm6368, 0, %v6367
    %v6370 = vsub.s32 32, %v6369
    %v6371 = vshll.u32 %v6362, %v6369
    %v6372 = vshrl.u32 %v6354, %v6370
    %v6373 = vor.u32 %v6371, %v6372
    %v6374 = vsub.s32 4294967266, %v6369
    %v6375 = vadd.s32 %v6374, 127
    %v6376 = vshll.u32 %v6375, 23
    %v6377 = vor.u32 4788187, %v6376
    %v6378 = vand.u32 2147483647, %v6377
    %v6380 = vcvt.s32.f32 %v6373
    %v6381 = vmul.f32 %v6380, %v6378
    %v6382 = vxor.u32 %v6381, 2147483648
    %v6383 = vsel %vm6262, %v6382, %v6381
    %v6384 = vsub.s32 4, %v6360
    %v6385 = vsel %vm6262, %v6384, %v6360
    %v6386 = vsel %vm6261, %v220, %v6383
    %v6387 = vsel %vm6261, 0, %v6385
    %v6388 = vmul.f32 %v6386, %v6386
    %v6389 = vmul.f32 %v6388, -0.001358992
    %v6390 = vadd.f32 %v6389, 0.041655596
    %v6391 = vmul.f32 %v6388, %v6390
    %v6392 = vadd.f32 %v6391, -0.4999988
    %v6393 = vmul.f32 %v6388, %v6392
    %v6394 = vadd.f32 1.0, %v6393
    %v6395 = vmul.f32 %v6386, %v6386
    %v6396 = vmul.f32 %v6395, -0.00019511016
    %v6397 = vadd.f32 %v6396, 0.008332121
    %v6398 = vmul.f32 %v6395, %v6397
    %v6399 = vadd.f32 %v6398, -0.16666654
    %v6400 = vmul.f32 %v6395, %v6399
    %v6401 = vadd.f32 %v6400, 1.0
    %v6402 = vmul.f32 %v6401, %v6386
    %vm6403 = vweird.f32 %v220
    %v6404 = vadd.s32 %v6387, 3
    %v6405 = vand.u32 %v6404, 3
    %vm6406 = vcmp.lt.s32.totalorder %v6405, 2
    %vm6407 = vcmp.eq.s32.totalorder %v6405, 0
    %v6408 = vxor.u32 %v6402, 2147483648
    %v6409 = vsel %vm6407, %v6394, %v6408
    %vm6410 = vcmp.eq.s32.totalorder %v6405, 2
    %v6411 = vxor.u32 %v6394, 2147483648
    %v6412 = vsel %vm6410, %v6411, %v6402
    %v6413 = vsel %vm6406, %v6409, %v6412
    %v6414 = vsel %vm6403, nan, %v6413
    %v6415 = vand.u32 2147483647, %v221
    %vm6416 = vcmp.le.f32.partialorder %v6415, 0.7853982
    %vm6417 = vcmp.lt.s32.totalorder %v221, 0
    %v6418 = vand.u32 %v221, 2139095040
    %v6419 = vshrl.u32 %v6418, 23
    %v6420 = vsub.s32 %v6419, 127
    %v6421 = vand.u32 2147483647, %v221
    %v6422 = vand.u32 %v6421, 8388607
    %v6423 = vor.u32 %v6422, 8388608
    %v6424 = vsub.s32 0, %v6423
    %v6425 = vadd.s32 %v6420, 1
    %vm6426 = vcmp.gt.s32.totalorder %v6425, 0
    %v6427 = vsel %vm6426, %v6425, 0
    %v6428 = vshrl.u32 %v6427, 5
    %v6429 = vand.u32 %v6427, 31
    %v6430 = vsub.s32 32, %v6429
    %v6431 = vshrl.u32 683565275, %v6430
    %v6432 = vshll.u32 683565275, %v6429
    %v6433 = vshrl.u32 2475754826, %v6430
    %v6434 = vor.u32 %v6432, %v6433
    %v6435 = vshll.u32 2475754826, %v6429
    %v6436 = vshrl.u32 2131351028, %v6430
    %v6437 = vor.u32 %v6435, %v6436
    %v6438 = vshll.u32 2131351028, %v6429
    %v6439 = vshrl.u32 2102212464, %v6430
    %v6440 = vor.u32 %v6438, %v6439
    %v6441 = vshll.u32 2102212464, %v6429
    %v6442 = vshrl.u32 920167782, %v6430
    %v6443 = vor.u32 %v6441, %v6442
    %v6444 = vshll.u32 920167782, %v6429
    %v6445 = vshrl.u32 1326507024, %v6430
    %v6446 = vor.u32 %v6444, %v6445
    %vm6447 = vcmp.lt.s32.totalorder %v6428, 1
    %vm6448 = vcmp.lt.s32.totalorder %v6428, 2
    %vm6449 = vcmp.lt.s32.totalorder %v6428, 3
    %vm6450 = vcmp.lt.s32.totalorder %v6428, 4
    %v6451 = vsel %vm6447, %v6431, %v6434
    %v6452 = vsel %vm6450, %v6440, 2102212464
    %v6453 = vsel %vm6449, %v6437, %v6452
    %v6454 = vsel %vm6448, %v6451, %v6453
    %v6455 = vsel %vm6447, %v6434, %v6437
    %v6456 = vsel %vm6450, %v6443, 920167782
    %v6457 = vsel %vm6449, %v6440, %v6456
    %v6458 = vsel %vm6448, %v6455, %v6457
    %v6459 = vsel %vm6447, %v6437, %v6440
    %v6460 = vsel %vm6450, %v6446, 1326507024
    %v6461 = vsel %vm6449, %v6443, %v6460
    %v6462 = vsel %vm6448, %v6459, %v6461
    %v6463 = vshll.u32 %v6423, 8
    %v6464 = vand.u32 %v6463, 65535
    %v6465 = vshrl.u32 %v6463, 16
    %v6466 = vand.u32 %v6462, 65535
    %v6467 = vshrl.u32 %v6462, 16
    %v6468 = vmul.u32 %v6464, %v6466
    %v6469 = vmul.u32 %v6464, %v6467
    %v6470 = vmul.u32 %v6465, %v6466
    %v6471 = vmul.u32 %v6465, %v6467
    %v6472 = vshll.u32 %v6469, 16
    %v6473 = vshrl.u32 %v6469, 16
    %v6474 = vshll.u32 %v6470, 16
    %v6475 = vshrl.u32 %v6470, 16
    %vm6476 = vc.u32 %v6468, %v6472
    %v6477 = vsel %vm6476, 1, 0
    %v6478 = vadd.s32 %v6468, %v6472
    %v6479 = vadd.s32 %v6471, %v6477
    %vm6480 = vc.u32 %v6478, %v6474
    %v6481 = vsel %vm6480, 1, 0
    %v6482 = vadd.s32 %v6478, %v6474
    %v6483 = vadd.s32 %v6479, %v6481
    %v6484 = vadd.s32 %v6483, %v6473
    %v6485 = vadd.s32 %v6484, %v6475
    %v6486 = vand.u32 %v6463, 65535
    %v6487 = vshrl.u32 %v6463, 16
    %v6488 = vand.u32 %v6458, 65535
    %v6489 = vshrl.u32 %v6458, 16
    %v6490 = vmul.u32 %v6486, %v6488
    %v6491 = vmul.u32 %v6486, %v6489
    %v6492 = vmul.u32 %v6487, %v6488
    %v6493 = vmul.u32 %v6487, %v6489
    %v6494 = vshll.u32 %v6491, 16
    %v6495 = vshrl.u32 %v6491, 16
    %v6496 = vshll.u32 %v6492, 16
    %v6497 = vshrl.u32 %v6492, 16
    %vm6498 = vc.u32 %v6490, %v6494
    %v6499 = vsel %vm6498, 1, 0
    %v6500 = vadd.s32 %v6490, %v6494
    %v6501 = vadd.s32 %v6493, %v6499
    %vm6502 = vc.u32 %v6500, %v6496
    %v6503 = vsel %vm6502, 1, 0
    %v6504 = vadd.s32 %v6500, %v6496
    %v6505 = vadd.s32 %v6501, %v6503
    %v6506 = vadd.s32 %v6505, %v6495
    %v6507 = vadd.s32 %v6506, %v6497
    %v6508 = vmul.u32 %v6463, %v6454
    %v6509 = vadd.s32 %v6485, %v6504
    %vm6510 = vc.u32 %v6485, %v6504
    %v6511 = vadd.s32 %v6507, 1
    %v6512 = vsel %vm6510, %v6511, %v6507
    %v6513 = vadd.s32 %v6508, %v6512
    %v6514 = vadd.s32 %v6513, 536870912
    %v6515 = vshrl.u32 %v6514, 30
    %v6516 = vshll.u32 %v6515, 30
    %v6517 = vsub.s32 %v6513, %v6516
    %vm6518 = vcmp.lt.s32.totalorder %v6517, 0
    %v6519 = vsub.s32 0, %v6517
    %v6520 = vsel %vm6518, %v6519, %v6517
    %v6521 = vclz %v6520
    %v6522 = vsub.s32 %v6521, 2
    %vm6523 = vcmp.gt.s32.totalorder 0, %v6522
    %v6524 = vsel %vm6523, 0, %v6522
    %v6525 = vsub.s32 32, %v6524
    %v6526 = vshll.u32 %v6517, %v6524
    %v6527 = vshrl.u32 %v6509, %v6525
    %v6528 = vor.u32 %v6526, %v6527
    %v6529 = vsub.s32 4294967266, %v6524
    %v6530 = vadd.s32 %v6529, 127
    %v6531 = vshll.u32 %v6530, 23
    %v6532 = vor.u32 4788187, %v6531
    %v6533 = vand.u32 2147483647, %v6532
    %v6535 = vcvt.s32.f32 %v6528
    %v6536 = vmul.f32 %v6535, %v6533
    %v6537 = vxor.u32 %v6536, 2147483648
    %v6538 = vsel %vm6417, %v6537, %v6536
    %v6539 = vsub.s32 4, %v6515
    %v6540 = vsel %vm6417, %v6539, %v6515
    %v6541 = vsel %vm6416, %v221, %v6538
    %v6542 = vsel %vm6416, 0, %v6540
    %v6543 = vmul.f32 %v6541, %v6541
    %v6544 = vmul.f32 %v6543, -0.001358992
    %v6545 = vadd.f32 %v6544, 0.041655596
    %v6546 = vmul.f32 %v6543, %v6545
    %v6547 = vadd.f32 %v6546, -0.4999988
    %v6548 = vmul.f32 %v6543, %v6547
    %v6549 = vadd.f32 1.0, %v6548
    %v6550 = vmul.f32 %v6541, %v6541
    %v6551 = vmul.f32 %v6550, -0.00019511016
    %v6552 = vadd.f32 %v6551, 0.008332121
    %v6553 = vmul.f32 %v6550, %v6552
    %v6554 = vadd.f32 %v6553, -0.16666654
    %v6555 = vmul.f32 %v6550, %v6554
    %v6556 = vadd.f32 %v6555, 1.0
    %v6557 = vmul.f32 %v6556, %v6541
    %vm6558 = vweird.f32 %v221
    %v6559 = vadd.s32 %v6542, 3
    %v6560 = vand.u32 %v6559, 3
    %vm6561 = vcmp.lt.s32.totalorder %v6560, 2
    %vm6562 = vcmp.eq.s32.totalorder %v6560, 0
    %v6563 = vxor.u32 %v6557, 2147483648
    %v6564 = vsel %vm6562, %v6549, %v6563
    %vm6565 = vcmp.eq.s32.totalorder %v6560, 2
    %v6566 = vxor.u32 %v6549, 2147483648
    %v6567 = vsel %vm6565, %v6566, %v6557
    %v6568 = vsel %vm6561, %v6564, %v6567
    %v6569 = vsel %vm6558, nan, %v6568
    %v6570 = vand.u32 2147483647, %v222
    %vm6571 = vcmp.le.f32.partialorder %v6570, 0.7853982
    %vm6572 = vcmp.lt.s32.totalorder %v222, 0
    %v6573 = vand.u32 %v222, 2139095040
    %v6574 = vshrl.u32 %v6573, 23
    %v6575 = vsub.s32 %v6574, 127
    %v6576 = vand.u32 2147483647, %v222
    %v6577 = vand.u32 %v6576, 8388607
    %v6578 = vor.u32 %v6577, 8388608
    %v6579 = vsub.s32 0, %v6578
    %v6580 = vadd.s32 %v6575, 1
    %vm6581 = vcmp.gt.s32.totalorder %v6580, 0
    %v6582 = vsel %vm6581, %v6580, 0
    %v6583 = vshrl.u32 %v6582, 5
    %v6584 = vand.u32 %v6582, 31
    %v6585 = vsub.s32 32, %v6584
    %v6586 = vshrl.u32 683565275, %v6585
    %v6587 = vshll.u32 683565275, %v6584
    %v6588 = vshrl.u32 2475754826, %v6585
    %v6589 = vor.u32 %v6587, %v6588
    %v6590 = vshll.u32 2475754826, %v6584
    %v6591 = vshrl.u32 2131351028, %v6585
    %v6592 = vor.u32 %v6590, %v6591
    %v6593 = vshll.u32 2131351028, %v6584
    %v6594 = vshrl.u32 2102212464, %v6585
    %v6595 = vor.u32 %v6593, %v6594
    %v6596 = vshll.u32 2102212464, %v6584
    %v6597 = vshrl.u32 920167782, %v6585
    %v6598 = vor.u32 %v6596, %v6597
    %v6599 = vshll.u32 920167782, %v6584
    %v6600 = vshrl.u32 1326507024, %v6585
    %v6601 = vor.u32 %v6599, %v6600
    %vm6602 = vcmp.lt.s32.totalorder %v6583, 1
    %vm6603 = vcmp.lt.s32.totalorder %v6583, 2
    %vm6604 = vcmp.lt.s32.totalorder %v6583, 3
    %vm6605 = vcmp.lt.s32.totalorder %v6583, 4
    %v6606 = vsel %vm6602, %v6586, %v6589
    %v6607 = vsel %vm6605, %v6595, 2102212464
    %v6608 = vsel %vm6604, %v6592, %v6607
    %v6609 = vsel %vm6603, %v6606, %v6608
    %v6610 = vsel %vm6602, %v6589, %v6592
    %v6611 = vsel %vm6605, %v6598, 920167782
    %v6612 = vsel %vm6604, %v6595, %v6611
    %v6613 = vsel %vm6603, %v6610, %v6612
    %v6614 = vsel %vm6602, %v6592, %v6595
    %v6615 = vsel %vm6605, %v6601, 1326507024
    %v6616 = vsel %vm6604, %v6598, %v6615
    %v6617 = vsel %vm6603, %v6614, %v6616
    %v6618 = vshll.u32 %v6578, 8
    %v6619 = vand.u32 %v6618, 65535
    %v6620 = vshrl.u32 %v6618, 16
    %v6621 = vand.u32 %v6617, 65535
    %v6622 = vshrl.u32 %v6617, 16
    %v6623 = vmul.u32 %v6619, %v6621
    %v6624 = vmul.u32 %v6619, %v6622
    %v6625 = vmul.u32 %v6620, %v6621
    %v6626 = vmul.u32 %v6620, %v6622
    %v6627 = vshll.u32 %v6624, 16
    %v6628 = vshrl.u32 %v6624, 16
    %v6629 = vshll.u32 %v6625, 16
    %v6630 = vshrl.u32 %v6625, 16
    %vm6631 = vc.u32 %v6623, %v6627
    %v6632 = vsel %vm6631, 1, 0
    %v6633 = vadd.s32 %v6623, %v6627
    %v6634 = vadd.s32 %v6626, %v6632
    %vm6635 = vc.u32 %v6633, %v6629
    %v6636 = vsel %vm6635, 1, 0
    %v6637 = vadd.s32 %v6633, %v6629
    %v6638 = vadd.s32 %v6634, %v6636
    %v6639 = vadd.s32 %v6638, %v6628
    %v6640 = vadd.s32 %v6639, %v6630
    %v6641 = vand.u32 %v6618, 65535
    %v6642 = vshrl.u32 %v6618, 16
    %v6643 = vand.u32 %v6613, 65535
    %v6644 = vshrl.u32 %v6613, 16
    %v6645 = vmul.u32 %v6641, %v6643
    %v6646 = vmul.u32 %v6641, %v6644
    %v6647 = vmul.u32 %v6642, %v6643
    %v6648 = vmul.u32 %v6642, %v6644
    %v6649 = vshll.u32 %v6646, 16
    %v6650 = vshrl.u32 %v6646, 16
    %v6651 = vshll.u32 %v6647, 16
    %v6652 = vshrl.u32 %v6647, 16
    %vm6653 = vc.u32 %v6645, %v6649
    %v6654 = vsel %vm6653, 1, 0
    %v6655 = vadd.s32 %v6645, %v6649
    %v6656 = vadd.s32 %v6648, %v6654
    %vm6657 = vc.u32 %v6655, %v6651
    %v6658 = vsel %vm6657, 1, 0
    %v6659 = vadd.s32 %v6655, %v6651
    %v6660 = vadd.s32 %v6656, %v6658
    %v6661 = vadd.s32 %v6660, %v6650
    %v6662 = vadd.s32 %v6661, %v6652
    %v6663 = vmul.u32 %v6618, %v6609
    %v6664 = vadd.s32 %v6640, %v6659
    %vm6665 = vc.u32 %v6640, %v6659
    %v6666 = vadd.s32 %v6662, 1
    %v6667 = vsel %vm6665, %v6666, %v6662
    %v6668 = vadd.s32 %v6663, %v6667
    %v6669 = vadd.s32 %v6668, 536870912
    %v6670 = vshrl.u32 %v6669, 30
    %v6671 = vshll.u32 %v6670, 30
    %v6672 = vsub.s32 %v6668, %v6671
    %vm6673 = vcmp.lt.s32.totalorder %v6672, 0
    %v6674 = vsub.s32 0, %v6672
    %v6675 = vsel %vm6673, %v6674, %v6672
    %v6676 = vclz %v6675
    %v6677 = vsub.s32 %v6676, 2
    %vm6678 = vcmp.gt.s32.totalorder 0, %v6677
    %v6679 = vsel %vm6678, 0, %v6677
    %v6680 = vsub.s32 32, %v6679
    %v6681 = vshll.u32 %v6672, %v6679
    %v6682 = vshrl.u32 %v6664, %v6680
    %v6683 = vor.u32 %v6681, %v6682
    %v6684 = vsub.s32 4294967266, %v6679
    %v6685 = vadd.s32 %v6684, 127
    %v6686 = vshll.u32 %v6685, 23
    %v6687 = vor.u32 4788187, %v6686
    %v6688 = vand.u32 2147483647, %v6687
    %v6690 = vcvt.s32.f32 %v6683
    %v6691 = vmul.f32 %v6690, %v6688
    %v6692 = vxor.u32 %v6691, 2147483648
    %v6693 = vsel %vm6572, %v6692, %v6691
    %v6694 = vsub.s32 4, %v6670
    %v6695 = vsel %vm6572, %v6694, %v6670
    %v6696 = vsel %vm6571, %v222, %v6693
    %v6697 = vsel %vm6571, 0, %v6695
    %v6698 = vmul.f32 %v6696, %v6696
    %v6699 = vmul.f32 %v6698, -0.001358992
    %v6700 = vadd.f32 %v6699, 0.041655596
    %v6701 = vmul.f32 %v6698, %v6700
    %v6702 = vadd.f32 %v6701, -0.4999988
    %v6703 = vmul.f32 %v6698, %v6702
    %v6704 = vadd.f32 1.0, %v6703
    %v6705 = vmul.f32 %v6696, %v6696
    %v6706 = vmul.f32 %v6705, -0.00019511016
    %v6707 = vadd.f32 %v6706, 0.008332121
    %v6708 = vmul.f32 %v6705, %v6707
    %v6709 = vadd.f32 %v6708, -0.16666654
    %v6710 = vmul.f32 %v6705, %v6709
    %v6711 = vadd.f32 %v6710, 1.0
    %v6712 = vmul.f32 %v6711, %v6696
    %vm6713 = vweird.f32 %v222
    %v6714 = vadd.s32 %v6697, 3
    %v6715 = vand.u32 %v6714, 3
    %vm6716 = vcmp.lt.s32.totalorder %v6715, 2
    %vm6717 = vcmp.eq.s32.totalorder %v6715, 0
    %v6718 = vxor.u32 %v6712, 2147483648
    %v6719 = vsel %vm6717, %v6704, %v6718
    %vm6720 = vcmp.eq.s32.totalorder %v6715, 2
    %v6721 = vxor.u32 %v6704, 2147483648
    %v6722 = vsel %vm6720, %v6721, %v6712
    %v6723 = vsel %vm6716, %v6719, %v6722
    %v6724 = vsel %vm6713, nan, %v6723
    %v6725 = vand.u32 2147483647, %v223
    %vm6726 = vcmp.le.f32.partialorder %v6725, 0.7853982
    %vm6727 = vcmp.lt.s32.totalorder %v223, 0
    %v6728 = vand.u32 %v223, 2139095040
    %v6729 = vshrl.u32 %v6728, 23
    %v6730 = vsub.s32 %v6729, 127
    %v6731 = vand.u32 2147483647, %v223
    %v6732 = vand.u32 %v6731, 8388607
    %v6733 = vor.u32 %v6732, 8388608
    %v6734 = vsub.s32 0, %v6733
    %v6735 = vadd.s32 %v6730, 1
    %vm6736 = vcmp.gt.s32.totalorder %v6735, 0
    %v6737 = vsel %vm6736, %v6735, 0
    %v6738 = vshrl.u32 %v6737, 5
    %v6739 = vand.u32 %v6737, 31
    %v6740 = vsub.s32 32, %v6739
    %v6741 = vshrl.u32 683565275, %v6740
    %v6742 = vshll.u32 683565275, %v6739
    %v6743 = vshrl.u32 2475754826, %v6740
    %v6744 = vor.u32 %v6742, %v6743
    %v6745 = vshll.u32 2475754826, %v6739
    %v6746 = vshrl.u32 2131351028, %v6740
    %v6747 = vor.u32 %v6745, %v6746
    %v6748 = vshll.u32 2131351028, %v6739
    %v6749 = vshrl.u32 2102212464, %v6740
    %v6750 = vor.u32 %v6748, %v6749
    %v6751 = vshll.u32 2102212464, %v6739
    %v6752 = vshrl.u32 920167782, %v6740
    %v6753 = vor.u32 %v6751, %v6752
    %v6754 = vshll.u32 920167782, %v6739
    %v6755 = vshrl.u32 1326507024, %v6740
    %v6756 = vor.u32 %v6754, %v6755
    %vm6757 = vcmp.lt.s32.totalorder %v6738, 1
    %vm6758 = vcmp.lt.s32.totalorder %v6738, 2
    %vm6759 = vcmp.lt.s32.totalorder %v6738, 3
    %vm6760 = vcmp.lt.s32.totalorder %v6738, 4
    %v6761 = vsel %vm6757, %v6741, %v6744
    %v6762 = vsel %vm6760, %v6750, 2102212464
    %v6763 = vsel %vm6759, %v6747, %v6762
    %v6764 = vsel %vm6758, %v6761, %v6763
    %v6765 = vsel %vm6757, %v6744, %v6747
    %v6766 = vsel %vm6760, %v6753, 920167782
    %v6767 = vsel %vm6759, %v6750, %v6766
    %v6768 = vsel %vm6758, %v6765, %v6767
    %v6769 = vsel %vm6757, %v6747, %v6750
    %v6770 = vsel %vm6760, %v6756, 1326507024
    %v6771 = vsel %vm6759, %v6753, %v6770
    %v6772 = vsel %vm6758, %v6769, %v6771
    %v6773 = vshll.u32 %v6733, 8
    %v6774 = vand.u32 %v6773, 65535
    %v6775 = vshrl.u32 %v6773, 16
    %v6776 = vand.u32 %v6772, 65535
    %v6777 = vshrl.u32 %v6772, 16
    %v6778 = vmul.u32 %v6774, %v6776
    %v6779 = vmul.u32 %v6774, %v6777
    %v6780 = vmul.u32 %v6775, %v6776
    %v6781 = vmul.u32 %v6775, %v6777
    %v6782 = vshll.u32 %v6779, 16
    %v6783 = vshrl.u32 %v6779, 16
    %v6784 = vshll.u32 %v6780, 16
    %v6785 = vshrl.u32 %v6780, 16
    %vm6786 = vc.u32 %v6778, %v6782
    %v6787 = vsel %vm6786, 1, 0
    %v6788 = vadd.s32 %v6778, %v6782
    %v6789 = vadd.s32 %v6781, %v6787
    %vm6790 = vc.u32 %v6788, %v6784
    %v6791 = vsel %vm6790, 1, 0
    %v6792 = vadd.s32 %v6788, %v6784
    %v6793 = vadd.s32 %v6789, %v6791
    %v6794 = vadd.s32 %v6793, %v6783
    %v6795 = vadd.s32 %v6794, %v6785
    %v6796 = vand.u32 %v6773, 65535
    %v6797 = vshrl.u32 %v6773, 16
    %v6798 = vand.u32 %v6768, 65535
    %v6799 = vshrl.u32 %v6768, 16
    %v6800 = vmul.u32 %v6796, %v6798
    %v6801 = vmul.u32 %v6796, %v6799
    %v6802 = vmul.u32 %v6797, %v6798
    %v6803 = vmul.u32 %v6797, %v6799
    %v6804 = vshll.u32 %v6801, 16
    %v6805 = vshrl.u32 %v6801, 16
    %v6806 = vshll.u32 %v6802, 16
    %v6807 = vshrl.u32 %v6802, 16
    %vm6808 = vc.u32 %v6800, %v6804
    %v6809 = vsel %vm6808, 1, 0
    %v6810 = vadd.s32 %v6800, %v6804
    %v6811 = vadd.s32 %v6803, %v6809
    %vm6812 = vc.u32 %v6810, %v6806
    %v6813 = vsel %vm6812, 1, 0
    %v6814 = vadd.s32 %v6810, %v6806
    %v6815 = vadd.s32 %v6811, %v6813
    %v6816 = vadd.s32 %v6815, %v6805
    %v6817 = vadd.s32 %v6816, %v6807
    %v6818 = vmul.u32 %v6773, %v6764
    %v6819 = vadd.s32 %v6795, %v6814
    %vm6820 = vc.u32 %v6795, %v6814
    %v6821 = vadd.s32 %v6817, 1
    %v6822 = vsel %vm6820, %v6821, %v6817
    %v6823 = vadd.s32 %v6818, %v6822
    %v6824 = vadd.s32 %v6823, 536870912
    %v6825 = vshrl.u32 %v6824, 30
    %v6826 = vshll.u32 %v6825, 30
    %v6827 = vsub.s32 %v6823, %v6826
    %vm6828 = vcmp.lt.s32.totalorder %v6827, 0
    %v6829 = vsub.s32 0, %v6827
    %v6830 = vsel %vm6828, %v6829, %v6827
    %v6831 = vclz %v6830
    %v6832 = vsub.s32 %v6831, 2
    %vm6833 = vcmp.gt.s32.totalorder 0, %v6832
    %v6834 = vsel %vm6833, 0, %v6832
    %v6835 = vsub.s32 32, %v6834
    %v6836 = vshll.u32 %v6827, %v6834
    %v6837 = vshrl.u32 %v6819, %v6835
    %v6838 = vor.u32 %v6836, %v6837
    %v6839 = vsub.s32 4294967266, %v6834
    %v6840 = vadd.s32 %v6839, 127
    %v6841 = vshll.u32 %v6840, 23
    %v6842 = vor.u32 4788187, %v6841
    %v6843 = vand.u32 2147483647, %v6842
    %v6845 = vcvt.s32.f32 %v6838
    %v6846 = vmul.f32 %v6845, %v6843
    %v6847 = vxor.u32 %v6846, 2147483648
    %v6848 = vsel %vm6727, %v6847, %v6846
    %v6849 = vsub.s32 4, %v6825
    %v6850 = vsel %vm6727, %v6849, %v6825
    %v6851 = vsel %vm6726, %v223, %v6848
    %v6852 = vsel %vm6726, 0, %v6850
    %v6853 = vmul.f32 %v6851, %v6851
    %v6854 = vmul.f32 %v6853, -0.001358992
    %v6855 = vadd.f32 %v6854, 0.041655596
    %v6856 = vmul.f32 %v6853, %v6855
    %v6857 = vadd.f32 %v6856, -0.4999988
    %v6858 = vmul.f32 %v6853, %v6857
    %v6859 = vadd.f32 1.0, %v6858
    %v6860 = vmul.f32 %v6851, %v6851
    %v6861 = vmul.f32 %v6860, -0.00019511016
    %v6862 = vadd.f32 %v6861, 0.008332121
    %v6863 = vmul.f32 %v6860, %v6862
    %v6864 = vadd.f32 %v6863, -0.16666654
    %v6865 = vmul.f32 %v6860, %v6864
    %v6866 = vadd.f32 %v6865, 1.0
    %v6867 = vmul.f32 %v6866, %v6851
    %vm6868 = vweird.f32 %v223
    %v6869 = vadd.s32 %v6852, 3
    %v6870 = vand.u32 %v6869, 3
    %vm6871 = vcmp.lt.s32.totalorder %v6870, 2
    %vm6872 = vcmp.eq.s32.totalorder %v6870, 0
    %v6873 = vxor.u32 %v6867, 2147483648
    %v6874 = vsel %vm6872, %v6859, %v6873
    %vm6875 = vcmp.eq.s32.totalorder %v6870, 2
    %v6876 = vxor.u32 %v6859, 2147483648
    %v6877 = vsel %vm6875, %v6876, %v6867
    %v6878 = vsel %vm6871, %v6874, %v6877
    %v6879 = vsel %vm6868, nan, %v6878
    %v6880 = vand.u32 2147483647, %v224
    %vm6881 = vcmp.le.f32.partialorder %v6880, 0.7853982
    %vm6882 = vcmp.lt.s32.totalorder %v224, 0
    %v6883 = vand.u32 %v224, 2139095040
    %v6884 = vshrl.u32 %v6883, 23
    %v6885 = vsub.s32 %v6884, 127
    %v6886 = vand.u32 2147483647, %v224
    %v6887 = vand.u32 %v6886, 8388607
    %v6888 = vor.u32 %v6887, 8388608
    %v6889 = vsub.s32 0, %v6888
    %v6890 = vadd.s32 %v6885, 1
    %vm6891 = vcmp.gt.s32.totalorder %v6890, 0
    %v6892 = vsel %vm6891, %v6890, 0
    %v6893 = vshrl.u32 %v6892, 5
    %v6894 = vand.u32 %v6892, 31
    %v6895 = vsub.s32 32, %v6894
    %v6896 = vshrl.u32 683565275, %v6895
    %v6897 = vshll.u32 683565275, %v6894
    %v6898 = vshrl.u32 2475754826, %v6895
    %v6899 = vor.u32 %v6897, %v6898
    %v6900 = vshll.u32 2475754826, %v6894
    %v6901 = vshrl.u32 2131351028, %v6895
    %v6902 = vor.u32 %v6900, %v6901
    %v6903 = vshll.u32 2131351028, %v6894
    %v6904 = vshrl.u32 2102212464, %v6895
    %v6905 = vor.u32 %v6903, %v6904
    %v6906 = vshll.u32 2102212464, %v6894
    %v6907 = vshrl.u32 920167782, %v6895
    %v6908 = vor.u32 %v6906, %v6907
    %v6909 = vshll.u32 920167782, %v6894
    %v6910 = vshrl.u32 1326507024, %v6895
    %v6911 = vor.u32 %v6909, %v6910
    %vm6912 = vcmp.lt.s32.totalorder %v6893, 1
    %vm6913 = vcmp.lt.s32.totalorder %v6893, 2
    %vm6914 = vcmp.lt.s32.totalorder %v6893, 3
    %vm6915 = vcmp.lt.s32.totalorder %v6893, 4
    %v6916 = vsel %vm6912, %v6896, %v6899
    %v6917 = vsel %vm6915, %v6905, 2102212464
    %v6918 = vsel %vm6914, %v6902, %v6917
    %v6919 = vsel %vm6913, %v6916, %v6918
    %v6920 = vsel %vm6912, %v6899, %v6902
    %v6921 = vsel %vm6915, %v6908, 920167782
    %v6922 = vsel %vm6914, %v6905, %v6921
    %v6923 = vsel %vm6913, %v6920, %v6922
    %v6924 = vsel %vm6912, %v6902, %v6905
    %v6925 = vsel %vm6915, %v6911, 1326507024
    %v6926 = vsel %vm6914, %v6908, %v6925
    %v6927 = vsel %vm6913, %v6924, %v6926
    %v6928 = vshll.u32 %v6888, 8
    %v6929 = vand.u32 %v6928, 65535
    %v6930 = vshrl.u32 %v6928, 16
    %v6931 = vand.u32 %v6927, 65535
    %v6932 = vshrl.u32 %v6927, 16
    %v6933 = vmul.u32 %v6929, %v6931
    %v6934 = vmul.u32 %v6929, %v6932
    %v6935 = vmul.u32 %v6930, %v6931
    %v6936 = vmul.u32 %v6930, %v6932
    %v6937 = vshll.u32 %v6934, 16
    %v6938 = vshrl.u32 %v6934, 16
    %v6939 = vshll.u32 %v6935, 16
    %v6940 = vshrl.u32 %v6935, 16
    %vm6941 = vc.u32 %v6933, %v6937
    %v6942 = vsel %vm6941, 1, 0
    %v6943 = vadd.s32 %v6933, %v6937
    %v6944 = vadd.s32 %v6936, %v6942
    %vm6945 = vc.u32 %v6943, %v6939
    %v6946 = vsel %vm6945, 1, 0
    %v6947 = vadd.s32 %v6943, %v6939
    %v6948 = vadd.s32 %v6944, %v6946
    %v6949 = vadd.s32 %v6948, %v6938
    %v6950 = vadd.s32 %v6949, %v6940
    %v6951 = vand.u32 %v6928, 65535
    %v6952 = vshrl.u32 %v6928, 16
    %v6953 = vand.u32 %v6923, 65535
    %v6954 = vshrl.u32 %v6923, 16
    %v6955 = vmul.u32 %v6951, %v6953
    %v6956 = vmul.u32 %v6951, %v6954
    %v6957 = vmul.u32 %v6952, %v6953
    %v6958 = vmul.u32 %v6952, %v6954
    %v6959 = vshll.u32 %v6956, 16
    %v6960 = vshrl.u32 %v6956, 16
    %v6961 = vshll.u32 %v6957, 16
    %v6962 = vshrl.u32 %v6957, 16
    %vm6963 = vc.u32 %v6955, %v6959
    %v6964 = vsel %vm6963, 1, 0
    %v6965 = vadd.s32 %v6955, %v6959
    %v6966 = vadd.s32 %v6958, %v6964
    %vm6967 = vc.u32 %v6965, %v6961
    %v6968 = vsel %vm6967, 1, 0
    %v6969 = vadd.s32 %v6965, %v6961
    %v6970 = vadd.s32 %v6966, %v6968
    %v6971 = vadd.s32 %v6970, %v6960
    %v6972 = vadd.s32 %v6971, %v6962
    %v6973 = vmul.u32 %v6928, %v6919
    %v6974 = vadd.s32 %v6950, %v6969
    %vm6975 = vc.u32 %v6950, %v6969
    %v6976 = vadd.s32 %v6972, 1
    %v6977 = vsel %vm6975, %v6976, %v6972
    %v6978 = vadd.s32 %v6973, %v6977
    %v6979 = vadd.s32 %v6978, 536870912
    %v6980 = vshrl.u32 %v6979, 30
    %v6981 = vshll.u32 %v6980, 30
    %v6982 = vsub.s32 %v6978, %v6981
    %vm6983 = vcmp.lt.s32.totalorder %v6982, 0
    %v6984 = vsub.s32 0, %v6982
    %v6985 = vsel %vm6983, %v6984, %v6982
    %v6986 = vclz %v6985
    %v6987 = vsub.s32 %v6986, 2
    %vm6988 = vcmp.gt.s32.totalorder 0, %v6987
    %v6989 = vsel %vm6988, 0, %v6987
    %v6990 = vsub.s32 32, %v6989
    %v6991 = vshll.u32 %v6982, %v6989
    %v6992 = vshrl.u32 %v6974, %v6990
    %v6993 = vor.u32 %v6991, %v6992
    %v6994 = vsub.s32 4294967266, %v6989
    %v6995 = vadd.s32 %v6994, 127
    %v6996 = vshll.u32 %v6995, 23
    %v6997 = vor.u32 4788187, %v6996
    %v6998 = vand.u32 2147483647, %v6997
    %v7000 = vcvt.s32.f32 %v6993
    %v7001 = vmul.f32 %v7000, %v6998
    %v7002 = vxor.u32 %v7001, 2147483648
    %v7003 = vsel %vm6882, %v7002, %v7001
    %v7004 = vsub.s32 4, %v6980
    %v7005 = vsel %vm6882, %v7004, %v6980
    %v7006 = vsel %vm6881, %v224, %v7003
    %v7007 = vsel %vm6881, 0, %v7005
    %v7008 = vmul.f32 %v7006, %v7006
    %v7009 = vmul.f32 %v7008, -0.001358992
    %v7010 = vadd.f32 %v7009, 0.041655596
    %v7011 = vmul.f32 %v7008, %v7010
    %v7012 = vadd.f32 %v7011, -0.4999988
    %v7013 = vmul.f32 %v7008, %v7012
    %v7014 = vadd.f32 1.0, %v7013
    %v7015 = vmul.f32 %v7006, %v7006
    %v7016 = vmul.f32 %v7015, -0.00019511016
    %v7017 = vadd.f32 %v7016, 0.008332121
    %v7018 = vmul.f32 %v7015, %v7017
    %v7019 = vadd.f32 %v7018, -0.16666654
    %v7020 = vmul.f32 %v7015, %v7019
    %v7021 = vadd.f32 %v7020, 1.0
    %v7022 = vmul.f32 %v7021, %v7006
    %vm7023 = vweird.f32 %v224
    %v7024 = vadd.s32 %v7007, 3
    %v7025 = vand.u32 %v7024, 3
    %vm7026 = vcmp.lt.s32.totalorder %v7025, 2
    %vm7027 = vcmp.eq.s32.totalorder %v7025, 0
    %v7028 = vxor.u32 %v7022, 2147483648
    %v7029 = vsel %vm7027, %v7014, %v7028
    %vm7030 = vcmp.eq.s32.totalorder %v7025, 2
    %v7031 = vxor.u32 %v7014, 2147483648
    %v7032 = vsel %vm7030, %v7031, %v7022
    %v7033 = vsel %vm7026, %v7029, %v7032
    %v7034 = vsel %vm7023, nan, %v7033
    %v7035 = vand.u32 2147483647, %v225
    %vm7036 = vcmp.le.f32.partialorder %v7035, 0.7853982
    %vm7037 = vcmp.lt.s32.totalorder %v225, 0
    %v7038 = vand.u32 %v225, 2139095040
    %v7039 = vshrl.u32 %v7038, 23
    %v7040 = vsub.s32 %v7039, 127
    %v7041 = vand.u32 2147483647, %v225
    %v7042 = vand.u32 %v7041, 8388607
    %v7043 = vor.u32 %v7042, 8388608
    %v7044 = vsub.s32 0, %v7043
    %v7045 = vadd.s32 %v7040, 1
    %vm7046 = vcmp.gt.s32.totalorder %v7045, 0
    %v7047 = vsel %vm7046, %v7045, 0
    %v7048 = vshrl.u32 %v7047, 5
    %v7049 = vand.u32 %v7047, 31
    %v7050 = vsub.s32 32, %v7049
    %v7051 = vshrl.u32 683565275, %v7050
    %v7052 = vshll.u32 683565275, %v7049
    %v7053 = vshrl.u32 2475754826, %v7050
    %v7054 = vor.u32 %v7052, %v7053
    %v7055 = vshll.u32 2475754826, %v7049
    %v7056 = vshrl.u32 2131351028, %v7050
    %v7057 = vor.u32 %v7055, %v7056
    %v7058 = vshll.u32 2131351028, %v7049
    %v7059 = vshrl.u32 2102212464, %v7050
    %v7060 = vor.u32 %v7058, %v7059
    %v7061 = vshll.u32 2102212464, %v7049
    %v7062 = vshrl.u32 920167782, %v7050
    %v7063 = vor.u32 %v7061, %v7062
    %v7064 = vshll.u32 920167782, %v7049
    %v7065 = vshrl.u32 1326507024, %v7050
    %v7066 = vor.u32 %v7064, %v7065
    %vm7067 = vcmp.lt.s32.totalorder %v7048, 1
    %vm7068 = vcmp.lt.s32.totalorder %v7048, 2
    %vm7069 = vcmp.lt.s32.totalorder %v7048, 3
    %vm7070 = vcmp.lt.s32.totalorder %v7048, 4
    %v7071 = vsel %vm7067, %v7051, %v7054
    %v7072 = vsel %vm7070, %v7060, 2102212464
    %v7073 = vsel %vm7069, %v7057, %v7072
    %v7074 = vsel %vm7068, %v7071, %v7073
    %v7075 = vsel %vm7067, %v7054, %v7057
    %v7076 = vsel %vm7070, %v7063, 920167782
    %v7077 = vsel %vm7069, %v7060, %v7076
    %v7078 = vsel %vm7068, %v7075, %v7077
    %v7079 = vsel %vm7067, %v7057, %v7060
    %v7080 = vsel %vm7070, %v7066, 1326507024
    %v7081 = vsel %vm7069, %v7063, %v7080
    %v7082 = vsel %vm7068, %v7079, %v7081
    %v7083 = vshll.u32 %v7043, 8
    %v7084 = vand.u32 %v7083, 65535
    %v7085 = vshrl.u32 %v7083, 16
    %v7086 = vand.u32 %v7082, 65535
    %v7087 = vshrl.u32 %v7082, 16
    %v7088 = vmul.u32 %v7084, %v7086
    %v7089 = vmul.u32 %v7084, %v7087
    %v7090 = vmul.u32 %v7085, %v7086
    %v7091 = vmul.u32 %v7085, %v7087
    %v7092 = vshll.u32 %v7089, 16
    %v7093 = vshrl.u32 %v7089, 16
    %v7094 = vshll.u32 %v7090, 16
    %v7095 = vshrl.u32 %v7090, 16
    %vm7096 = vc.u32 %v7088, %v7092
    %v7097 = vsel %vm7096, 1, 0
    %v7098 = vadd.s32 %v7088, %v7092
    %v7099 = vadd.s32 %v7091, %v7097
    %vm7100 = vc.u32 %v7098, %v7094
    %v7101 = vsel %vm7100, 1, 0
    %v7102 = vadd.s32 %v7098, %v7094
    %v7103 = vadd.s32 %v7099, %v7101
    %v7104 = vadd.s32 %v7103, %v7093
    %v7105 = vadd.s32 %v7104, %v7095
    %v7106 = vand.u32 %v7083, 65535
    %v7107 = vshrl.u32 %v7083, 16
    %v7108 = vand.u32 %v7078, 65535
    %v7109 = vshrl.u32 %v7078, 16
    %v7110 = vmul.u32 %v7106, %v7108
    %v7111 = vmul.u32 %v7106, %v7109
    %v7112 = vmul.u32 %v7107, %v7108
    %v7113 = vmul.u32 %v7107, %v7109
    %v7114 = vshll.u32 %v7111, 16
    %v7115 = vshrl.u32 %v7111, 16
    %v7116 = vshll.u32 %v7112, 16
    %v7117 = vshrl.u32 %v7112, 16
    %vm7118 = vc.u32 %v7110, %v7114
    %v7119 = vsel %vm7118, 1, 0
    %v7120 = vadd.s32 %v7110, %v7114
    %v7121 = vadd.s32 %v7113, %v7119
    %vm7122 = vc.u32 %v7120, %v7116
    %v7123 = vsel %vm7122, 1, 0
    %v7124 = vadd.s32 %v7120, %v7116
    %v7125 = vadd.s32 %v7121, %v7123
    %v7126 = vadd.s32 %v7125, %v7115
    %v7127 = vadd.s32 %v7126, %v7117
    %v7128 = vmul.u32 %v7083, %v7074
    %v7129 = vadd.s32 %v7105, %v7124
    %vm7130 = vc.u32 %v7105, %v7124
    %v7131 = vadd.s32 %v7127, 1
    %v7132 = vsel %vm7130, %v7131, %v7127
    %v7133 = vadd.s32 %v7128, %v7132
    %v7134 = vadd.s32 %v7133, 536870912
    %v7135 = vshrl.u32 %v7134, 30
    %v7136 = vshll.u32 %v7135, 30
    %v7137 = vsub.s32 %v7133, %v7136
    %vm7138 = vcmp.lt.s32.totalorder %v7137, 0
    %v7139 = vsub.s32 0, %v7137
    %v7140 = vsel %vm7138, %v7139, %v7137
    %v7141 = vclz %v7140
    %v7142 = vsub.s32 %v7141, 2
    %vm7143 = vcmp.gt.s32.totalorder 0, %v7142
    %v7144 = vsel %vm7143, 0, %v7142
    %v7145 = vsub.s32 32, %v7144
    %v7146 = vshll.u32 %v7137, %v7144
    %v7147 = vshrl.u32 %v7129, %v7145
    %v7148 = vor.u32 %v7146, %v7147
    %v7149 = vsub.s32 4294967266, %v7144
    %v7150 = vadd.s32 %v7149, 127
    %v7151 = vshll.u32 %v7150, 23
    %v7152 = vor.u32 4788187, %v7151
    %v7153 = vand.u32 2147483647, %v7152
    %v7155 = vcvt.s32.f32 %v7148
    %v7156 = vmul.f32 %v7155, %v7153
    %v7157 = vxor.u32 %v7156, 2147483648
    %v7158 = vsel %vm7037, %v7157, %v7156
    %v7159 = vsub.s32 4, %v7135
    %v7160 = vsel %vm7037, %v7159, %v7135
    %v7161 = vsel %vm7036, %v225, %v7158
    %v7162 = vsel %vm7036, 0, %v7160
    %v7163 = vmul.f32 %v7161, %v7161
    %v7164 = vmul.f32 %v7163, -0.001358992
    %v7165 = vadd.f32 %v7164, 0.041655596
    %v7166 = vmul.f32 %v7163, %v7165
    %v7167 = vadd.f32 %v7166, -0.4999988
    %v7168 = vmul.f32 %v7163, %v7167
    %v7169 = vadd.f32 1.0, %v7168
    %v7170 = vmul.f32 %v7161, %v7161
    %v7171 = vmul.f32 %v7170, -0.00019511016
    %v7172 = vadd.f32 %v7171, 0.008332121
    %v7173 = vmul.f32 %v7170, %v7172
    %v7174 = vadd.f32 %v7173, -0.16666654
    %v7175 = vmul.f32 %v7170, %v7174
    %v7176 = vadd.f32 %v7175, 1.0
    %v7177 = vmul.f32 %v7176, %v7161
    %vm7178 = vweird.f32 %v225
    %v7179 = vadd.s32 %v7162, 3
    %v7180 = vand.u32 %v7179, 3
    %vm7181 = vcmp.lt.s32.totalorder %v7180, 2
    %vm7182 = vcmp.eq.s32.totalorder %v7180, 0
    %v7183 = vxor.u32 %v7177, 2147483648
    %v7184 = vsel %vm7182, %v7169, %v7183
    %vm7185 = vcmp.eq.s32.totalorder %v7180, 2
    %v7186 = vxor.u32 %v7169, 2147483648
    %v7187 = vsel %vm7185, %v7186, %v7177
    %v7188 = vsel %vm7181, %v7184, %v7187
    %v7189 = vsel %vm7178, nan, %v7188
    %v7190 = vand.u32 2147483647, %v226
    %vm7191 = vcmp.le.f32.partialorder %v7190, 0.7853982
    %vm7192 = vcmp.lt.s32.totalorder %v226, 0
    %v7193 = vand.u32 %v226, 2139095040
    %v7194 = vshrl.u32 %v7193, 23
    %v7195 = vsub.s32 %v7194, 127
    %v7196 = vand.u32 2147483647, %v226
    %v7197 = vand.u32 %v7196, 8388607
    %v7198 = vor.u32 %v7197, 8388608
    %v7199 = vsub.s32 0, %v7198
    %v7200 = vadd.s32 %v7195, 1
    %vm7201 = vcmp.gt.s32.totalorder %v7200, 0
    %v7202 = vsel %vm7201, %v7200, 0
    %v7203 = vshrl.u32 %v7202, 5
    %v7204 = vand.u32 %v7202, 31
    %v7205 = vsub.s32 32, %v7204
    %v7206 = vshrl.u32 683565275, %v7205
    %v7207 = vshll.u32 683565275, %v7204
    %v7208 = vshrl.u32 2475754826, %v7205
    %v7209 = vor.u32 %v7207, %v7208
    %v7210 = vshll.u32 2475754826, %v7204
    %v7211 = vshrl.u32 2131351028, %v7205
    %v7212 = vor.u32 %v7210, %v7211
    %v7213 = vshll.u32 2131351028, %v7204
    %v7214 = vshrl.u32 2102212464, %v7205
    %v7215 = vor.u32 %v7213, %v7214
    %v7216 = vshll.u32 2102212464, %v7204
    %v7217 = vshrl.u32 920167782, %v7205
    %v7218 = vor.u32 %v7216, %v7217
    %v7219 = vshll.u32 920167782, %v7204
    %v7220 = vshrl.u32 1326507024, %v7205
    %v7221 = vor.u32 %v7219, %v7220
    %vm7222 = vcmp.lt.s32.totalorder %v7203, 1
    %vm7223 = vcmp.lt.s32.totalorder %v7203, 2
    %vm7224 = vcmp.lt.s32.totalorder %v7203, 3
    %vm7225 = vcmp.lt.s32.totalorder %v7203, 4
    %v7226 = vsel %vm7222, %v7206, %v7209
    %v7227 = vsel %vm7225, %v7215, 2102212464
    %v7228 = vsel %vm7224, %v7212, %v7227
    %v7229 = vsel %vm7223, %v7226, %v7228
    %v7230 = vsel %vm7222, %v7209, %v7212
    %v7231 = vsel %vm7225, %v7218, 920167782
    %v7232 = vsel %vm7224, %v7215, %v7231
    %v7233 = vsel %vm7223, %v7230, %v7232
    %v7234 = vsel %vm7222, %v7212, %v7215
    %v7235 = vsel %vm7225, %v7221, 1326507024
    %v7236 = vsel %vm7224, %v7218, %v7235
    %v7237 = vsel %vm7223, %v7234, %v7236
    %v7238 = vshll.u32 %v7198, 8
    %v7239 = vand.u32 %v7238, 65535
    %v7240 = vshrl.u32 %v7238, 16
    %v7241 = vand.u32 %v7237, 65535
    %v7242 = vshrl.u32 %v7237, 16
    %v7243 = vmul.u32 %v7239, %v7241
    %v7244 = vmul.u32 %v7239, %v7242
    %v7245 = vmul.u32 %v7240, %v7241
    %v7246 = vmul.u32 %v7240, %v7242
    %v7247 = vshll.u32 %v7244, 16
    %v7248 = vshrl.u32 %v7244, 16
    %v7249 = vshll.u32 %v7245, 16
    %v7250 = vshrl.u32 %v7245, 16
    %vm7251 = vc.u32 %v7243, %v7247
    %v7252 = vsel %vm7251, 1, 0
    %v7253 = vadd.s32 %v7243, %v7247
    %v7254 = vadd.s32 %v7246, %v7252
    %vm7255 = vc.u32 %v7253, %v7249
    %v7256 = vsel %vm7255, 1, 0
    %v7257 = vadd.s32 %v7253, %v7249
    %v7258 = vadd.s32 %v7254, %v7256
    %v7259 = vadd.s32 %v7258, %v7248
    %v7260 = vadd.s32 %v7259, %v7250
    %v7261 = vand.u32 %v7238, 65535
    %v7262 = vshrl.u32 %v7238, 16
    %v7263 = vand.u32 %v7233, 65535
    %v7264 = vshrl.u32 %v7233, 16
    %v7265 = vmul.u32 %v7261, %v7263
    %v7266 = vmul.u32 %v7261, %v7264
    %v7267 = vmul.u32 %v7262, %v7263
    %v7268 = vmul.u32 %v7262, %v7264
    %v7269 = vshll.u32 %v7266, 16
    %v7270 = vshrl.u32 %v7266, 16
    %v7271 = vshll.u32 %v7267, 16
    %v7272 = vshrl.u32 %v7267, 16
    %vm7273 = vc.u32 %v7265, %v7269
    %v7274 = vsel %vm7273, 1, 0
    %v7275 = vadd.s32 %v7265, %v7269
    %v7276 = vadd.s32 %v7268, %v7274
    %vm7277 = vc.u32 %v7275, %v7271
    %v7278 = vsel %vm7277, 1, 0
    %v7279 = vadd.s32 %v7275, %v7271
    %v7280 = vadd.s32 %v7276, %v7278
    %v7281 = vadd.s32 %v7280, %v7270
    %v7282 = vadd.s32 %v7281, %v7272
    %v7283 = vmul.u32 %v7238, %v7229
    %v7284 = vadd.s32 %v7260, %v7279
    %vm7285 = vc.u32 %v7260, %v7279
    %v7286 = vadd.s32 %v7282, 1
    %v7287 = vsel %vm7285, %v7286, %v7282
    %v7288 = vadd.s32 %v7283, %v7287
    %v7289 = vadd.s32 %v7288, 536870912
    %v7290 = vshrl.u32 %v7289, 30
    %v7291 = vshll.u32 %v7290, 30
    %v7292 = vsub.s32 %v7288, %v7291
    %vm7293 = vcmp.lt.s32.totalorder %v7292, 0
    %v7294 = vsub.s32 0, %v7292
    %v7295 = vsel %vm7293, %v7294, %v7292
    %v7296 = vclz %v7295
    %v7297 = vsub.s32 %v7296, 2
    %vm7298 = vcmp.gt.s32.totalorder 0, %v7297
    %v7299 = vsel %vm7298, 0, %v7297
    %v7300 = vsub.s32 32, %v7299
    %v7301 = vshll.u32 %v7292, %v7299
    %v7302 = vshrl.u32 %v7284, %v7300
    %v7303 = vor.u32 %v7301, %v7302
    %v7304 = vsub.s32 4294967266, %v7299
    %v7305 = vadd.s32 %v7304, 127
    %v7306 = vshll.u32 %v7305, 23
    %v7307 = vor.u32 4788187, %v7306
    %v7308 = vand.u32 2147483647, %v7307
    %v7310 = vcvt.s32.f32 %v7303
    %v7311 = vmul.f32 %v7310, %v7308
    %v7312 = vxor.u32 %v7311, 2147483648
    %v7313 = vsel %vm7192, %v7312, %v7311
    %v7314 = vsub.s32 4, %v7290
    %v7315 = vsel %vm7192, %v7314, %v7290
    %v7316 = vsel %vm7191, %v226, %v7313
    %v7317 = vsel %vm7191, 0, %v7315
    %v7318 = vmul.f32 %v7316, %v7316
    %v7319 = vmul.f32 %v7318, -0.001358992
    %v7320 = vadd.f32 %v7319, 0.041655596
    %v7321 = vmul.f32 %v7318, %v7320
    %v7322 = vadd.f32 %v7321, -0.4999988
    %v7323 = vmul.f32 %v7318, %v7322
    %v7324 = vadd.f32 1.0, %v7323
    %v7325 = vmul.f32 %v7316, %v7316
    %v7326 = vmul.f32 %v7325, -0.00019511016
    %v7327 = vadd.f32 %v7326, 0.008332121
    %v7328 = vmul.f32 %v7325, %v7327
    %v7329 = vadd.f32 %v7328, -0.16666654
    %v7330 = vmul.f32 %v7325, %v7329
    %v7331 = vadd.f32 %v7330, 1.0
    %v7332 = vmul.f32 %v7331, %v7316
    %vm7333 = vweird.f32 %v226
    %v7334 = vadd.s32 %v7317, 3
    %v7335 = vand.u32 %v7334, 3
    %vm7336 = vcmp.lt.s32.totalorder %v7335, 2
    %vm7337 = vcmp.eq.s32.totalorder %v7335, 0
    %v7338 = vxor.u32 %v7332, 2147483648
    %v7339 = vsel %vm7337, %v7324, %v7338
    %vm7340 = vcmp.eq.s32.totalorder %v7335, 2
    %v7341 = vxor.u32 %v7324, 2147483648
    %v7342 = vsel %vm7340, %v7341, %v7332
    %v7343 = vsel %vm7336, %v7339, %v7342
    %v7344 = vsel %vm7333, nan, %v7343
    %v7345 = vand.u32 2147483647, %v227
    %vm7346 = vcmp.le.f32.partialorder %v7345, 0.7853982
    %vm7347 = vcmp.lt.s32.totalorder %v227, 0
    %v7348 = vand.u32 %v227, 2139095040
    %v7349 = vshrl.u32 %v7348, 23
    %v7350 = vsub.s32 %v7349, 127
    %v7351 = vand.u32 2147483647, %v227
    %v7352 = vand.u32 %v7351, 8388607
    %v7353 = vor.u32 %v7352, 8388608
    %v7354 = vsub.s32 0, %v7353
    %v7355 = vadd.s32 %v7350, 1
    %vm7356 = vcmp.gt.s32.totalorder %v7355, 0
    %v7357 = vsel %vm7356, %v7355, 0
    %v7358 = vshrl.u32 %v7357, 5
    %v7359 = vand.u32 %v7357, 31
    %v7360 = vsub.s32 32, %v7359
    %v7361 = vshrl.u32 683565275, %v7360
    %v7362 = vshll.u32 683565275, %v7359
    %v7363 = vshrl.u32 2475754826, %v7360
    %v7364 = vor.u32 %v7362, %v7363
    %v7365 = vshll.u32 2475754826, %v7359
    %v7366 = vshrl.u32 2131351028, %v7360
    %v7367 = vor.u32 %v7365, %v7366
    %v7368 = vshll.u32 2131351028, %v7359
    %v7369 = vshrl.u32 2102212464, %v7360
    %v7370 = vor.u32 %v7368, %v7369
    %v7371 = vshll.u32 2102212464, %v7359
    %v7372 = vshrl.u32 920167782, %v7360
    %v7373 = vor.u32 %v7371, %v7372
    %v7374 = vshll.u32 920167782, %v7359
    %v7375 = vshrl.u32 1326507024, %v7360
    %v7376 = vor.u32 %v7374, %v7375
    %vm7377 = vcmp.lt.s32.totalorder %v7358, 1
    %vm7378 = vcmp.lt.s32.totalorder %v7358, 2
    %vm7379 = vcmp.lt.s32.totalorder %v7358, 3
    %vm7380 = vcmp.lt.s32.totalorder %v7358, 4
    %v7381 = vsel %vm7377, %v7361, %v7364
    %v7382 = vsel %vm7380, %v7370, 2102212464
    %v7383 = vsel %vm7379, %v7367, %v7382
    %v7384 = vsel %vm7378, %v7381, %v7383
    %v7385 = vsel %vm7377, %v7364, %v7367
    %v7386 = vsel %vm7380, %v7373, 920167782
    %v7387 = vsel %vm7379, %v7370, %v7386
    %v7388 = vsel %vm7378, %v7385, %v7387
    %v7389 = vsel %vm7377, %v7367, %v7370
    %v7390 = vsel %vm7380, %v7376, 1326507024
    %v7391 = vsel %vm7379, %v7373, %v7390
    %v7392 = vsel %vm7378, %v7389, %v7391
    %v7393 = vshll.u32 %v7353, 8
    %v7394 = vand.u32 %v7393, 65535
    %v7395 = vshrl.u32 %v7393, 16
    %v7396 = vand.u32 %v7392, 65535
    %v7397 = vshrl.u32 %v7392, 16
    %v7398 = vmul.u32 %v7394, %v7396
    %v7399 = vmul.u32 %v7394, %v7397
    %v7400 = vmul.u32 %v7395, %v7396
    %v7401 = vmul.u32 %v7395, %v7397
    %v7402 = vshll.u32 %v7399, 16
    %v7403 = vshrl.u32 %v7399, 16
    %v7404 = vshll.u32 %v7400, 16
    %v7405 = vshrl.u32 %v7400, 16
    %vm7406 = vc.u32 %v7398, %v7402
    %v7407 = vsel %vm7406, 1, 0
    %v7408 = vadd.s32 %v7398, %v7402
    %v7409 = vadd.s32 %v7401, %v7407
    %vm7410 = vc.u32 %v7408, %v7404
    %v7411 = vsel %vm7410, 1, 0
    %v7412 = vadd.s32 %v7408, %v7404
    %v7413 = vadd.s32 %v7409, %v7411
    %v7414 = vadd.s32 %v7413, %v7403
    %v7415 = vadd.s32 %v7414, %v7405
    %v7416 = vand.u32 %v7393, 65535
    %v7417 = vshrl.u32 %v7393, 16
    %v7418 = vand.u32 %v7388, 65535
    %v7419 = vshrl.u32 %v7388, 16
    %v7420 = vmul.u32 %v7416, %v7418
    %v7421 = vmul.u32 %v7416, %v7419
    %v7422 = vmul.u32 %v7417, %v7418
    %v7423 = vmul.u32 %v7417, %v7419
    %v7424 = vshll.u32 %v7421, 16
    %v7425 = vshrl.u32 %v7421, 16
    %v7426 = vshll.u32 %v7422, 16
    %v7427 = vshrl.u32 %v7422, 16
    %vm7428 = vc.u32 %v7420, %v7424
    %v7429 = vsel %vm7428, 1, 0
    %v7430 = vadd.s32 %v7420, %v7424
    %v7431 = vadd.s32 %v7423, %v7429
    %vm7432 = vc.u32 %v7430, %v7426
    %v7433 = vsel %vm7432, 1, 0
    %v7434 = vadd.s32 %v7430, %v7426
    %v7435 = vadd.s32 %v7431, %v7433
    %v7436 = vadd.s32 %v7435, %v7425
    %v7437 = vadd.s32 %v7436, %v7427
    %v7438 = vmul.u32 %v7393, %v7384
    %v7439 = vadd.s32 %v7415, %v7434
    %vm7440 = vc.u32 %v7415, %v7434
    %v7441 = vadd.s32 %v7437, 1
    %v7442 = vsel %vm7440, %v7441, %v7437
    %v7443 = vadd.s32 %v7438, %v7442
    %v7444 = vadd.s32 %v7443, 536870912
    %v7445 = vshrl.u32 %v7444, 30
    %v7446 = vshll.u32 %v7445, 30
    %v7447 = vsub.s32 %v7443, %v7446
    %vm7448 = vcmp.lt.s32.totalorder %v7447, 0
    %v7449 = vsub.s32 0, %v7447
    %v7450 = vsel %vm7448, %v7449, %v7447
    %v7451 = vclz %v7450
    %v7452 = vsub.s32 %v7451, 2
    %vm7453 = vcmp.gt.s32.totalorder 0, %v7452
    %v7454 = vsel %vm7453, 0, %v7452
    %v7455 = vsub.s32 32, %v7454
    %v7456 = vshll.u32 %v7447, %v7454
    %v7457 = vshrl.u32 %v7439, %v7455
    %v7458 = vor.u32 %v7456, %v7457
    %v7459 = vsub.s32 4294967266, %v7454
    %v7460 = vadd.s32 %v7459, 127
    %v7461 = vshll.u32 %v7460, 23
    %v7462 = vor.u32 4788187, %v7461
    %v7463 = vand.u32 2147483647, %v7462
    %v7465 = vcvt.s32.f32 %v7458
    %v7466 = vmul.f32 %v7465, %v7463
    %v7467 = vxor.u32 %v7466, 2147483648
    %v7468 = vsel %vm7347, %v7467, %v7466
    %v7469 = vsub.s32 4, %v7445
    %v7470 = vsel %vm7347, %v7469, %v7445
    %v7471 = vsel %vm7346, %v227, %v7468
    %v7472 = vsel %vm7346, 0, %v7470
    %v7473 = vmul.f32 %v7471, %v7471
    %v7474 = vmul.f32 %v7473, -0.001358992
    %v7475 = vadd.f32 %v7474, 0.041655596
    %v7476 = vmul.f32 %v7473, %v7475
    %v7477 = vadd.f32 %v7476, -0.4999988
    %v7478 = vmul.f32 %v7473, %v7477
    %v7479 = vadd.f32 1.0, %v7478
    %v7480 = vmul.f32 %v7471, %v7471
    %v7481 = vmul.f32 %v7480, -0.00019511016
    %v7482 = vadd.f32 %v7481, 0.008332121
    %v7483 = vmul.f32 %v7480, %v7482
    %v7484 = vadd.f32 %v7483, -0.16666654
    %v7485 = vmul.f32 %v7480, %v7484
    %v7486 = vadd.f32 %v7485, 1.0
    %v7487 = vmul.f32 %v7486, %v7471
    %vm7488 = vweird.f32 %v227
    %v7489 = vadd.s32 %v7472, 3
    %v7490 = vand.u32 %v7489, 3
    %vm7491 = vcmp.lt.s32.totalorder %v7490, 2
    %vm7492 = vcmp.eq.s32.totalorder %v7490, 0
    %v7493 = vxor.u32 %v7487, 2147483648
    %v7494 = vsel %vm7492, %v7479, %v7493
    %vm7495 = vcmp.eq.s32.totalorder %v7490, 2
    %v7496 = vxor.u32 %v7479, 2147483648
    %v7497 = vsel %vm7495, %v7496, %v7487
    %v7498 = vsel %vm7491, %v7494, %v7497
    %v7499 = vsel %vm7488, nan, %v7498
    %v7500 = vand.u32 2147483647, %v228
    %vm7501 = vcmp.le.f32.partialorder %v7500, 0.7853982
    %vm7502 = vcmp.lt.s32.totalorder %v228, 0
    %v7503 = vand.u32 %v228, 2139095040
    %v7504 = vshrl.u32 %v7503, 23
    %v7505 = vsub.s32 %v7504, 127
    %v7506 = vand.u32 2147483647, %v228
    %v7507 = vand.u32 %v7506, 8388607
    %v7508 = vor.u32 %v7507, 8388608
    %v7509 = vsub.s32 0, %v7508
    %v7510 = vadd.s32 %v7505, 1
    %vm7511 = vcmp.gt.s32.totalorder %v7510, 0
    %v7512 = vsel %vm7511, %v7510, 0
    %v7513 = vshrl.u32 %v7512, 5
    %v7514 = vand.u32 %v7512, 31
    %v7515 = vsub.s32 32, %v7514
    %v7516 = vshrl.u32 683565275, %v7515
    %v7517 = vshll.u32 683565275, %v7514
    %v7518 = vshrl.u32 2475754826, %v7515
    %v7519 = vor.u32 %v7517, %v7518
    %v7520 = vshll.u32 2475754826, %v7514
    %v7521 = vshrl.u32 2131351028, %v7515
    %v7522 = vor.u32 %v7520, %v7521
    %v7523 = vshll.u32 2131351028, %v7514
    %v7524 = vshrl.u32 2102212464, %v7515
    %v7525 = vor.u32 %v7523, %v7524
    %v7526 = vshll.u32 2102212464, %v7514
    %v7527 = vshrl.u32 920167782, %v7515
    %v7528 = vor.u32 %v7526, %v7527
    %v7529 = vshll.u32 920167782, %v7514
    %v7530 = vshrl.u32 1326507024, %v7515
    %v7531 = vor.u32 %v7529, %v7530
    %vm7532 = vcmp.lt.s32.totalorder %v7513, 1
    %vm7533 = vcmp.lt.s32.totalorder %v7513, 2
    %vm7534 = vcmp.lt.s32.totalorder %v7513, 3
    %vm7535 = vcmp.lt.s32.totalorder %v7513, 4
    %v7536 = vsel %vm7532, %v7516, %v7519
    %v7537 = vsel %vm7535, %v7525, 2102212464
    %v7538 = vsel %vm7534, %v7522, %v7537
    %v7539 = vsel %vm7533, %v7536, %v7538
    %v7540 = vsel %vm7532, %v7519, %v7522
    %v7541 = vsel %vm7535, %v7528, 920167782
    %v7542 = vsel %vm7534, %v7525, %v7541
    %v7543 = vsel %vm7533, %v7540, %v7542
    %v7544 = vsel %vm7532, %v7522, %v7525
    %v7545 = vsel %vm7535, %v7531, 1326507024
    %v7546 = vsel %vm7534, %v7528, %v7545
    %v7547 = vsel %vm7533, %v7544, %v7546
    %v7548 = vshll.u32 %v7508, 8
    %v7549 = vand.u32 %v7548, 65535
    %v7550 = vshrl.u32 %v7548, 16
    %v7551 = vand.u32 %v7547, 65535
    %v7552 = vshrl.u32 %v7547, 16
    %v7553 = vmul.u32 %v7549, %v7551
    %v7554 = vmul.u32 %v7549, %v7552
    %v7555 = vmul.u32 %v7550, %v7551
    %v7556 = vmul.u32 %v7550, %v7552
    %v7557 = vshll.u32 %v7554, 16
    %v7558 = vshrl.u32 %v7554, 16
    %v7559 = vshll.u32 %v7555, 16
    %v7560 = vshrl.u32 %v7555, 16
    %vm7561 = vc.u32 %v7553, %v7557
    %v7562 = vsel %vm7561, 1, 0
    %v7563 = vadd.s32 %v7553, %v7557
    %v7564 = vadd.s32 %v7556, %v7562
    %vm7565 = vc.u32 %v7563, %v7559
    %v7566 = vsel %vm7565, 1, 0
    %v7567 = vadd.s32 %v7563, %v7559
    %v7568 = vadd.s32 %v7564, %v7566
    %v7569 = vadd.s32 %v7568, %v7558
    %v7570 = vadd.s32 %v7569, %v7560
    %v7571 = vand.u32 %v7548, 65535
    %v7572 = vshrl.u32 %v7548, 16
    %v7573 = vand.u32 %v7543, 65535
    %v7574 = vshrl.u32 %v7543, 16
    %v7575 = vmul.u32 %v7571, %v7573
    %v7576 = vmul.u32 %v7571, %v7574
    %v7577 = vmul.u32 %v7572, %v7573
    %v7578 = vmul.u32 %v7572, %v7574
    %v7579 = vshll.u32 %v7576, 16
    %v7580 = vshrl.u32 %v7576, 16
    %v7581 = vshll.u32 %v7577, 16
    %v7582 = vshrl.u32 %v7577, 16
    %vm7583 = vc.u32 %v7575, %v7579
    %v7584 = vsel %vm7583, 1, 0
    %v7585 = vadd.s32 %v7575, %v7579
    %v7586 = vadd.s32 %v7578, %v7584
    %vm7587 = vc.u32 %v7585, %v7581
    %v7588 = vsel %vm7587, 1, 0
    %v7589 = vadd.s32 %v7585, %v7581
    %v7590 = vadd.s32 %v7586, %v7588
    %v7591 = vadd.s32 %v7590, %v7580
    %v7592 = vadd.s32 %v7591, %v7582
    %v7593 = vmul.u32 %v7548, %v7539
    %v7594 = vadd.s32 %v7570, %v7589
    %vm7595 = vc.u32 %v7570, %v7589
    %v7596 = vadd.s32 %v7592, 1
    %v7597 = vsel %vm7595, %v7596, %v7592
    %v7598 = vadd.s32 %v7593, %v7597
    %v7599 = vadd.s32 %v7598, 536870912
    %v7600 = vshrl.u32 %v7599, 30
    %v7601 = vshll.u32 %v7600, 30
    %v7602 = vsub.s32 %v7598, %v7601
    %vm7603 = vcmp.lt.s32.totalorder %v7602, 0
    %v7604 = vsub.s32 0, %v7602
    %v7605 = vsel %vm7603, %v7604, %v7602
    %v7606 = vclz %v7605
    %v7607 = vsub.s32 %v7606, 2
    %vm7608 = vcmp.gt.s32.totalorder 0, %v7607
    %v7609 = vsel %vm7608, 0, %v7607
    %v7610 = vsub.s32 32, %v7609
    %v7611 = vshll.u32 %v7602, %v7609
    %v7612 = vshrl.u32 %v7594, %v7610
    %v7613 = vor.u32 %v7611, %v7612
    %v7614 = vsub.s32 4294967266, %v7609
    %v7615 = vadd.s32 %v7614, 127
    %v7616 = vshll.u32 %v7615, 23
    %v7617 = vor.u32 4788187, %v7616
    %v7618 = vand.u32 2147483647, %v7617
    %v7620 = vcvt.s32.f32 %v7613
    %v7621 = vmul.f32 %v7620, %v7618
    %v7622 = vxor.u32 %v7621, 2147483648
    %v7623 = vsel %vm7502, %v7622, %v7621
    %v7624 = vsub.s32 4, %v7600
    %v7625 = vsel %vm7502, %v7624, %v7600
    %v7626 = vsel %vm7501, %v228, %v7623
    %v7627 = vsel %vm7501, 0, %v7625
    %v7628 = vmul.f32 %v7626, %v7626
    %v7629 = vmul.f32 %v7628, -0.001358992
    %v7630 = vadd.f32 %v7629, 0.041655596
    %v7631 = vmul.f32 %v7628, %v7630
    %v7632 = vadd.f32 %v7631, -0.4999988
    %v7633 = vmul.f32 %v7628, %v7632
    %v7634 = vadd.f32 1.0, %v7633
    %v7635 = vmul.f32 %v7626, %v7626
    %v7636 = vmul.f32 %v7635, -0.00019511016
    %v7637 = vadd.f32 %v7636, 0.008332121
    %v7638 = vmul.f32 %v7635, %v7637
    %v7639 = vadd.f32 %v7638, -0.16666654
    %v7640 = vmul.f32 %v7635, %v7639
    %v7641 = vadd.f32 %v7640, 1.0
    %v7642 = vmul.f32 %v7641, %v7626
    %vm7643 = vweird.f32 %v228
    %v7644 = vadd.s32 %v7627, 3
    %v7645 = vand.u32 %v7644, 3
    %vm7646 = vcmp.lt.s32.totalorder %v7645, 2
    %vm7647 = vcmp.eq.s32.totalorder %v7645, 0
    %v7648 = vxor.u32 %v7642, 2147483648
    %v7649 = vsel %vm7647, %v7634, %v7648
    %vm7650 = vcmp.eq.s32.totalorder %v7645, 2
    %v7651 = vxor.u32 %v7634, 2147483648
    %v7652 = vsel %vm7650, %v7651, %v7642
    %v7653 = vsel %vm7646, %v7649, %v7652
    %v7654 = vsel %vm7643, nan, %v7653
    %v7655 = vand.u32 2147483647, %v229
    %vm7656 = vcmp.le.f32.partialorder %v7655, 0.7853982
    %vm7657 = vcmp.lt.s32.totalorder %v229, 0
    %v7658 = vand.u32 %v229, 2139095040
    %v7659 = vshrl.u32 %v7658, 23
    %v7660 = vsub.s32 %v7659, 127
    %v7661 = vand.u32 2147483647, %v229
    %v7662 = vand.u32 %v7661, 8388607
    %v7663 = vor.u32 %v7662, 8388608
    %v7664 = vsub.s32 0, %v7663
    %v7665 = vadd.s32 %v7660, 1
    %vm7666 = vcmp.gt.s32.totalorder %v7665, 0
    %v7667 = vsel %vm7666, %v7665, 0
    %v7668 = vshrl.u32 %v7667, 5
    %v7669 = vand.u32 %v7667, 31
    %v7670 = vsub.s32 32, %v7669
    %v7671 = vshrl.u32 683565275, %v7670
    %v7672 = vshll.u32 683565275, %v7669
    %v7673 = vshrl.u32 2475754826, %v7670
    %v7674 = vor.u32 %v7672, %v7673
    %v7675 = vshll.u32 2475754826, %v7669
    %v7676 = vshrl.u32 2131351028, %v7670
    %v7677 = vor.u32 %v7675, %v7676
    %v7678 = vshll.u32 2131351028, %v7669
    %v7679 = vshrl.u32 2102212464, %v7670
    %v7680 = vor.u32 %v7678, %v7679
    %v7681 = vshll.u32 2102212464, %v7669
    %v7682 = vshrl.u32 920167782, %v7670
    %v7683 = vor.u32 %v7681, %v7682
    %v7684 = vshll.u32 920167782, %v7669
    %v7685 = vshrl.u32 1326507024, %v7670
    %v7686 = vor.u32 %v7684, %v7685
    %vm7687 = vcmp.lt.s32.totalorder %v7668, 1
    %vm7688 = vcmp.lt.s32.totalorder %v7668, 2
    %vm7689 = vcmp.lt.s32.totalorder %v7668, 3
    %vm7690 = vcmp.lt.s32.totalorder %v7668, 4
    %v7691 = vsel %vm7687, %v7671, %v7674
    %v7692 = vsel %vm7690, %v7680, 2102212464
    %v7693 = vsel %vm7689, %v7677, %v7692
    %v7694 = vsel %vm7688, %v7691, %v7693
    %v7695 = vsel %vm7687, %v7674, %v7677
    %v7696 = vsel %vm7690, %v7683, 920167782
    %v7697 = vsel %vm7689, %v7680, %v7696
    %v7698 = vsel %vm7688, %v7695, %v7697
    %v7699 = vsel %vm7687, %v7677, %v7680
    %v7700 = vsel %vm7690, %v7686, 1326507024
    %v7701 = vsel %vm7689, %v7683, %v7700
    %v7702 = vsel %vm7688, %v7699, %v7701
    %v7703 = vshll.u32 %v7663, 8
    %v7704 = vand.u32 %v7703, 65535
    %v7705 = vshrl.u32 %v7703, 16
    %v7706 = vand.u32 %v7702, 65535
    %v7707 = vshrl.u32 %v7702, 16
    %v7708 = vmul.u32 %v7704, %v7706
    %v7709 = vmul.u32 %v7704, %v7707
    %v7710 = vmul.u32 %v7705, %v7706
    %v7711 = vmul.u32 %v7705, %v7707
    %v7712 = vshll.u32 %v7709, 16
    %v7713 = vshrl.u32 %v7709, 16
    %v7714 = vshll.u32 %v7710, 16
    %v7715 = vshrl.u32 %v7710, 16
    %vm7716 = vc.u32 %v7708, %v7712
    %v7717 = vsel %vm7716, 1, 0
    %v7718 = vadd.s32 %v7708, %v7712
    %v7719 = vadd.s32 %v7711, %v7717
    %vm7720 = vc.u32 %v7718, %v7714
    %v7721 = vsel %vm7720, 1, 0
    %v7722 = vadd.s32 %v7718, %v7714
    %v7723 = vadd.s32 %v7719, %v7721
    %v7724 = vadd.s32 %v7723, %v7713
    %v7725 = vadd.s32 %v7724, %v7715
    %v7726 = vand.u32 %v7703, 65535
    %v7727 = vshrl.u32 %v7703, 16
    %v7728 = vand.u32 %v7698, 65535
    %v7729 = vshrl.u32 %v7698, 16
    %v7730 = vmul.u32 %v7726, %v7728
    %v7731 = vmul.u32 %v7726, %v7729
    %v7732 = vmul.u32 %v7727, %v7728
    %v7733 = vmul.u32 %v7727, %v7729
    %v7734 = vshll.u32 %v7731, 16
    %v7735 = vshrl.u32 %v7731, 16
    %v7736 = vshll.u32 %v7732, 16
    %v7737 = vshrl.u32 %v7732, 16
    %vm7738 = vc.u32 %v7730, %v7734
    %v7739 = vsel %vm7738, 1, 0
    %v7740 = vadd.s32 %v7730, %v7734
    %v7741 = vadd.s32 %v7733, %v7739
    %vm7742 = vc.u32 %v7740, %v7736
    %v7743 = vsel %vm7742, 1, 0
    %v7744 = vadd.s32 %v7740, %v7736
    %v7745 = vadd.s32 %v7741, %v7743
    %v7746 = vadd.s32 %v7745, %v7735
    %v7747 = vadd.s32 %v7746, %v7737
    %v7748 = vmul.u32 %v7703, %v7694
    %v7749 = vadd.s32 %v7725, %v7744
    %vm7750 = vc.u32 %v7725, %v7744
    %v7751 = vadd.s32 %v7747, 1
    %v7752 = vsel %vm7750, %v7751, %v7747
    %v7753 = vadd.s32 %v7748, %v7752
    %v7754 = vadd.s32 %v7753, 536870912
    %v7755 = vshrl.u32 %v7754, 30
    %v7756 = vshll.u32 %v7755, 30
    %v7757 = vsub.s32 %v7753, %v7756
    %vm7758 = vcmp.lt.s32.totalorder %v7757, 0
    %v7759 = vsub.s32 0, %v7757
    %v7760 = vsel %vm7758, %v7759, %v7757
    %v7761 = vclz %v7760
    %v7762 = vsub.s32 %v7761, 2
    %vm7763 = vcmp.gt.s32.totalorder 0, %v7762
    %v7764 = vsel %vm7763, 0, %v7762
    %v7765 = vsub.s32 32, %v7764
    %v7766 = vshll.u32 %v7757, %v7764
    %v7767 = vshrl.u32 %v7749, %v7765
    %v7768 = vor.u32 %v7766, %v7767
    %v7769 = vsub.s32 4294967266, %v7764
    %v7770 = vadd.s32 %v7769, 127
    %v7771 = vshll.u32 %v7770, 23
    %v7772 = vor.u32 4788187, %v7771
    %v7773 = vand.u32 2147483647, %v7772
    %v7775 = vcvt.s32.f32 %v7768
    %v7776 = vmul.f32 %v7775, %v7773
    %v7777 = vxor.u32 %v7776, 2147483648
    %v7778 = vsel %vm7657, %v7777, %v7776
    %v7779 = vsub.s32 4, %v7755
    %v7780 = vsel %vm7657, %v7779, %v7755
    %v7781 = vsel %vm7656, %v229, %v7778
    %v7782 = vsel %vm7656, 0, %v7780
    %v7783 = vmul.f32 %v7781, %v7781
    %v7784 = vmul.f32 %v7783, -0.001358992
    %v7785 = vadd.f32 %v7784, 0.041655596
    %v7786 = vmul.f32 %v7783, %v7785
    %v7787 = vadd.f32 %v7786, -0.4999988
    %v7788 = vmul.f32 %v7783, %v7787
    %v7789 = vadd.f32 1.0, %v7788
    %v7790 = vmul.f32 %v7781, %v7781
    %v7791 = vmul.f32 %v7790, -0.00019511016
    %v7792 = vadd.f32 %v7791, 0.008332121
    %v7793 = vmul.f32 %v7790, %v7792
    %v7794 = vadd.f32 %v7793, -0.16666654
    %v7795 = vmul.f32 %v7790, %v7794
    %v7796 = vadd.f32 %v7795, 1.0
    %v7797 = vmul.f32 %v7796, %v7781
    %vm7798 = vweird.f32 %v229
    %v7799 = vadd.s32 %v7782, 3
    %v7800 = vand.u32 %v7799, 3
    %vm7801 = vcmp.lt.s32.totalorder %v7800, 2
    %vm7802 = vcmp.eq.s32.totalorder %v7800, 0
    %v7803 = vxor.u32 %v7797, 2147483648
    %v7804 = vsel %vm7802, %v7789, %v7803
    %vm7805 = vcmp.eq.s32.totalorder %v7800, 2
    %v7806 = vxor.u32 %v7789, 2147483648
    %v7807 = vsel %vm7805, %v7806, %v7797
    %v7808 = vsel %vm7801, %v7804, %v7807
    %v7809 = vsel %vm7798, nan, %v7808
    %v7810 = vand.u32 2147483647, %v230
    %vm7811 = vcmp.le.f32.partialorder %v7810, 0.7853982
    %vm7812 = vcmp.lt.s32.totalorder %v230, 0
    %v7813 = vand.u32 %v230, 2139095040
    %v7814 = vshrl.u32 %v7813, 23
    %v7815 = vsub.s32 %v7814, 127
    %v7816 = vand.u32 2147483647, %v230
    %v7817 = vand.u32 %v7816, 8388607
    %v7818 = vor.u32 %v7817, 8388608
    %v7819 = vsub.s32 0, %v7818
    %v7820 = vadd.s32 %v7815, 1
    %vm7821 = vcmp.gt.s32.totalorder %v7820, 0
    %v7822 = vsel %vm7821, %v7820, 0
    %v7823 = vshrl.u32 %v7822, 5
    %v7824 = vand.u32 %v7822, 31
    %v7825 = vsub.s32 32, %v7824
    %v7826 = vshrl.u32 683565275, %v7825
    %v7827 = vshll.u32 683565275, %v7824
    %v7828 = vshrl.u32 2475754826, %v7825
    %v7829 = vor.u32 %v7827, %v7828
    %v7830 = vshll.u32 2475754826, %v7824
    %v7831 = vshrl.u32 2131351028, %v7825
    %v7832 = vor.u32 %v7830, %v7831
    %v7833 = vshll.u32 2131351028, %v7824
    %v7834 = vshrl.u32 2102212464, %v7825
    %v7835 = vor.u32 %v7833, %v7834
    %v7836 = vshll.u32 2102212464, %v7824
    %v7837 = vshrl.u32 920167782, %v7825
    %v7838 = vor.u32 %v7836, %v7837
    %v7839 = vshll.u32 920167782, %v7824
    %v7840 = vshrl.u32 1326507024, %v7825
    %v7841 = vor.u32 %v7839, %v7840
    %vm7842 = vcmp.lt.s32.totalorder %v7823, 1
    %vm7843 = vcmp.lt.s32.totalorder %v7823, 2
    %vm7844 = vcmp.lt.s32.totalorder %v7823, 3
    %vm7845 = vcmp.lt.s32.totalorder %v7823, 4
    %v7846 = vsel %vm7842, %v7826, %v7829
    %v7847 = vsel %vm7845, %v7835, 2102212464
    %v7848 = vsel %vm7844, %v7832, %v7847
    %v7849 = vsel %vm7843, %v7846, %v7848
    %v7850 = vsel %vm7842, %v7829, %v7832
    %v7851 = vsel %vm7845, %v7838, 920167782
    %v7852 = vsel %vm7844, %v7835, %v7851
    %v7853 = vsel %vm7843, %v7850, %v7852
    %v7854 = vsel %vm7842, %v7832, %v7835
    %v7855 = vsel %vm7845, %v7841, 1326507024
    %v7856 = vsel %vm7844, %v7838, %v7855
    %v7857 = vsel %vm7843, %v7854, %v7856
    %v7858 = vshll.u32 %v7818, 8
    %v7859 = vand.u32 %v7858, 65535
    %v7860 = vshrl.u32 %v7858, 16
    %v7861 = vand.u32 %v7857, 65535
    %v7862 = vshrl.u32 %v7857, 16
    %v7863 = vmul.u32 %v7859, %v7861
    %v7864 = vmul.u32 %v7859, %v7862
    %v7865 = vmul.u32 %v7860, %v7861
    %v7866 = vmul.u32 %v7860, %v7862
    %v7867 = vshll.u32 %v7864, 16
    %v7868 = vshrl.u32 %v7864, 16
    %v7869 = vshll.u32 %v7865, 16
    %v7870 = vshrl.u32 %v7865, 16
    %vm7871 = vc.u32 %v7863, %v7867
    %v7872 = vsel %vm7871, 1, 0
    %v7873 = vadd.s32 %v7863, %v7867
    %v7874 = vadd.s32 %v7866, %v7872
    %vm7875 = vc.u32 %v7873, %v7869
    %v7876 = vsel %vm7875, 1, 0
    %v7877 = vadd.s32 %v7873, %v7869
    %v7878 = vadd.s32 %v7874, %v7876
    %v7879 = vadd.s32 %v7878, %v7868
    %v7880 = vadd.s32 %v7879, %v7870
    %v7881 = vand.u32 %v7858, 65535
    %v7882 = vshrl.u32 %v7858, 16
    %v7883 = vand.u32 %v7853, 65535
    %v7884 = vshrl.u32 %v7853, 16
    %v7885 = vmul.u32 %v7881, %v7883
    %v7886 = vmul.u32 %v7881, %v7884
    %v7887 = vmul.u32 %v7882, %v7883
    %v7888 = vmul.u32 %v7882, %v7884
    %v7889 = vshll.u32 %v7886, 16
    %v7890 = vshrl.u32 %v7886, 16
    %v7891 = vshll.u32 %v7887, 16
    %v7892 = vshrl.u32 %v7887, 16
    %vm7893 = vc.u32 %v7885, %v7889
    %v7894 = vsel %vm7893, 1, 0
    %v7895 = vadd.s32 %v7885, %v7889
    %v7896 = vadd.s32 %v7888, %v7894
    %vm7897 = vc.u32 %v7895, %v7891
    %v7898 = vsel %vm7897, 1, 0
    %v7899 = vadd.s32 %v7895, %v7891
    %v7900 = vadd.s32 %v7896, %v7898
    %v7901 = vadd.s32 %v7900, %v7890
    %v7902 = vadd.s32 %v7901, %v7892
    %v7903 = vmul.u32 %v7858, %v7849
    %v7904 = vadd.s32 %v7880, %v7899
    %vm7905 = vc.u32 %v7880, %v7899
    %v7906 = vadd.s32 %v7902, 1
    %v7907 = vsel %vm7905, %v7906, %v7902
    %v7908 = vadd.s32 %v7903, %v7907
    %v7909 = vadd.s32 %v7908, 536870912
    %v7910 = vshrl.u32 %v7909, 30
    %v7911 = vshll.u32 %v7910, 30
    %v7912 = vsub.s32 %v7908, %v7911
    %vm7913 = vcmp.lt.s32.totalorder %v7912, 0
    %v7914 = vsub.s32 0, %v7912
    %v7915 = vsel %vm7913, %v7914, %v7912
    %v7916 = vclz %v7915
    %v7917 = vsub.s32 %v7916, 2
    %vm7918 = vcmp.gt.s32.totalorder 0, %v7917
    %v7919 = vsel %vm7918, 0, %v7917
    %v7920 = vsub.s32 32, %v7919
    %v7921 = vshll.u32 %v7912, %v7919
    %v7922 = vshrl.u32 %v7904, %v7920
    %v7923 = vor.u32 %v7921, %v7922
    %v7924 = vsub.s32 4294967266, %v7919
    %v7925 = vadd.s32 %v7924, 127
    %v7926 = vshll.u32 %v7925, 23
    %v7927 = vor.u32 4788187, %v7926
    %v7928 = vand.u32 2147483647, %v7927
    %v7930 = vcvt.s32.f32 %v7923
    %v7931 = vmul.f32 %v7930, %v7928
    %v7932 = vxor.u32 %v7931, 2147483648
    %v7933 = vsel %vm7812, %v7932, %v7931
    %v7934 = vsub.s32 4, %v7910
    %v7935 = vsel %vm7812, %v7934, %v7910
    %v7936 = vsel %vm7811, %v230, %v7933
    %v7937 = vsel %vm7811, 0, %v7935
    %v7938 = vmul.f32 %v7936, %v7936
    %v7939 = vmul.f32 %v7938, -0.001358992
    %v7940 = vadd.f32 %v7939, 0.041655596
    %v7941 = vmul.f32 %v7938, %v7940
    %v7942 = vadd.f32 %v7941, -0.4999988
    %v7943 = vmul.f32 %v7938, %v7942
    %v7944 = vadd.f32 1.0, %v7943
    %v7945 = vmul.f32 %v7936, %v7936
    %v7946 = vmul.f32 %v7945, -0.00019511016
    %v7947 = vadd.f32 %v7946, 0.008332121
    %v7948 = vmul.f32 %v7945, %v7947
    %v7949 = vadd.f32 %v7948, -0.16666654
    %v7950 = vmul.f32 %v7945, %v7949
    %v7951 = vadd.f32 %v7950, 1.0
    %v7952 = vmul.f32 %v7951, %v7936
    %vm7953 = vweird.f32 %v230
    %v7954 = vadd.s32 %v7937, 3
    %v7955 = vand.u32 %v7954, 3
    %vm7956 = vcmp.lt.s32.totalorder %v7955, 2
    %vm7957 = vcmp.eq.s32.totalorder %v7955, 0
    %v7958 = vxor.u32 %v7952, 2147483648
    %v7959 = vsel %vm7957, %v7944, %v7958
    %vm7960 = vcmp.eq.s32.totalorder %v7955, 2
    %v7961 = vxor.u32 %v7944, 2147483648
    %v7962 = vsel %vm7960, %v7961, %v7952
    %v7963 = vsel %vm7956, %v7959, %v7962
    %v7964 = vsel %vm7953, nan, %v7963
    %v7965 = vand.u32 2147483647, %v231
    %vm7966 = vcmp.le.f32.partialorder %v7965, 0.7853982
    %vm7967 = vcmp.lt.s32.totalorder %v231, 0
    %v7968 = vand.u32 %v231, 2139095040
    %v7969 = vshrl.u32 %v7968, 23
    %v7970 = vsub.s32 %v7969, 127
    %v7971 = vand.u32 2147483647, %v231
    %v7972 = vand.u32 %v7971, 8388607
    %v7973 = vor.u32 %v7972, 8388608
    %v7974 = vsub.s32 0, %v7973
    %v7975 = vadd.s32 %v7970, 1
    %vm7976 = vcmp.gt.s32.totalorder %v7975, 0
    %v7977 = vsel %vm7976, %v7975, 0
    %v7978 = vshrl.u32 %v7977, 5
    %v7979 = vand.u32 %v7977, 31
    %v7980 = vsub.s32 32, %v7979
    %v7981 = vshrl.u32 683565275, %v7980
    %v7982 = vshll.u32 683565275, %v7979
    %v7983 = vshrl.u32 2475754826, %v7980
    %v7984 = vor.u32 %v7982, %v7983
    %v7985 = vshll.u32 2475754826, %v7979
    %v7986 = vshrl.u32 2131351028, %v7980
    %v7987 = vor.u32 %v7985, %v7986
    %v7988 = vshll.u32 2131351028, %v7979
    %v7989 = vshrl.u32 2102212464, %v7980
    %v7990 = vor.u32 %v7988, %v7989
    %v7991 = vshll.u32 2102212464, %v7979
    %v7992 = vshrl.u32 920167782, %v7980
    %v7993 = vor.u32 %v7991, %v7992
    %v7994 = vshll.u32 920167782, %v7979
    %v7995 = vshrl.u32 1326507024, %v7980
    %v7996 = vor.u32 %v7994, %v7995
    %vm7997 = vcmp.lt.s32.totalorder %v7978, 1
    %vm7998 = vcmp.lt.s32.totalorder %v7978, 2
    %vm7999 = vcmp.lt.s32.totalorder %v7978, 3
    %vm8000 = vcmp.lt.s32.totalorder %v7978, 4
    %v8001 = vsel %vm7997, %v7981, %v7984
    %v8002 = vsel %vm8000, %v7990, 2102212464
    %v8003 = vsel %vm7999, %v7987, %v8002
    %v8004 = vsel %vm7998, %v8001, %v8003
    %v8005 = vsel %vm7997, %v7984, %v7987
    %v8006 = vsel %vm8000, %v7993, 920167782
    %v8007 = vsel %vm7999, %v7990, %v8006
    %v8008 = vsel %vm7998, %v8005, %v8007
    %v8009 = vsel %vm7997, %v7987, %v7990
    %v8010 = vsel %vm8000, %v7996, 1326507024
    %v8011 = vsel %vm7999, %v7993, %v8010
    %v8012 = vsel %vm7998, %v8009, %v8011
    %v8013 = vshll.u32 %v7973, 8
    %v8014 = vand.u32 %v8013, 65535
    %v8015 = vshrl.u32 %v8013, 16
    %v8016 = vand.u32 %v8012, 65535
    %v8017 = vshrl.u32 %v8012, 16
    %v8018 = vmul.u32 %v8014, %v8016
    %v8019 = vmul.u32 %v8014, %v8017
    %v8020 = vmul.u32 %v8015, %v8016
    %v8021 = vmul.u32 %v8015, %v8017
    %v8022 = vshll.u32 %v8019, 16
    %v8023 = vshrl.u32 %v8019, 16
    %v8024 = vshll.u32 %v8020, 16
    %v8025 = vshrl.u32 %v8020, 16
    %vm8026 = vc.u32 %v8018, %v8022
    %v8027 = vsel %vm8026, 1, 0
    %v8028 = vadd.s32 %v8018, %v8022
    %v8029 = vadd.s32 %v8021, %v8027
    %vm8030 = vc.u32 %v8028, %v8024
    %v8031 = vsel %vm8030, 1, 0
    %v8032 = vadd.s32 %v8028, %v8024
    %v8033 = vadd.s32 %v8029, %v8031
    %v8034 = vadd.s32 %v8033, %v8023
    %v8035 = vadd.s32 %v8034, %v8025
    %v8036 = vand.u32 %v8013, 65535
    %v8037 = vshrl.u32 %v8013, 16
    %v8038 = vand.u32 %v8008, 65535
    %v8039 = vshrl.u32 %v8008, 16
    %v8040 = vmul.u32 %v8036, %v8038
    %v8041 = vmul.u32 %v8036, %v8039
    %v8042 = vmul.u32 %v8037, %v8038
    %v8043 = vmul.u32 %v8037, %v8039
    %v8044 = vshll.u32 %v8041, 16
    %v8045 = vshrl.u32 %v8041, 16
    %v8046 = vshll.u32 %v8042, 16
    %v8047 = vshrl.u32 %v8042, 16
    %vm8048 = vc.u32 %v8040, %v8044
    %v8049 = vsel %vm8048, 1, 0
    %v8050 = vadd.s32 %v8040, %v8044
    %v8051 = vadd.s32 %v8043, %v8049
    %vm8052 = vc.u32 %v8050, %v8046
    %v8053 = vsel %vm8052, 1, 0
    %v8054 = vadd.s32 %v8050, %v8046
    %v8055 = vadd.s32 %v8051, %v8053
    %v8056 = vadd.s32 %v8055, %v8045
    %v8057 = vadd.s32 %v8056, %v8047
    %v8058 = vmul.u32 %v8013, %v8004
    %v8059 = vadd.s32 %v8035, %v8054
    %vm8060 = vc.u32 %v8035, %v8054
    %v8061 = vadd.s32 %v8057, 1
    %v8062 = vsel %vm8060, %v8061, %v8057
    %v8063 = vadd.s32 %v8058, %v8062
    %v8064 = vadd.s32 %v8063, 536870912
    %v8065 = vshrl.u32 %v8064, 30
    %v8066 = vshll.u32 %v8065, 30
    %v8067 = vsub.s32 %v8063, %v8066
    %vm8068 = vcmp.lt.s32.totalorder %v8067, 0
    %v8069 = vsub.s32 0, %v8067
    %v8070 = vsel %vm8068, %v8069, %v8067
    %v8071 = vclz %v8070
    %v8072 = vsub.s32 %v8071, 2
    %vm8073 = vcmp.gt.s32.totalorder 0, %v8072
    %v8074 = vsel %vm8073, 0, %v8072
    %v8075 = vsub.s32 32, %v8074
    %v8076 = vshll.u32 %v8067, %v8074
    %v8077 = vshrl.u32 %v8059, %v8075
    %v8078 = vor.u32 %v8076, %v8077
    %v8079 = vsub.s32 4294967266, %v8074
    %v8080 = vadd.s32 %v8079, 127
    %v8081 = vshll.u32 %v8080, 23
    %v8082 = vor.u32 4788187, %v8081
    %v8083 = vand.u32 2147483647, %v8082
    %v8085 = vcvt.s32.f32 %v8078
    %v8086 = vmul.f32 %v8085, %v8083
    %v8087 = vxor.u32 %v8086, 2147483648
    %v8088 = vsel %vm7967, %v8087, %v8086
    %v8089 = vsub.s32 4, %v8065
    %v8090 = vsel %vm7967, %v8089, %v8065
    %v8091 = vsel %vm7966, %v231, %v8088
    %v8092 = vsel %vm7966, 0, %v8090
    %v8093 = vmul.f32 %v8091, %v8091
    %v8094 = vmul.f32 %v8093, -0.001358992
    %v8095 = vadd.f32 %v8094, 0.041655596
    %v8096 = vmul.f32 %v8093, %v8095
    %v8097 = vadd.f32 %v8096, -0.4999988
    %v8098 = vmul.f32 %v8093, %v8097
    %v8099 = vadd.f32 1.0, %v8098
    %v8100 = vmul.f32 %v8091, %v8091
    %v8101 = vmul.f32 %v8100, -0.00019511016
    %v8102 = vadd.f32 %v8101, 0.008332121
    %v8103 = vmul.f32 %v8100, %v8102
    %v8104 = vadd.f32 %v8103, -0.16666654
    %v8105 = vmul.f32 %v8100, %v8104
    %v8106 = vadd.f32 %v8105, 1.0
    %v8107 = vmul.f32 %v8106, %v8091
    %vm8108 = vweird.f32 %v231
    %v8109 = vadd.s32 %v8092, 3
    %v8110 = vand.u32 %v8109, 3
    %vm8111 = vcmp.lt.s32.totalorder %v8110, 2
    %vm8112 = vcmp.eq.s32.totalorder %v8110, 0
    %v8113 = vxor.u32 %v8107, 2147483648
    %v8114 = vsel %vm8112, %v8099, %v8113
    %vm8115 = vcmp.eq.s32.totalorder %v8110, 2
    %v8116 = vxor.u32 %v8099, 2147483648
    %v8117 = vsel %vm8115, %v8116, %v8107
    %v8118 = vsel %vm8111, %v8114, %v8117
    %v8119 = vsel %vm8108, nan, %v8118
    %v8120 = vand.u32 2147483647, %v232
    %vm8121 = vcmp.le.f32.partialorder %v8120, 0.7853982
    %vm8122 = vcmp.lt.s32.totalorder %v232, 0
    %v8123 = vand.u32 %v232, 2139095040
    %v8124 = vshrl.u32 %v8123, 23
    %v8125 = vsub.s32 %v8124, 127
    %v8126 = vand.u32 2147483647, %v232
    %v8127 = vand.u32 %v8126, 8388607
    %v8128 = vor.u32 %v8127, 8388608
    %v8129 = vsub.s32 0, %v8128
    %v8130 = vadd.s32 %v8125, 1
    %vm8131 = vcmp.gt.s32.totalorder %v8130, 0
    %v8132 = vsel %vm8131, %v8130, 0
    %v8133 = vshrl.u32 %v8132, 5
    %v8134 = vand.u32 %v8132, 31
    %v8135 = vsub.s32 32, %v8134
    %v8136 = vshrl.u32 683565275, %v8135
    %v8137 = vshll.u32 683565275, %v8134
    %v8138 = vshrl.u32 2475754826, %v8135
    %v8139 = vor.u32 %v8137, %v8138
    %v8140 = vshll.u32 2475754826, %v8134
    %v8141 = vshrl.u32 2131351028, %v8135
    %v8142 = vor.u32 %v8140, %v8141
    %v8143 = vshll.u32 2131351028, %v8134
    %v8144 = vshrl.u32 2102212464, %v8135
    %v8145 = vor.u32 %v8143, %v8144
    %v8146 = vshll.u32 2102212464, %v8134
    %v8147 = vshrl.u32 920167782, %v8135
    %v8148 = vor.u32 %v8146, %v8147
    %v8149 = vshll.u32 920167782, %v8134
    %v8150 = vshrl.u32 1326507024, %v8135
    %v8151 = vor.u32 %v8149, %v8150
    %vm8152 = vcmp.lt.s32.totalorder %v8133, 1
    %vm8153 = vcmp.lt.s32.totalorder %v8133, 2
    %vm8154 = vcmp.lt.s32.totalorder %v8133, 3
    %vm8155 = vcmp.lt.s32.totalorder %v8133, 4
    %v8156 = vsel %vm8152, %v8136, %v8139
    %v8157 = vsel %vm8155, %v8145, 2102212464
    %v8158 = vsel %vm8154, %v8142, %v8157
    %v8159 = vsel %vm8153, %v8156, %v8158
    %v8160 = vsel %vm8152, %v8139, %v8142
    %v8161 = vsel %vm8155, %v8148, 920167782
    %v8162 = vsel %vm8154, %v8145, %v8161
    %v8163 = vsel %vm8153, %v8160, %v8162
    %v8164 = vsel %vm8152, %v8142, %v8145
    %v8165 = vsel %vm8155, %v8151, 1326507024
    %v8166 = vsel %vm8154, %v8148, %v8165
    %v8167 = vsel %vm8153, %v8164, %v8166
    %v8168 = vshll.u32 %v8128, 8
    %v8169 = vand.u32 %v8168, 65535
    %v8170 = vshrl.u32 %v8168, 16
    %v8171 = vand.u32 %v8167, 65535
    %v8172 = vshrl.u32 %v8167, 16
    %v8173 = vmul.u32 %v8169, %v8171
    %v8174 = vmul.u32 %v8169, %v8172
    %v8175 = vmul.u32 %v8170, %v8171
    %v8176 = vmul.u32 %v8170, %v8172
    %v8177 = vshll.u32 %v8174, 16
    %v8178 = vshrl.u32 %v8174, 16
    %v8179 = vshll.u32 %v8175, 16
    %v8180 = vshrl.u32 %v8175, 16
    %vm8181 = vc.u32 %v8173, %v8177
    %v8182 = vsel %vm8181, 1, 0
    %v8183 = vadd.s32 %v8173, %v8177
    %v8184 = vadd.s32 %v8176, %v8182
    %vm8185 = vc.u32 %v8183, %v8179
    %v8186 = vsel %vm8185, 1, 0
    %v8187 = vadd.s32 %v8183, %v8179
    %v8188 = vadd.s32 %v8184, %v8186
    %v8189 = vadd.s32 %v8188, %v8178
    %v8190 = vadd.s32 %v8189, %v8180
    %v8191 = vand.u32 %v8168, 65535
    %v8192 = vshrl.u32 %v8168, 16
    %v8193 = vand.u32 %v8163, 65535
    %v8194 = vshrl.u32 %v8163, 16
    %v8195 = vmul.u32 %v8191, %v8193
    %v8196 = vmul.u32 %v8191, %v8194
    %v8197 = vmul.u32 %v8192, %v8193
    %v8198 = vmul.u32 %v8192, %v8194
    %v8199 = vshll.u32 %v8196, 16
    %v8200 = vshrl.u32 %v8196, 16
    %v8201 = vshll.u32 %v8197, 16
    %v8202 = vshrl.u32 %v8197, 16
    %vm8203 = vc.u32 %v8195, %v8199
    %v8204 = vsel %vm8203, 1, 0
    %v8205 = vadd.s32 %v8195, %v8199
    %v8206 = vadd.s32 %v8198, %v8204
    %vm8207 = vc.u32 %v8205, %v8201
    %v8208 = vsel %vm8207, 1, 0
    %v8209 = vadd.s32 %v8205, %v8201
    %v8210 = vadd.s32 %v8206, %v8208
    %v8211 = vadd.s32 %v8210, %v8200
    %v8212 = vadd.s32 %v8211, %v8202
    %v8213 = vmul.u32 %v8168, %v8159
    %v8214 = vadd.s32 %v8190, %v8209
    %vm8215 = vc.u32 %v8190, %v8209
    %v8216 = vadd.s32 %v8212, 1
    %v8217 = vsel %vm8215, %v8216, %v8212
    %v8218 = vadd.s32 %v8213, %v8217
    %v8219 = vadd.s32 %v8218, 536870912
    %v8220 = vshrl.u32 %v8219, 30
    %v8221 = vshll.u32 %v8220, 30
    %v8222 = vsub.s32 %v8218, %v8221
    %vm8223 = vcmp.lt.s32.totalorder %v8222, 0
    %v8224 = vsub.s32 0, %v8222
    %v8225 = vsel %vm8223, %v8224, %v8222
    %v8226 = vclz %v8225
    %v8227 = vsub.s32 %v8226, 2
    %vm8228 = vcmp.gt.s32.totalorder 0, %v8227
    %v8229 = vsel %vm8228, 0, %v8227
    %v8230 = vsub.s32 32, %v8229
    %v8231 = vshll.u32 %v8222, %v8229
    %v8232 = vshrl.u32 %v8214, %v8230
    %v8233 = vor.u32 %v8231, %v8232
    %v8234 = vsub.s32 4294967266, %v8229
    %v8235 = vadd.s32 %v8234, 127
    %v8236 = vshll.u32 %v8235, 23
    %v8237 = vor.u32 4788187, %v8236
    %v8238 = vand.u32 2147483647, %v8237
    %v8240 = vcvt.s32.f32 %v8233
    %v8241 = vmul.f32 %v8240, %v8238
    %v8242 = vxor.u32 %v8241, 2147483648
    %v8243 = vsel %vm8122, %v8242, %v8241
    %v8244 = vsub.s32 4, %v8220
    %v8245 = vsel %vm8122, %v8244, %v8220
    %v8246 = vsel %vm8121, %v232, %v8243
    %v8247 = vsel %vm8121, 0, %v8245
    %v8248 = vmul.f32 %v8246, %v8246
    %v8249 = vmul.f32 %v8248, -0.001358992
    %v8250 = vadd.f32 %v8249, 0.041655596
    %v8251 = vmul.f32 %v8248, %v8250
    %v8252 = vadd.f32 %v8251, -0.4999988
    %v8253 = vmul.f32 %v8248, %v8252
    %v8254 = vadd.f32 1.0, %v8253
    %v8255 = vmul.f32 %v8246, %v8246
    %v8256 = vmul.f32 %v8255, -0.00019511016
    %v8257 = vadd.f32 %v8256, 0.008332121
    %v8258 = vmul.f32 %v8255, %v8257
    %v8259 = vadd.f32 %v8258, -0.16666654
    %v8260 = vmul.f32 %v8255, %v8259
    %v8261 = vadd.f32 %v8260, 1.0
    %v8262 = vmul.f32 %v8261, %v8246
    %vm8263 = vweird.f32 %v232
    %v8264 = vadd.s32 %v8247, 3
    %v8265 = vand.u32 %v8264, 3
    %vm8266 = vcmp.lt.s32.totalorder %v8265, 2
    %vm8267 = vcmp.eq.s32.totalorder %v8265, 0
    %v8268 = vxor.u32 %v8262, 2147483648
    %v8269 = vsel %vm8267, %v8254, %v8268
    %vm8270 = vcmp.eq.s32.totalorder %v8265, 2
    %v8271 = vxor.u32 %v8254, 2147483648
    %v8272 = vsel %vm8270, %v8271, %v8262
    %v8273 = vsel %vm8266, %v8269, %v8272
    %v8274 = vsel %vm8263, nan, %v8273
    %v8275 = vand.u32 2147483647, %v233
    %vm8276 = vcmp.le.f32.partialorder %v8275, 0.7853982
    %vm8277 = vcmp.lt.s32.totalorder %v233, 0
    %v8278 = vand.u32 %v233, 2139095040
    %v8279 = vshrl.u32 %v8278, 23
    %v8280 = vsub.s32 %v8279, 127
    %v8281 = vand.u32 2147483647, %v233
    %v8282 = vand.u32 %v8281, 8388607
    %v8283 = vor.u32 %v8282, 8388608
    %v8284 = vsub.s32 0, %v8283
    %v8285 = vadd.s32 %v8280, 1
    %vm8286 = vcmp.gt.s32.totalorder %v8285, 0
    %v8287 = vsel %vm8286, %v8285, 0
    %v8288 = vshrl.u32 %v8287, 5
    %v8289 = vand.u32 %v8287, 31
    %v8290 = vsub.s32 32, %v8289
    %v8291 = vshrl.u32 683565275, %v8290
    %v8292 = vshll.u32 683565275, %v8289
    %v8293 = vshrl.u32 2475754826, %v8290
    %v8294 = vor.u32 %v8292, %v8293
    %v8295 = vshll.u32 2475754826, %v8289
    %v8296 = vshrl.u32 2131351028, %v8290
    %v8297 = vor.u32 %v8295, %v8296
    %v8298 = vshll.u32 2131351028, %v8289
    %v8299 = vshrl.u32 2102212464, %v8290
    %v8300 = vor.u32 %v8298, %v8299
    %v8301 = vshll.u32 2102212464, %v8289
    %v8302 = vshrl.u32 920167782, %v8290
    %v8303 = vor.u32 %v8301, %v8302
    %v8304 = vshll.u32 920167782, %v8289
    %v8305 = vshrl.u32 1326507024, %v8290
    %v8306 = vor.u32 %v8304, %v8305
    %vm8307 = vcmp.lt.s32.totalorder %v8288, 1
    %vm8308 = vcmp.lt.s32.totalorder %v8288, 2
    %vm8309 = vcmp.lt.s32.totalorder %v8288, 3
    %vm8310 = vcmp.lt.s32.totalorder %v8288, 4
    %v8311 = vsel %vm8307, %v8291, %v8294
    %v8312 = vsel %vm8310, %v8300, 2102212464
    %v8313 = vsel %vm8309, %v8297, %v8312
    %v8314 = vsel %vm8308, %v8311, %v8313
    %v8315 = vsel %vm8307, %v8294, %v8297
    %v8316 = vsel %vm8310, %v8303, 920167782
    %v8317 = vsel %vm8309, %v8300, %v8316
    %v8318 = vsel %vm8308, %v8315, %v8317
    %v8319 = vsel %vm8307, %v8297, %v8300
    %v8320 = vsel %vm8310, %v8306, 1326507024
    %v8321 = vsel %vm8309, %v8303, %v8320
    %v8322 = vsel %vm8308, %v8319, %v8321
    %v8323 = vshll.u32 %v8283, 8
    %v8324 = vand.u32 %v8323, 65535
    %v8325 = vshrl.u32 %v8323, 16
    %v8326 = vand.u32 %v8322, 65535
    %v8327 = vshrl.u32 %v8322, 16
    %v8328 = vmul.u32 %v8324, %v8326
    %v8329 = vmul.u32 %v8324, %v8327
    %v8330 = vmul.u32 %v8325, %v8326
    %v8331 = vmul.u32 %v8325, %v8327
    %v8332 = vshll.u32 %v8329, 16
    %v8333 = vshrl.u32 %v8329, 16
    %v8334 = vshll.u32 %v8330, 16
    %v8335 = vshrl.u32 %v8330, 16
    %vm8336 = vc.u32 %v8328, %v8332
    %v8337 = vsel %vm8336, 1, 0
    %v8338 = vadd.s32 %v8328, %v8332
    %v8339 = vadd.s32 %v8331, %v8337
    %vm8340 = vc.u32 %v8338, %v8334
    %v8341 = vsel %vm8340, 1, 0
    %v8342 = vadd.s32 %v8338, %v8334
    %v8343 = vadd.s32 %v8339, %v8341
    %v8344 = vadd.s32 %v8343, %v8333
    %v8345 = vadd.s32 %v8344, %v8335
    %v8346 = vand.u32 %v8323, 65535
    %v8347 = vshrl.u32 %v8323, 16
    %v8348 = vand.u32 %v8318, 65535
    %v8349 = vshrl.u32 %v8318, 16
    %v8350 = vmul.u32 %v8346, %v8348
    %v8351 = vmul.u32 %v8346, %v8349
    %v8352 = vmul.u32 %v8347, %v8348
    %v8353 = vmul.u32 %v8347, %v8349
    %v8354 = vshll.u32 %v8351, 16
    %v8355 = vshrl.u32 %v8351, 16
    %v8356 = vshll.u32 %v8352, 16
    %v8357 = vshrl.u32 %v8352, 16
    %vm8358 = vc.u32 %v8350, %v8354
    %v8359 = vsel %vm8358, 1, 0
    %v8360 = vadd.s32 %v8350, %v8354
    %v8361 = vadd.s32 %v8353, %v8359
    %vm8362 = vc.u32 %v8360, %v8356
    %v8363 = vsel %vm8362, 1, 0
    %v8364 = vadd.s32 %v8360, %v8356
    %v8365 = vadd.s32 %v8361, %v8363
    %v8366 = vadd.s32 %v8365, %v8355
    %v8367 = vadd.s32 %v8366, %v8357
    %v8368 = vmul.u32 %v8323, %v8314
    %v8369 = vadd.s32 %v8345, %v8364
    %vm8370 = vc.u32 %v8345, %v8364
    %v8371 = vadd.s32 %v8367, 1
    %v8372 = vsel %vm8370, %v8371, %v8367
    %v8373 = vadd.s32 %v8368, %v8372
    %v8374 = vadd.s32 %v8373, 536870912
    %v8375 = vshrl.u32 %v8374, 30
    %v8376 = vshll.u32 %v8375, 30
    %v8377 = vsub.s32 %v8373, %v8376
    %vm8378 = vcmp.lt.s32.totalorder %v8377, 0
    %v8379 = vsub.s32 0, %v8377
    %v8380 = vsel %vm8378, %v8379, %v8377
    %v8381 = vclz %v8380
    %v8382 = vsub.s32 %v8381, 2
    %vm8383 = vcmp.gt.s32.totalorder 0, %v8382
    %v8384 = vsel %vm8383, 0, %v8382
    %v8385 = vsub.s32 32, %v8384
    %v8386 = vshll.u32 %v8377, %v8384
    %v8387 = vshrl.u32 %v8369, %v8385
    %v8388 = vor.u32 %v8386, %v8387
    %v8389 = vsub.s32 4294967266, %v8384
    %v8390 = vadd.s32 %v8389, 127
    %v8391 = vshll.u32 %v8390, 23
    %v8392 = vor.u32 4788187, %v8391
    %v8393 = vand.u32 2147483647, %v8392
    %v8395 = vcvt.s32.f32 %v8388
    %v8396 = vmul.f32 %v8395, %v8393
    %v8397 = vxor.u32 %v8396, 2147483648
    %v8398 = vsel %vm8277, %v8397, %v8396
    %v8399 = vsub.s32 4, %v8375
    %v8400 = vsel %vm8277, %v8399, %v8375
    %v8401 = vsel %vm8276, %v233, %v8398
    %v8402 = vsel %vm8276, 0, %v8400
    %v8403 = vmul.f32 %v8401, %v8401
    %v8404 = vmul.f32 %v8403, -0.001358992
    %v8405 = vadd.f32 %v8404, 0.041655596
    %v8406 = vmul.f32 %v8403, %v8405
    %v8407 = vadd.f32 %v8406, -0.4999988
    %v8408 = vmul.f32 %v8403, %v8407
    %v8409 = vadd.f32 1.0, %v8408
    %v8410 = vmul.f32 %v8401, %v8401
    %v8411 = vmul.f32 %v8410, -0.00019511016
    %v8412 = vadd.f32 %v8411, 0.008332121
    %v8413 = vmul.f32 %v8410, %v8412
    %v8414 = vadd.f32 %v8413, -0.16666654
    %v8415 = vmul.f32 %v8410, %v8414
    %v8416 = vadd.f32 %v8415, 1.0
    %v8417 = vmul.f32 %v8416, %v8401
    %vm8418 = vweird.f32 %v233
    %v8419 = vadd.s32 %v8402, 3
    %v8420 = vand.u32 %v8419, 3
    %vm8421 = vcmp.lt.s32.totalorder %v8420, 2
    %vm8422 = vcmp.eq.s32.totalorder %v8420, 0
    %v8423 = vxor.u32 %v8417, 2147483648
    %v8424 = vsel %vm8422, %v8409, %v8423
    %vm8425 = vcmp.eq.s32.totalorder %v8420, 2
    %v8426 = vxor.u32 %v8409, 2147483648
    %v8427 = vsel %vm8425, %v8426, %v8417
    %v8428 = vsel %vm8421, %v8424, %v8427
    %v8429 = vsel %vm8418, nan, %v8428
    %v8430 = vand.u32 2147483647, %v234
    %vm8431 = vcmp.le.f32.partialorder %v8430, 0.7853982
    %vm8432 = vcmp.lt.s32.totalorder %v234, 0
    %v8433 = vand.u32 %v234, 2139095040
    %v8434 = vshrl.u32 %v8433, 23
    %v8435 = vsub.s32 %v8434, 127
    %v8436 = vand.u32 2147483647, %v234
    %v8437 = vand.u32 %v8436, 8388607
    %v8438 = vor.u32 %v8437, 8388608
    %v8439 = vsub.s32 0, %v8438
    %v8440 = vadd.s32 %v8435, 1
    %vm8441 = vcmp.gt.s32.totalorder %v8440, 0
    %v8442 = vsel %vm8441, %v8440, 0
    %v8443 = vshrl.u32 %v8442, 5
    %v8444 = vand.u32 %v8442, 31
    %v8445 = vsub.s32 32, %v8444
    %v8446 = vshrl.u32 683565275, %v8445
    %v8447 = vshll.u32 683565275, %v8444
    %v8448 = vshrl.u32 2475754826, %v8445
    %v8449 = vor.u32 %v8447, %v8448
    %v8450 = vshll.u32 2475754826, %v8444
    %v8451 = vshrl.u32 2131351028, %v8445
    %v8452 = vor.u32 %v8450, %v8451
    %v8453 = vshll.u32 2131351028, %v8444
    %v8454 = vshrl.u32 2102212464, %v8445
    %v8455 = vor.u32 %v8453, %v8454
    %v8456 = vshll.u32 2102212464, %v8444
    %v8457 = vshrl.u32 920167782, %v8445
    %v8458 = vor.u32 %v8456, %v8457
    %v8459 = vshll.u32 920167782, %v8444
    %v8460 = vshrl.u32 1326507024, %v8445
    %v8461 = vor.u32 %v8459, %v8460
    %vm8462 = vcmp.lt.s32.totalorder %v8443, 1
    %vm8463 = vcmp.lt.s32.totalorder %v8443, 2
    %vm8464 = vcmp.lt.s32.totalorder %v8443, 3
    %vm8465 = vcmp.lt.s32.totalorder %v8443, 4
    %v8466 = vsel %vm8462, %v8446, %v8449
    %v8467 = vsel %vm8465, %v8455, 2102212464
    %v8468 = vsel %vm8464, %v8452, %v8467
    %v8469 = vsel %vm8463, %v8466, %v8468
    %v8470 = vsel %vm8462, %v8449, %v8452
    %v8471 = vsel %vm8465, %v8458, 920167782
    %v8472 = vsel %vm8464, %v8455, %v8471
    %v8473 = vsel %vm8463, %v8470, %v8472
    %v8474 = vsel %vm8462, %v8452, %v8455
    %v8475 = vsel %vm8465, %v8461, 1326507024
    %v8476 = vsel %vm8464, %v8458, %v8475
    %v8477 = vsel %vm8463, %v8474, %v8476
    %v8478 = vshll.u32 %v8438, 8
    %v8479 = vand.u32 %v8478, 65535
    %v8480 = vshrl.u32 %v8478, 16
    %v8481 = vand.u32 %v8477, 65535
    %v8482 = vshrl.u32 %v8477, 16
    %v8483 = vmul.u32 %v8479, %v8481
    %v8484 = vmul.u32 %v8479, %v8482
    %v8485 = vmul.u32 %v8480, %v8481
    %v8486 = vmul.u32 %v8480, %v8482
    %v8487 = vshll.u32 %v8484, 16
    %v8488 = vshrl.u32 %v8484, 16
    %v8489 = vshll.u32 %v8485, 16
    %v8490 = vshrl.u32 %v8485, 16
    %vm8491 = vc.u32 %v8483, %v8487
    %v8492 = vsel %vm8491, 1, 0
    %v8493 = vadd.s32 %v8483, %v8487
    %v8494 = vadd.s32 %v8486, %v8492
    %vm8495 = vc.u32 %v8493, %v8489
    %v8496 = vsel %vm8495, 1, 0
    %v8497 = vadd.s32 %v8493, %v8489
    %v8498 = vadd.s32 %v8494, %v8496
    %v8499 = vadd.s32 %v8498, %v8488
    %v8500 = vadd.s32 %v8499, %v8490
    %v8501 = vand.u32 %v8478, 65535
    %v8502 = vshrl.u32 %v8478, 16
    %v8503 = vand.u32 %v8473, 65535
    %v8504 = vshrl.u32 %v8473, 16
    %v8505 = vmul.u32 %v8501, %v8503
    %v8506 = vmul.u32 %v8501, %v8504
    %v8507 = vmul.u32 %v8502, %v8503
    %v8508 = vmul.u32 %v8502, %v8504
    %v8509 = vshll.u32 %v8506, 16
    %v8510 = vshrl.u32 %v8506, 16
    %v8511 = vshll.u32 %v8507, 16
    %v8512 = vshrl.u32 %v8507, 16
    %vm8513 = vc.u32 %v8505, %v8509
    %v8514 = vsel %vm8513, 1, 0
    %v8515 = vadd.s32 %v8505, %v8509
    %v8516 = vadd.s32 %v8508, %v8514
    %vm8517 = vc.u32 %v8515, %v8511
    %v8518 = vsel %vm8517, 1, 0
    %v8519 = vadd.s32 %v8515, %v8511
    %v8520 = vadd.s32 %v8516, %v8518
    %v8521 = vadd.s32 %v8520, %v8510
    %v8522 = vadd.s32 %v8521, %v8512
    %v8523 = vmul.u32 %v8478, %v8469
    %v8524 = vadd.s32 %v8500, %v8519
    %vm8525 = vc.u32 %v8500, %v8519
    %v8526 = vadd.s32 %v8522, 1
    %v8527 = vsel %vm8525, %v8526, %v8522
    %v8528 = vadd.s32 %v8523, %v8527
    %v8529 = vadd.s32 %v8528, 536870912
    %v8530 = vshrl.u32 %v8529, 30
    %v8531 = vshll.u32 %v8530, 30
    %v8532 = vsub.s32 %v8528, %v8531
    %vm8533 = vcmp.lt.s32.totalorder %v8532, 0
    %v8534 = vsub.s32 0, %v8532
    %v8535 = vsel %vm8533, %v8534, %v8532
    %v8536 = vclz %v8535
    %v8537 = vsub.s32 %v8536, 2
    %vm8538 = vcmp.gt.s32.totalorder 0, %v8537
    %v8539 = vsel %vm8538, 0, %v8537
    %v8540 = vsub.s32 32, %v8539
    %v8541 = vshll.u32 %v8532, %v8539
    %v8542 = vshrl.u32 %v8524, %v8540
    %v8543 = vor.u32 %v8541, %v8542
    %v8544 = vsub.s32 4294967266, %v8539
    %v8545 = vadd.s32 %v8544, 127
    %v8546 = vshll.u32 %v8545, 23
    %v8547 = vor.u32 4788187, %v8546
    %v8548 = vand.u32 2147483647, %v8547
    %v8550 = vcvt.s32.f32 %v8543
    %v8551 = vmul.f32 %v8550, %v8548
    %v8552 = vxor.u32 %v8551, 2147483648
    %v8553 = vsel %vm8432, %v8552, %v8551
    %v8554 = vsub.s32 4, %v8530
    %v8555 = vsel %vm8432, %v8554, %v8530
    %v8556 = vsel %vm8431, %v234, %v8553
    %v8557 = vsel %vm8431, 0, %v8555
    %v8558 = vmul.f32 %v8556, %v8556
    %v8559 = vmul.f32 %v8558, -0.001358992
    %v8560 = vadd.f32 %v8559, 0.041655596
    %v8561 = vmul.f32 %v8558, %v8560
    %v8562 = vadd.f32 %v8561, -0.4999988
    %v8563 = vmul.f32 %v8558, %v8562
    %v8564 = vadd.f32 1.0, %v8563
    %v8565 = vmul.f32 %v8556, %v8556
    %v8566 = vmul.f32 %v8565, -0.00019511016
    %v8567 = vadd.f32 %v8566, 0.008332121
    %v8568 = vmul.f32 %v8565, %v8567
    %v8569 = vadd.f32 %v8568, -0.16666654
    %v8570 = vmul.f32 %v8565, %v8569
    %v8571 = vadd.f32 %v8570, 1.0
    %v8572 = vmul.f32 %v8571, %v8556
    %vm8573 = vweird.f32 %v234
    %v8574 = vadd.s32 %v8557, 3
    %v8575 = vand.u32 %v8574, 3
    %vm8576 = vcmp.lt.s32.totalorder %v8575, 2
    %vm8577 = vcmp.eq.s32.totalorder %v8575, 0
    %v8578 = vxor.u32 %v8572, 2147483648
    %v8579 = vsel %vm8577, %v8564, %v8578
    %vm8580 = vcmp.eq.s32.totalorder %v8575, 2
    %v8581 = vxor.u32 %v8564, 2147483648
    %v8582 = vsel %vm8580, %v8581, %v8572
    %v8583 = vsel %vm8576, %v8579, %v8582
    %v8584 = vsel %vm8573, nan, %v8583
    %v8585 = vand.u32 2147483647, %v235
    %vm8586 = vcmp.le.f32.partialorder %v8585, 0.7853982
    %vm8587 = vcmp.lt.s32.totalorder %v235, 0
    %v8588 = vand.u32 %v235, 2139095040
    %v8589 = vshrl.u32 %v8588, 23
    %v8590 = vsub.s32 %v8589, 127
    %v8591 = vand.u32 2147483647, %v235
    %v8592 = vand.u32 %v8591, 8388607
    %v8593 = vor.u32 %v8592, 8388608
    %v8594 = vsub.s32 0, %v8593
    %v8595 = vadd.s32 %v8590, 1
    %vm8596 = vcmp.gt.s32.totalorder %v8595, 0
    %v8597 = vsel %vm8596, %v8595, 0
    %v8598 = vshrl.u32 %v8597, 5
    %v8599 = vand.u32 %v8597, 31
    %v8600 = vsub.s32 32, %v8599
    %v8601 = vshrl.u32 683565275, %v8600
    %v8602 = vshll.u32 683565275, %v8599
    %v8603 = vshrl.u32 2475754826, %v8600
    %v8604 = vor.u32 %v8602, %v8603
    %v8605 = vshll.u32 2475754826, %v8599
    %v8606 = vshrl.u32 2131351028, %v8600
    %v8607 = vor.u32 %v8605, %v8606
    %v8608 = vshll.u32 2131351028, %v8599
    %v8609 = vshrl.u32 2102212464, %v8600
    %v8610 = vor.u32 %v8608, %v8609
    %v8611 = vshll.u32 2102212464, %v8599
    %v8612 = vshrl.u32 920167782, %v8600
    %v8613 = vor.u32 %v8611, %v8612
    %v8614 = vshll.u32 920167782, %v8599
    %v8615 = vshrl.u32 1326507024, %v8600
    %v8616 = vor.u32 %v8614, %v8615
    %vm8617 = vcmp.lt.s32.totalorder %v8598, 1
    %vm8618 = vcmp.lt.s32.totalorder %v8598, 2
    %vm8619 = vcmp.lt.s32.totalorder %v8598, 3
    %vm8620 = vcmp.lt.s32.totalorder %v8598, 4
    %v8621 = vsel %vm8617, %v8601, %v8604
    %v8622 = vsel %vm8620, %v8610, 2102212464
    %v8623 = vsel %vm8619, %v8607, %v8622
    %v8624 = vsel %vm8618, %v8621, %v8623
    %v8625 = vsel %vm8617, %v8604, %v8607
    %v8626 = vsel %vm8620, %v8613, 920167782
    %v8627 = vsel %vm8619, %v8610, %v8626
    %v8628 = vsel %vm8618, %v8625, %v8627
    %v8629 = vsel %vm8617, %v8607, %v8610
    %v8630 = vsel %vm8620, %v8616, 1326507024
    %v8631 = vsel %vm8619, %v8613, %v8630
    %v8632 = vsel %vm8618, %v8629, %v8631
    %v8633 = vshll.u32 %v8593, 8
    %v8634 = vand.u32 %v8633, 65535
    %v8635 = vshrl.u32 %v8633, 16
    %v8636 = vand.u32 %v8632, 65535
    %v8637 = vshrl.u32 %v8632, 16
    %v8638 = vmul.u32 %v8634, %v8636
    %v8639 = vmul.u32 %v8634, %v8637
    %v8640 = vmul.u32 %v8635, %v8636
    %v8641 = vmul.u32 %v8635, %v8637
    %v8642 = vshll.u32 %v8639, 16
    %v8643 = vshrl.u32 %v8639, 16
    %v8644 = vshll.u32 %v8640, 16
    %v8645 = vshrl.u32 %v8640, 16
    %vm8646 = vc.u32 %v8638, %v8642
    %v8647 = vsel %vm8646, 1, 0
    %v8648 = vadd.s32 %v8638, %v8642
    %v8649 = vadd.s32 %v8641, %v8647
    %vm8650 = vc.u32 %v8648, %v8644
    %v8651 = vsel %vm8650, 1, 0
    %v8652 = vadd.s32 %v8648, %v8644
    %v8653 = vadd.s32 %v8649, %v8651
    %v8654 = vadd.s32 %v8653, %v8643
    %v8655 = vadd.s32 %v8654, %v8645
    %v8656 = vand.u32 %v8633, 65535
    %v8657 = vshrl.u32 %v8633, 16
    %v8658 = vand.u32 %v8628, 65535
    %v8659 = vshrl.u32 %v8628, 16
    %v8660 = vmul.u32 %v8656, %v8658
    %v8661 = vmul.u32 %v8656, %v8659
    %v8662 = vmul.u32 %v8657, %v8658
    %v8663 = vmul.u32 %v8657, %v8659
    %v8664 = vshll.u32 %v8661, 16
    %v8665 = vshrl.u32 %v8661, 16
    %v8666 = vshll.u32 %v8662, 16
    %v8667 = vshrl.u32 %v8662, 16
    %vm8668 = vc.u32 %v8660, %v8664
    %v8669 = vsel %vm8668, 1, 0
    %v8670 = vadd.s32 %v8660, %v8664
    %v8671 = vadd.s32 %v8663, %v8669
    %vm8672 = vc.u32 %v8670, %v8666
    %v8673 = vsel %vm8672, 1, 0
    %v8674 = vadd.s32 %v8670, %v8666
    %v8675 = vadd.s32 %v8671, %v8673
    %v8676 = vadd.s32 %v8675, %v8665
    %v8677 = vadd.s32 %v8676, %v8667
    %v8678 = vmul.u32 %v8633, %v8624
    %v8679 = vadd.s32 %v8655, %v8674
    %vm8680 = vc.u32 %v8655, %v8674
    %v8681 = vadd.s32 %v8677, 1
    %v8682 = vsel %vm8680, %v8681, %v8677
    %v8683 = vadd.s32 %v8678, %v8682
    %v8684 = vadd.s32 %v8683, 536870912
    %v8685 = vshrl.u32 %v8684, 30
    %v8686 = vshll.u32 %v8685, 30
    %v8687 = vsub.s32 %v8683, %v8686
    %vm8688 = vcmp.lt.s32.totalorder %v8687, 0
    %v8689 = vsub.s32 0, %v8687
    %v8690 = vsel %vm8688, %v8689, %v8687
    %v8691 = vclz %v8690
    %v8692 = vsub.s32 %v8691, 2
    %vm8693 = vcmp.gt.s32.totalorder 0, %v8692
    %v8694 = vsel %vm8693, 0, %v8692
    %v8695 = vsub.s32 32, %v8694
    %v8696 = vshll.u32 %v8687, %v8694
    %v8697 = vshrl.u32 %v8679, %v8695
    %v8698 = vor.u32 %v8696, %v8697
    %v8699 = vsub.s32 4294967266, %v8694
    %v8700 = vadd.s32 %v8699, 127
    %v8701 = vshll.u32 %v8700, 23
    %v8702 = vor.u32 4788187, %v8701
    %v8703 = vand.u32 2147483647, %v8702
    %v8705 = vcvt.s32.f32 %v8698
    %v8706 = vmul.f32 %v8705, %v8703
    %v8707 = vxor.u32 %v8706, 2147483648
    %v8708 = vsel %vm8587, %v8707, %v8706
    %v8709 = vsub.s32 4, %v8685
    %v8710 = vsel %vm8587, %v8709, %v8685
    %v8711 = vsel %vm8586, %v235, %v8708
    %v8712 = vsel %vm8586, 0, %v8710
    %v8713 = vmul.f32 %v8711, %v8711
    %v8714 = vmul.f32 %v8713, -0.001358992
    %v8715 = vadd.f32 %v8714, 0.041655596
    %v8716 = vmul.f32 %v8713, %v8715
    %v8717 = vadd.f32 %v8716, -0.4999988
    %v8718 = vmul.f32 %v8713, %v8717
    %v8719 = vadd.f32 1.0, %v8718
    %v8720 = vmul.f32 %v8711, %v8711
    %v8721 = vmul.f32 %v8720, -0.00019511016
    %v8722 = vadd.f32 %v8721, 0.008332121
    %v8723 = vmul.f32 %v8720, %v8722
    %v8724 = vadd.f32 %v8723, -0.16666654
    %v8725 = vmul.f32 %v8720, %v8724
    %v8726 = vadd.f32 %v8725, 1.0
    %v8727 = vmul.f32 %v8726, %v8711
    %vm8728 = vweird.f32 %v235
    %v8729 = vadd.s32 %v8712, 3
    %v8730 = vand.u32 %v8729, 3
    %vm8731 = vcmp.lt.s32.totalorder %v8730, 2
    %vm8732 = vcmp.eq.s32.totalorder %v8730, 0
    %v8733 = vxor.u32 %v8727, 2147483648
    %v8734 = vsel %vm8732, %v8719, %v8733
    %vm8735 = vcmp.eq.s32.totalorder %v8730, 2
    %v8736 = vxor.u32 %v8719, 2147483648
    %v8737 = vsel %vm8735, %v8736, %v8727
    %v8738 = vsel %vm8731, %v8734, %v8737
    %v8739 = vsel %vm8728, nan, %v8738
    %v8740 = vand.u32 2147483647, %v236
    %vm8741 = vcmp.le.f32.partialorder %v8740, 0.7853982
    %vm8742 = vcmp.lt.s32.totalorder %v236, 0
    %v8743 = vand.u32 %v236, 2139095040
    %v8744 = vshrl.u32 %v8743, 23
    %v8745 = vsub.s32 %v8744, 127
    %v8746 = vand.u32 2147483647, %v236
    %v8747 = vand.u32 %v8746, 8388607
    %v8748 = vor.u32 %v8747, 8388608
    %v8749 = vsub.s32 0, %v8748
    %v8750 = vadd.s32 %v8745, 1
    %vm8751 = vcmp.gt.s32.totalorder %v8750, 0
    %v8752 = vsel %vm8751, %v8750, 0
    %v8753 = vshrl.u32 %v8752, 5
    %v8754 = vand.u32 %v8752, 31
    %v8755 = vsub.s32 32, %v8754
    %v8756 = vshrl.u32 683565275, %v8755
    %v8757 = vshll.u32 683565275, %v8754
    %v8758 = vshrl.u32 2475754826, %v8755
    %v8759 = vor.u32 %v8757, %v8758
    %v8760 = vshll.u32 2475754826, %v8754
    %v8761 = vshrl.u32 2131351028, %v8755
    %v8762 = vor.u32 %v8760, %v8761
    %v8763 = vshll.u32 2131351028, %v8754
    %v8764 = vshrl.u32 2102212464, %v8755
    %v8765 = vor.u32 %v8763, %v8764
    %v8766 = vshll.u32 2102212464, %v8754
    %v8767 = vshrl.u32 920167782, %v8755
    %v8768 = vor.u32 %v8766, %v8767
    %v8769 = vshll.u32 920167782, %v8754
    %v8770 = vshrl.u32 1326507024, %v8755
    %v8771 = vor.u32 %v8769, %v8770
    %vm8772 = vcmp.lt.s32.totalorder %v8753, 1
    %vm8773 = vcmp.lt.s32.totalorder %v8753, 2
    %vm8774 = vcmp.lt.s32.totalorder %v8753, 3
    %vm8775 = vcmp.lt.s32.totalorder %v8753, 4
    %v8776 = vsel %vm8772, %v8756, %v8759
    %v8777 = vsel %vm8775, %v8765, 2102212464
    %v8778 = vsel %vm8774, %v8762, %v8777
    %v8779 = vsel %vm8773, %v8776, %v8778
    %v8780 = vsel %vm8772, %v8759, %v8762
    %v8781 = vsel %vm8775, %v8768, 920167782
    %v8782 = vsel %vm8774, %v8765, %v8781
    %v8783 = vsel %vm8773, %v8780, %v8782
    %v8784 = vsel %vm8772, %v8762, %v8765
    %v8785 = vsel %vm8775, %v8771, 1326507024
    %v8786 = vsel %vm8774, %v8768, %v8785
    %v8787 = vsel %vm8773, %v8784, %v8786
    %v8788 = vshll.u32 %v8748, 8
    %v8789 = vand.u32 %v8788, 65535
    %v8790 = vshrl.u32 %v8788, 16
    %v8791 = vand.u32 %v8787, 65535
    %v8792 = vshrl.u32 %v8787, 16
    %v8793 = vmul.u32 %v8789, %v8791
    %v8794 = vmul.u32 %v8789, %v8792
    %v8795 = vmul.u32 %v8790, %v8791
    %v8796 = vmul.u32 %v8790, %v8792
    %v8797 = vshll.u32 %v8794, 16
    %v8798 = vshrl.u32 %v8794, 16
    %v8799 = vshll.u32 %v8795, 16
    %v8800 = vshrl.u32 %v8795, 16
    %vm8801 = vc.u32 %v8793, %v8797
    %v8802 = vsel %vm8801, 1, 0
    %v8803 = vadd.s32 %v8793, %v8797
    %v8804 = vadd.s32 %v8796, %v8802
    %vm8805 = vc.u32 %v8803, %v8799
    %v8806 = vsel %vm8805, 1, 0
    %v8807 = vadd.s32 %v8803, %v8799
    %v8808 = vadd.s32 %v8804, %v8806
    %v8809 = vadd.s32 %v8808, %v8798
    %v8810 = vadd.s32 %v8809, %v8800
    %v8811 = vand.u32 %v8788, 65535
    %v8812 = vshrl.u32 %v8788, 16
    %v8813 = vand.u32 %v8783, 65535
    %v8814 = vshrl.u32 %v8783, 16
    %v8815 = vmul.u32 %v8811, %v8813
    %v8816 = vmul.u32 %v8811, %v8814
    %v8817 = vmul.u32 %v8812, %v8813
    %v8818 = vmul.u32 %v8812, %v8814
    %v8819 = vshll.u32 %v8816, 16
    %v8820 = vshrl.u32 %v8816, 16
    %v8821 = vshll.u32 %v8817, 16
    %v8822 = vshrl.u32 %v8817, 16
    %vm8823 = vc.u32 %v8815, %v8819
    %v8824 = vsel %vm8823, 1, 0
    %v8825 = vadd.s32 %v8815, %v8819
    %v8826 = vadd.s32 %v8818, %v8824
    %vm8827 = vc.u32 %v8825, %v8821
    %v8828 = vsel %vm8827, 1, 0
    %v8829 = vadd.s32 %v8825, %v8821
    %v8830 = vadd.s32 %v8826, %v8828
    %v8831 = vadd.s32 %v8830, %v8820
    %v8832 = vadd.s32 %v8831, %v8822
    %v8833 = vmul.u32 %v8788, %v8779
    %v8834 = vadd.s32 %v8810, %v8829
    %vm8835 = vc.u32 %v8810, %v8829
    %v8836 = vadd.s32 %v8832, 1
    %v8837 = vsel %vm8835, %v8836, %v8832
    %v8838 = vadd.s32 %v8833, %v8837
    %v8839 = vadd.s32 %v8838, 536870912
    %v8840 = vshrl.u32 %v8839, 30
    %v8841 = vshll.u32 %v8840, 30
    %v8842 = vsub.s32 %v8838, %v8841
    %vm8843 = vcmp.lt.s32.totalorder %v8842, 0
    %v8844 = vsub.s32 0, %v8842
    %v8845 = vsel %vm8843, %v8844, %v8842
    %v8846 = vclz %v8845
    %v8847 = vsub.s32 %v8846, 2
    %vm8848 = vcmp.gt.s32.totalorder 0, %v8847
    %v8849 = vsel %vm8848, 0, %v8847
    %v8850 = vsub.s32 32, %v8849
    %v8851 = vshll.u32 %v8842, %v8849
    %v8852 = vshrl.u32 %v8834, %v8850
    %v8853 = vor.u32 %v8851, %v8852
    %v8854 = vsub.s32 4294967266, %v8849
    %v8855 = vadd.s32 %v8854, 127
    %v8856 = vshll.u32 %v8855, 23
    %v8857 = vor.u32 4788187, %v8856
    %v8858 = vand.u32 2147483647, %v8857
    %v8860 = vcvt.s32.f32 %v8853
    %v8861 = vmul.f32 %v8860, %v8858
    %v8862 = vxor.u32 %v8861, 2147483648
    %v8863 = vsel %vm8742, %v8862, %v8861
    %v8864 = vsub.s32 4, %v8840
    %v8865 = vsel %vm8742, %v8864, %v8840
    %v8866 = vsel %vm8741, %v236, %v8863
    %v8867 = vsel %vm8741, 0, %v8865
    %v8868 = vmul.f32 %v8866, %v8866
    %v8869 = vmul.f32 %v8868, -0.001358992
    %v8870 = vadd.f32 %v8869, 0.041655596
    %v8871 = vmul.f32 %v8868, %v8870
    %v8872 = vadd.f32 %v8871, -0.4999988
    %v8873 = vmul.f32 %v8868, %v8872
    %v8874 = vadd.f32 1.0, %v8873
    %v8875 = vmul.f32 %v8866, %v8866
    %v8876 = vmul.f32 %v8875, -0.00019511016
    %v8877 = vadd.f32 %v8876, 0.008332121
    %v8878 = vmul.f32 %v8875, %v8877
    %v8879 = vadd.f32 %v8878, -0.16666654
    %v8880 = vmul.f32 %v8875, %v8879
    %v8881 = vadd.f32 %v8880, 1.0
    %v8882 = vmul.f32 %v8881, %v8866
    %vm8883 = vweird.f32 %v236
    %v8884 = vadd.s32 %v8867, 3
    %v8885 = vand.u32 %v8884, 3
    %vm8886 = vcmp.lt.s32.totalorder %v8885, 2
    %vm8887 = vcmp.eq.s32.totalorder %v8885, 0
    %v8888 = vxor.u32 %v8882, 2147483648
    %v8889 = vsel %vm8887, %v8874, %v8888
    %vm8890 = vcmp.eq.s32.totalorder %v8885, 2
    %v8891 = vxor.u32 %v8874, 2147483648
    %v8892 = vsel %vm8890, %v8891, %v8882
    %v8893 = vsel %vm8886, %v8889, %v8892
    %v8894 = vsel %vm8883, nan, %v8893
    %v8895 = vand.u32 2147483647, %v237
    %vm8896 = vcmp.le.f32.partialorder %v8895, 0.7853982
    %vm8897 = vcmp.lt.s32.totalorder %v237, 0
    %v8898 = vand.u32 %v237, 2139095040
    %v8899 = vshrl.u32 %v8898, 23
    %v8900 = vsub.s32 %v8899, 127
    %v8901 = vand.u32 2147483647, %v237
    %v8902 = vand.u32 %v8901, 8388607
    %v8903 = vor.u32 %v8902, 8388608
    %v8904 = vsub.s32 0, %v8903
    %v8905 = vadd.s32 %v8900, 1
    %vm8906 = vcmp.gt.s32.totalorder %v8905, 0
    %v8907 = vsel %vm8906, %v8905, 0
    %v8908 = vshrl.u32 %v8907, 5
    %v8909 = vand.u32 %v8907, 31
    %v8910 = vsub.s32 32, %v8909
    %v8911 = vshrl.u32 683565275, %v8910
    %v8912 = vshll.u32 683565275, %v8909
    %v8913 = vshrl.u32 2475754826, %v8910
    %v8914 = vor.u32 %v8912, %v8913
    %v8915 = vshll.u32 2475754826, %v8909
    %v8916 = vshrl.u32 2131351028, %v8910
    %v8917 = vor.u32 %v8915, %v8916
    %v8918 = vshll.u32 2131351028, %v8909
    %v8919 = vshrl.u32 2102212464, %v8910
    %v8920 = vor.u32 %v8918, %v8919
    %v8921 = vshll.u32 2102212464, %v8909
    %v8922 = vshrl.u32 920167782, %v8910
    %v8923 = vor.u32 %v8921, %v8922
    %v8924 = vshll.u32 920167782, %v8909
    %v8925 = vshrl.u32 1326507024, %v8910
    %v8926 = vor.u32 %v8924, %v8925
    %vm8927 = vcmp.lt.s32.totalorder %v8908, 1
    %vm8928 = vcmp.lt.s32.totalorder %v8908, 2
    %vm8929 = vcmp.lt.s32.totalorder %v8908, 3
    %vm8930 = vcmp.lt.s32.totalorder %v8908, 4
    %v8931 = vsel %vm8927, %v8911, %v8914
    %v8932 = vsel %vm8930, %v8920, 2102212464
    %v8933 = vsel %vm8929, %v8917, %v8932
    %v8934 = vsel %vm8928, %v8931, %v8933
    %v8935 = vsel %vm8927, %v8914, %v8917
    %v8936 = vsel %vm8930, %v8923, 920167782
    %v8937 = vsel %vm8929, %v8920, %v8936
    %v8938 = vsel %vm8928, %v8935, %v8937
    %v8939 = vsel %vm8927, %v8917, %v8920
    %v8940 = vsel %vm8930, %v8926, 1326507024
    %v8941 = vsel %vm8929, %v8923, %v8940
    %v8942 = vsel %vm8928, %v8939, %v8941
    %v8943 = vshll.u32 %v8903, 8
    %v8944 = vand.u32 %v8943, 65535
    %v8945 = vshrl.u32 %v8943, 16
    %v8946 = vand.u32 %v8942, 65535
    %v8947 = vshrl.u32 %v8942, 16
    %v8948 = vmul.u32 %v8944, %v8946
    %v8949 = vmul.u32 %v8944, %v8947
    %v8950 = vmul.u32 %v8945, %v8946
    %v8951 = vmul.u32 %v8945, %v8947
    %v8952 = vshll.u32 %v8949, 16
    %v8953 = vshrl.u32 %v8949, 16
    %v8954 = vshll.u32 %v8950, 16
    %v8955 = vshrl.u32 %v8950, 16
    %vm8956 = vc.u32 %v8948, %v8952
    %v8957 = vsel %vm8956, 1, 0
    %v8958 = vadd.s32 %v8948, %v8952
    %v8959 = vadd.s32 %v8951, %v8957
    %vm8960 = vc.u32 %v8958, %v8954
    %v8961 = vsel %vm8960, 1, 0
    %v8962 = vadd.s32 %v8958, %v8954
    %v8963 = vadd.s32 %v8959, %v8961
    %v8964 = vadd.s32 %v8963, %v8953
    %v8965 = vadd.s32 %v8964, %v8955
    %v8966 = vand.u32 %v8943, 65535
    %v8967 = vshrl.u32 %v8943, 16
    %v8968 = vand.u32 %v8938, 65535
    %v8969 = vshrl.u32 %v8938, 16
    %v8970 = vmul.u32 %v8966, %v8968
    %v8971 = vmul.u32 %v8966, %v8969
    %v8972 = vmul.u32 %v8967, %v8968
    %v8973 = vmul.u32 %v8967, %v8969
    %v8974 = vshll.u32 %v8971, 16
    %v8975 = vshrl.u32 %v8971, 16
    %v8976 = vshll.u32 %v8972, 16
    %v8977 = vshrl.u32 %v8972, 16
    %vm8978 = vc.u32 %v8970, %v8974
    %v8979 = vsel %vm8978, 1, 0
    %v8980 = vadd.s32 %v8970, %v8974
    %v8981 = vadd.s32 %v8973, %v8979
    %vm8982 = vc.u32 %v8980, %v8976
    %v8983 = vsel %vm8982, 1, 0
    %v8984 = vadd.s32 %v8980, %v8976
    %v8985 = vadd.s32 %v8981, %v8983
    %v8986 = vadd.s32 %v8985, %v8975
    %v8987 = vadd.s32 %v8986, %v8977
    %v8988 = vmul.u32 %v8943, %v8934
    %v8989 = vadd.s32 %v8965, %v8984
    %vm8990 = vc.u32 %v8965, %v8984
    %v8991 = vadd.s32 %v8987, 1
    %v8992 = vsel %vm8990, %v8991, %v8987
    %v8993 = vadd.s32 %v8988, %v8992
    %v8994 = vadd.s32 %v8993, 536870912
    %v8995 = vshrl.u32 %v8994, 30
    %v8996 = vshll.u32 %v8995, 30
    %v8997 = vsub.s32 %v8993, %v8996
    %vm8998 = vcmp.lt.s32.totalorder %v8997, 0
    %v8999 = vsub.s32 0, %v8997
    %v9000 = vsel %vm8998, %v8999, %v8997
    %v9001 = vclz %v9000
    %v9002 = vsub.s32 %v9001, 2
    %vm9003 = vcmp.gt.s32.totalorder 0, %v9002
    %v9004 = vsel %vm9003, 0, %v9002
    %v9005 = vsub.s32 32, %v9004
    %v9006 = vshll.u32 %v8997, %v9004
    %v9007 = vshrl.u32 %v8989, %v9005
    %v9008 = vor.u32 %v9006, %v9007
    %v9009 = vsub.s32 4294967266, %v9004
    %v9010 = vadd.s32 %v9009, 127
    %v9011 = vshll.u32 %v9010, 23
    %v9012 = vor.u32 4788187, %v9011
    %v9013 = vand.u32 2147483647, %v9012
    %v9015 = vcvt.s32.f32 %v9008
    %v9016 = vmul.f32 %v9015, %v9013
    %v9017 = vxor.u32 %v9016, 2147483648
    %v9018 = vsel %vm8897, %v9017, %v9016
    %v9019 = vsub.s32 4, %v8995
    %v9020 = vsel %vm8897, %v9019, %v8995
    %v9021 = vsel %vm8896, %v237, %v9018
    %v9022 = vsel %vm8896, 0, %v9020
    %v9023 = vmul.f32 %v9021, %v9021
    %v9024 = vmul.f32 %v9023, -0.001358992
    %v9025 = vadd.f32 %v9024, 0.041655596
    %v9026 = vmul.f32 %v9023, %v9025
    %v9027 = vadd.f32 %v9026, -0.4999988
    %v9028 = vmul.f32 %v9023, %v9027
    %v9029 = vadd.f32 1.0, %v9028
    %v9030 = vmul.f32 %v9021, %v9021
    %v9031 = vmul.f32 %v9030, -0.00019511016
    %v9032 = vadd.f32 %v9031, 0.008332121
    %v9033 = vmul.f32 %v9030, %v9032
    %v9034 = vadd.f32 %v9033, -0.16666654
    %v9035 = vmul.f32 %v9030, %v9034
    %v9036 = vadd.f32 %v9035, 1.0
    %v9037 = vmul.f32 %v9036, %v9021
    %vm9038 = vweird.f32 %v237
    %v9039 = vadd.s32 %v9022, 3
    %v9040 = vand.u32 %v9039, 3
    %vm9041 = vcmp.lt.s32.totalorder %v9040, 2
    %vm9042 = vcmp.eq.s32.totalorder %v9040, 0
    %v9043 = vxor.u32 %v9037, 2147483648
    %v9044 = vsel %vm9042, %v9029, %v9043
    %vm9045 = vcmp.eq.s32.totalorder %v9040, 2
    %v9046 = vxor.u32 %v9029, 2147483648
    %v9047 = vsel %vm9045, %v9046, %v9037
    %v9048 = vsel %vm9041, %v9044, %v9047
    %v9049 = vsel %vm9038, nan, %v9048
    %v9050 = vand.u32 2147483647, %v238
    %vm9051 = vcmp.le.f32.partialorder %v9050, 0.7853982
    %vm9052 = vcmp.lt.s32.totalorder %v238, 0
    %v9053 = vand.u32 %v238, 2139095040
    %v9054 = vshrl.u32 %v9053, 23
    %v9055 = vsub.s32 %v9054, 127
    %v9056 = vand.u32 2147483647, %v238
    %v9057 = vand.u32 %v9056, 8388607
    %v9058 = vor.u32 %v9057, 8388608
    %v9059 = vsub.s32 0, %v9058
    %v9060 = vadd.s32 %v9055, 1
    %vm9061 = vcmp.gt.s32.totalorder %v9060, 0
    %v9062 = vsel %vm9061, %v9060, 0
    %v9063 = vshrl.u32 %v9062, 5
    %v9064 = vand.u32 %v9062, 31
    %v9065 = vsub.s32 32, %v9064
    %v9066 = vshrl.u32 683565275, %v9065
    %v9067 = vshll.u32 683565275, %v9064
    %v9068 = vshrl.u32 2475754826, %v9065
    %v9069 = vor.u32 %v9067, %v9068
    %v9070 = vshll.u32 2475754826, %v9064
    %v9071 = vshrl.u32 2131351028, %v9065
    %v9072 = vor.u32 %v9070, %v9071
    %v9073 = vshll.u32 2131351028, %v9064
    %v9074 = vshrl.u32 2102212464, %v9065
    %v9075 = vor.u32 %v9073, %v9074
    %v9076 = vshll.u32 2102212464, %v9064
    %v9077 = vshrl.u32 920167782, %v9065
    %v9078 = vor.u32 %v9076, %v9077
    %v9079 = vshll.u32 920167782, %v9064
    %v9080 = vshrl.u32 1326507024, %v9065
    %v9081 = vor.u32 %v9079, %v9080
    %vm9082 = vcmp.lt.s32.totalorder %v9063, 1
    %vm9083 = vcmp.lt.s32.totalorder %v9063, 2
    %vm9084 = vcmp.lt.s32.totalorder %v9063, 3
    %vm9085 = vcmp.lt.s32.totalorder %v9063, 4
    %v9086 = vsel %vm9082, %v9066, %v9069
    %v9087 = vsel %vm9085, %v9075, 2102212464
    %v9088 = vsel %vm9084, %v9072, %v9087
    %v9089 = vsel %vm9083, %v9086, %v9088
    %v9090 = vsel %vm9082, %v9069, %v9072
    %v9091 = vsel %vm9085, %v9078, 920167782
    %v9092 = vsel %vm9084, %v9075, %v9091
    %v9093 = vsel %vm9083, %v9090, %v9092
    %v9094 = vsel %vm9082, %v9072, %v9075
    %v9095 = vsel %vm9085, %v9081, 1326507024
    %v9096 = vsel %vm9084, %v9078, %v9095
    %v9097 = vsel %vm9083, %v9094, %v9096
    %v9098 = vshll.u32 %v9058, 8
    %v9099 = vand.u32 %v9098, 65535
    %v9100 = vshrl.u32 %v9098, 16
    %v9101 = vand.u32 %v9097, 65535
    %v9102 = vshrl.u32 %v9097, 16
    %v9103 = vmul.u32 %v9099, %v9101
    %v9104 = vmul.u32 %v9099, %v9102
    %v9105 = vmul.u32 %v9100, %v9101
    %v9106 = vmul.u32 %v9100, %v9102
    %v9107 = vshll.u32 %v9104, 16
    %v9108 = vshrl.u32 %v9104, 16
    %v9109 = vshll.u32 %v9105, 16
    %v9110 = vshrl.u32 %v9105, 16
    %vm9111 = vc.u32 %v9103, %v9107
    %v9112 = vsel %vm9111, 1, 0
    %v9113 = vadd.s32 %v9103, %v9107
    %v9114 = vadd.s32 %v9106, %v9112
    %vm9115 = vc.u32 %v9113, %v9109
    %v9116 = vsel %vm9115, 1, 0
    %v9117 = vadd.s32 %v9113, %v9109
    %v9118 = vadd.s32 %v9114, %v9116
    %v9119 = vadd.s32 %v9118, %v9108
    %v9120 = vadd.s32 %v9119, %v9110
    %v9121 = vand.u32 %v9098, 65535
    %v9122 = vshrl.u32 %v9098, 16
    %v9123 = vand.u32 %v9093, 65535
    %v9124 = vshrl.u32 %v9093, 16
    %v9125 = vmul.u32 %v9121, %v9123
    %v9126 = vmul.u32 %v9121, %v9124
    %v9127 = vmul.u32 %v9122, %v9123
    %v9128 = vmul.u32 %v9122, %v9124
    %v9129 = vshll.u32 %v9126, 16
    %v9130 = vshrl.u32 %v9126, 16
    %v9131 = vshll.u32 %v9127, 16
    %v9132 = vshrl.u32 %v9127, 16
    %vm9133 = vc.u32 %v9125, %v9129
    %v9134 = vsel %vm9133, 1, 0
    %v9135 = vadd.s32 %v9125, %v9129
    %v9136 = vadd.s32 %v9128, %v9134
    %vm9137 = vc.u32 %v9135, %v9131
    %v9138 = vsel %vm9137, 1, 0
    %v9139 = vadd.s32 %v9135, %v9131
    %v9140 = vadd.s32 %v9136, %v9138
    %v9141 = vadd.s32 %v9140, %v9130
    %v9142 = vadd.s32 %v9141, %v9132
    %v9143 = vmul.u32 %v9098, %v9089
    %v9144 = vadd.s32 %v9120, %v9139
    %vm9145 = vc.u32 %v9120, %v9139
    %v9146 = vadd.s32 %v9142, 1
    %v9147 = vsel %vm9145, %v9146, %v9142
    %v9148 = vadd.s32 %v9143, %v9147
    %v9149 = vadd.s32 %v9148, 536870912
    %v9150 = vshrl.u32 %v9149, 30
    %v9151 = vshll.u32 %v9150, 30
    %v9152 = vsub.s32 %v9148, %v9151
    %vm9153 = vcmp.lt.s32.totalorder %v9152, 0
    %v9154 = vsub.s32 0, %v9152
    %v9155 = vsel %vm9153, %v9154, %v9152
    %v9156 = vclz %v9155
    %v9157 = vsub.s32 %v9156, 2
    %vm9158 = vcmp.gt.s32.totalorder 0, %v9157
    %v9159 = vsel %vm9158, 0, %v9157
    %v9160 = vsub.s32 32, %v9159
    %v9161 = vshll.u32 %v9152, %v9159
    %v9162 = vshrl.u32 %v9144, %v9160
    %v9163 = vor.u32 %v9161, %v9162
    %v9164 = vsub.s32 4294967266, %v9159
    %v9165 = vadd.s32 %v9164, 127
    %v9166 = vshll.u32 %v9165, 23
    %v9167 = vor.u32 4788187, %v9166
    %v9168 = vand.u32 2147483647, %v9167
    %v9170 = vcvt.s32.f32 %v9163
    %v9171 = vmul.f32 %v9170, %v9168
    %v9172 = vxor.u32 %v9171, 2147483648
    %v9173 = vsel %vm9052, %v9172, %v9171
    %v9174 = vsub.s32 4, %v9150
    %v9175 = vsel %vm9052, %v9174, %v9150
    %v9176 = vsel %vm9051, %v238, %v9173
    %v9177 = vsel %vm9051, 0, %v9175
    %v9178 = vmul.f32 %v9176, %v9176
    %v9179 = vmul.f32 %v9178, -0.001358992
    %v9180 = vadd.f32 %v9179, 0.041655596
    %v9181 = vmul.f32 %v9178, %v9180
    %v9182 = vadd.f32 %v9181, -0.4999988
    %v9183 = vmul.f32 %v9178, %v9182
    %v9184 = vadd.f32 1.0, %v9183
    %v9185 = vmul.f32 %v9176, %v9176
    %v9186 = vmul.f32 %v9185, -0.00019511016
    %v9187 = vadd.f32 %v9186, 0.008332121
    %v9188 = vmul.f32 %v9185, %v9187
    %v9189 = vadd.f32 %v9188, -0.16666654
    %v9190 = vmul.f32 %v9185, %v9189
    %v9191 = vadd.f32 %v9190, 1.0
    %v9192 = vmul.f32 %v9191, %v9176
    %vm9193 = vweird.f32 %v238
    %v9194 = vadd.s32 %v9177, 3
    %v9195 = vand.u32 %v9194, 3
    %vm9196 = vcmp.lt.s32.totalorder %v9195, 2
    %vm9197 = vcmp.eq.s32.totalorder %v9195, 0
    %v9198 = vxor.u32 %v9192, 2147483648
    %v9199 = vsel %vm9197, %v9184, %v9198
    %vm9200 = vcmp.eq.s32.totalorder %v9195, 2
    %v9201 = vxor.u32 %v9184, 2147483648
    %v9202 = vsel %vm9200, %v9201, %v9192
    %v9203 = vsel %vm9196, %v9199, %v9202
    %v9204 = vsel %vm9193, nan, %v9203
    %v9205 = vand.u32 2147483647, %v239
    %vm9206 = vcmp.le.f32.partialorder %v9205, 0.7853982
    %vm9207 = vcmp.lt.s32.totalorder %v239, 0
    %v9208 = vand.u32 %v239, 2139095040
    %v9209 = vshrl.u32 %v9208, 23
    %v9210 = vsub.s32 %v9209, 127
    %v9211 = vand.u32 2147483647, %v239
    %v9212 = vand.u32 %v9211, 8388607
    %v9213 = vor.u32 %v9212, 8388608
    %v9214 = vsub.s32 0, %v9213
    %v9215 = vadd.s32 %v9210, 1
    %vm9216 = vcmp.gt.s32.totalorder %v9215, 0
    %v9217 = vsel %vm9216, %v9215, 0
    %v9218 = vshrl.u32 %v9217, 5
    %v9219 = vand.u32 %v9217, 31
    %v9220 = vsub.s32 32, %v9219
    %v9221 = vshrl.u32 683565275, %v9220
    %v9222 = vshll.u32 683565275, %v9219
    %v9223 = vshrl.u32 2475754826, %v9220
    %v9224 = vor.u32 %v9222, %v9223
    %v9225 = vshll.u32 2475754826, %v9219
    %v9226 = vshrl.u32 2131351028, %v9220
    %v9227 = vor.u32 %v9225, %v9226
    %v9228 = vshll.u32 2131351028, %v9219
    %v9229 = vshrl.u32 2102212464, %v9220
    %v9230 = vor.u32 %v9228, %v9229
    %v9231 = vshll.u32 2102212464, %v9219
    %v9232 = vshrl.u32 920167782, %v9220
    %v9233 = vor.u32 %v9231, %v9232
    %v9234 = vshll.u32 920167782, %v9219
    %v9235 = vshrl.u32 1326507024, %v9220
    %v9236 = vor.u32 %v9234, %v9235
    %vm9237 = vcmp.lt.s32.totalorder %v9218, 1
    %vm9238 = vcmp.lt.s32.totalorder %v9218, 2
    %vm9239 = vcmp.lt.s32.totalorder %v9218, 3
    %vm9240 = vcmp.lt.s32.totalorder %v9218, 4
    %v9241 = vsel %vm9237, %v9221, %v9224
    %v9242 = vsel %vm9240, %v9230, 2102212464
    %v9243 = vsel %vm9239, %v9227, %v9242
    %v9244 = vsel %vm9238, %v9241, %v9243
    %v9245 = vsel %vm9237, %v9224, %v9227
    %v9246 = vsel %vm9240, %v9233, 920167782
    %v9247 = vsel %vm9239, %v9230, %v9246
    %v9248 = vsel %vm9238, %v9245, %v9247
    %v9249 = vsel %vm9237, %v9227, %v9230
    %v9250 = vsel %vm9240, %v9236, 1326507024
    %v9251 = vsel %vm9239, %v9233, %v9250
    %v9252 = vsel %vm9238, %v9249, %v9251
    %v9253 = vshll.u32 %v9213, 8
    %v9254 = vand.u32 %v9253, 65535
    %v9255 = vshrl.u32 %v9253, 16
    %v9256 = vand.u32 %v9252, 65535
    %v9257 = vshrl.u32 %v9252, 16
    %v9258 = vmul.u32 %v9254, %v9256
    %v9259 = vmul.u32 %v9254, %v9257
    %v9260 = vmul.u32 %v9255, %v9256
    %v9261 = vmul.u32 %v9255, %v9257
    %v9262 = vshll.u32 %v9259, 16
    %v9263 = vshrl.u32 %v9259, 16
    %v9264 = vshll.u32 %v9260, 16
    %v9265 = vshrl.u32 %v9260, 16
    %vm9266 = vc.u32 %v9258, %v9262
    %v9267 = vsel %vm9266, 1, 0
    %v9268 = vadd.s32 %v9258, %v9262
    %v9269 = vadd.s32 %v9261, %v9267
    %vm9270 = vc.u32 %v9268, %v9264
    %v9271 = vsel %vm9270, 1, 0
    %v9272 = vadd.s32 %v9268, %v9264
    %v9273 = vadd.s32 %v9269, %v9271
    %v9274 = vadd.s32 %v9273, %v9263
    %v9275 = vadd.s32 %v9274, %v9265
    %v9276 = vand.u32 %v9253, 65535
    %v9277 = vshrl.u32 %v9253, 16
    %v9278 = vand.u32 %v9248, 65535
    %v9279 = vshrl.u32 %v9248, 16
    %v9280 = vmul.u32 %v9276, %v9278
    %v9281 = vmul.u32 %v9276, %v9279
    %v9282 = vmul.u32 %v9277, %v9278
    %v9283 = vmul.u32 %v9277, %v9279
    %v9284 = vshll.u32 %v9281, 16
    %v9285 = vshrl.u32 %v9281, 16
    %v9286 = vshll.u32 %v9282, 16
    %v9287 = vshrl.u32 %v9282, 16
    %vm9288 = vc.u32 %v9280, %v9284
    %v9289 = vsel %vm9288, 1, 0
    %v9290 = vadd.s32 %v9280, %v9284
    %v9291 = vadd.s32 %v9283, %v9289
    %vm9292 = vc.u32 %v9290, %v9286
    %v9293 = vsel %vm9292, 1, 0
    %v9294 = vadd.s32 %v9290, %v9286
    %v9295 = vadd.s32 %v9291, %v9293
    %v9296 = vadd.s32 %v9295, %v9285
    %v9297 = vadd.s32 %v9296, %v9287
    %v9298 = vmul.u32 %v9253, %v9244
    %v9299 = vadd.s32 %v9275, %v9294
    %vm9300 = vc.u32 %v9275, %v9294
    %v9301 = vadd.s32 %v9297, 1
    %v9302 = vsel %vm9300, %v9301, %v9297
    %v9303 = vadd.s32 %v9298, %v9302
    %v9304 = vadd.s32 %v9303, 536870912
    %v9305 = vshrl.u32 %v9304, 30
    %v9306 = vshll.u32 %v9305, 30
    %v9307 = vsub.s32 %v9303, %v9306
    %vm9308 = vcmp.lt.s32.totalorder %v9307, 0
    %v9309 = vsub.s32 0, %v9307
    %v9310 = vsel %vm9308, %v9309, %v9307
    %v9311 = vclz %v9310
    %v9312 = vsub.s32 %v9311, 2
    %vm9313 = vcmp.gt.s32.totalorder 0, %v9312
    %v9314 = vsel %vm9313, 0, %v9312
    %v9315 = vsub.s32 32, %v9314
    %v9316 = vshll.u32 %v9307, %v9314
    %v9317 = vshrl.u32 %v9299, %v9315
    %v9318 = vor.u32 %v9316, %v9317
    %v9319 = vsub.s32 4294967266, %v9314
    %v9320 = vadd.s32 %v9319, 127
    %v9321 = vshll.u32 %v9320, 23
    %v9322 = vor.u32 4788187, %v9321
    %v9323 = vand.u32 2147483647, %v9322
    %v9325 = vcvt.s32.f32 %v9318
    %v9326 = vmul.f32 %v9325, %v9323
    %v9327 = vxor.u32 %v9326, 2147483648
    %v9328 = vsel %vm9207, %v9327, %v9326
    %v9329 = vsub.s32 4, %v9305
    %v9330 = vsel %vm9207, %v9329, %v9305
    %v9331 = vsel %vm9206, %v239, %v9328
    %v9332 = vsel %vm9206, 0, %v9330
    %v9333 = vmul.f32 %v9331, %v9331
    %v9334 = vmul.f32 %v9333, -0.001358992
    %v9335 = vadd.f32 %v9334, 0.041655596
    %v9336 = vmul.f32 %v9333, %v9335
    %v9337 = vadd.f32 %v9336, -0.4999988
    %v9338 = vmul.f32 %v9333, %v9337
    %v9339 = vadd.f32 1.0, %v9338
    %v9340 = vmul.f32 %v9331, %v9331
    %v9341 = vmul.f32 %v9340, -0.00019511016
    %v9342 = vadd.f32 %v9341, 0.008332121
    %v9343 = vmul.f32 %v9340, %v9342
    %v9344 = vadd.f32 %v9343, -0.16666654
    %v9345 = vmul.f32 %v9340, %v9344
    %v9346 = vadd.f32 %v9345, 1.0
    %v9347 = vmul.f32 %v9346, %v9331
    %vm9348 = vweird.f32 %v239
    %v9349 = vadd.s32 %v9332, 3
    %v9350 = vand.u32 %v9349, 3
    %vm9351 = vcmp.lt.s32.totalorder %v9350, 2
    %vm9352 = vcmp.eq.s32.totalorder %v9350, 0
    %v9353 = vxor.u32 %v9347, 2147483648
    %v9354 = vsel %vm9352, %v9339, %v9353
    %vm9355 = vcmp.eq.s32.totalorder %v9350, 2
    %v9356 = vxor.u32 %v9339, 2147483648
    %v9357 = vsel %vm9355, %v9356, %v9347
    %v9358 = vsel %vm9351, %v9354, %v9357
    %v9359 = vsel %vm9348, nan, %v9358
    %v9360 = vand.u32 2147483647, %v240
    %vm9361 = vcmp.le.f32.partialorder %v9360, 0.7853982
    %vm9362 = vcmp.lt.s32.totalorder %v240, 0
    %v9363 = vand.u32 %v240, 2139095040
    %v9364 = vshrl.u32 %v9363, 23
    %v9365 = vsub.s32 %v9364, 127
    %v9366 = vand.u32 2147483647, %v240
    %v9367 = vand.u32 %v9366, 8388607
    %v9368 = vor.u32 %v9367, 8388608
    %v9369 = vsub.s32 0, %v9368
    %v9370 = vadd.s32 %v9365, 1
    %vm9371 = vcmp.gt.s32.totalorder %v9370, 0
    %v9372 = vsel %vm9371, %v9370, 0
    %v9373 = vshrl.u32 %v9372, 5
    %v9374 = vand.u32 %v9372, 31
    %v9375 = vsub.s32 32, %v9374
    %v9376 = vshrl.u32 683565275, %v9375
    %v9377 = vshll.u32 683565275, %v9374
    %v9378 = vshrl.u32 2475754826, %v9375
    %v9379 = vor.u32 %v9377, %v9378
    %v9380 = vshll.u32 2475754826, %v9374
    %v9381 = vshrl.u32 2131351028, %v9375
    %v9382 = vor.u32 %v9380, %v9381
    %v9383 = vshll.u32 2131351028, %v9374
    %v9384 = vshrl.u32 2102212464, %v9375
    %v9385 = vor.u32 %v9383, %v9384
    %v9386 = vshll.u32 2102212464, %v9374
    %v9387 = vshrl.u32 920167782, %v9375
    %v9388 = vor.u32 %v9386, %v9387
    %v9389 = vshll.u32 920167782, %v9374
    %v9390 = vshrl.u32 1326507024, %v9375
    %v9391 = vor.u32 %v9389, %v9390
    %vm9392 = vcmp.lt.s32.totalorder %v9373, 1
    %vm9393 = vcmp.lt.s32.totalorder %v9373, 2
    %vm9394 = vcmp.lt.s32.totalorder %v9373, 3
    %vm9395 = vcmp.lt.s32.totalorder %v9373, 4
    %v9396 = vsel %vm9392, %v9376, %v9379
    %v9397 = vsel %vm9395, %v9385, 2102212464
    %v9398 = vsel %vm9394, %v9382, %v9397
    %v9399 = vsel %vm9393, %v9396, %v9398
    %v9400 = vsel %vm9392, %v9379, %v9382
    %v9401 = vsel %vm9395, %v9388, 920167782
    %v9402 = vsel %vm9394, %v9385, %v9401
    %v9403 = vsel %vm9393, %v9400, %v9402
    %v9404 = vsel %vm9392, %v9382, %v9385
    %v9405 = vsel %vm9395, %v9391, 1326507024
    %v9406 = vsel %vm9394, %v9388, %v9405
    %v9407 = vsel %vm9393, %v9404, %v9406
    %v9408 = vshll.u32 %v9368, 8
    %v9409 = vand.u32 %v9408, 65535
    %v9410 = vshrl.u32 %v9408, 16
    %v9411 = vand.u32 %v9407, 65535
    %v9412 = vshrl.u32 %v9407, 16
    %v9413 = vmul.u32 %v9409, %v9411
    %v9414 = vmul.u32 %v9409, %v9412
    %v9415 = vmul.u32 %v9410, %v9411
    %v9416 = vmul.u32 %v9410, %v9412
    %v9417 = vshll.u32 %v9414, 16
    %v9418 = vshrl.u32 %v9414, 16
    %v9419 = vshll.u32 %v9415, 16
    %v9420 = vshrl.u32 %v9415, 16
    %vm9421 = vc.u32 %v9413, %v9417
    %v9422 = vsel %vm9421, 1, 0
    %v9423 = vadd.s32 %v9413, %v9417
    %v9424 = vadd.s32 %v9416, %v9422
    %vm9425 = vc.u32 %v9423, %v9419
    %v9426 = vsel %vm9425, 1, 0
    %v9427 = vadd.s32 %v9423, %v9419
    %v9428 = vadd.s32 %v9424, %v9426
    %v9429 = vadd.s32 %v9428, %v9418
    %v9430 = vadd.s32 %v9429, %v9420
    %v9431 = vand.u32 %v9408, 65535
    %v9432 = vshrl.u32 %v9408, 16
    %v9433 = vand.u32 %v9403, 65535
    %v9434 = vshrl.u32 %v9403, 16
    %v9435 = vmul.u32 %v9431, %v9433
    %v9436 = vmul.u32 %v9431, %v9434
    %v9437 = vmul.u32 %v9432, %v9433
    %v9438 = vmul.u32 %v9432, %v9434
    %v9439 = vshll.u32 %v9436, 16
    %v9440 = vshrl.u32 %v9436, 16
    %v9441 = vshll.u32 %v9437, 16
    %v9442 = vshrl.u32 %v9437, 16
    %vm9443 = vc.u32 %v9435, %v9439
    %v9444 = vsel %vm9443, 1, 0
    %v9445 = vadd.s32 %v9435, %v9439
    %v9446 = vadd.s32 %v9438, %v9444
    %vm9447 = vc.u32 %v9445, %v9441
    %v9448 = vsel %vm9447, 1, 0
    %v9449 = vadd.s32 %v9445, %v9441
    %v9450 = vadd.s32 %v9446, %v9448
    %v9451 = vadd.s32 %v9450, %v9440
    %v9452 = vadd.s32 %v9451, %v9442
    %v9453 = vmul.u32 %v9408, %v9399
    %v9454 = vadd.s32 %v9430, %v9449
    %vm9455 = vc.u32 %v9430, %v9449
    %v9456 = vadd.s32 %v9452, 1
    %v9457 = vsel %vm9455, %v9456, %v9452
    %v9458 = vadd.s32 %v9453, %v9457
    %v9459 = vadd.s32 %v9458, 536870912
    %v9460 = vshrl.u32 %v9459, 30
    %v9461 = vshll.u32 %v9460, 30
    %v9462 = vsub.s32 %v9458, %v9461
    %vm9463 = vcmp.lt.s32.totalorder %v9462, 0
    %v9464 = vsub.s32 0, %v9462
    %v9465 = vsel %vm9463, %v9464, %v9462
    %v9466 = vclz %v9465
    %v9467 = vsub.s32 %v9466, 2
    %vm9468 = vcmp.gt.s32.totalorder 0, %v9467
    %v9469 = vsel %vm9468, 0, %v9467
    %v9470 = vsub.s32 32, %v9469
    %v9471 = vshll.u32 %v9462, %v9469
    %v9472 = vshrl.u32 %v9454, %v9470
    %v9473 = vor.u32 %v9471, %v9472
    %v9474 = vsub.s32 4294967266, %v9469
    %v9475 = vadd.s32 %v9474, 127
    %v9476 = vshll.u32 %v9475, 23
    %v9477 = vor.u32 4788187, %v9476
    %v9478 = vand.u32 2147483647, %v9477
    %v9480 = vcvt.s32.f32 %v9473
    %v9481 = vmul.f32 %v9480, %v9478
    %v9482 = vxor.u32 %v9481, 2147483648
    %v9483 = vsel %vm9362, %v9482, %v9481
    %v9484 = vsub.s32 4, %v9460
    %v9485 = vsel %vm9362, %v9484, %v9460
    %v9486 = vsel %vm9361, %v240, %v9483
    %v9487 = vsel %vm9361, 0, %v9485
    %v9488 = vmul.f32 %v9486, %v9486
    %v9489 = vmul.f32 %v9488, -0.001358992
    %v9490 = vadd.f32 %v9489, 0.041655596
    %v9491 = vmul.f32 %v9488, %v9490
    %v9492 = vadd.f32 %v9491, -0.4999988
    %v9493 = vmul.f32 %v9488, %v9492
    %v9494 = vadd.f32 1.0, %v9493
    %v9495 = vmul.f32 %v9486, %v9486
    %v9496 = vmul.f32 %v9495, -0.00019511016
    %v9497 = vadd.f32 %v9496, 0.008332121
    %v9498 = vmul.f32 %v9495, %v9497
    %v9499 = vadd.f32 %v9498, -0.16666654
    %v9500 = vmul.f32 %v9495, %v9499
    %v9501 = vadd.f32 %v9500, 1.0
    %v9502 = vmul.f32 %v9501, %v9486
    %vm9503 = vweird.f32 %v240
    %v9504 = vadd.s32 %v9487, 3
    %v9505 = vand.u32 %v9504, 3
    %vm9506 = vcmp.lt.s32.totalorder %v9505, 2
    %vm9507 = vcmp.eq.s32.totalorder %v9505, 0
    %v9508 = vxor.u32 %v9502, 2147483648
    %v9509 = vsel %vm9507, %v9494, %v9508
    %vm9510 = vcmp.eq.s32.totalorder %v9505, 2
    %v9511 = vxor.u32 %v9494, 2147483648
    %v9512 = vsel %vm9510, %v9511, %v9502
    %v9513 = vsel %vm9506, %v9509, %v9512
    %v9514 = vsel %vm9503, nan, %v9513
    %v9515 = vand.u32 2147483647, %v241
    %vm9516 = vcmp.le.f32.partialorder %v9515, 0.7853982
    %vm9517 = vcmp.lt.s32.totalorder %v241, 0
    %v9518 = vand.u32 %v241, 2139095040
    %v9519 = vshrl.u32 %v9518, 23
    %v9520 = vsub.s32 %v9519, 127
    %v9521 = vand.u32 2147483647, %v241
    %v9522 = vand.u32 %v9521, 8388607
    %v9523 = vor.u32 %v9522, 8388608
    %v9524 = vsub.s32 0, %v9523
    %v9525 = vadd.s32 %v9520, 1
    %vm9526 = vcmp.gt.s32.totalorder %v9525, 0
    %v9527 = vsel %vm9526, %v9525, 0
    %v9528 = vshrl.u32 %v9527, 5
    %v9529 = vand.u32 %v9527, 31
    %v9530 = vsub.s32 32, %v9529
    %v9531 = vshrl.u32 683565275, %v9530
    %v9532 = vshll.u32 683565275, %v9529
    %v9533 = vshrl.u32 2475754826, %v9530
    %v9534 = vor.u32 %v9532, %v9533
    %v9535 = vshll.u32 2475754826, %v9529
    %v9536 = vshrl.u32 2131351028, %v9530
    %v9537 = vor.u32 %v9535, %v9536
    %v9538 = vshll.u32 2131351028, %v9529
    %v9539 = vshrl.u32 2102212464, %v9530
    %v9540 = vor.u32 %v9538, %v9539
    %v9541 = vshll.u32 2102212464, %v9529
    %v9542 = vshrl.u32 920167782, %v9530
    %v9543 = vor.u32 %v9541, %v9542
    %v9544 = vshll.u32 920167782, %v9529
    %v9545 = vshrl.u32 1326507024, %v9530
    %v9546 = vor.u32 %v9544, %v9545
    %vm9547 = vcmp.lt.s32.totalorder %v9528, 1
    %vm9548 = vcmp.lt.s32.totalorder %v9528, 2
    %vm9549 = vcmp.lt.s32.totalorder %v9528, 3
    %vm9550 = vcmp.lt.s32.totalorder %v9528, 4
    %v9551 = vsel %vm9547, %v9531, %v9534
    %v9552 = vsel %vm9550, %v9540, 2102212464
    %v9553 = vsel %vm9549, %v9537, %v9552
    %v9554 = vsel %vm9548, %v9551, %v9553
    %v9555 = vsel %vm9547, %v9534, %v9537
    %v9556 = vsel %vm9550, %v9543, 920167782
    %v9557 = vsel %vm9549, %v9540, %v9556
    %v9558 = vsel %vm9548, %v9555, %v9557
    %v9559 = vsel %vm9547, %v9537, %v9540
    %v9560 = vsel %vm9550, %v9546, 1326507024
    %v9561 = vsel %vm9549, %v9543, %v9560
    %v9562 = vsel %vm9548, %v9559, %v9561
    %v9563 = vshll.u32 %v9523, 8
    %v9564 = vand.u32 %v9563, 65535
    %v9565 = vshrl.u32 %v9563, 16
    %v9566 = vand.u32 %v9562, 65535
    %v9567 = vshrl.u32 %v9562, 16
    %v9568 = vmul.u32 %v9564, %v9566
    %v9569 = vmul.u32 %v9564, %v9567
    %v9570 = vmul.u32 %v9565, %v9566
    %v9571 = vmul.u32 %v9565, %v9567
    %v9572 = vshll.u32 %v9569, 16
    %v9573 = vshrl.u32 %v9569, 16
    %v9574 = vshll.u32 %v9570, 16
    %v9575 = vshrl.u32 %v9570, 16
    %vm9576 = vc.u32 %v9568, %v9572
    %v9577 = vsel %vm9576, 1, 0
    %v9578 = vadd.s32 %v9568, %v9572
    %v9579 = vadd.s32 %v9571, %v9577
    %vm9580 = vc.u32 %v9578, %v9574
    %v9581 = vsel %vm9580, 1, 0
    %v9582 = vadd.s32 %v9578, %v9574
    %v9583 = vadd.s32 %v9579, %v9581
    %v9584 = vadd.s32 %v9583, %v9573
    %v9585 = vadd.s32 %v9584, %v9575
    %v9586 = vand.u32 %v9563, 65535
    %v9587 = vshrl.u32 %v9563, 16
    %v9588 = vand.u32 %v9558, 65535
    %v9589 = vshrl.u32 %v9558, 16
    %v9590 = vmul.u32 %v9586, %v9588
    %v9591 = vmul.u32 %v9586, %v9589
    %v9592 = vmul.u32 %v9587, %v9588
    %v9593 = vmul.u32 %v9587, %v9589
    %v9594 = vshll.u32 %v9591, 16
    %v9595 = vshrl.u32 %v9591, 16
    %v9596 = vshll.u32 %v9592, 16
    %v9597 = vshrl.u32 %v9592, 16
    %vm9598 = vc.u32 %v9590, %v9594
    %v9599 = vsel %vm9598, 1, 0
    %v9600 = vadd.s32 %v9590, %v9594
    %v9601 = vadd.s32 %v9593, %v9599
    %vm9602 = vc.u32 %v9600, %v9596
    %v9603 = vsel %vm9602, 1, 0
    %v9604 = vadd.s32 %v9600, %v9596
    %v9605 = vadd.s32 %v9601, %v9603
    %v9606 = vadd.s32 %v9605, %v9595
    %v9607 = vadd.s32 %v9606, %v9597
    %v9608 = vmul.u32 %v9563, %v9554
    %v9609 = vadd.s32 %v9585, %v9604
    %vm9610 = vc.u32 %v9585, %v9604
    %v9611 = vadd.s32 %v9607, 1
    %v9612 = vsel %vm9610, %v9611, %v9607
    %v9613 = vadd.s32 %v9608, %v9612
    %v9614 = vadd.s32 %v9613, 536870912
    %v9615 = vshrl.u32 %v9614, 30
    %v9616 = vshll.u32 %v9615, 30
    %v9617 = vsub.s32 %v9613, %v9616
    %vm9618 = vcmp.lt.s32.totalorder %v9617, 0
    %v9619 = vsub.s32 0, %v9617
    %v9620 = vsel %vm9618, %v9619, %v9617
    %v9621 = vclz %v9620
    %v9622 = vsub.s32 %v9621, 2
    %vm9623 = vcmp.gt.s32.totalorder 0, %v9622
    %v9624 = vsel %vm9623, 0, %v9622
    %v9625 = vsub.s32 32, %v9624
    %v9626 = vshll.u32 %v9617, %v9624
    %v9627 = vshrl.u32 %v9609, %v9625
    %v9628 = vor.u32 %v9626, %v9627
    %v9629 = vsub.s32 4294967266, %v9624
    %v9630 = vadd.s32 %v9629, 127
    %v9631 = vshll.u32 %v9630, 23
    %v9632 = vor.u32 4788187, %v9631
    %v9633 = vand.u32 2147483647, %v9632
    %v9635 = vcvt.s32.f32 %v9628
    %v9636 = vmul.f32 %v9635, %v9633
    %v9637 = vxor.u32 %v9636, 2147483648
    %v9638 = vsel %vm9517, %v9637, %v9636
    %v9639 = vsub.s32 4, %v9615
    %v9640 = vsel %vm9517, %v9639, %v9615
    %v9641 = vsel %vm9516, %v241, %v9638
    %v9642 = vsel %vm9516, 0, %v9640
    %v9643 = vmul.f32 %v9641, %v9641
    %v9644 = vmul.f32 %v9643, -0.001358992
    %v9645 = vadd.f32 %v9644, 0.041655596
    %v9646 = vmul.f32 %v9643, %v9645
    %v9647 = vadd.f32 %v9646, -0.4999988
    %v9648 = vmul.f32 %v9643, %v9647
    %v9649 = vadd.f32 1.0, %v9648
    %v9650 = vmul.f32 %v9641, %v9641
    %v9651 = vmul.f32 %v9650, -0.00019511016
    %v9652 = vadd.f32 %v9651, 0.008332121
    %v9653 = vmul.f32 %v9650, %v9652
    %v9654 = vadd.f32 %v9653, -0.16666654
    %v9655 = vmul.f32 %v9650, %v9654
    %v9656 = vadd.f32 %v9655, 1.0
    %v9657 = vmul.f32 %v9656, %v9641
    %vm9658 = vweird.f32 %v241
    %v9659 = vadd.s32 %v9642, 3
    %v9660 = vand.u32 %v9659, 3
    %vm9661 = vcmp.lt.s32.totalorder %v9660, 2
    %vm9662 = vcmp.eq.s32.totalorder %v9660, 0
    %v9663 = vxor.u32 %v9657, 2147483648
    %v9664 = vsel %vm9662, %v9649, %v9663
    %vm9665 = vcmp.eq.s32.totalorder %v9660, 2
    %v9666 = vxor.u32 %v9649, 2147483648
    %v9667 = vsel %vm9665, %v9666, %v9657
    %v9668 = vsel %vm9661, %v9664, %v9667
    %v9669 = vsel %vm9658, nan, %v9668
    %v9670 = vand.u32 2147483647, %v242
    %vm9671 = vcmp.le.f32.partialorder %v9670, 0.7853982
    %vm9672 = vcmp.lt.s32.totalorder %v242, 0
    %v9673 = vand.u32 %v242, 2139095040
    %v9674 = vshrl.u32 %v9673, 23
    %v9675 = vsub.s32 %v9674, 127
    %v9676 = vand.u32 2147483647, %v242
    %v9677 = vand.u32 %v9676, 8388607
    %v9678 = vor.u32 %v9677, 8388608
    %v9679 = vsub.s32 0, %v9678
    %v9680 = vadd.s32 %v9675, 1
    %vm9681 = vcmp.gt.s32.totalorder %v9680, 0
    %v9682 = vsel %vm9681, %v9680, 0
    %v9683 = vshrl.u32 %v9682, 5
    %v9684 = vand.u32 %v9682, 31
    %v9685 = vsub.s32 32, %v9684
    %v9686 = vshrl.u32 683565275, %v9685
    %v9687 = vshll.u32 683565275, %v9684
    %v9688 = vshrl.u32 2475754826, %v9685
    %v9689 = vor.u32 %v9687, %v9688
    %v9690 = vshll.u32 2475754826, %v9684
    %v9691 = vshrl.u32 2131351028, %v9685
    %v9692 = vor.u32 %v9690, %v9691
    %v9693 = vshll.u32 2131351028, %v9684
    %v9694 = vshrl.u32 2102212464, %v9685
    %v9695 = vor.u32 %v9693, %v9694
    %v9696 = vshll.u32 2102212464, %v9684
    %v9697 = vshrl.u32 920167782, %v9685
    %v9698 = vor.u32 %v9696, %v9697
    %v9699 = vshll.u32 920167782, %v9684
    %v9700 = vshrl.u32 1326507024, %v9685
    %v9701 = vor.u32 %v9699, %v9700
    %vm9702 = vcmp.lt.s32.totalorder %v9683, 1
    %vm9703 = vcmp.lt.s32.totalorder %v9683, 2
    %vm9704 = vcmp.lt.s32.totalorder %v9683, 3
    %vm9705 = vcmp.lt.s32.totalorder %v9683, 4
    %v9706 = vsel %vm9702, %v9686, %v9689
    %v9707 = vsel %vm9705, %v9695, 2102212464
    %v9708 = vsel %vm9704, %v9692, %v9707
    %v9709 = vsel %vm9703, %v9706, %v9708
    %v9710 = vsel %vm9702, %v9689, %v9692
    %v9711 = vsel %vm9705, %v9698, 920167782
    %v9712 = vsel %vm9704, %v9695, %v9711
    %v9713 = vsel %vm9703, %v9710, %v9712
    %v9714 = vsel %vm9702, %v9692, %v9695
    %v9715 = vsel %vm9705, %v9701, 1326507024
    %v9716 = vsel %vm9704, %v9698, %v9715
    %v9717 = vsel %vm9703, %v9714, %v9716
    %v9718 = vshll.u32 %v9678, 8
    %v9719 = vand.u32 %v9718, 65535
    %v9720 = vshrl.u32 %v9718, 16
    %v9721 = vand.u32 %v9717, 65535
    %v9722 = vshrl.u32 %v9717, 16
    %v9723 = vmul.u32 %v9719, %v9721
    %v9724 = vmul.u32 %v9719, %v9722
    %v9725 = vmul.u32 %v9720, %v9721
    %v9726 = vmul.u32 %v9720, %v9722
    %v9727 = vshll.u32 %v9724, 16
    %v9728 = vshrl.u32 %v9724, 16
    %v9729 = vshll.u32 %v9725, 16
    %v9730 = vshrl.u32 %v9725, 16
    %vm9731 = vc.u32 %v9723, %v9727
    %v9732 = vsel %vm9731, 1, 0
    %v9733 = vadd.s32 %v9723, %v9727
    %v9734 = vadd.s32 %v9726, %v9732
    %vm9735 = vc.u32 %v9733, %v9729
    %v9736 = vsel %vm9735, 1, 0
    %v9737 = vadd.s32 %v9733, %v9729
    %v9738 = vadd.s32 %v9734, %v9736
    %v9739 = vadd.s32 %v9738, %v9728
    %v9740 = vadd.s32 %v9739, %v9730
    %v9741 = vand.u32 %v9718, 65535
    %v9742 = vshrl.u32 %v9718, 16
    %v9743 = vand.u32 %v9713, 65535
    %v9744 = vshrl.u32 %v9713, 16
    %v9745 = vmul.u32 %v9741, %v9743
    %v9746 = vmul.u32 %v9741, %v9744
    %v9747 = vmul.u32 %v9742, %v9743
    %v9748 = vmul.u32 %v9742, %v9744
    %v9749 = vshll.u32 %v9746, 16
    %v9750 = vshrl.u32 %v9746, 16
    %v9751 = vshll.u32 %v9747, 16
    %v9752 = vshrl.u32 %v9747, 16
    %vm9753 = vc.u32 %v9745, %v9749
    %v9754 = vsel %vm9753, 1, 0
    %v9755 = vadd.s32 %v9745, %v9749
    %v9756 = vadd.s32 %v9748, %v9754
    %vm9757 = vc.u32 %v9755, %v9751
    %v9758 = vsel %vm9757, 1, 0
    %v9759 = vadd.s32 %v9755, %v9751
    %v9760 = vadd.s32 %v9756, %v9758
    %v9761 = vadd.s32 %v9760, %v9750
    %v9762 = vadd.s32 %v9761, %v9752
    %v9763 = vmul.u32 %v9718, %v9709
    %v9764 = vadd.s32 %v9740, %v9759
    %vm9765 = vc.u32 %v9740, %v9759
    %v9766 = vadd.s32 %v9762, 1
    %v9767 = vsel %vm9765, %v9766, %v9762
    %v9768 = vadd.s32 %v9763, %v9767
    %v9769 = vadd.s32 %v9768, 536870912
    %v9770 = vshrl.u32 %v9769, 30
    %v9771 = vshll.u32 %v9770, 30
    %v9772 = vsub.s32 %v9768, %v9771
    %vm9773 = vcmp.lt.s32.totalorder %v9772, 0
    %v9774 = vsub.s32 0, %v9772
    %v9775 = vsel %vm9773, %v9774, %v9772
    %v9776 = vclz %v9775
    %v9777 = vsub.s32 %v9776, 2
    %vm9778 = vcmp.gt.s32.totalorder 0, %v9777
    %v9779 = vsel %vm9778, 0, %v9777
    %v9780 = vsub.s32 32, %v9779
    %v9781 = vshll.u32 %v9772, %v9779
    %v9782 = vshrl.u32 %v9764, %v9780
    %v9783 = vor.u32 %v9781, %v9782
    %v9784 = vsub.s32 4294967266, %v9779
    %v9785 = vadd.s32 %v9784, 127
    %v9786 = vshll.u32 %v9785, 23
    %v9787 = vor.u32 4788187, %v9786
    %v9788 = vand.u32 2147483647, %v9787
    %v9790 = vcvt.s32.f32 %v9783
    %v9791 = vmul.f32 %v9790, %v9788
    %v9792 = vxor.u32 %v9791, 2147483648
    %v9793 = vsel %vm9672, %v9792, %v9791
    %v9794 = vsub.s32 4, %v9770
    %v9795 = vsel %vm9672, %v9794, %v9770
    %v9796 = vsel %vm9671, %v242, %v9793
    %v9797 = vsel %vm9671, 0, %v9795
    %v9798 = vmul.f32 %v9796, %v9796
    %v9799 = vmul.f32 %v9798, -0.001358992
    %v9800 = vadd.f32 %v9799, 0.041655596
    %v9801 = vmul.f32 %v9798, %v9800
    %v9802 = vadd.f32 %v9801, -0.4999988
    %v9803 = vmul.f32 %v9798, %v9802
    %v9804 = vadd.f32 1.0, %v9803
    %v9805 = vmul.f32 %v9796, %v9796
    %v9806 = vmul.f32 %v9805, -0.00019511016
    %v9807 = vadd.f32 %v9806, 0.008332121
    %v9808 = vmul.f32 %v9805, %v9807
    %v9809 = vadd.f32 %v9808, -0.16666654
    %v9810 = vmul.f32 %v9805, %v9809
    %v9811 = vadd.f32 %v9810, 1.0
    %v9812 = vmul.f32 %v9811, %v9796
    %vm9813 = vweird.f32 %v242
    %v9814 = vadd.s32 %v9797, 3
    %v9815 = vand.u32 %v9814, 3
    %vm9816 = vcmp.lt.s32.totalorder %v9815, 2
    %vm9817 = vcmp.eq.s32.totalorder %v9815, 0
    %v9818 = vxor.u32 %v9812, 2147483648
    %v9819 = vsel %vm9817, %v9804, %v9818
    %vm9820 = vcmp.eq.s32.totalorder %v9815, 2
    %v9821 = vxor.u32 %v9804, 2147483648
    %v9822 = vsel %vm9820, %v9821, %v9812
    %v9823 = vsel %vm9816, %v9819, %v9822
    %v9824 = vsel %vm9813, nan, %v9823
    %v9825 = vand.u32 2147483647, %v243
    %vm9826 = vcmp.le.f32.partialorder %v9825, 0.7853982
    %vm9827 = vcmp.lt.s32.totalorder %v243, 0
    %v9828 = vand.u32 %v243, 2139095040
    %v9829 = vshrl.u32 %v9828, 23
    %v9830 = vsub.s32 %v9829, 127
    %v9831 = vand.u32 2147483647, %v243
    %v9832 = vand.u32 %v9831, 8388607
    %v9833 = vor.u32 %v9832, 8388608
    %v9834 = vsub.s32 0, %v9833
    %v9835 = vadd.s32 %v9830, 1
    %vm9836 = vcmp.gt.s32.totalorder %v9835, 0
    %v9837 = vsel %vm9836, %v9835, 0
    %v9838 = vshrl.u32 %v9837, 5
    %v9839 = vand.u32 %v9837, 31
    %v9840 = vsub.s32 32, %v9839
    %v9841 = vshrl.u32 683565275, %v9840
    %v9842 = vshll.u32 683565275, %v9839
    %v9843 = vshrl.u32 2475754826, %v9840
    %v9844 = vor.u32 %v9842, %v9843
    %v9845 = vshll.u32 2475754826, %v9839
    %v9846 = vshrl.u32 2131351028, %v9840
    %v9847 = vor.u32 %v9845, %v9846
    %v9848 = vshll.u32 2131351028, %v9839
    %v9849 = vshrl.u32 2102212464, %v9840
    %v9850 = vor.u32 %v9848, %v9849
    %v9851 = vshll.u32 2102212464, %v9839
    %v9852 = vshrl.u32 920167782, %v9840
    %v9853 = vor.u32 %v9851, %v9852
    %v9854 = vshll.u32 920167782, %v9839
    %v9855 = vshrl.u32 1326507024, %v9840
    %v9856 = vor.u32 %v9854, %v9855
    %vm9857 = vcmp.lt.s32.totalorder %v9838, 1
    %vm9858 = vcmp.lt.s32.totalorder %v9838, 2
    %vm9859 = vcmp.lt.s32.totalorder %v9838, 3
    %vm9860 = vcmp.lt.s32.totalorder %v9838, 4
    %v9861 = vsel %vm9857, %v9841, %v9844
    %v9862 = vsel %vm9860, %v9850, 2102212464
    %v9863 = vsel %vm9859, %v9847, %v9862
    %v9864 = vsel %vm9858, %v9861, %v9863
    %v9865 = vsel %vm9857, %v9844, %v9847
    %v9866 = vsel %vm9860, %v9853, 920167782
    %v9867 = vsel %vm9859, %v9850, %v9866
    %v9868 = vsel %vm9858, %v9865, %v9867
    %v9869 = vsel %vm9857, %v9847, %v9850
    %v9870 = vsel %vm9860, %v9856, 1326507024
    %v9871 = vsel %vm9859, %v9853, %v9870
    %v9872 = vsel %vm9858, %v9869, %v9871
    %v9873 = vshll.u32 %v9833, 8
    %v9874 = vand.u32 %v9873, 65535
    %v9875 = vshrl.u32 %v9873, 16
    %v9876 = vand.u32 %v9872, 65535
    %v9877 = vshrl.u32 %v9872, 16
    %v9878 = vmul.u32 %v9874, %v9876
    %v9879 = vmul.u32 %v9874, %v9877
    %v9880 = vmul.u32 %v9875, %v9876
    %v9881 = vmul.u32 %v9875, %v9877
    %v9882 = vshll.u32 %v9879, 16
    %v9883 = vshrl.u32 %v9879, 16
    %v9884 = vshll.u32 %v9880, 16
    %v9885 = vshrl.u32 %v9880, 16
    %vm9886 = vc.u32 %v9878, %v9882
    %v9887 = vsel %vm9886, 1, 0
    %v9888 = vadd.s32 %v9878, %v9882
    %v9889 = vadd.s32 %v9881, %v9887
    %vm9890 = vc.u32 %v9888, %v9884
    %v9891 = vsel %vm9890, 1, 0
    %v9892 = vadd.s32 %v9888, %v9884
    %v9893 = vadd.s32 %v9889, %v9891
    %v9894 = vadd.s32 %v9893, %v9883
    %v9895 = vadd.s32 %v9894, %v9885
    %v9896 = vand.u32 %v9873, 65535
    %v9897 = vshrl.u32 %v9873, 16
    %v9898 = vand.u32 %v9868, 65535
    %v9899 = vshrl.u32 %v9868, 16
    %v9900 = vmul.u32 %v9896, %v9898
    %v9901 = vmul.u32 %v9896, %v9899
    %v9902 = vmul.u32 %v9897, %v9898
    %v9903 = vmul.u32 %v9897, %v9899
    %v9904 = vshll.u32 %v9901, 16
    %v9905 = vshrl.u32 %v9901, 16
    %v9906 = vshll.u32 %v9902, 16
    %v9907 = vshrl.u32 %v9902, 16
    %vm9908 = vc.u32 %v9900, %v9904
    %v9909 = vsel %vm9908, 1, 0
    %v9910 = vadd.s32 %v9900, %v9904
    %v9911 = vadd.s32 %v9903, %v9909
    %vm9912 = vc.u32 %v9910, %v9906
    %v9913 = vsel %vm9912, 1, 0
    %v9914 = vadd.s32 %v9910, %v9906
    %v9915 = vadd.s32 %v9911, %v9913
    %v9916 = vadd.s32 %v9915, %v9905
    %v9917 = vadd.s32 %v9916, %v9907
    %v9918 = vmul.u32 %v9873, %v9864
    %v9919 = vadd.s32 %v9895, %v9914
    %vm9920 = vc.u32 %v9895, %v9914
    %v9921 = vadd.s32 %v9917, 1
    %v9922 = vsel %vm9920, %v9921, %v9917
    %v9923 = vadd.s32 %v9918, %v9922
    %v9924 = vadd.s32 %v9923, 536870912
    %v9925 = vshrl.u32 %v9924, 30
    %v9926 = vshll.u32 %v9925, 30
    %v9927 = vsub.s32 %v9923, %v9926
    %vm9928 = vcmp.lt.s32.totalorder %v9927, 0
    %v9929 = vsub.s32 0, %v9927
    %v9930 = vsel %vm9928, %v9929, %v9927
    %v9931 = vclz %v9930
    %v9932 = vsub.s32 %v9931, 2
    %vm9933 = vcmp.gt.s32.totalorder 0, %v9932
    %v9934 = vsel %vm9933, 0, %v9932
    %v9935 = vsub.s32 32, %v9934
    %v9936 = vshll.u32 %v9927, %v9934
    %v9937 = vshrl.u32 %v9919, %v9935
    %v9938 = vor.u32 %v9936, %v9937
    %v9939 = vsub.s32 4294967266, %v9934
    %v9940 = vadd.s32 %v9939, 127
    %v9941 = vshll.u32 %v9940, 23
    %v9942 = vor.u32 4788187, %v9941
    %v9943 = vand.u32 2147483647, %v9942
    %v9945 = vcvt.s32.f32 %v9938
    %v9946 = vmul.f32 %v9945, %v9943
    %v9947 = vxor.u32 %v9946, 2147483648
    %v9948 = vsel %vm9827, %v9947, %v9946
    %v9949 = vsub.s32 4, %v9925
    %v9950 = vsel %vm9827, %v9949, %v9925
    %v9951 = vsel %vm9826, %v243, %v9948
    %v9952 = vsel %vm9826, 0, %v9950
    %v9953 = vmul.f32 %v9951, %v9951
    %v9954 = vmul.f32 %v9953, -0.001358992
    %v9955 = vadd.f32 %v9954, 0.041655596
    %v9956 = vmul.f32 %v9953, %v9955
    %v9957 = vadd.f32 %v9956, -0.4999988
    %v9958 = vmul.f32 %v9953, %v9957
    %v9959 = vadd.f32 1.0, %v9958
    %v9960 = vmul.f32 %v9951, %v9951
    %v9961 = vmul.f32 %v9960, -0.00019511016
    %v9962 = vadd.f32 %v9961, 0.008332121
    %v9963 = vmul.f32 %v9960, %v9962
    %v9964 = vadd.f32 %v9963, -0.16666654
    %v9965 = vmul.f32 %v9960, %v9964
    %v9966 = vadd.f32 %v9965, 1.0
    %v9967 = vmul.f32 %v9966, %v9951
    %vm9968 = vweird.f32 %v243
    %v9969 = vadd.s32 %v9952, 3
    %v9970 = vand.u32 %v9969, 3
    %vm9971 = vcmp.lt.s32.totalorder %v9970, 2
    %vm9972 = vcmp.eq.s32.totalorder %v9970, 0
    %v9973 = vxor.u32 %v9967, 2147483648
    %v9974 = vsel %vm9972, %v9959, %v9973
    %vm9975 = vcmp.eq.s32.totalorder %v9970, 2
    %v9976 = vxor.u32 %v9959, 2147483648
    %v9977 = vsel %vm9975, %v9976, %v9967
    %v9978 = vsel %vm9971, %v9974, %v9977
    %v9979 = vsel %vm9968, nan, %v9978
    %v9980 = vand.u32 2147483647, %v244
    %vm9981 = vcmp.le.f32.partialorder %v9980, 0.7853982
    %vm9982 = vcmp.lt.s32.totalorder %v244, 0
    %v9983 = vand.u32 %v244, 2139095040
    %v9984 = vshrl.u32 %v9983, 23
    %v9985 = vsub.s32 %v9984, 127
    %v9986 = vand.u32 2147483647, %v244
    %v9987 = vand.u32 %v9986, 8388607
    %v9988 = vor.u32 %v9987, 8388608
    %v9989 = vsub.s32 0, %v9988
    %v9990 = vadd.s32 %v9985, 1
    %vm9991 = vcmp.gt.s32.totalorder %v9990, 0
    %v9992 = vsel %vm9991, %v9990, 0
    %v9993 = vshrl.u32 %v9992, 5
    %v9994 = vand.u32 %v9992, 31
    %v9995 = vsub.s32 32, %v9994
    %v9996 = vshrl.u32 683565275, %v9995
    %v9997 = vshll.u32 683565275, %v9994
    %v9998 = vshrl.u32 2475754826, %v9995
    %v9999 = vor.u32 %v9997, %v9998
    %v10000 = vshll.u32 2475754826, %v9994
    %v10001 = vshrl.u32 2131351028, %v9995
    %v10002 = vor.u32 %v10000, %v10001
    %v10003 = vshll.u32 2131351028, %v9994
    %v10004 = vshrl.u32 2102212464, %v9995
    %v10005 = vor.u32 %v10003, %v10004
    %v10006 = vshll.u32 2102212464, %v9994
    %v10007 = vshrl.u32 920167782, %v9995
    %v10008 = vor.u32 %v10006, %v10007
    %v10009 = vshll.u32 920167782, %v9994
    %v10010 = vshrl.u32 1326507024, %v9995
    %v10011 = vor.u32 %v10009, %v10010
    %vm10012 = vcmp.lt.s32.totalorder %v9993, 1
    %vm10013 = vcmp.lt.s32.totalorder %v9993, 2
    %vm10014 = vcmp.lt.s32.totalorder %v9993, 3
    %vm10015 = vcmp.lt.s32.totalorder %v9993, 4
    %v10016 = vsel %vm10012, %v9996, %v9999
    %v10017 = vsel %vm10015, %v10005, 2102212464
    %v10018 = vsel %vm10014, %v10002, %v10017
    %v10019 = vsel %vm10013, %v10016, %v10018
    %v10020 = vsel %vm10012, %v9999, %v10002
    %v10021 = vsel %vm10015, %v10008, 920167782
    %v10022 = vsel %vm10014, %v10005, %v10021
    %v10023 = vsel %vm10013, %v10020, %v10022
    %v10024 = vsel %vm10012, %v10002, %v10005
    %v10025 = vsel %vm10015, %v10011, 1326507024
    %v10026 = vsel %vm10014, %v10008, %v10025
    %v10027 = vsel %vm10013, %v10024, %v10026
    %v10028 = vshll.u32 %v9988, 8
    %v10029 = vand.u32 %v10028, 65535
    %v10030 = vshrl.u32 %v10028, 16
    %v10031 = vand.u32 %v10027, 65535
    %v10032 = vshrl.u32 %v10027, 16
    %v10033 = vmul.u32 %v10029, %v10031
    %v10034 = vmul.u32 %v10029, %v10032
    %v10035 = vmul.u32 %v10030, %v10031
    %v10036 = vmul.u32 %v10030, %v10032
    %v10037 = vshll.u32 %v10034, 16
    %v10038 = vshrl.u32 %v10034, 16
    %v10039 = vshll.u32 %v10035, 16
    %v10040 = vshrl.u32 %v10035, 16
    %vm10041 = vc.u32 %v10033, %v10037
    %v10042 = vsel %vm10041, 1, 0
    %v10043 = vadd.s32 %v10033, %v10037
    %v10044 = vadd.s32 %v10036, %v10042
    %vm10045 = vc.u32 %v10043, %v10039
    %v10046 = vsel %vm10045, 1, 0
    %v10047 = vadd.s32 %v10043, %v10039
    %v10048 = vadd.s32 %v10044, %v10046
    %v10049 = vadd.s32 %v10048, %v10038
    %v10050 = vadd.s32 %v10049, %v10040
    %v10051 = vand.u32 %v10028, 65535
    %v10052 = vshrl.u32 %v10028, 16
    %v10053 = vand.u32 %v10023, 65535
    %v10054 = vshrl.u32 %v10023, 16
    %v10055 = vmul.u32 %v10051, %v10053
    %v10056 = vmul.u32 %v10051, %v10054
    %v10057 = vmul.u32 %v10052, %v10053
    %v10058 = vmul.u32 %v10052, %v10054
    %v10059 = vshll.u32 %v10056, 16
    %v10060 = vshrl.u32 %v10056, 16
    %v10061 = vshll.u32 %v10057, 16
    %v10062 = vshrl.u32 %v10057, 16
    %vm10063 = vc.u32 %v10055, %v10059
    %v10064 = vsel %vm10063, 1, 0
    %v10065 = vadd.s32 %v10055, %v10059
    %v10066 = vadd.s32 %v10058, %v10064
    %vm10067 = vc.u32 %v10065, %v10061
    %v10068 = vsel %vm10067, 1, 0
    %v10069 = vadd.s32 %v10065, %v10061
    %v10070 = vadd.s32 %v10066, %v10068
    %v10071 = vadd.s32 %v10070, %v10060
    %v10072 = vadd.s32 %v10071, %v10062
    %v10073 = vmul.u32 %v10028, %v10019
    %v10074 = vadd.s32 %v10050, %v10069
    %vm10075 = vc.u32 %v10050, %v10069
    %v10076 = vadd.s32 %v10072, 1
    %v10077 = vsel %vm10075, %v10076, %v10072
    %v10078 = vadd.s32 %v10073, %v10077
    %v10079 = vadd.s32 %v10078, 536870912
    %v10080 = vshrl.u32 %v10079, 30
    %v10081 = vshll.u32 %v10080, 30
    %v10082 = vsub.s32 %v10078, %v10081
    %vm10083 = vcmp.lt.s32.totalorder %v10082, 0
    %v10084 = vsub.s32 0, %v10082
    %v10085 = vsel %vm10083, %v10084, %v10082
    %v10086 = vclz %v10085
    %v10087 = vsub.s32 %v10086, 2
    %vm10088 = vcmp.gt.s32.totalorder 0, %v10087
    %v10089 = vsel %vm10088, 0, %v10087
    %v10090 = vsub.s32 32, %v10089
    %v10091 = vshll.u32 %v10082, %v10089
    %v10092 = vshrl.u32 %v10074, %v10090
    %v10093 = vor.u32 %v10091, %v10092
    %v10094 = vsub.s32 4294967266, %v10089
    %v10095 = vadd.s32 %v10094, 127
    %v10096 = vshll.u32 %v10095, 23
    %v10097 = vor.u32 4788187, %v10096
    %v10098 = vand.u32 2147483647, %v10097
    %v10100 = vcvt.s32.f32 %v10093
    %v10101 = vmul.f32 %v10100, %v10098
    %v10102 = vxor.u32 %v10101, 2147483648
    %v10103 = vsel %vm9982, %v10102, %v10101
    %v10104 = vsub.s32 4, %v10080
    %v10105 = vsel %vm9982, %v10104, %v10080
    %v10106 = vsel %vm9981, %v244, %v10103
    %v10107 = vsel %vm9981, 0, %v10105
    %v10108 = vmul.f32 %v10106, %v10106
    %v10109 = vmul.f32 %v10108, -0.001358992
    %v10110 = vadd.f32 %v10109, 0.041655596
    %v10111 = vmul.f32 %v10108, %v10110
    %v10112 = vadd.f32 %v10111, -0.4999988
    %v10113 = vmul.f32 %v10108, %v10112
    %v10114 = vadd.f32 1.0, %v10113
    %v10115 = vmul.f32 %v10106, %v10106
    %v10116 = vmul.f32 %v10115, -0.00019511016
    %v10117 = vadd.f32 %v10116, 0.008332121
    %v10118 = vmul.f32 %v10115, %v10117
    %v10119 = vadd.f32 %v10118, -0.16666654
    %v10120 = vmul.f32 %v10115, %v10119
    %v10121 = vadd.f32 %v10120, 1.0
    %v10122 = vmul.f32 %v10121, %v10106
    %vm10123 = vweird.f32 %v244
    %v10124 = vadd.s32 %v10107, 3
    %v10125 = vand.u32 %v10124, 3
    %vm10126 = vcmp.lt.s32.totalorder %v10125, 2
    %vm10127 = vcmp.eq.s32.totalorder %v10125, 0
    %v10128 = vxor.u32 %v10122, 2147483648
    %v10129 = vsel %vm10127, %v10114, %v10128
    %vm10130 = vcmp.eq.s32.totalorder %v10125, 2
    %v10131 = vxor.u32 %v10114, 2147483648
    %v10132 = vsel %vm10130, %v10131, %v10122
    %v10133 = vsel %vm10126, %v10129, %v10132
    %v10134 = vsel %vm10123, nan, %v10133
    %v10135 = vsel %vm246, %v400, %v5329
    %v10136 = vsel %vm246, %v554, %v5484
    %v10137 = vsel %vm246, %v708, %v5639
    %v10138 = vsel %vm246, %v862, %v5794
    %v10139 = vsel %vm246, %v1016, %v5949
    %v10140 = vsel %vm246, %v1170, %v6104
    %v10141 = vsel %vm246, %v1324, %v6259
    %v10142 = vsel %vm246, %v1478, %v6414
    %v10143 = vsel %vm246, %v1632, %v6569
    %v10144 = vsel %vm246, %v1786, %v6724
    %v10145 = vsel %vm246, %v1940, %v6879
    %v10146 = vsel %vm246, %v2094, %v7034
    %v10147 = vsel %vm246, %v2248, %v7189
    %v10148 = vsel %vm246, %v2402, %v7344
    %v10149 = vsel %vm246, %v2556, %v7499
    %v10150 = vsel %vm246, %v2710, %v7654
    %v10151 = vsel %vm246, %v2864, %v7809
    %v10152 = vsel %vm246, %v3018, %v7964
    %v10153 = vsel %vm246, %v3172, %v8119
    %v10154 = vsel %vm246, %v3326, %v8274
    %v10155 = vsel %vm246, %v3480, %v8429
    %v10156 = vsel %vm246, %v3634, %v8584
    %v10157 = vsel %vm246, %v3788, %v8739
    %v10158 = vsel %vm246, %v3942, %v8894
    %v10159 = vsel %vm246, %v4096, %v9049
    %v10160 = vsel %vm246, %v4250, %v9204
    %v10161 = vsel %vm246, %v4404, %v9359
    %v10162 = vsel %vm246, %v4558, %v9514
    %v10163 = vsel %vm246, %v4712, %v9669
    %v10164 = vsel %vm246, %v4866, %v9824
    %v10165 = vsel %vm246, %v5020, %v9979
    %v10166 = vsel %vm246, %v5174, %v10134
    %10167 = vst [vmem:[#allocation7] sm:$0xff] %v10135
    %10168 = vst [vmem:[#allocation7 + $0x8] sm:$0xff] %v10136
    %10169 = vst [vmem:[#allocation7 + $0x10] sm:$0xff] %v10137
    %10170 = vst [vmem:[#allocation7 + $0x18] sm:$0xff] %v10138
    %10171 = vst [vmem:[#allocation7 + $0x20] sm:$0xff] %v10139
    %10172 = vst [vmem:[#allocation7 + $0x28] sm:$0xff] %v10140
    %10173 = vst [vmem:[#allocation7 + $0x30] sm:$0xff] %v10141
    %10174 = vst [vmem:[#allocation7 + $0x38] sm:$0xff] %v10142
    %10175 = vst [vmem:[#allocation7 + $0x40] sm:$0xff] %v10143
    %10176 = vst [vmem:[#allocation7 + $0x48] sm:$0xff] %v10144
    %10177 = vst [vmem:[#allocation7 + $0x50] sm:$0xff] %v10145
    %10178 = vst [vmem:[#allocation7 + $0x58] sm:$0xff] %v10146
    %10179 = vst [vmem:[#allocation7 + $0x60] sm:$0xff] %v10147
    %10180 = vst [vmem:[#allocation7 + $0x68] sm:$0xff] %v10148
    %10181 = vst [vmem:[#allocation7 + $0x70] sm:$0xff] %v10149
    %10182 = vst [vmem:[#allocation7 + $0x78] sm:$0xff] %v10150
    %10183 = vst [vmem:[#allocation7 + $0x80] sm:$0xff] %v10151
    %10184 = vst [vmem:[#allocation7 + $0x88] sm:$0xff] %v10152
    %10185 = vst [vmem:[#allocation7 + $0x90] sm:$0xff] %v10153
    %10186 = vst [vmem:[#allocation7 + $0x98] sm:$0xff] %v10154
    %10187 = vst [vmem:[#allocation7 + $0xa0] sm:$0xff] %v10155
    %10188 = vst [vmem:[#allocation7 + $0xa8] sm:$0xff] %v10156
    %10189 = vst [vmem:[#allocation7 + $0xb0] sm:$0xff] %v10157
    %10190 = vst [vmem:[#allocation7 + $0xb8] sm:$0xff] %v10158
    %10191 = vst [vmem:[#allocation7 + $0xc0] sm:$0xff] %v10159
    %10192 = vst [vmem:[#allocation7 + $0xc8] sm:$0xff] %v10160
    %10193 = vst [vmem:[#allocation7 + $0xd0] sm:$0xff] %v10161
    %10194 = vst [vmem:[#allocation7 + $0xd8] sm:$0xff] %v10162
    %10195 = vst [vmem:[#allocation7 + $0xe0] sm:$0xff] %v10163
    %10196 = vst [vmem:[#allocation7 + $0xe8] sm:$0xff] %v10164
    %10197 = vst [vmem:[#allocation7 + $0xf0] sm:$0xff] %v10165
    %10198 = vst [vmem:[#allocation7 + $0xf8] sm:$0xff] %v10166
    // Predicated region
    $region18: #{tpu_custom_call.1} parent=1 // pred_check
      _
    $region19: #{tpu_custom_call.1} parent=1 // pred_check_branch
      %10200 = sbr.rel (0) target = $region21
    $region20: #{tpu_custom_call.1} parent=1 // pred_region
      %10202 = vsyncadd [#allocation4], 0
      %s10203 = sshll.u32 [#allocation7], 4
      %s10204 = int_to_ptr.vmem [resolvable:$true] %s10203
      %s10205 = sshll.u32 %s2, 4
      %s10206 = int_to_ptr.hbm [resolvable:$true] %s10205
      %10211 = dma.vmem_to_hbm [thread:$0]  %s10204, 4096, %s10206, [#allocation4], 128, 128, 8
    $region21: #{tpu_custom_call.1} parent=1 // pred_fallthru
      _
    // Predicated region
    $region22: #{tpu_custom_call.1} parent=1 // pred_check
      _
    $region23: #{tpu_custom_call.1} parent=1 // pred_check_branch
      %10213 = sbr.rel (0) target = $region25
    $region24: #{tpu_custom_call.1} parent=1 // pred_region
      %10215 = dma.done [#allocation4], 4096
    $region25: #{tpu_custom_call.1} parent=1 // pred_fallthru
      _
    %10216 = vsyncpa [#allocation3], 1
    %10217 = vsyncpa [#allocation6], 1
    %10218 = vsyncpa [#allocation4], 1

</llo_original>
